<compile_context>
chip_gen: v6e
topology: v6e:2x2x1
jax: 0.10.0
libtpu: 0.0.40
codegen_flags: <defaults>
</compile_context>

<pallas_src>
import functools

import numpy as np

import jax
import jax.numpy as jnp
from jax.experimental import pallas as pl
from jax.experimental.pallas import tpu as pltpu

NEG_SLOPE = 0.1     # LeakyReLU slope
BN_EPS = 1e-5

# static per-layer conv config: (name, kernel_size, padding) — kept out of the
# traced params so all shape/pad arithmetic is concrete at trace time.
LAYER_CFG = (
    ("layer1", 7, 3),
    ("layer2", 3, 1),
    ("layer3", 1, 0),
    ("layer4", 3, 1),
    ("layer5", 3, 1),
)


# ----------------------------- Pallas kernels ------------------------------

def _conv_bn_lrelu_pool_kernel(w_ref, x_ref, shift_ref, sel_ref, o_ref):
    """Fused ConvLayer step on one column tile of the patch matrix.

    w_ref     : (Cout, K)        bf16  BN-folded conv weights
    x_ref     : (K, TN)          bf16  im2col patch tile (TN = q * 2W pixels)
    shift_ref : (Cout, 1)        f32   folded conv-bias + BN shift
    sel_ref   : (4, TN, TN//4)   bf16  0/1 tap selectors for the 2x2 max-pool
    o_ref     : (Cout, TN//4)    bf16  pooled activations (lane-dense tile)
    """
    acc = jnp.dot(w_ref[...], x_ref[...], preferred_element_type=jnp.float32)
    y = acc + shift_ref[...]                       # bias + BatchNorm (eval) shift
    y = jnp.where(y >= 0, y, NEG_SLOPE * y)        # LeakyReLU(0.1)
    yb = y.astype(jnp.bfloat16)
    # 2x2 max-pool fused into the writeback: each pooled pixel's four taps are
    # gathered with 0/1 selection matmuls on the (otherwise idle) MXU, so no
    # strided lane slicing / relayout is needed and the store stays lane-dense.
    t00 = jnp.dot(yb, sel_ref[0], preferred_element_type=jnp.float32)
    t01 = jnp.dot(yb, sel_ref[1], preferred_element_type=jnp.float32)
    t10 = jnp.dot(yb, sel_ref[2], preferred_element_type=jnp.float32)
    t11 = jnp.dot(yb, sel_ref[3], preferred_element_type=jnp.float32)
    o_ref[...] = jnp.maximum(jnp.maximum(t00, t01),
                             jnp.maximum(t10, t11)).astype(o_ref.dtype)


def _fc_kernel(x_ref, w_ref, b_ref, o_ref, *, act):
    """y = x @ w + b (+ LeakyReLU) on one output-column tile."""
    acc = jnp.dot(x_ref[...], w_ref[...], preferred_element_type=jnp.float32)
    y = acc + b_ref[...]
    if act:
        y = jnp.where(y >= 0, y, NEG_SLOPE * y)
    o_ref[...] = y.astype(o_ref.dtype)


# ------------------------------ layer wrappers ------------------------------

def _pool_tap_selectors(w_img, q):
    """0/1 matrices that gather the 4 taps of each 2x2 pool window out of a
    (Cout, TN) conv tile holding q row-pairs of width w_img (channel-major)."""
    two_w = 2 * w_img
    tn = q * two_w
    wo = w_img // 2
    kout = q * wo
    sel = np.zeros((4, tn, kout), np.float32)
    for p in range(q):
        for k in range(wo):
            col = p * wo + k
            base = p * two_w + 2 * k
            sel[0, base, col] = 1.0               # (h,   w)
            sel[1, base + 1, col] = 1.0           # (h,   w+1)
            sel[2, base + w_img, col] = 1.0       # (h+1, w)
            sel[3, base + w_img + 1, col] = 1.0   # (h+1, w+1)
    return jnp.asarray(sel, dtype=jnp.bfloat16)


def conv_bn_lrelu_pool(a_cm, w_fold, shift, *, ksize, pad, n, h, w):
    """ConvLayer.forward (conv + BN(eval) + LeakyReLU + 2x2 maxpool), fused.

    a_cm: (Cin, N*H*W) bf16 channel-major -> (Cout, N*(H//2)*(W//2)) bf16.
    """
    assert h % 2 == 0 and w % 2 == 0, "maxpool(2,2) needs even spatial dims"
    cin = a_cm.shape[0]
    cout = w_fold.shape[0]
    m = n * h * w

    # im2col glue in XLA, built directly in (K, M) channel-major layout.
    # TODO(synk): fuse im2col into the kernel with halo-row DMAs to avoid the
    # kh*kw activation blow-up in HBM.
    if ksize == 1 and pad == 0:
        patches = a_cm                                    # 1x1 conv: no im2col
    else:
        x4 = a_cm.reshape(cin, n, h, w)
        xp = jnp.pad(x4, ((0, 0), (0, 0), (pad, pad), (pad, pad)))
        cols = [xp[:, :, i:i + h, j:j + w]
                for i in range(ksize) for j in range(ksize)]
        patches = jnp.stack(cols, axis=0).reshape(ksize * ksize * cin, m)
    kdim = patches.shape[0]

    # Tile geometry: each tile holds q whole pooling row-pairs (2*w columns
    # each) so the pool can be completed inside the kernel; TN targets ~512.
    two_w = 2 * w
    rp_total = m // two_w
    q = min(rp_total, max(1, 512 // two_w))
    while rp_total % q:
        q -= 1
    tn = q * two_w
    kout = tn // 4
    grid = m // tn

    sel = _pool_tap_selectors(w, q)                       # (4, tn, kout)
    shift2 = shift.reshape(cout, 1).astype(jnp.float32)

    return pl.pallas_call(
        _conv_bn_lrelu_pool_kernel,
        out_shape=jax.ShapeDtypeStruct((cout, m // 4), jnp.bfloat16),
        grid=(grid,),
        in_specs=[
            pl.BlockSpec((cout, kdim), lambda i: (0, 0)),
            pl.BlockSpec((kdim, tn), lambda i: (0, i)),
            pl.BlockSpec((cout, 1), lambda i: (0, 0)),
            pl.BlockSpec((4, tn, kout), lambda i: (0, 0, 0)),
        ],
        out_specs=pl.BlockSpec((cout, kout), lambda i: (0, i)),
        compiler_params=pltpu.CompilerParams(
            dimension_semantics=("parallel",)),
    )(w_fold, patches, shift2, sel)


def linear(x, w_t, bias, *, act, out_dtype):
    """y = x @ w_t + bias (+ LeakyReLU).  x:(B,K) bf16, w_t:(K,N) bf16."""
    b, kdim = x.shape
    nout = w_t.shape[1]
    bp = ((b + 7) // 8) * 8                     # pad batch only to 8 rows
    xp = jnp.pad(x, ((0, bp - b), (0, 0)))
    tn = 512 if nout % 512 == 0 else nout       # fc1 -> 2 parallel 512-wide tiles
    grid = nout // tn
    bias2 = bias.reshape(1, nout).astype(jnp.float32)
    out = pl.pallas_call(
        functools.partial(_fc_kernel, act=act),
        out_shape=jax.ShapeDtypeStruct((bp, nout), out_dtype),
        grid=(grid,),
        in_specs=[
            pl.BlockSpec((bp, kdim), lambda j: (0, 0)),
            pl.BlockSpec((kdim, tn), lambda j: (0, j)),
            pl.BlockSpec((1, tn), lambda j: (0, j)),
        ],
        out_specs=pl.BlockSpec((bp, tn), lambda j: (0, j)),
        compiler_params=pltpu.CompilerParams(
            dimension_semantics=("parallel",)),
    )(xp, w_t, bias2)
    return out[:b]


# ------------------------------ model forward -------------------------------

def mini_model_forward(x_nchw, params, *, image_width, image_height,
                       grid_ratio, num_bounding_boxes, num_classes):
    n, cin, h, w = x_nchw.shape
    # NCHW -> channel-major (C, N*H*W): big spatial axis stays on the lanes.
    a = jnp.transpose(x_nchw, (1, 0, 2, 3)).reshape(cin, n * h * w)
    a = a.astype(jnp.bfloat16)
    for name, ksize, pad in LAYER_CFG:
        p = params[name]
        a = conv_bn_lrelu_pool(a, p["w_fold"], p["shift"],
                               ksize=ksize, pad=pad, n=n, h=h, w=w)
        h //= 2
        w //= 2

    # channel-major -> torch's x.view(N, -1) (NCHW flatten order)
    cfinal = a.shape[0]
    feat = jnp.transpose(a.reshape(cfinal, n, h * w), (1, 0, 2)).reshape(
        n, cfinal * h * w)

    x1 = linear(feat, params["fc1_wt"], params["fc1_b"],
                act=True, out_dtype=jnp.bfloat16)
    # TODO(synk): nn.Dropout treated as identity (eval-mode inference).
    x2 = linear(x1, params["fc2_wt"], params["fc2_b"],
                act=False, out_dtype=jnp.float32)

    return x2.reshape(-1, image_width // grid_ratio, image_height // grid_ratio,
                      num_bounding_boxes * (5 + num_classes))


# ------------------- parameter prep (done once, outside jit) ----------------

def prepare_params(raw):
    """Fold eval-mode BatchNorm + conv bias into bf16 matmul weights, reshape
    conv weights to (Cout, k*k*Cin), pre-transpose FC weights."""
    prepared = {}
    for name, _ksize, _pad in LAYER_CFG:
        p = raw[name]
        cout = p["w"].shape[0]
        scale = p["gamma"] / jnp.sqrt(p["var"] + BN_EPS)          # (Cout,)
        w_mat = jnp.transpose(p["w"], (0, 2, 3, 1)).reshape(cout, -1)
        prepared[name] = dict(
            w_fold=(w_mat * scale[:, None]).astype(jnp.bfloat16),
            shift=(p["beta"] + (p["b"] - p["mean"]) * scale).astype(jnp.float32),
        )
    w1, b1 = raw["fc1"]
    w2, b2 = raw["fc2"]
    prepared["fc1_wt"] = jnp.transpose(w1).astype(jnp.bfloat16)   # (in, out)
    prepared["fc1_b"] = b1.astype(jnp.float32)
    prepared["fc2_wt"] = jnp.transpose(w2).astype(jnp.bfloat16)
    prepared["fc2_b"] = b2.astype(jnp.float32)
    return prepared


# ------------------------ deterministic parameter init ----------------------

def init_conv_params(key, cin, cout, k):
    k1, k2, k3, k4, k5, k6 = jax.random.split(key, 6)
    fan_in = cin * k * k
    return dict(
        w=jax.random.normal(k1, (cout, cin, k, k), jnp.float32) / jnp.sqrt(fan_in),
        b=0.1 * jax.random.normal(k2, (cout,), jnp.float32),
        gamma=1.0 + 0.1 * jax.random.normal(k3, (cout,), jnp.float32),
        beta=0.1 * jax.random.normal(k4, (cout,), jnp.float32),
        mean=0.1 * jax.random.normal(k5, (cout,), jnp.float32),
        var=1.0 + 0.1 * jax.random.uniform(k6, (cout,), jnp.float32),
    )


def init_linear_params(key, fan_in, fan_out):
    k1, k2 = jax.random.split(key)
    w = jax.random.normal(k1, (fan_out, fan_in), jnp.float32) / jnp.sqrt(fan_in)
    b = 0.1 * jax.random.normal(k2, (fan_out,), jnp.float32)
    return (w, b)


if __name__ == "__main__":
    # small, self-consistent config (spatial /32 through 5 pools; W*H//8 == fc1 in)
    IMAGE_W = IMAGE_H = 64
    IMAGE_CH = 1
    GRID_RATIO = 32
    NUM_BB = 2
    NUM_CLASSES = 10
    BATCH = 2

    root = jax.random.PRNGKey(0)
    kx, k1, k2, k3, k4, k5, kf1, kf2 = jax.random.split(root, 8)

    raw_params = {
        "layer1": init_conv_params(k1, IMAGE_CH, 8, 7),
        "layer2": init_conv_params(k2, 8, 16, 3),
        "layer3": init_conv_params(k3, 16, 32, 1),
        "layer4": init_conv_params(k4, 32, 64, 3),
        "layer5": init_conv_params(k5, 64, 128, 3),
        "fc1": init_linear_params(kf1, IMAGE_W * IMAGE_H // 8, 1024),
        "fc2": init_linear_params(
            kf2, 1024,
            (IMAGE_W // GRID_RATIO) * (IMAGE_H // GRID_RATIO)
            * NUM_BB * (5 + NUM_CLASSES)),
    }
    params = prepare_params(raw_params)   # one-time host-side folding / casting

    x = jax.random.normal(kx, (BATCH, IMAGE_CH, IMAGE_H, IMAGE_W), jnp.float32)

    fwd = jax.jit(functools.partial(
        mini_model_forward,
        image_width=IMAGE_W, image_height=IMAGE_H, grid_ratio=GRID_RATIO,
        num_bounding_boxes=NUM_BB, num_classes=NUM_CLASSES))

    out = fwd(x, params)
    jax.block_until_ready(out)

    expected = (BATCH, IMAGE_W // GRID_RATIO, IMAGE_H // GRID_RATIO,
                NUM_BB * (5 + NUM_CLASSES))
    assert out.shape == expected, (out.shape, expected)
    assert out.dtype == jnp.float32
    assert bool(jnp.all(jnp.isfinite(out)))
    print("KERNEL_OK")
</pallas_src>

<mosaic_0001>
module attributes {stable_mosaic.version = 11 : i64} {
  func.func @_conv_bn_lrelu_pool_kernel(%arg0: i32, %arg1: memref<8x49xbf16, #tpu.memory_space<vmem>>, %arg2: memref<49x512xbf16, #tpu.memory_space<vmem>>, %arg3: memref<8x1xf32, #tpu.memory_space<vmem>>, %arg4: memref<4x512x128xbf16, #tpu.memory_space<vmem>>, %arg5: memref<8x128xbf16, #tpu.memory_space<vmem>>) attributes {dimension_semantics = [#tpu.dimension_semantics<parallel>], iteration_bounds = array<i64: 16>, scalar_prefetch = 0 : i64, scratch_operands = 0 : i64, tpu.core_type = #tpu.core_type<tc>, window_params = [{pipeline_mode = #tpu.pipeline_mode<synchronous>, transform_indices = @transform_0, window_bounds = array<i64: 8, 49>}, {transform_indices = @transform_1, window_bounds = array<i64: 49, 512>}, {pipeline_mode = #tpu.pipeline_mode<synchronous>, transform_indices = @transform_2, window_bounds = array<i64: 8, 1>}, {pipeline_mode = #tpu.pipeline_mode<synchronous>, transform_indices = @transform_3, window_bounds = array<i64: 4, 512, 128>}, {transform_indices = @transform_4, window_bounds = array<i64: 8, 128>}]} {
    %c0 = arith.constant 0 : index
    %c0_0 = arith.constant 0 : index
    %0 = vector.load %arg1[%c0, %c0_0] : memref<8x49xbf16, #tpu.memory_space<vmem>>, vector<8x49xbf16>
    %c0_1 = arith.constant 0 : index
    %c0_2 = arith.constant 0 : index
    %1 = vector.load %arg2[%c0_1, %c0_2] : memref<49x512xbf16, #tpu.memory_space<vmem>>, vector<49x512xbf16>
    %cst = arith.constant dense<0.000000e+00> : vector<8x512xf32>
    %2 = tpu.matmul %0, %1, %cst {dimension_numbers = #tpu.dot_dimension_numbers<[1], [0], [0], [1], [0, 0, 1, 1], [], []>} : vector<8x49xbf16>, vector<49x512xbf16>, vector<8x512xf32> -> vector<8x512xf32>
    %c0_3 = arith.constant 0 : index
    %c0_4 = arith.constant 0 : index
    %3 = vector.load %arg3[%c0_3, %c0_4] : memref<8x1xf32, #tpu.memory_space<vmem>>, vector<8x1xf32>
    %4 = vector.broadcast %3 : vector<8x1xf32> to vector<8x512xf32>
    %5 = arith.addf %2, %4 : vector<8x512xf32>
    %cst_5 = arith.constant 0.000000e+00 : f32
    %6 = vector.broadcast %cst_5 : f32 to vector<8x512xf32>
    %7 = arith.cmpf oge, %5, %6 : vector<8x512xf32>
    %cst_6 = arith.constant 1.000000e-01 : f32
    %8 = vector.broadcast %cst_6 : f32 to vector<8x512xf32>
    %9 = arith.mulf %8, %5 : vector<8x512xf32>
    %10 = arith.select %7, %5, %9 : vector<8x512xi1>, vector<8x512xf32>
    %11 = arith.truncf %10 : vector<8x512xf32> to vector<8x512xbf16>
    %c0_7 = arith.constant 0 : index
    %c0_8 = arith.constant 0 : index
    %c0_9 = arith.constant 0 : index
    %12 = vector.load %arg4[%c0_7, %c0_8, %c0_9] : memref<4x512x128xbf16, #tpu.memory_space<vmem>>, vector<1x512x128xbf16>
    %13 = vector.shape_cast %12 : vector<1x512x128xbf16> to vector<512x128xbf16>
    %cst_10 = arith.constant dense<0.000000e+00> : vector<8x128xf32>
    %14 = tpu.matmul %11, %13, %cst_10 {dimension_numbers = #tpu.dot_dimension_numbers<[1], [0], [0], [1], [0, 0, 1, 1], [], []>} : vector<8x512xbf16>, vector<512x128xbf16>, vector<8x128xf32> -> vector<8x128xf32>
    %c1 = arith.constant 1 : index
    %c0_11 = arith.constant 0 : index
    %c0_12 = arith.constant 0 : index
    %15 = vector.load %arg4[%c1, %c0_11, %c0_12] : memref<4x512x128xbf16, #tpu.memory_space<vmem>>, vector<1x512x128xbf16>
    %16 = vector.shape_cast %15 : vector<1x512x128xbf16> to vector<512x128xbf16>
    %cst_13 = arith.constant dense<0.000000e+00> : vector<8x128xf32>
    %17 = tpu.matmul %11, %16, %cst_13 {dimension_numbers = #tpu.dot_dimension_numbers<[1], [0], [0], [1], [0, 0, 1, 1], [], []>} : vector<8x512xbf16>, vector<512x128xbf16>, vector<8x128xf32> -> vector<8x128xf32>
    %c2 = arith.constant 2 : index
    %c0_14 = arith.constant 0 : index
    %c0_15 = arith.constant 0 : index
    %18 = vector.load %arg4[%c2, %c0_14, %c0_15] : memref<4x512x128xbf16, #tpu.memory_space<vmem>>, vector<1x512x128xbf16>
    %19 = vector.shape_cast %18 : vector<1x512x128xbf16> to vector<512x128xbf16>
    %cst_16 = arith.constant dense<0.000000e+00> : vector<8x128xf32>
    %20 = tpu.matmul %11, %19, %cst_16 {dimension_numbers = #tpu.dot_dimension_numbers<[1], [0], [0], [1], [0, 0, 1, 1], [], []>} : vector<8x512xbf16>, vector<512x128xbf16>, vector<8x128xf32> -> vector<8x128xf32>
    %c3 = arith.constant 3 : index
    %c0_17 = arith.constant 0 : index
    %c0_18 = arith.constant 0 : index
    %21 = vector.load %arg4[%c3, %c0_17, %c0_18] : memref<4x512x128xbf16, #tpu.memory_space<vmem>>, vector<1x512x128xbf16>
    %22 = vector.shape_cast %21 : vector<1x512x128xbf16> to vector<512x128xbf16>
    %cst_19 = arith.constant dense<0.000000e+00> : vector<8x128xf32>
    %23 = tpu.matmul %11, %22, %cst_19 {dimension_numbers = #tpu.dot_dimension_numbers<[1], [0], [0], [1], [0, 0, 1, 1], [], []>} : vector<8x512xbf16>, vector<512x128xbf16>, vector<8x128xf32> -> vector<8x128xf32>
    %24 = arith.maximumf %14, %17 : vector<8x128xf32>
    %25 = arith.maximumf %20, %23 : vector<8x128xf32>
    %26 = arith.maximumf %24, %25 : vector<8x128xf32>
    %27 = arith.truncf %26 : vector<8x128xf32> to vector<8x128xbf16>
    %c0_20 = arith.constant 0 : index
    %c0_21 = arith.constant 0 : index
    %28 = vector.load %arg5[%c0_20, %c0_21] : memref<8x128xbf16, #tpu.memory_space<vmem>>, vector<8x128xbf16>
    tpu.vector_store %arg5[%c0_20, %c0_21], %27 {strides = array<i32>} : memref<8x128xbf16, #tpu.memory_space<vmem>>, vector<8x128xbf16>,
    return
  }
  func.func @transform_0(%arg0: i32) -> (i32, i32) {
    %c0_i32 = arith.constant 0 : i32
    %c0_i32_0 = arith.constant 0 : i32
    %c0_i32_1 = arith.constant 0 : i32
    return %c0_i32, %c0_i32_0 : i32, i32
  }
  func.func @transform_1(%arg0: i32) -> (i32, i32) {
    %c0_i32 = arith.constant 0 : i32
    %c0_i32_0 = arith.constant 0 : i32
    return %c0_i32, %arg0 : i32, i32
  }
  func.func @transform_2(%arg0: i32) -> (i32, i32) {
    %c0_i32 = arith.constant 0 : i32
    %c0_i32_0 = arith.constant 0 : i32
    %c0_i32_1 = arith.constant 0 : i32
    return %c0_i32, %c0_i32_0 : i32, i32
  }
  func.func @transform_3(%arg0: i32) -> (i32, i32, i32) {
    %c0_i32 = arith.constant 0 : i32
    %c0_i32_0 = arith.constant 0 : i32
    %c0_i32_1 = arith.constant 0 : i32
    %c0_i32_2 = arith.constant 0 : i32
    return %c0_i32, %c0_i32_0, %c0_i32_1 : i32, i32, i32
  }
  func.func @transform_4(%arg0: i32) -> (i32, i32) {
    %c0_i32 = arith.constant 0 : i32
    %c0_i32_0 = arith.constant 0 : i32
    return %c0_i32, %arg0 : i32, i32
  }
}

module attributes {stable_mosaic.version = 11 : i64} {
  func.func @_conv_bn_lrelu_pool_kernel(%arg0: i32, %arg1: memref<16x72xbf16, #tpu.memory_space<vmem>>, %arg2: memref<72x512xbf16, #tpu.memory_space<vmem>>, %arg3: memref<16x1xf32, #tpu.memory_space<vmem>>, %arg4: memref<4x512x128xbf16, #tpu.memory_space<vmem>>, %arg5: memref<16x128xbf16, #tpu.memory_space<vmem>>) attributes {dimension_semantics = [#tpu.dimension_semantics<parallel>], iteration_bounds = array<i64: 4>, scalar_prefetch = 0 : i64, scratch_operands = 0 : i64, tpu.core_type = #tpu.core_type<tc>, window_params = [{pipeline_mode = #tpu.pipeline_mode<synchronous>, transform_indices = @transform_0, window_bounds = array<i64: 16, 72>}, {transform_indices = @transform_1, window_bounds = array<i64: 72, 512>}, {pipeline_mode = #tpu.pipeline_mode<synchronous>, transform_indices = @transform_2, window_bounds = array<i64: 16, 1>}, {pipeline_mode = #tpu.pipeline_mode<synchronous>, transform_indices = @transform_3, window_bounds = array<i64: 4, 512, 128>}, {transform_indices = @transform_4, window_bounds = array<i64: 16, 128>}]} {
    %c0 = arith.constant 0 : index
    %c0_0 = arith.constant 0 : index
    %0 = vector.load %arg1[%c0, %c0_0] : memref<16x72xbf16, #tpu.memory_space<vmem>>, vector<16x72xbf16>
    %c0_1 = arith.constant 0 : index
    %c0_2 = arith.constant 0 : index
    %1 = vector.load %arg2[%c0_1, %c0_2] : memref<72x512xbf16, #tpu.memory_space<vmem>>, vector<72x512xbf16>
    %cst = arith.constant dense<0.000000e+00> : vector<16x512xf32>
    %2 = tpu.matmul %0, %1, %cst {dimension_numbers = #tpu.dot_dimension_numbers<[1], [0], [0], [1], [0, 0, 1, 1], [], []>} : vector<16x72xbf16>, vector<72x512xbf16>, vector<16x512xf32> -> vector<16x512xf32>
    %c0_3 = arith.constant 0 : index
    %c0_4 = arith.constant 0 : index
    %3 = vector.load %arg3[%c0_3, %c0_4] : memref<16x1xf32, #tpu.memory_space<vmem>>, vector<16x1xf32>
    %4 = vector.broadcast %3 : vector<16x1xf32> to vector<16x512xf32>
    %5 = arith.addf %2, %4 : vector<16x512xf32>
    %cst_5 = arith.constant 0.000000e+00 : f32
    %6 = vector.broadcast %cst_5 : f32 to vector<16x512xf32>
    %7 = arith.cmpf oge, %5, %6 : vector<16x512xf32>
    %cst_6 = arith.constant 1.000000e-01 : f32
    %8 = vector.broadcast %cst_6 : f32 to vector<16x512xf32>
    %9 = arith.mulf %8, %5 : vector<16x512xf32>
    %10 = arith.select %7, %5, %9 : vector<16x512xi1>, vector<16x512xf32>
    %11 = arith.truncf %10 : vector<16x512xf32> to vector<16x512xbf16>
    %c0_7 = arith.constant 0 : index
    %c0_8 = arith.constant 0 : index
    %c0_9 = arith.constant 0 : index
    %12 = vector.load %arg4[%c0_7, %c0_8, %c0_9] : memref<4x512x128xbf16, #tpu.memory_space<vmem>>, vector<1x512x128xbf16>
    %13 = vector.shape_cast %12 : vector<1x512x128xbf16> to vector<512x128xbf16>
    %cst_10 = arith.constant dense<0.000000e+00> : vector<16x128xf32>
    %14 = tpu.matmul %11, %13, %cst_10 {dimension_numbers = #tpu.dot_dimension_numbers<[1], [0], [0], [1], [0, 0, 1, 1], [], []>} : vector<16x512xbf16>, vector<512x128xbf16>, vector<16x128xf32> -> vector<16x128xf32>
    %c1 = arith.constant 1 : index
    %c0_11 = arith.constant 0 : index
    %c0_12 = arith.constant 0 : index
    %15 = vector.load %arg4[%c1, %c0_11, %c0_12] : memref<4x512x128xbf16, #tpu.memory_space<vmem>>, vector<1x512x128xbf16>
    %16 = vector.shape_cast %15 : vector<1x512x128xbf16> to vector<512x128xbf16>
    %cst_13 = arith.constant dense<0.000000e+00> : vector<16x128xf32>
    %17 = tpu.matmul %11, %16, %cst_13 {dimension_numbers = #tpu.dot_dimension_numbers<[1], [0], [0], [1], [0, 0, 1, 1], [], []>} : vector<16x512xbf16>, vector<512x128xbf16>, vector<16x128xf32> -> vector<16x128xf32>
    %c2 = arith.constant 2 : index
    %c0_14 = arith.constant 0 : index
    %c0_15 = arith.constant 0 : index
    %18 = vector.load %arg4[%c2, %c0_14, %c0_15] : memref<4x512x128xbf16, #tpu.memory_space<vmem>>, vector<1x512x128xbf16>
    %19 = vector.shape_cast %18 : vector<1x512x128xbf16> to vector<512x128xbf16>
    %cst_16 = arith.constant dense<0.000000e+00> : vector<16x128xf32>
    %20 = tpu.matmul %11, %19, %cst_16 {dimension_numbers = #tpu.dot_dimension_numbers<[1], [0], [0], [1], [0, 0, 1, 1], [], []>} : vector<16x512xbf16>, vector<512x128xbf16>, vector<16x128xf32> -> vector<16x128xf32>
    %c3 = arith.constant 3 : index
    %c0_17 = arith.constant 0 : index
    %c0_18 = arith.constant 0 : index
    %21 = vector.load %arg4[%c3, %c0_17, %c0_18] : memref<4x512x128xbf16, #tpu.memory_space<vmem>>, vector<1x512x128xbf16>
    %22 = vector.shape_cast %21 : vector<1x512x128xbf16> to vector<512x128xbf16>
    %cst_19 = arith.constant dense<0.000000e+00> : vector<16x128xf32>
    %23 = tpu.matmul %11, %22, %cst_19 {dimension_numbers = #tpu.dot_dimension_numbers<[1], [0], [0], [1], [0, 0, 1, 1], [], []>} : vector<16x512xbf16>, vector<512x128xbf16>, vector<16x128xf32> -> vector<16x128xf32>
    %24 = arith.maximumf %14, %17 : vector<16x128xf32>
    %25 = arith.maximumf %20, %23 : vector<16x128xf32>
    %26 = arith.maximumf %24, %25 : vector<16x128xf32>
    %27 = arith.truncf %26 : vector<16x128xf32> to vector<16x128xbf16>
    %c0_20 = arith.constant 0 : index
    %c0_21 = arith.constant 0 : index
    %28 = vector.load %arg5[%c0_20, %c0_21] : memref<16x128xbf16, #tpu.memory_space<vmem>>, vector<16x128xbf16>
    tpu.vector_store %arg5[%c0_20, %c0_21], %27 {strides = array<i32>} : memref<16x128xbf16, #tpu.memory_space<vmem>>, vector<16x128xbf16>,
    return
  }
  func.func @transform_0(%arg0: i32) -> (i32, i32) {
    %c0_i32 = arith.constant 0 : i32
    %c0_i32_0 = arith.constant 0 : i32
    %c0_i32_1 = arith.constant 0 : i32
    return %c0_i32, %c0_i32_0 : i32, i32
  }
  func.func @transform_1(%arg0: i32) -> (i32, i32) {
    %c0_i32 = arith.constant 0 : i32
    %c0_i32_0 = arith.constant 0 : i32
    return %c0_i32, %arg0 : i32, i32
  }
  func.func @transform_2(%arg0: i32) -> (i32, i32) {
    %c0_i32 = arith.constant 0 : i32
    %c0_i32_0 = arith.constant 0 : i32
    %c0_i32_1 = arith.constant 0 : i32
    return %c0_i32, %c0_i32_0 : i32, i32
  }
  func.func @transform_3(%arg0: i32) -> (i32, i32, i32) {
    %c0_i32 = arith.constant 0 : i32
    %c0_i32_0 = arith.constant 0 : i32
    %c0_i32_1 = arith.constant 0 : i32
    %c0_i32_2 = arith.constant 0 : i32
    return %c0_i32, %c0_i32_0, %c0_i32_1 : i32, i32, i32
  }
  func.func @transform_4(%arg0: i32) -> (i32, i32) {
    %c0_i32 = arith.constant 0 : i32
    %c0_i32_0 = arith.constant 0 : i32
    return %c0_i32, %arg0 : i32, i32
  }
}

module attributes {stable_mosaic.version = 11 : i64} {
  func.func @_conv_bn_lrelu_pool_kernel(%arg0: i32, %arg1: memref<32x16xbf16, #tpu.memory_space<vmem>>, %arg2: memref<16x512xbf16, #tpu.memory_space<vmem>>, %arg3: memref<32x1xf32, #tpu.memory_space<vmem>>, %arg4: memref<4x512x128xbf16, #tpu.memory_space<vmem>>, %arg5: memref<32x128xbf16, #tpu.memory_space<vmem>>) attributes {dimension_semantics = [#tpu.dimension_semantics<parallel>], iteration_bounds = array<i64: 1>, scalar_prefetch = 0 : i64, scratch_operands = 0 : i64, tpu.core_type = #tpu.core_type<tc>, window_params = [{pipeline_mode = #tpu.pipeline_mode<synchronous>, transform_indices = @transform_0, window_bounds = array<i64: 32, 16>}, {transform_indices = @transform_1, window_bounds = array<i64: 16, 512>}, {pipeline_mode = #tpu.pipeline_mode<synchronous>, transform_indices = @transform_2, window_bounds = array<i64: 32, 1>}, {pipeline_mode = #tpu.pipeline_mode<synchronous>, transform_indices = @transform_3, window_bounds = array<i64: 4, 512, 128>}, {transform_indices = @transform_4, window_bounds = array<i64: 32, 128>}]} {
    %c0 = arith.constant 0 : index
    %c0_0 = arith.constant 0 : index
    %0 = vector.load %arg1[%c0, %c0_0] : memref<32x16xbf16, #tpu.memory_space<vmem>>, vector<32x16xbf16>
    %c0_1 = arith.constant 0 : index
    %c0_2 = arith.constant 0 : index
    %1 = vector.load %arg2[%c0_1, %c0_2] : memref<16x512xbf16, #tpu.memory_space<vmem>>, vector<16x512xbf16>
    %cst = arith.constant dense<0.000000e+00> : vector<32x512xf32>
    %2 = tpu.matmul %0, %1, %cst {dimension_numbers = #tpu.dot_dimension_numbers<[1], [0], [0], [1], [0, 0, 1, 1], [], []>} : vector<32x16xbf16>, vector<16x512xbf16>, vector<32x512xf32> -> vector<32x512xf32>
    %c0_3 = arith.constant 0 : index
    %c0_4 = arith.constant 0 : index
    %3 = vector.load %arg3[%c0_3, %c0_4] : memref<32x1xf32, #tpu.memory_space<vmem>>, vector<32x1xf32>
    %4 = vector.broadcast %3 : vector<32x1xf32> to vector<32x512xf32>
    %5 = arith.addf %2, %4 : vector<32x512xf32>
    %cst_5 = arith.constant 0.000000e+00 : f32
    %6 = vector.broadcast %cst_5 : f32 to vector<32x512xf32>
    %7 = arith.cmpf oge, %5, %6 : vector<32x512xf32>
    %cst_6 = arith.constant 1.000000e-01 : f32
    %8 = vector.broadcast %cst_6 : f32 to vector<32x512xf32>
    %9 = arith.mulf %8, %5 : vector<32x512xf32>
    %10 = arith.select %7, %5, %9 : vector<32x512xi1>, vector<32x512xf32>
    %11 = arith.truncf %10 : vector<32x512xf32> to vector<32x512xbf16>
    %c0_7 = arith.constant 0 : index
    %c0_8 = arith.constant 0 : index
    %c0_9 = arith.constant 0 : index
    %12 = vector.load %arg4[%c0_7, %c0_8, %c0_9] : memref<4x512x128xbf16, #tpu.memory_space<vmem>>, vector<1x512x128xbf16>
    %13 = vector.shape_cast %12 : vector<1x512x128xbf16> to vector<512x128xbf16>
    %cst_10 = arith.constant dense<0.000000e+00> : vector<32x128xf32>
    %14 = tpu.matmul %11, %13, %cst_10 {dimension_numbers = #tpu.dot_dimension_numbers<[1], [0], [0], [1], [0, 0, 1, 1], [], []>} : vector<32x512xbf16>, vector<512x128xbf16>, vector<32x128xf32> -> vector<32x128xf32>
    %c1 = arith.constant 1 : index
    %c0_11 = arith.constant 0 : index
    %c0_12 = arith.constant 0 : index
    %15 = vector.load %arg4[%c1, %c0_11, %c0_12] : memref<4x512x128xbf16, #tpu.memory_space<vmem>>, vector<1x512x128xbf16>
    %16 = vector.shape_cast %15 : vector<1x512x128xbf16> to vector<512x128xbf16>
    %cst_13 = arith.constant dense<0.000000e+00> : vector<32x128xf32>
    %17 = tpu.matmul %11, %16, %cst_13 {dimension_numbers = #tpu.dot_dimension_numbers<[1], [0], [0], [1], [0, 0, 1, 1], [], []>} : vector<32x512xbf16>, vector<512x128xbf16>, vector<32x128xf32> -> vector<32x128xf32>
    %c2 = arith.constant 2 : index
    %c0_14 = arith.constant 0 : index
    %c0_15 = arith.constant 0 : index
    %18 = vector.load %arg4[%c2, %c0_14, %c0_15] : memref<4x512x128xbf16, #tpu.memory_space<vmem>>, vector<1x512x128xbf16>
    %19 = vector.shape_cast %18 : vector<1x512x128xbf16> to vector<512x128xbf16>
    %cst_16 = arith.constant dense<0.000000e+00> : vector<32x128xf32>
    %20 = tpu.matmul %11, %19, %cst_16 {dimension_numbers = #tpu.dot_dimension_numbers<[1], [0], [0], [1], [0, 0, 1, 1], [], []>} : vector<32x512xbf16>, vector<512x128xbf16>, vector<32x128xf32> -> vector<32x128xf32>
    %c3 = arith.constant 3 : index
    %c0_17 = arith.constant 0 : index
    %c0_18 = arith.constant 0 : index
    %21 = vector.load %arg4[%c3, %c0_17, %c0_18] : memref<4x512x128xbf16, #tpu.memory_space<vmem>>, vector<1x512x128xbf16>
    %22 = vector.shape_cast %21 : vector<1x512x128xbf16> to vector<512x128xbf16>
    %cst_19 = arith.constant dense<0.000000e+00> : vector<32x128xf32>
    %23 = tpu.matmul %11, %22, %cst_19 {dimension_numbers = #tpu.dot_dimension_numbers<[1], [0], [0], [1], [0, 0, 1, 1], [], []>} : vector<32x512xbf16>, vector<512x128xbf16>, vector<32x128xf32> -> vector<32x128xf32>
    %24 = arith.maximumf %14, %17 : vector<32x128xf32>
    %25 = arith.maximumf %20, %23 : vector<32x128xf32>
    %26 = arith.maximumf %24, %25 : vector<32x128xf32>
    %27 = arith.truncf %26 : vector<32x128xf32> to vector<32x128xbf16>
    %c0_20 = arith.constant 0 : index
    %c0_21 = arith.constant 0 : index
    %28 = vector.load %arg5[%c0_20, %c0_21] : memref<32x128xbf16, #tpu.memory_space<vmem>>, vector<32x128xbf16>
    tpu.vector_store %arg5[%c0_20, %c0_21], %27 {strides = array<i32>} : memref<32x128xbf16, #tpu.memory_space<vmem>>, vector<32x128xbf16>,
    return
  }
  func.func @transform_0(%arg0: i32) -> (i32, i32) {
    %c0_i32 = arith.constant 0 : i32
    %c0_i32_0 = arith.constant 0 : i32
    %c0_i32_1 = arith.constant 0 : i32
    return %c0_i32, %c0_i32_0 : i32, i32
  }
  func.func @transform_1(%arg0: i32) -> (i32, i32) {
    %c0_i32 = arith.constant 0 : i32
    %c0_i32_0 = arith.constant 0 : i32
    return %c0_i32, %arg0 : i32, i32
  }
  func.func @transform_2(%arg0: i32) -> (i32, i32) {
    %c0_i32 = arith.constant 0 : i32
    %c0_i32_0 = arith.constant 0 : i32
    %c0_i32_1 = arith.constant 0 : i32
    return %c0_i32, %c0_i32_0 : i32, i32
  }
  func.func @transform_3(%arg0: i32) -> (i32, i32, i32) {
    %c0_i32 = arith.constant 0 : i32
    %c0_i32_0 = arith.constant 0 : i32
    %c0_i32_1 = arith.constant 0 : i32
    %c0_i32_2 = arith.constant 0 : i32
    return %c0_i32, %c0_i32_0, %c0_i32_1 : i32, i32, i32
  }
  func.func @transform_4(%arg0: i32) -> (i32, i32) {
    %c0_i32 = arith.constant 0 : i32
    %c0_i32_0 = arith.constant 0 : i32
    return %c0_i32, %arg0 : i32, i32
  }
}

module attributes {stable_mosaic.version = 11 : i64} {
  func.func @_conv_bn_lrelu_pool_kernel(%arg0: i32, %arg1: memref<64x288xbf16, #tpu.memory_space<vmem>>, %arg2: memref<288x128xbf16, #tpu.memory_space<vmem>>, %arg3: memref<64x1xf32, #tpu.memory_space<vmem>>, %arg4: memref<4x128x32xbf16, #tpu.memory_space<vmem>>, %arg5: memref<64x32xbf16, #tpu.memory_space<vmem>>) attributes {dimension_semantics = [#tpu.dimension_semantics<parallel>], iteration_bounds = array<i64: 1>, scalar_prefetch = 0 : i64, scratch_operands = 0 : i64, tpu.core_type = #tpu.core_type<tc>, window_params = [{pipeline_mode = #tpu.pipeline_mode<synchronous>, transform_indices = @transform_0, window_bounds = array<i64: 64, 288>}, {transform_indices = @transform_1, window_bounds = array<i64: 288, 128>}, {pipeline_mode = #tpu.pipeline_mode<synchronous>, transform_indices = @transform_2, window_bounds = array<i64: 64, 1>}, {pipeline_mode = #tpu.pipeline_mode<synchronous>, transform_indices = @transform_3, window_bounds = array<i64: 4, 128, 32>}, {transform_indices = @transform_4, window_bounds = array<i64: 64, 32>}]} {
    %c0 = arith.constant 0 : index
    %c0_0 = arith.constant 0 : index
    %0 = vector.load %arg1[%c0, %c0_0] : memref<64x288xbf16, #tpu.memory_space<vmem>>, vector<64x288xbf16>
    %c0_1 = arith.constant 0 : index
    %c0_2 = arith.constant 0 : index
    %1 = vector.load %arg2[%c0_1, %c0_2] : memref<288x128xbf16, #tpu.memory_space<vmem>>, vector<288x128xbf16>
    %cst = arith.constant dense<0.000000e+00> : vector<64x128xf32>
    %2 = tpu.matmul %0, %1, %cst {dimension_numbers = #tpu.dot_dimension_numbers<[1], [0], [0], [1], [0, 0, 1, 1], [], []>} : vector<64x288xbf16>, vector<288x128xbf16>, vector<64x128xf32> -> vector<64x128xf32>
    %c0_3 = arith.constant 0 : index
    %c0_4 = arith.constant 0 : index
    %3 = vector.load %arg3[%c0_3, %c0_4] : memref<64x1xf32, #tpu.memory_space<vmem>>, vector<64x1xf32>
    %4 = vector.broadcast %3 : vector<64x1xf32> to vector<64x128xf32>
    %5 = arith.addf %2, %4 : vector<64x128xf32>
    %cst_5 = arith.constant 0.000000e+00 : f32
    %6 = vector.broadcast %cst_5 : f32 to vector<64x128xf32>
    %7 = arith.cmpf oge, %5, %6 : vector<64x128xf32>
    %cst_6 = arith.constant 1.000000e-01 : f32
    %8 = vector.broadcast %cst_6 : f32 to vector<64x128xf32>
    %9 = arith.mulf %8, %5 : vector<64x128xf32>
    %10 = arith.select %7, %5, %9 : vector<64x128xi1>, vector<64x128xf32>
    %11 = arith.truncf %10 : vector<64x128xf32> to vector<64x128xbf16>
    %c0_7 = arith.constant 0 : index
    %c0_8 = arith.constant 0 : index
    %c0_9 = arith.constant 0 : index
    %12 = vector.load %arg4[%c0_7, %c0_8, %c0_9] : memref<4x128x32xbf16, #tpu.memory_space<vmem>>, vector<1x128x32xbf16>
    %13 = vector.shape_cast %12 : vector<1x128x32xbf16> to vector<128x32xbf16>
    %cst_10 = arith.constant dense<0.000000e+00> : vector<64x32xf32>
    %14 = tpu.matmul %11, %13, %cst_10 {dimension_numbers = #tpu.dot_dimension_numbers<[1], [0], [0], [1], [0, 0, 1, 1], [], []>} : vector<64x128xbf16>, vector<128x32xbf16>, vector<64x32xf32> -> vector<64x32xf32>
    %c1 = arith.constant 1 : index
    %c0_11 = arith.constant 0 : index
    %c0_12 = arith.constant 0 : index
    %15 = vector.load %arg4[%c1, %c0_11, %c0_12] : memref<4x128x32xbf16, #tpu.memory_space<vmem>>, vector<1x128x32xbf16>
    %16 = vector.shape_cast %15 : vector<1x128x32xbf16> to vector<128x32xbf16>
    %cst_13 = arith.constant dense<0.000000e+00> : vector<64x32xf32>
    %17 = tpu.matmul %11, %16, %cst_13 {dimension_numbers = #tpu.dot_dimension_numbers<[1], [0], [0], [1], [0, 0, 1, 1], [], []>} : vector<64x128xbf16>, vector<128x32xbf16>, vector<64x32xf32> -> vector<64x32xf32>
    %c2 = arith.constant 2 : index
    %c0_14 = arith.constant 0 : index
    %c0_15 = arith.constant 0 : index
    %18 = vector.load %arg4[%c2, %c0_14, %c0_15] : memref<4x128x32xbf16, #tpu.memory_space<vmem>>, vector<1x128x32xbf16>
    %19 = vector.shape_cast %18 : vector<1x128x32xbf16> to vector<128x32xbf16>
    %cst_16 = arith.constant dense<0.000000e+00> : vector<64x32xf32>
    %20 = tpu.matmul %11, %19, %cst_16 {dimension_numbers = #tpu.dot_dimension_numbers<[1], [0], [0], [1], [0, 0, 1, 1], [], []>} : vector<64x128xbf16>, vector<128x32xbf16>, vector<64x32xf32> -> vector<64x32xf32>
    %c3 = arith.constant 3 : index
    %c0_17 = arith.constant 0 : index
    %c0_18 = arith.constant 0 : index
    %21 = vector.load %arg4[%c3, %c0_17, %c0_18] : memref<4x128x32xbf16, #tpu.memory_space<vmem>>, vector<1x128x32xbf16>
    %22 = vector.shape_cast %21 : vector<1x128x32xbf16> to vector<128x32xbf16>
    %cst_19 = arith.constant dense<0.000000e+00> : vector<64x32xf32>
    %23 = tpu.matmul %11, %22, %cst_19 {dimension_numbers = #tpu.dot_dimension_numbers<[1], [0], [0], [1], [0, 0, 1, 1], [], []>} : vector<64x128xbf16>, vector<128x32xbf16>, vector<64x32xf32> -> vector<64x32xf32>
    %24 = arith.maximumf %14, %17 : vector<64x32xf32>
    %25 = arith.maximumf %20, %23 : vector<64x32xf32>
    %26 = arith.maximumf %24, %25 : vector<64x32xf32>
    %27 = arith.truncf %26 : vector<64x32xf32> to vector<64x32xbf16>
    %c0_20 = arith.constant 0 : index
    %c0_21 = arith.constant 0 : index
    %28 = vector.load %arg5[%c0_20, %c0_21] : memref<64x32xbf16, #tpu.memory_space<vmem>>, vector<64x32xbf16>
    tpu.vector_store %arg5[%c0_20, %c0_21], %27 {strides = array<i32>} : memref<64x32xbf16, #tpu.memory_space<vmem>>, vector<64x32xbf16>,
    return
  }
  func.func @transform_0(%arg0: i32) -> (i32, i32) {
    %c0_i32 = arith.constant 0 : i32
    %c0_i32_0 = arith.constant 0 : i32
    %c0_i32_1 = arith.constant 0 : i32
    return %c0_i32, %c0_i32_0 : i32, i32
  }
  func.func @transform_1(%arg0: i32) -> (i32, i32) {
    %c0_i32 = arith.constant 0 : i32
    %c0_i32_0 = arith.constant 0 : i32
    return %c0_i32, %arg0 : i32, i32
  }
  func.func @transform_2(%arg0: i32) -> (i32, i32) {
    %c0_i32 = arith.constant 0 : i32
    %c0_i32_0 = arith.constant 0 : i32
    %c0_i32_1 = arith.constant 0 : i32
    return %c0_i32, %c0_i32_0 : i32, i32
  }
  func.func @transform_3(%arg0: i32) -> (i32, i32, i32) {
    %c0_i32 = arith.constant 0 : i32
    %c0_i32_0 = arith.constant 0 : i32
    %c0_i32_1 = arith.constant 0 : i32
    %c0_i32_2 = arith.constant 0 : i32
    return %c0_i32, %c0_i32_0, %c0_i32_1 : i32, i32, i32
  }
  func.func @transform_4(%arg0: i32) -> (i32, i32) {
    %c0_i32 = arith.constant 0 : i32
    %c0_i32_0 = arith.constant 0 : i32
    return %c0_i32, %arg0 : i32, i32
  }
}

module attributes {stable_mosaic.version = 11 : i64} {
  func.func @_conv_bn_lrelu_pool_kernel(%arg0: i32, %arg1: memref<128x576xbf16, #tpu.memory_space<vmem>>, %arg2: memref<576x32xbf16, #tpu.memory_space<vmem>>, %arg3: memref<128x1xf32, #tpu.memory_space<vmem>>, %arg4: memref<4x32x8xbf16, #tpu.memory_space<vmem>>, %arg5: memref<128x8xbf16, #tpu.memory_space<vmem>>) attributes {dimension_semantics = [#tpu.dimension_semantics<parallel>], iteration_bounds = array<i64: 1>, scalar_prefetch = 0 : i64, scratch_operands = 0 : i64, tpu.core_type = #tpu.core_type<tc>, window_params = [{pipeline_mode = #tpu.pipeline_mode<synchronous>, transform_indices = @transform_0, window_bounds = array<i64: 128, 576>}, {transform_indices = @transform_1, window_bounds = array<i64: 576, 32>}, {pipeline_mode = #tpu.pipeline_mode<synchronous>, transform_indices = @transform_2, window_bounds = array<i64: 128, 1>}, {pipeline_mode = #tpu.pipeline_mode<synchronous>, transform_indices = @transform_3, window_bounds = array<i64: 4, 32, 8>}, {transform_indices = @transform_4, window_bounds = array<i64: 128, 8>}]} {
    %c0 = arith.constant 0 : index
    %c0_0 = arith.constant 0 : index
    %0 = vector.load %arg1[%c0, %c0_0] : memref<128x576xbf16, #tpu.memory_space<vmem>>, vector<128x576xbf16>
    %c0_1 = arith.constant 0 : index
    %c0_2 = arith.constant 0 : index
    %1 = vector.load %arg2[%c0_1, %c0_2] : memref<576x32xbf16, #tpu.memory_space<vmem>>, vector<576x32xbf16>
    %cst = arith.constant dense<0.000000e+00> : vector<128x32xf32>
    %2 = tpu.matmul %0, %1, %cst {dimension_numbers = #tpu.dot_dimension_numbers<[1], [0], [0], [1], [0, 0, 1, 1], [], []>} : vector<128x576xbf16>, vector<576x32xbf16>, vector<128x32xf32> -> vector<128x32xf32>
    %c0_3 = arith.constant 0 : index
    %c0_4 = arith.constant 0 : index
    %3 = vector.load %arg3[%c0_3, %c0_4] : memref<128x1xf32, #tpu.memory_space<vmem>>, vector<128x1xf32>
    %4 = vector.broadcast %3 : vector<128x1xf32> to vector<128x32xf32>
    %5 = arith.addf %2, %4 : vector<128x32xf32>
    %cst_5 = arith.constant 0.000000e+00 : f32
    %6 = vector.broadcast %cst_5 : f32 to vector<128x32xf32>
    %7 = arith.cmpf oge, %5, %6 : vector<128x32xf32>
    %cst_6 = arith.constant 1.000000e-01 : f32
    %8 = vector.broadcast %cst_6 : f32 to vector<128x32xf32>
    %9 = arith.mulf %8, %5 : vector<128x32xf32>
    %10 = arith.select %7, %5, %9 : vector<128x32xi1>, vector<128x32xf32>
    %11 = arith.truncf %10 : vector<128x32xf32> to vector<128x32xbf16>
    %c0_7 = arith.constant 0 : index
    %c0_8 = arith.constant 0 : index
    %c0_9 = arith.constant 0 : index
    %12 = vector.load %arg4[%c0_7, %c0_8, %c0_9] : memref<4x32x8xbf16, #tpu.memory_space<vmem>>, vector<1x32x8xbf16>
    %13 = vector.shape_cast %12 : vector<1x32x8xbf16> to vector<32x8xbf16>
    %cst_10 = arith.constant dense<0.000000e+00> : vector<128x8xf32>
    %14 = tpu.matmul %11, %13, %cst_10 {dimension_numbers = #tpu.dot_dimension_numbers<[1], [0], [0], [1], [0, 0, 1, 1], [], []>} : vector<128x32xbf16>, vector<32x8xbf16>, vector<128x8xf32> -> vector<128x8xf32>
    %c1 = arith.constant 1 : index
    %c0_11 = arith.constant 0 : index
    %c0_12 = arith.constant 0 : index
    %15 = vector.load %arg4[%c1, %c0_11, %c0_12] : memref<4x32x8xbf16, #tpu.memory_space<vmem>>, vector<1x32x8xbf16>
    %16 = vector.shape_cast %15 : vector<1x32x8xbf16> to vector<32x8xbf16>
    %cst_13 = arith.constant dense<0.000000e+00> : vector<128x8xf32>
    %17 = tpu.matmul %11, %16, %cst_13 {dimension_numbers = #tpu.dot_dimension_numbers<[1], [0], [0], [1], [0, 0, 1, 1], [], []>} : vector<128x32xbf16>, vector<32x8xbf16>, vector<128x8xf32> -> vector<128x8xf32>
    %c2 = arith.constant 2 : index
    %c0_14 = arith.constant 0 : index
    %c0_15 = arith.constant 0 : index
    %18 = vector.load %arg4[%c2, %c0_14, %c0_15] : memref<4x32x8xbf16, #tpu.memory_space<vmem>>, vector<1x32x8xbf16>
    %19 = vector.shape_cast %18 : vector<1x32x8xbf16> to vector<32x8xbf16>
    %cst_16 = arith.constant dense<0.000000e+00> : vector<128x8xf32>
    %20 = tpu.matmul %11, %19, %cst_16 {dimension_numbers = #tpu.dot_dimension_numbers<[1], [0], [0], [1], [0, 0, 1, 1], [], []>} : vector<128x32xbf16>, vector<32x8xbf16>, vector<128x8xf32> -> vector<128x8xf32>
    %c3 = arith.constant 3 : index
    %c0_17 = arith.constant 0 : index
    %c0_18 = arith.constant 0 : index
    %21 = vector.load %arg4[%c3, %c0_17, %c0_18] : memref<4x32x8xbf16, #tpu.memory_space<vmem>>, vector<1x32x8xbf16>
    %22 = vector.shape_cast %21 : vector<1x32x8xbf16> to vector<32x8xbf16>
    %cst_19 = arith.constant dense<0.000000e+00> : vector<128x8xf32>
    %23 = tpu.matmul %11, %22, %cst_19 {dimension_numbers = #tpu.dot_dimension_numbers<[1], [0], [0], [1], [0, 0, 1, 1], [], []>} : vector<128x32xbf16>, vector<32x8xbf16>, vector<128x8xf32> -> vector<128x8xf32>
    %24 = arith.maximumf %14, %17 : vector<128x8xf32>
    %25 = arith.maximumf %20, %23 : vector<128x8xf32>
    %26 = arith.maximumf %24, %25 : vector<128x8xf32>
    %27 = arith.truncf %26 : vector<128x8xf32> to vector<128x8xbf16>
    %c0_20 = arith.constant 0 : index
    %c0_21 = arith.constant 0 : index
    %28 = vector.load %arg5[%c0_20, %c0_21] : memref<128x8xbf16, #tpu.memory_space<vmem>>, vector<128x8xbf16>
    tpu.vector_store %arg5[%c0_20, %c0_21], %27 {strides = array<i32>} : memref<128x8xbf16, #tpu.memory_space<vmem>>, vector<128x8xbf16>,
    return
  }
  func.func @transform_0(%arg0: i32) -> (i32, i32) {
    %c0_i32 = arith.constant 0 : i32
    %c0_i32_0 = arith.constant 0 : i32
    %c0_i32_1 = arith.constant 0 : i32
    return %c0_i32, %c0_i32_0 : i32, i32
  }
  func.func @transform_1(%arg0: i32) -> (i32, i32) {
    %c0_i32 = arith.constant 0 : i32
    %c0_i32_0 = arith.constant 0 : i32
    return %c0_i32, %arg0 : i32, i32
  }
  func.func @transform_2(%arg0: i32) -> (i32, i32) {
    %c0_i32 = arith.constant 0 : i32
    %c0_i32_0 = arith.constant 0 : i32
    %c0_i32_1 = arith.constant 0 : i32
    return %c0_i32, %c0_i32_0 : i32, i32
  }
  func.func @transform_3(%arg0: i32) -> (i32, i32, i32) {
    %c0_i32 = arith.constant 0 : i32
    %c0_i32_0 = arith.constant 0 : i32
    %c0_i32_1 = arith.constant 0 : i32
    %c0_i32_2 = arith.constant 0 : i32
    return %c0_i32, %c0_i32_0, %c0_i32_1 : i32, i32, i32
  }
  func.func @transform_4(%arg0: i32) -> (i32, i32) {
    %c0_i32 = arith.constant 0 : i32
    %c0_i32_0 = arith.constant 0 : i32
    return %c0_i32, %arg0 : i32, i32
  }
}

module attributes {stable_mosaic.version = 11 : i64} {
  func.func @_fc_kernel(%arg0: i32, %arg1: memref<8x512xbf16, #tpu.memory_space<vmem>>, %arg2: memref<512x512xbf16, #tpu.memory_space<vmem>>, %arg3: memref<1x512xf32, #tpu.memory_space<vmem>>, %arg4: memref<8x512xbf16, #tpu.memory_space<vmem>>) attributes {dimension_semantics = [#tpu.dimension_semantics<parallel>], iteration_bounds = array<i64: 2>, scalar_prefetch = 0 : i64, scratch_operands = 0 : i64, tpu.core_type = #tpu.core_type<tc>, window_params = [{pipeline_mode = #tpu.pipeline_mode<synchronous>, transform_indices = @transform_0, window_bounds = array<i64: 8, 512>}, {transform_indices = @transform_1, window_bounds = array<i64: 512, 512>}, {transform_indices = @transform_2, window_bounds = array<i64: 1, 512>}, {transform_indices = @transform_3, window_bounds = array<i64: 8, 512>}]} {
    %c0 = arith.constant 0 : index
    %c0_0 = arith.constant 0 : index
    %0 = vector.load %arg1[%c0, %c0_0] : memref<8x512xbf16, #tpu.memory_space<vmem>>, vector<8x512xbf16>
    %c0_1 = arith.constant 0 : index
    %c0_2 = arith.constant 0 : index
    %1 = vector.load %arg2[%c0_1, %c0_2] : memref<512x512xbf16, #tpu.memory_space<vmem>>, vector<512x512xbf16>
    %cst = arith.constant dense<0.000000e+00> : vector<8x512xf32>
    %2 = tpu.matmul %0, %1, %cst {dimension_numbers = #tpu.dot_dimension_numbers<[1], [0], [0], [1], [0, 0, 1, 1], [], []>} : vector<8x512xbf16>, vector<512x512xbf16>, vector<8x512xf32> -> vector<8x512xf32>
    %c0_3 = arith.constant 0 : index
    %c0_4 = arith.constant 0 : index
    %3 = vector.load %arg3[%c0_3, %c0_4] : memref<1x512xf32, #tpu.memory_space<vmem>>, vector<1x512xf32>
    %4 = vector.broadcast %3 : vector<1x512xf32> to vector<8x512xf32>
    %5 = arith.addf %2, %4 : vector<8x512xf32>
    %cst_5 = arith.constant 0.000000e+00 : f32
    %6 = vector.broadcast %cst_5 : f32 to vector<8x512xf32>
    %7 = arith.cmpf oge, %5, %6 : vector<8x512xf32>
    %cst_6 = arith.constant 1.000000e-01 : f32
    %8 = vector.broadcast %cst_6 : f32 to vector<8x512xf32>
    %9 = arith.mulf %8, %5 : vector<8x512xf32>
    %10 = arith.select %7, %5, %9 : vector<8x512xi1>, vector<8x512xf32>
    %11 = arith.truncf %10 : vector<8x512xf32> to vector<8x512xbf16>
    %c0_7 = arith.constant 0 : index
    %c0_8 = arith.constant 0 : index
    %12 = vector.load %arg4[%c0_7, %c0_8] : memref<8x512xbf16, #tpu.memory_space<vmem>>, vector<8x512xbf16>
    tpu.vector_store %arg4[%c0_7, %c0_8], %11 {strides = array<i32>} : memref<8x512xbf16, #tpu.memory_space<vmem>>, vector<8x512xbf16>,
    return
  }
  func.func @transform_0(%arg0: i32) -> (i32, i32) {
    %c0_i32 = arith.constant 0 : i32
    %c0_i32_0 = arith.constant 0 : i32
    %c0_i32_1 = arith.constant 0 : i32
    return %c0_i32, %c0_i32_0 : i32, i32
  }
  func.func @transform_1(%arg0: i32) -> (i32, i32) {
    %c0_i32 = arith.constant 0 : i32
    %c0_i32_0 = arith.constant 0 : i32
    return %c0_i32, %arg0 : i32, i32
  }
  func.func @transform_2(%arg0: i32) -> (i32, i32) {
    %c0_i32 = arith.constant 0 : i32
    %c0_i32_0 = arith.constant 0 : i32
    return %c0_i32, %arg0 : i32, i32
  }
  func.func @transform_3(%arg0: i32) -> (i32, i32) {
    %c0_i32 = arith.constant 0 : i32
    %c0_i32_0 = arith.constant 0 : i32
    return %c0_i32, %arg0 : i32, i32
  }
}

module attributes {stable_mosaic.version = 11 : i64} {
  func.func @_fc_kernel(%arg0: i32, %arg1: memref<8x1024xbf16, #tpu.memory_space<vmem>>, %arg2: memref<1024x120xbf16, #tpu.memory_space<vmem>>, %arg3: memref<1x120xf32, #tpu.memory_space<vmem>>, %arg4: memref<8x120xf32, #tpu.memory_space<vmem>>) attributes {dimension_semantics = [#tpu.dimension_semantics<parallel>], iteration_bounds = array<i64: 1>, scalar_prefetch = 0 : i64, scratch_operands = 0 : i64, tpu.core_type = #tpu.core_type<tc>, window_params = [{pipeline_mode = #tpu.pipeline_mode<synchronous>, transform_indices = @transform_0, window_bounds = array<i64: 8, 1024>}, {transform_indices = @transform_1, window_bounds = array<i64: 1024, 120>}, {transform_indices = @transform_2, window_bounds = array<i64: 1, 120>}, {transform_indices = @transform_3, window_bounds = array<i64: 8, 120>}]} {
    %c0 = arith.constant 0 : index
    %c0_0 = arith.constant 0 : index
    %0 = vector.load %arg1[%c0, %c0_0] : memref<8x1024xbf16, #tpu.memory_space<vmem>>, vector<8x1024xbf16>
    %c0_1 = arith.constant 0 : index
    %c0_2 = arith.constant 0 : index
    %1 = vector.load %arg2[%c0_1, %c0_2] : memref<1024x120xbf16, #tpu.memory_space<vmem>>, vector<1024x120xbf16>
    %cst = arith.constant dense<0.000000e+00> : vector<8x120xf32>
    %2 = tpu.matmul %0, %1, %cst {dimension_numbers = #tpu.dot_dimension_numbers<[1], [0], [0], [1], [0, 0, 1, 1], [], []>} : vector<8x1024xbf16>, vector<1024x120xbf16>, vector<8x120xf32> -> vector<8x120xf32>
    %c0_3 = arith.constant 0 : index
    %c0_4 = arith.constant 0 : index
    %3 = vector.load %arg3[%c0_3, %c0_4] : memref<1x120xf32, #tpu.memory_space<vmem>>, vector<1x120xf32>
    %4 = vector.broadcast %3 : vector<1x120xf32> to vector<8x120xf32>
    %5 = arith.addf %2, %4 : vector<8x120xf32>
    %c0_5 = arith.constant 0 : index
    %c0_6 = arith.constant 0 : index
    %6 = vector.load %arg4[%c0_5, %c0_6] : memref<8x120xf32, #tpu.memory_space<vmem>>, vector<8x120xf32>
    tpu.vector_store %arg4[%c0_5, %c0_6], %5 {strides = array<i32>} : memref<8x120xf32, #tpu.memory_space<vmem>>, vector<8x120xf32>,
    return
  }
  func.func @transform_0(%arg0: i32) -> (i32, i32) {
    %c0_i32 = arith.constant 0 : i32
    %c0_i32_0 = arith.constant 0 : i32
    %c0_i32_1 = arith.constant 0 : i32
    return %c0_i32, %c0_i32_0 : i32, i32
  }
  func.func @transform_1(%arg0: i32) -> (i32, i32) {
    %c0_i32 = arith.constant 0 : i32
    %c0_i32_0 = arith.constant 0 : i32
    return %c0_i32, %arg0 : i32, i32
  }
  func.func @transform_2(%arg0: i32) -> (i32, i32) {
    %c0_i32 = arith.constant 0 : i32
    %c0_i32_0 = arith.constant 0 : i32
    return %c0_i32, %arg0 : i32, i32
  }
  func.func @transform_3(%arg0: i32) -> (i32, i32) {
    %c0_i32 = arith.constant 0 : i32
    %c0_i32_0 = arith.constant 0 : i32
    return %c0_i32, %arg0 : i32, i32
  }
}

</mosaic_0001>

<llo_original>
// kernel: mini_model_forward.7
$region0: #{mini_model_forward.7}
  #allocation0 [shape = 'u32[]', space=smem, size = 0x4, offset = 0x4, fixed_abs, tag = 'smem constant byte address 0x4 - core index']
  #allocation1 [shape = 'u32[144,128]{1,0:T(1,128)}', space=vmem, size = 0x12000, scoped, tag = 'internal scratch']
  %s0 = inlined_call_operand.vmem [shape: bf16[8,49], index: 0, kind: input, shape index: {}]
  %s1 = inlined_call_operand.vmem [shape: bf16[49,8192], index: 1, kind: input, shape index: {}]
  %s2 = inlined_call_operand.vmem [shape: f32[8,1], index: 2, kind: input, shape index: {}]
  %s3 = inlined_call_operand.vmem [shape: bf16[4,512,128], index: 3, kind: input, shape index: {}]
  %s4 = inlined_call_operand.vmem [shape: bf16[8,2048], index: 4, kind: output, shape index: {}]
  %s5 = sld [smem:[#allocation0]]
  $region72: #{mini_model_forward.7} parent=0
    _
  %s7 = ssub.s32 1, %s5
  %s8 = scalar_select 0, %s7, %s5
  $region1: #{mini_model_forward.7} parent=0
    #allocation2 [shape = 'u8[114688]{0}', space=vmem, size = 0x1c000, scoped, tag = 'input window, operand 1']
    loop: start=0, step=1, limit=18
    $region2: #{mini_model_forward.7} parent=1 // loop_pre_header
      _
    $region3: #{mini_model_forward.7} parent=1 // loop_header
      %s10 = sphi 0, %s14
      %p11 = scmp.ge.s32.totalorder %s10, 18
      %s18 = sphi 0, %s18
      %s20 = sphi 0, %s18
      %s21 = sphi 0, %s20
      %s35 = sphi 0, %s21
      %s41 = sphi 0, %s43
      %s44 = sphi 0, %s41
      %s45 = sphi 0, %s44
      %s61 = sphi 0, %s45
      %s65 = sphi 0, %s65
      %s67 = sphi 0, %s65
      %s68 = sphi 0, %s67
      %s82 = sphi 0, %s68
      %s86 = sphi 0, %s86
      %s88 = sphi 0, %s86
      %s89 = sphi 0, %s88
      %s103 = sphi 0, %s89
      %s109 = sphi 0, %s111
      %s112 = sphi 0, %s109
      %s113 = sphi 0, %s112
      %s129 = sphi 0, %s113
    $region4: #{mini_model_forward.7} parent=1 // loop_header_branch
      %13 = sbr.rel (%p11) target = $region8
    $region5: #{mini_model_forward.7} parent=1 // loop_body
      %s15 = ssub.s32 %s10, 1
      %s16 = ssub.s32 %s10, 2
      %s17 = sadd.s32 %s10, 1
      %s19 = sadd.s32 %s18, 1
      %p22 = scmp.eq.s32.totalorder %s10, 15
      %p23 = scmp.ne.s32.totalorder %s18, %s20
      %p24 = scmp.eq.s32.totalorder %s10, 0
      %p25 = por %p23, %p24
      %p26 = scmp.ne.s32.totalorder %s18, %s20
      %p27 = scmp.eq.s32.totalorder %s15, 15
      %p28 = por %p26, %p27
      %p29 = scmp.ne.s32.totalorder %s20, %s21
      %p30 = scmp.eq.s32.totalorder %s15, 0
      %p31 = por %p29, %p30
      %p32 = scmp.ne.s32.totalorder %s20, %s21
      %p33 = scmp.eq.s32.totalorder %s16, 15
      %p34 = por %p32, %p33
      %p36 = scmp.ne.s32.totalorder %s21, %s35
      %p37 = scmp.eq.s32.totalorder %s16, 0
      %p38 = por %p36, %p37
      %s39 = ssub.s32 %s10, %s17
      %p40 = scmp.eq.s32.totalorder %s39, 0
      %s42 = sadd.s32 %s41, 1
      %s43 = scalar_select %p40, %s41, %s42
      %p46 = pneg %p40
      %p47 = scmp.eq.s32.totalorder %s10, 15
      %p48 = por %p46, %p47
      %p49 = scmp.ne.s32.totalorder %s41, %s44
      %p50 = scmp.eq.s32.totalorder %s10, 0
      %p51 = por %p49, %p50
      %p52 = scmp.ne.s32.totalorder %s41, %s44
      %p53 = scmp.eq.s32.totalorder %s15, 15
      %p54 = por %p52, %p53
      %p55 = scmp.ne.s32.totalorder %s44, %s45
      %p56 = scmp.eq.s32.totalorder %s15, 0
      %p57 = por %p55, %p56
      %p58 = scmp.ne.s32.totalorder %s44, %s45
      %p59 = scmp.eq.s32.totalorder %s16, 15
      %p60 = por %p58, %p59
      %p62 = scmp.ne.s32.totalorder %s45, %s61
      %p63 = scmp.eq.s32.totalorder %s16, 0
      %p64 = por %p62, %p63
      %s66 = sadd.s32 %s65, 1
      %p69 = scmp.eq.s32.totalorder %s10, 15
      %p70 = scmp.ne.s32.totalorder %s65, %s67
      %p71 = scmp.eq.s32.totalorder %s10, 0
      %p72 = por %p70, %p71
      %p73 = scmp.ne.s32.totalorder %s65, %s67
      %p74 = scmp.eq.s32.totalorder %s15, 15
      %p75 = por %p73, %p74
      %p76 = scmp.ne.s32.totalorder %s67, %s68
      %p77 = scmp.eq.s32.totalorder %s15, 0
      %p78 = por %p76, %p77
      %p79 = scmp.ne.s32.totalorder %s67, %s68
      %p80 = scmp.eq.s32.totalorder %s16, 15
      %p81 = por %p79, %p80
      %p83 = scmp.ne.s32.totalorder %s68, %s82
      %p84 = scmp.eq.s32.totalorder %s16, 0
      %p85 = por %p83, %p84
      %s87 = sadd.s32 %s86, 1
      %p90 = scmp.eq.s32.totalorder %s10, 15
      %p91 = scmp.ne.s32.totalorder %s86, %s88
      %p92 = scmp.eq.s32.totalorder %s10, 0
      %p93 = por %p91, %p92
      %p94 = scmp.ne.s32.totalorder %s86, %s88
      %p95 = scmp.eq.s32.totalorder %s15, 15
      %p96 = por %p94, %p95
      %p97 = scmp.ne.s32.totalorder %s88, %s89
      %p98 = scmp.eq.s32.totalorder %s15, 0
      %p99 = por %p97, %p98
      %p100 = scmp.ne.s32.totalorder %s88, %s89
      %p101 = scmp.eq.s32.totalorder %s16, 15
      %p102 = por %p100, %p101
      %p104 = scmp.ne.s32.totalorder %s89, %s103
      %p105 = scmp.eq.s32.totalorder %s16, 0
      %p106 = por %p104, %p105
      %s107 = ssub.s32 %s10, %s17
      %p108 = scmp.eq.s32.totalorder %s107, 0
      %s110 = sadd.s32 %s109, 1
      %s111 = scalar_select %p108, %s109, %s110
      %p114 = pneg %p108
      %p115 = scmp.eq.s32.totalorder %s10, 15
      %p116 = por %p114, %p115
      %p117 = scmp.ne.s32.totalorder %s109, %s112
      %p118 = scmp.eq.s32.totalorder %s10, 0
      %p119 = por %p117, %p118
      %p120 = scmp.ne.s32.totalorder %s109, %s112
      %p121 = scmp.eq.s32.totalorder %s15, 15
      %p122 = por %p120, %p121
      %p123 = scmp.ne.s32.totalorder %s112, %s113
      %p124 = scmp.eq.s32.totalorder %s15, 0
      %p125 = por %p123, %p124
      %p126 = scmp.ne.s32.totalorder %s112, %s113
      %p127 = scmp.eq.s32.totalorder %s16, 15
      %p128 = por %p126, %p127
      %p130 = scmp.ne.s32.totalorder %s113, %s129
      %p131 = scmp.eq.s32.totalorder %s16, 0
      %p132 = por %p130, %p131
      %p133 = scmp.le.s32.totalorder 1, %s10
      %p134 = scmp.lt.s32.totalorder %s10, 17
      %p135 = pnand %p133, %p134
      %p136 = pneg %p135
      // Predicated region
      $region9: #{mini_model_forward.7} parent=5 // pred_check
        _
      $region10: #{mini_model_forward.7} parent=5 // pred_check_branch
        %138 = sbr.rel (%p135) target = $region12
      $region11: #{mini_model_forward.7} parent=5 // pred_region
        %s139 = ssub.s32 %s10, 1
        // Predicated region
        $region13: #{mini_model_forward.7} parent=11 // pred_check
          %p140 = pneg %p31
        $region14: #{mini_model_forward.7} parent=11 // pred_check_branch
          %142 = sbr.rel (%p140) target = $region16
        $region15: #{mini_model_forward.7} parent=11 // pred_region
          _
        $region16: #{mini_model_forward.7} parent=11 // pred_fallthru
          _
        // Predicated region
        $region17: #{mini_model_forward.7} parent=11 // pred_check
          %p143 = pneg %p78
        $region18: #{mini_model_forward.7} parent=11 // pred_check_branch
          %145 = sbr.rel (%p143) target = $region20
        $region19: #{mini_model_forward.7} parent=11 // pred_region
          _
        $region20: #{mini_model_forward.7} parent=11 // pred_fallthru
          _
        // Predicated region
        $region21: #{mini_model_forward.7} parent=11 // pred_check
          %p146 = pneg %p99
        $region22: #{mini_model_forward.7} parent=11 // pred_check_branch
          %148 = sbr.rel (%p146) target = $region24
        $region23: #{mini_model_forward.7} parent=11 // pred_region
          _
        $region24: #{mini_model_forward.7} parent=11 // pred_fallthru
          _
      $region12: #{mini_model_forward.7} parent=5 // pred_fallthru
        _
      %p149 = scmp.lt.s32.totalorder %s10, 16
      // Predicated region
      $region25: #{mini_model_forward.7} parent=5 // pred_check
        %p150 = pneg %p149
      $region26: #{mini_model_forward.7} parent=5 // pred_check_branch
        %152 = sbr.rel (%p150) target = $region28
      $region27: #{mini_model_forward.7} parent=5 // pred_region
        // Predicated region
        $region29: #{mini_model_forward.7} parent=27 // pred_check
          %p153 = pneg %p51
        $region30: #{mini_model_forward.7} parent=27 // pred_check_branch
          %155 = sbr.rel (%p153) target = $region32
        $region31: #{mini_model_forward.7} parent=27 // pred_region
          %s156 = sand.u32 %s41, 1
          %s157 = sand.u32 %s41, 1
          %s158 = smul.addr %s157, 112
          %s159 = scalar_lea.vmem [#allocation2], %s158
          %s160 = smul.u32 4, %s10
          %s161 = smul.addr %s160, 4
          %s162 = scalar_lea.vmem %s1, %s161
          // Predicated region
          $region33: #{mini_model_forward.7} parent=31 // pred_check
            _
          $region34: #{mini_model_forward.7} parent=31 // pred_check_branch
            %164 = sbr.rel (0) target = $region36
          $region35: #{mini_model_forward.7} parent=31 // pred_region
            // Predicated region
            $region37: #{mini_model_forward.7} parent=35 // pred_check
              _
            $region38: #{mini_model_forward.7} parent=35 // pred_check_branch
              %166 = sbr.rel (0) target = $region40
            $region39: #{mini_model_forward.7} parent=35 // pred_region
              loop: start=0, step=1, limit=1
              $region41: #{mini_model_forward.7} parent=39 // loop_pre_header
                _
              $region42: #{mini_model_forward.7} parent=39 // loop_header
                %s168 = sphi 0, %s172
                %p169 = scmp.ge.s32.totalorder %s168, 1
                %s173 = sphi %s162, %s162
                %s174 = sphi %s159, %s159
              $region43: #{mini_model_forward.7} parent=39 // loop_header_branch
                %171 = sbr.rel (%p169) target = $region47
              $region44: #{mini_model_forward.7} parent=39 // loop_body
                %v175 = vld [vmem:[%s173] sm:$0xff]
                %176 = vst [vmem:[%s174] sm:$0xff] %v175
                %v177 = vld [vmem:[%s173 + $0x8] sm:$0xff]
                %178 = vst [vmem:[%s174 + $0x8] sm:$0xff] %v177
                %v179 = vld [vmem:[%s173 + $0x100] sm:$0xff]
                %180 = vst [vmem:[%s174 + $0x10] sm:$0xff] %v179
                %v181 = vld [vmem:[%s173 + $0x108] sm:$0xff]
                %182 = vst [vmem:[%s174 + $0x18] sm:$0xff] %v181
                %v183 = vld [vmem:[%s173 + $0x200] sm:$0xff]
                %184 = vst [vmem:[%s174 + $0x20] sm:$0xff] %v183
                %v185 = vld [vmem:[%s173 + $0x208] sm:$0xff]
                %186 = vst [vmem:[%s174 + $0x28] sm:$0xff] %v185
                %v187 = vld [vmem:[%s173 + $0x300] sm:$0xff]
                %188 = vst [vmem:[%s174 + $0x30] sm:$0xff] %v187
                %v189 = vld [vmem:[%s173 + $0x308] sm:$0xff]
                %190 = vst [vmem:[%s174 + $0x38] sm:$0xff] %v189
                %v191 = vld [vmem:[%s173 + $0x400] sm:$0xff]
                %192 = vst [vmem:[%s174 + $0x40] sm:$0xff] %v191
                %v193 = vld [vmem:[%s173 + $0x408] sm:$0xff]
                %194 = vst [vmem:[%s174 + $0x48] sm:$0xff] %v193
                %v195 = vld [vmem:[%s173 + $0x500] sm:$0xff]
                %196 = vst [vmem:[%s174 + $0x50] sm:$0xff] %v195
                %v197 = vld [vmem:[%s173 + $0x508] sm:$0xff]
                %198 = vst [vmem:[%s174 + $0x58] sm:$0xff] %v197
                %v199 = vld [vmem:[%s173 + $0x600] sm:$0xff]
                %200 = vst [vmem:[%s174 + $0x60] sm:$0xff] %v199
                %v201 = vld [vmem:[%s173 + $0x608] sm:$0xff]
                %202 = vst [vmem:[%s174 + $0x68] sm:$0xff] %v201
              $region45: #{mini_model_forward.7} parent=39 // loop_footer
                %s172 = sadd.s32 1, %s168
              $region46: #{mini_model_forward.7} parent=39 // loop_footer_branch
                %167 = sbr.rel target = $region42
              $region47: #{mini_model_forward.7} parent=39 // loop_exit
                _
            $region40: #{mini_model_forward.7} parent=35 // pred_fallthru
              _
            // Predicated region
            $region48: #{mini_model_forward.7} parent=35 // pred_check
              _
            $region49: #{mini_model_forward.7} parent=35 // pred_check_branch
              %204 = sbr.rel target = $region51
            $region50: #{mini_model_forward.7} parent=35 // pred_region
              _
            $region51: #{mini_model_forward.7} parent=35 // pred_fallthru
              _
          $region36: #{mini_model_forward.7} parent=31 // pred_fallthru
            _
          %205 = vnop
        $region32: #{mini_model_forward.7} parent=27 // pred_fallthru
          _
      $region28: #{mini_model_forward.7} parent=5 // pred_fallthru
        _
      %p206 = scmp.le.s32.totalorder 1, %s10
      %p207 = scmp.lt.s32.totalorder %s10, 17
      %p208 = pnand %p206, %p207
      %p209 = pneg %p208
      // Predicated region
      $region52: #{mini_model_forward.7} parent=5 // pred_check
        _
      $region53: #{mini_model_forward.7} parent=5 // pred_check_branch
        %211 = sbr.rel (%p208) target = $region55
      $region54: #{mini_model_forward.7} parent=5 // pred_region
        %s212 = ssub.s32 %s10, 1
        %s213 = sand.u32 %s44, 1
        %s214 = sand.u32 %s44, 1
        %s215 = smul.addr %s214, 112
        %s216 = scalar_lea.vmem [#allocation2], %s215
        // Predicated region
        $region56: #{mini_model_forward.7} parent=54 // pred_check
          %p217 = pneg %p57
        $region57: #{mini_model_forward.7} parent=54 // pred_check_branch
          %219 = sbr.rel (%p217) target = $region59
        $region58: #{mini_model_forward.7} parent=54 // pred_region
          _
        $region59: #{mini_model_forward.7} parent=54 // pred_fallthru
          _
        %p220 = pneg %p31
        %p221 = pneg %p28
        %s222 = sand.u32 %s44, 1
        %s223 = sand.u32 %s44, 1
        %s224 = smul.addr %s223, 112
        %s225 = scalar_lea.vmem [#allocation2], %s224
        %p226 = pneg %p57
        %p227 = pneg %p54
        %p228 = pneg %p78
        %p229 = pneg %p75
        %p230 = pneg %p99
        %p231 = pneg %p96
        %p232 = pneg %p125
        %p233 = pneg %p122
        %p234 = scmp.lt.s32.totalorder %s15, 15
        %s235 = scalar_select %p234, %s15, 15
        %s236 = smul.addr %s235, 4
        %s237 = scalar_lea.vmem %s4, %s236
        %s238 = smul.u32 4, %s15
        %p239 = scmp.lt.s32.totalorder %s15, 15
        %s240 = scalar_select %p239, %s15, 15
        %s241 = smul.addr %s240, 4
        %s242 = scalar_lea.vmem %s4, %s241
        %v244 = vld [vmem:[%s0] sm:$0xf]
        %v245 = vld [vmem:[%s216] sm:$0xff]
        %v246 = vld [vmem:[%s216 + $0x8] sm:$0xff]
        %v247 = vld [vmem:[%s216 + $0x10] sm:$0xff]
        %v248 = vld [vmem:[%s216 + $0x18] sm:$0xff]
        %v249 = vld [vmem:[%s216 + $0x20] sm:$0xff]
        %v250 = vld [vmem:[%s216 + $0x28] sm:$0xff]
        %v251 = vld [vmem:[%s216 + $0x30] sm:$0xff]
        %v252 = vld [vmem:[%s216 + $0x38] sm:$0xff]
        %v253 = vld [vmem:[%s216 + $0x40] sm:$0xff]
        %v254 = vld [vmem:[%s216 + $0x48] sm:$0xff]
        %v255 = vld [vmem:[%s216 + $0x50] sm:$0xff]
        %v256 = vld [vmem:[%s216 + $0x58] sm:$0xff]
        %v257 = vld [vmem:[%s216 + $0x60] sm:$0x11]
        %v258 = vld [vmem:[%s216 + $0x68] sm:$0x11]
        %v259 = vld [vmem:[%s2] sm:$0xff]
        %261 = vset.pattern.permute.xlu0 0
        %262 = vperm.xlu0 %261, %v259
        %v263 = vpop.permute.xlu0 %262
        %v279 = vunpack.c.l.b16 %v245
        %v280 = vunpack.c.h.b16 %v245
        %v281 = vunpack.c.l.b16 %v246
        %v282 = vunpack.c.h.b16 %v246
        %v283 = vunpack.c.l.b16 %v247
        %v284 = vunpack.c.h.b16 %v247
        %v285 = vunpack.c.l.b16 %v248
        %v286 = vunpack.c.h.b16 %v248
        %v287 = vunpack.c.l.b16 %v249
        %v288 = vunpack.c.h.b16 %v249
        %v289 = vunpack.c.l.b16 %v250
        %v290 = vunpack.c.h.b16 %v250
        %v291 = vunpack.c.l.b16 %v251
        %v292 = vunpack.c.h.b16 %v251
        %v293 = vunpack.c.l.b16 %v252
        %v294 = vunpack.c.h.b16 %v252
        %v295 = vunpack.c.l.b16 %v253
        %v296 = vunpack.c.h.b16 %v253
        %v297 = vunpack.c.l.b16 %v254
        %v298 = vunpack.c.h.b16 %v254
        %v299 = vunpack.c.l.b16 %v255
        %v300 = vunpack.c.h.b16 %v255
        %v301 = vunpack.c.l.b16 %v256
        %v302 = vunpack.c.h.b16 %v256
        %v303 = vunpack.c.l.b16 %v257
        %v304 = vunpack.c.h.b16 %v257
        %v305 = vunpack.c.l.b16 %v258
        %v306 = vunpack.c.h.b16 %v258
        %v307 = vpack.c.b16 %v283, %v279
        %v308 = vpack.c.b16 %v284, %v280
        %v309 = vpack.c.b16 %v285, %v281
        %v310 = vpack.c.b16 %v286, %v282
        %v311 = vpack.c.b16 %v291, %v287
        %v312 = vpack.c.b16 %v292, %v288
        %v313 = vpack.c.b16 %v293, %v289
        %v314 = vpack.c.b16 %v294, %v290
        %v315 = vpack.c.b16 %v299, %v295
        %v316 = vpack.c.b16 %v300, %v296
        %v317 = vpack.c.b16 %v301, %v297
        %v318 = vpack.c.b16 %v302, %v298
        %v319 = vpack.c.b16 %v303, %v303
        %v320 = vpack.c.b16 %v304, %v304
        %v321 = vpack.c.b16 %v305, %v305
        %v322 = vpack.c.b16 %v306, %v306
        %vm335 = vcmask 400384
        %v337 = vsel %vm335, %v244, 0
        %vm339 = vcmask 1040384
        %v340 = vsel 0, 4294967295, 65535
        %v341 = vsel %vm339, %v340, 0
        %v343 = vand.u32 %v319, %v341
        %v346 = vand.u32 %v320, %v341
        %v349 = vand.u32 %v321, %v341
        %v352 = vand.u32 %v322, %v341
        %354 = vmatprep.subr.bf16.mxu0 0
        %355 = vmatpush1.bf16.msra.mxu0 0
        %356 = vmatprep.subr.bf16.mxu0 0
        %357 = vmatpush1.bf16.msra.mxu0 0
        %358 = vmatprep.subr.bf16.mxu0 0
        %359 = vmatpush1.bf16.msra.mxu0 0
        %360 = vmatprep.subr.bf16.mxu0 0
        %361 = vmatpush1.bf16.msra.mxu0 0
        %362 = vmatprep.subr.bf16.mxu0 %v346
        %363 = vmatpush1.bf16.msra.mxu0 %v343
        %364 = vmatprep.subr.bf16.mxu0 %v316
        %365 = vmatpush1.bf16.msra.mxu0 %v315
        %366 = vmatprep.subr.bf16.mxu0 %v312
        %367 = vmatpush1.bf16.msra.mxu0 %v311
        %368 = vmatprep.subr.bf16.mxu0 %v308
        %369 = vmatpush1.bf16.msra.mxu0 %v307
        %370 = vmatprep.subr.bf16.mxu0 0
        %371 = vmatpush2.bf16.msra.mxu0 0
        %372 = vmatprep.subr.bf16.mxu0 0
        %373 = vmatpush2.bf16.msra.mxu0 0
        %374 = vmatprep.subr.bf16.mxu0 0
        %375 = vmatpush2.bf16.msra.mxu0 0
        %376 = vmatprep.subr.bf16.mxu0 0
        %377 = vmatpush2.bf16.msra.mxu0 0
        %378 = vmatprep.subr.bf16.mxu0 0
        %379 = vmatpush2.bf16.msra.mxu0 0
        %380 = vmatprep.subr.bf16.mxu0 0
        %381 = vmatpush2.bf16.msra.mxu0 0
        %382 = vmatprep.subr.bf16.mxu0 0
        %383 = vmatpush2.bf16.msra.mxu0 0
        %384 = vmatprep.subr.bf16.mxu0 0
        %385 = vmatpush2.bf16.msra.mxu0 0
        %386 = vmatprep.mubr.bf16.mxu0 0
        %387 = vmatmul.mubr.bf16.gmra.mxu0 %v337
        %v388 = vpop.f32.mrf.mxu0
        %v389 = vadd.f32 %v263, %v388
        %v390 = vpop.f32.mrf.mxu0
        %v391 = vadd.f32 %v263, %v390
        %v392 = vpop.f32.mrf.mxu0
        %v393 = vpop.f32.mrf.mxu0
        %394 = vdwg.mxu0
        %395 = vmatprep.subr.bf16.mxu0 0
        %396 = vmatpush1.bf16.msra.mxu0 0
        %397 = vmatprep.subr.bf16.mxu0 0
        %398 = vmatpush1.bf16.msra.mxu0 0
        %399 = vmatprep.subr.bf16.mxu0 0
        %400 = vmatpush1.bf16.msra.mxu0 0
        %401 = vmatprep.subr.bf16.mxu0 0
        %402 = vmatpush1.bf16.msra.mxu0 0
        %403 = vmatprep.subr.bf16.mxu0 %v352
        %404 = vmatpush1.bf16.msra.mxu0 %v349
        %405 = vmatprep.subr.bf16.mxu0 %v318
        %406 = vmatpush1.bf16.msra.mxu0 %v317
        %407 = vmatprep.subr.bf16.mxu0 %v314
        %408 = vmatpush1.bf16.msra.mxu0 %v313
        %409 = vmatprep.subr.bf16.mxu0 %v310
        %410 = vmatpush1.bf16.msra.mxu0 %v309
        %411 = vmatprep.subr.bf16.mxu0 0
        %412 = vmatpush2.bf16.msra.mxu0 0
        %413 = vmatprep.subr.bf16.mxu0 0
        %414 = vmatpush2.bf16.msra.mxu0 0
        %415 = vmatprep.subr.bf16.mxu0 0
        %416 = vmatpush2.bf16.msra.mxu0 0
        %417 = vmatprep.subr.bf16.mxu0 0
        %418 = vmatpush2.bf16.msra.mxu0 0
        %419 = vmatprep.subr.bf16.mxu0 0
        %420 = vmatpush2.bf16.msra.mxu0 0
        %421 = vmatprep.subr.bf16.mxu0 0
        %422 = vmatpush2.bf16.msra.mxu0 0
        %423 = vmatprep.subr.bf16.mxu0 0
        %424 = vmatpush2.bf16.msra.mxu0 0
        %425 = vmatprep.subr.bf16.mxu0 0
        %426 = vmatpush2.bf16.msra.mxu0 0
        %427 = vmatprep.mubr.bf16.mxu0 0
        %428 = vmatmul.mubr.bf16.gmra.mxu0 %v337
        %v429 = vpop.f32.mrf.mxu0
        %v430 = vadd.f32 %v263, %v429
        %v431 = vpop.f32.mrf.mxu0
        %v432 = vadd.f32 %v263, %v431
        %v433 = vpop.f32.mrf.mxu0
        %v434 = vpop.f32.mrf.mxu0
        %435 = vdwg.mxu0
        %vm436 = vcmp.ge.f32.partialorder %v389, 0.0
        %vm437 = vcmp.ge.f32.partialorder %v391, 0.0
        %vm438 = vcmp.ge.f32.partialorder %v430, 0.0
        %vm439 = vcmp.ge.f32.partialorder %v432, 0.0
        %v440 = vmul.f32 %v389, 0.1
        %v441 = vmul.f32 %v391, 0.1
        %v442 = vmul.f32 %v430, 0.1
        %v443 = vmul.f32 %v432, 0.1
        %v444 = vsel %vm436, %v389, %v440
        %v445 = vsel %vm437, %v391, %v441
        %v446 = vsel %vm438, %v430, %v442
        %v447 = vsel %vm439, %v432, %v443
        %v448 = vpack.c.bf16 %v444, %v444
        %v449 = vpack.c.bf16 %v445, %v445
        %v450 = vpack.c.bf16 %v446, %v446
        %v451 = vpack.c.bf16 %v447, %v447
        %v452 = vld [vmem:[%s3] sm:$0xf]
        %v453 = vld [vmem:[%s3 + $0x4] sm:$0xf]
        %v454 = vld [vmem:[%s3 + $0x8] sm:$0xf]
        %v455 = vld [vmem:[%s3 + $0xc] sm:$0xf]
        %v456 = vld [vmem:[%s3 + $0x10] sm:$0xf]
        %v457 = vld [vmem:[%s3 + $0x14] sm:$0xf]
        %v458 = vld [vmem:[%s3 + $0x18] sm:$0xf]
        %v459 = vld [vmem:[%s3 + $0x1c] sm:$0xf]
        %v460 = vld [vmem:[%s3 + $0x20] sm:$0xf]
        %v461 = vld [vmem:[%s3 + $0x24] sm:$0xf]
        %v462 = vld [vmem:[%s3 + $0x28] sm:$0xf]
        %v463 = vld [vmem:[%s3 + $0x2c] sm:$0xf]
        %v464 = vld [vmem:[%s3 + $0x30] sm:$0xf]
        %v465 = vld [vmem:[%s3 + $0x34] sm:$0xf]
        %v466 = vld [vmem:[%s3 + $0x38] sm:$0xf]
        %v467 = vld [vmem:[%s3 + $0x3c] sm:$0xf]
        %v468 = vld [vmem:[%s3 + $0x40] sm:$0xf]
        %v469 = vld [vmem:[%s3 + $0x44] sm:$0xf]
        %v470 = vld [vmem:[%s3 + $0x48] sm:$0xf]
        %v471 = vld [vmem:[%s3 + $0x4c] sm:$0xf]
        %v472 = vld [vmem:[%s3 + $0x50] sm:$0xf]
        %v473 = vld [vmem:[%s3 + $0x54] sm:$0xf]
        %v474 = vld [vmem:[%s3 + $0x58] sm:$0xf]
        %v475 = vld [vmem:[%s3 + $0x5c] sm:$0xf]
        %v476 = vld [vmem:[%s3 + $0x60] sm:$0xf]
        %v477 = vld [vmem:[%s3 + $0x64] sm:$0xf]
        %v478 = vld [vmem:[%s3 + $0x68] sm:$0xf]
        %v479 = vld [vmem:[%s3 + $0x6c] sm:$0xf]
        %v480 = vld [vmem:[%s3 + $0x70] sm:$0xf]
        %v481 = vld [vmem:[%s3 + $0x74] sm:$0xf]
        %v482 = vld [vmem:[%s3 + $0x78] sm:$0xf]
        %v483 = vld [vmem:[%s3 + $0x7c] sm:$0xf]
        %v484 = vld [vmem:[%s3 + $0x80] sm:$0xf]
        %v485 = vld [vmem:[%s3 + $0x84] sm:$0xf]
        %v486 = vld [vmem:[%s3 + $0x88] sm:$0xf]
        %v487 = vld [vmem:[%s3 + $0x8c] sm:$0xf]
        %v488 = vld [vmem:[%s3 + $0x90] sm:$0xf]
        %v489 = vld [vmem:[%s3 + $0x94] sm:$0xf]
        %v490 = vld [vmem:[%s3 + $0x98] sm:$0xf]
        %v491 = vld [vmem:[%s3 + $0x9c] sm:$0xf]
        %v492 = vld [vmem:[%s3 + $0xa0] sm:$0xf]
        %v493 = vld [vmem:[%s3 + $0xa4] sm:$0xf]
        %v494 = vld [vmem:[%s3 + $0xa8] sm:$0xf]
        %v495 = vld [vmem:[%s3 + $0xac] sm:$0xf]
        %v496 = vld [vmem:[%s3 + $0xb0] sm:$0xf]
        %v497 = vld [vmem:[%s3 + $0xb4] sm:$0xf]
        %v498 = vld [vmem:[%s3 + $0xb8] sm:$0xf]
        %v499 = vld [vmem:[%s3 + $0xbc] sm:$0xf]
        %v500 = vld [vmem:[%s3 + $0xc0] sm:$0xf]
        %v501 = vld [vmem:[%s3 + $0xc4] sm:$0xf]
        %v502 = vld [vmem:[%s3 + $0xc8] sm:$0xf]
        %v503 = vld [vmem:[%s3 + $0xcc] sm:$0xf]
        %v504 = vld [vmem:[%s3 + $0xd0] sm:$0xf]
        %v505 = vld [vmem:[%s3 + $0xd4] sm:$0xf]
        %v506 = vld [vmem:[%s3 + $0xd8] sm:$0xf]
        %v507 = vld [vmem:[%s3 + $0xdc] sm:$0xf]
        %v508 = vld [vmem:[%s3 + $0xe0] sm:$0xf]
        %v509 = vld [vmem:[%s3 + $0xe4] sm:$0xf]
        %v510 = vld [vmem:[%s3 + $0xe8] sm:$0xf]
        %v511 = vld [vmem:[%s3 + $0xec] sm:$0xf]
        %v512 = vld [vmem:[%s3 + $0xf0] sm:$0xf]
        %v513 = vld [vmem:[%s3 + $0xf4] sm:$0xf]
        %v514 = vld [vmem:[%s3 + $0xf8] sm:$0xf]
        %v515 = vld [vmem:[%s3 + $0xfc] sm:$0xf]
        %v580 = vunpack.c.l.b16 %v452
        %v581 = vunpack.c.l.b16 %v453
        %v582 = vunpack.c.l.b16 %v454
        %v583 = vunpack.c.l.b16 %v455
        %v584 = vunpack.c.l.b16 %v456
        %v585 = vunpack.c.l.b16 %v457
        %v586 = vunpack.c.l.b16 %v458
        %v587 = vunpack.c.l.b16 %v459
        %v588 = vunpack.c.l.b16 %v460
        %v589 = vunpack.c.l.b16 %v461
        %v590 = vunpack.c.l.b16 %v462
        %v591 = vunpack.c.l.b16 %v463
        %v592 = vunpack.c.l.b16 %v464
        %v593 = vunpack.c.l.b16 %v465
        %v594 = vunpack.c.l.b16 %v466
        %v595 = vunpack.c.l.b16 %v467
        %v596 = vunpack.c.l.b16 %v468
        %v597 = vunpack.c.l.b16 %v469
        %v598 = vunpack.c.l.b16 %v470
        %v599 = vunpack.c.l.b16 %v471
        %v600 = vunpack.c.l.b16 %v472
        %v601 = vunpack.c.l.b16 %v473
        %v602 = vunpack.c.l.b16 %v474
        %v603 = vunpack.c.l.b16 %v475
        %v604 = vunpack.c.l.b16 %v476
        %v605 = vunpack.c.l.b16 %v477
        %v606 = vunpack.c.l.b16 %v478
        %v607 = vunpack.c.l.b16 %v479
        %v608 = vunpack.c.l.b16 %v480
        %v609 = vunpack.c.l.b16 %v481
        %v610 = vunpack.c.l.b16 %v482
        %v611 = vunpack.c.l.b16 %v483
        %v612 = vunpack.c.l.b16 %v484
        %v613 = vunpack.c.l.b16 %v485
        %v614 = vunpack.c.l.b16 %v486
        %v615 = vunpack.c.l.b16 %v487
        %v616 = vunpack.c.l.b16 %v488
        %v617 = vunpack.c.l.b16 %v489
        %v618 = vunpack.c.l.b16 %v490
        %v619 = vunpack.c.l.b16 %v491
        %v620 = vunpack.c.l.b16 %v492
        %v621 = vunpack.c.l.b16 %v493
        %v622 = vunpack.c.l.b16 %v494
        %v623 = vunpack.c.l.b16 %v495
        %v624 = vunpack.c.l.b16 %v496
        %v625 = vunpack.c.l.b16 %v497
        %v626 = vunpack.c.l.b16 %v498
        %v627 = vunpack.c.l.b16 %v499
        %v628 = vunpack.c.l.b16 %v500
        %v629 = vunpack.c.l.b16 %v501
        %v630 = vunpack.c.l.b16 %v502
        %v631 = vunpack.c.l.b16 %v503
        %v632 = vunpack.c.l.b16 %v504
        %v633 = vunpack.c.l.b16 %v505
        %v634 = vunpack.c.l.b16 %v506
        %v635 = vunpack.c.l.b16 %v507
        %v636 = vunpack.c.l.b16 %v508
        %v637 = vunpack.c.l.b16 %v509
        %v638 = vunpack.c.l.b16 %v510
        %v639 = vunpack.c.l.b16 %v511
        %v640 = vunpack.c.l.b16 %v512
        %v641 = vunpack.c.l.b16 %v513
        %v642 = vunpack.c.l.b16 %v514
        %v643 = vunpack.c.l.b16 %v515
        %v644 = vpack.c.b16 %v581, %v580
        %v645 = vpack.c.b16 %v583, %v582
        %v646 = vpack.c.b16 %v585, %v584
        %v647 = vpack.c.b16 %v587, %v586
        %v648 = vpack.c.b16 %v589, %v588
        %v649 = vpack.c.b16 %v591, %v590
        %v650 = vpack.c.b16 %v593, %v592
        %v651 = vpack.c.b16 %v595, %v594
        %v652 = vpack.c.b16 %v597, %v596
        %v653 = vpack.c.b16 %v599, %v598
        %v654 = vpack.c.b16 %v601, %v600
        %v655 = vpack.c.b16 %v603, %v602
        %v656 = vpack.c.b16 %v605, %v604
        %v657 = vpack.c.b16 %v607, %v606
        %v658 = vpack.c.b16 %v609, %v608
        %v659 = vpack.c.b16 %v611, %v610
        %v660 = vpack.c.b16 %v613, %v612
        %v661 = vpack.c.b16 %v615, %v614
        %v662 = vpack.c.b16 %v617, %v616
        %v663 = vpack.c.b16 %v619, %v618
        %v664 = vpack.c.b16 %v621, %v620
        %v665 = vpack.c.b16 %v623, %v622
        %v666 = vpack.c.b16 %v625, %v624
        %v667 = vpack.c.b16 %v627, %v626
        %v668 = vpack.c.b16 %v629, %v628
        %v669 = vpack.c.b16 %v631, %v630
        %v670 = vpack.c.b16 %v633, %v632
        %v671 = vpack.c.b16 %v635, %v634
        %v672 = vpack.c.b16 %v637, %v636
        %v673 = vpack.c.b16 %v639, %v638
        %v674 = vpack.c.b16 %v641, %v640
        %v675 = vpack.c.b16 %v643, %v642
        %708 = vmatprep.subr.bf16.mxu0 0
        %709 = vmatpush1.bf16.msra.mxu0 %v651
        %710 = vmatprep.subr.bf16.mxu0 0
        %711 = vmatpush1.bf16.msra.mxu0 %v650
        %712 = vmatprep.subr.bf16.mxu0 0
        %713 = vmatpush1.bf16.msra.mxu0 %v649
        %714 = vmatprep.subr.bf16.mxu0 0
        %715 = vmatpush1.bf16.msra.mxu0 %v648
        %716 = vmatprep.subr.bf16.mxu0 0
        %717 = vmatpush1.bf16.msra.mxu0 %v647
        %718 = vmatprep.subr.bf16.mxu0 0
        %719 = vmatpush1.bf16.msra.mxu0 %v646
        %720 = vmatprep.subr.bf16.mxu0 0
        %721 = vmatpush1.bf16.msra.mxu0 %v645
        %722 = vmatprep.subr.bf16.mxu0 0
        %723 = vmatpush1.bf16.msra.mxu0 %v644
        %724 = vmatprep.subr.bf16.mxu0 0
        %725 = vmatpush2.bf16.msra.mxu0 %v659
        %726 = vmatprep.subr.bf16.mxu0 0
        %727 = vmatpush2.bf16.msra.mxu0 %v658
        %728 = vmatprep.subr.bf16.mxu0 0
        %729 = vmatpush2.bf16.msra.mxu0 %v657
        %730 = vmatprep.subr.bf16.mxu0 0
        %731 = vmatpush2.bf16.msra.mxu0 %v656
        %732 = vmatprep.subr.bf16.mxu0 0
        %733 = vmatpush2.bf16.msra.mxu0 %v655
        %734 = vmatprep.subr.bf16.mxu0 0
        %735 = vmatpush2.bf16.msra.mxu0 %v654
        %736 = vmatprep.subr.bf16.mxu0 0
        %737 = vmatpush2.bf16.msra.mxu0 %v653
        %738 = vmatprep.subr.bf16.mxu0 0
        %739 = vmatpush2.bf16.msra.mxu0 %v652
        %740 = vmatprep.mubr.bf16.mxu0 %v449
        %741 = vmatmul.mubr.bf16.gmra.mxu0 %v448
        %v742 = vpop.f32.mrf.mxu0
        %v743 = vadd.f32 0.0, %v742
        %v744 = vpop.f32.mrf.mxu0
        %v745 = vpop.f32.mrf.mxu0
        %v746 = vpop.f32.mrf.mxu0
        %747 = vdwg.mxu0
        %748 = vmatprep.subr.bf16.mxu0 0
        %749 = vmatpush1.bf16.msra.mxu0 %v667
        %750 = vmatprep.subr.bf16.mxu0 0
        %751 = vmatpush1.bf16.msra.mxu0 %v666
        %752 = vmatprep.subr.bf16.mxu0 0
        %753 = vmatpush1.bf16.msra.mxu0 %v665
        %754 = vmatprep.subr.bf16.mxu0 0
        %755 = vmatpush1.bf16.msra.mxu0 %v664
        %756 = vmatprep.subr.bf16.mxu0 0
        %757 = vmatpush1.bf16.msra.mxu0 %v663
        %758 = vmatprep.subr.bf16.mxu0 0
        %759 = vmatpush1.bf16.msra.mxu0 %v662
        %760 = vmatprep.subr.bf16.mxu0 0
        %761 = vmatpush1.bf16.msra.mxu0 %v661
        %762 = vmatprep.subr.bf16.mxu0 0
        %763 = vmatpush1.bf16.msra.mxu0 %v660
        %764 = vmatprep.subr.bf16.mxu0 0
        %765 = vmatpush2.bf16.msra.mxu0 %v675
        %766 = vmatprep.subr.bf16.mxu0 0
        %767 = vmatpush2.bf16.msra.mxu0 %v674
        %768 = vmatprep.subr.bf16.mxu0 0
        %769 = vmatpush2.bf16.msra.mxu0 %v673
        %770 = vmatprep.subr.bf16.mxu0 0
        %771 = vmatpush2.bf16.msra.mxu0 %v672
        %772 = vmatprep.subr.bf16.mxu0 0
        %773 = vmatpush2.bf16.msra.mxu0 %v671
        %774 = vmatprep.subr.bf16.mxu0 0
        %775 = vmatpush2.bf16.msra.mxu0 %v670
        %776 = vmatprep.subr.bf16.mxu0 0
        %777 = vmatpush2.bf16.msra.mxu0 %v669
        %778 = vmatprep.subr.bf16.mxu0 0
        %779 = vmatpush2.bf16.msra.mxu0 %v668
        %780 = vmatprep.mubr.bf16.mxu0 %v451
        %781 = vmatmul.mubr.bf16.gmra.mxu0 %v450
        %v782 = vpop.f32.mrf.mxu0
        %v783 = vadd.f32 %v743, %v782
        %v784 = vpop.f32.mrf.mxu0
        %v785 = vpop.f32.mrf.mxu0
        %v786 = vpop.f32.mrf.mxu0
        %787 = vdwg.mxu0
        %s788 = scalar_lea.vmem %s3, 256
        %v789 = vld [vmem:[%s788] sm:$0xf]
        %v790 = vld [vmem:[%s788 + $0x4] sm:$0xf]
        %v791 = vld [vmem:[%s788 + $0x8] sm:$0xf]
        %v792 = vld [vmem:[%s788 + $0xc] sm:$0xf]
        %v793 = vld [vmem:[%s788 + $0x10] sm:$0xf]
        %v794 = vld [vmem:[%s788 + $0x14] sm:$0xf]
        %v795 = vld [vmem:[%s788 + $0x18] sm:$0xf]
        %v796 = vld [vmem:[%s788 + $0x1c] sm:$0xf]
        %v797 = vld [vmem:[%s788 + $0x20] sm:$0xf]
        %v798 = vld [vmem:[%s788 + $0x24] sm:$0xf]
        %v799 = vld [vmem:[%s788 + $0x28] sm:$0xf]
        %v800 = vld [vmem:[%s788 + $0x2c] sm:$0xf]
        %v801 = vld [vmem:[%s788 + $0x30] sm:$0xf]
        %v802 = vld [vmem:[%s788 + $0x34] sm:$0xf]
        %v803 = vld [vmem:[%s788 + $0x38] sm:$0xf]
        %v804 = vld [vmem:[%s788 + $0x3c] sm:$0xf]
        %v805 = vld [vmem:[%s788 + $0x40] sm:$0xf]
        %v806 = vld [vmem:[%s788 + $0x44] sm:$0xf]
        %v807 = vld [vmem:[%s788 + $0x48] sm:$0xf]
        %v808 = vld [vmem:[%s788 + $0x4c] sm:$0xf]
        %v809 = vld [vmem:[%s788 + $0x50] sm:$0xf]
        %v810 = vld [vmem:[%s788 + $0x54] sm:$0xf]
        %v811 = vld [vmem:[%s788 + $0x58] sm:$0xf]
        %v812 = vld [vmem:[%s788 + $0x5c] sm:$0xf]
        %v813 = vld [vmem:[%s788 + $0x60] sm:$0xf]
        %v814 = vld [vmem:[%s788 + $0x64] sm:$0xf]
        %v815 = vld [vmem:[%s788 + $0x68] sm:$0xf]
        %v816 = vld [vmem:[%s788 + $0x6c] sm:$0xf]
        %v817 = vld [vmem:[%s788 + $0x70] sm:$0xf]
        %v818 = vld [vmem:[%s788 + $0x74] sm:$0xf]
        %v819 = vld [vmem:[%s788 + $0x78] sm:$0xf]
        %v820 = vld [vmem:[%s788 + $0x7c] sm:$0xf]
        %v821 = vld [vmem:[%s788 + $0x80] sm:$0xf]
        %v822 = vld [vmem:[%s788 + $0x84] sm:$0xf]
        %v823 = vld [vmem:[%s788 + $0x88] sm:$0xf]
        %v824 = vld [vmem:[%s788 + $0x8c] sm:$0xf]
        %v825 = vld [vmem:[%s788 + $0x90] sm:$0xf]
        %v826 = vld [vmem:[%s788 + $0x94] sm:$0xf]
        %v827 = vld [vmem:[%s788 + $0x98] sm:$0xf]
        %v828 = vld [vmem:[%s788 + $0x9c] sm:$0xf]
        %v829 = vld [vmem:[%s788 + $0xa0] sm:$0xf]
        %v830 = vld [vmem:[%s788 + $0xa4] sm:$0xf]
        %v831 = vld [vmem:[%s788 + $0xa8] sm:$0xf]
        %v832 = vld [vmem:[%s788 + $0xac] sm:$0xf]
        %v833 = vld [vmem:[%s788 + $0xb0] sm:$0xf]
        %v834 = vld [vmem:[%s788 + $0xb4] sm:$0xf]
        %v835 = vld [vmem:[%s788 + $0xb8] sm:$0xf]
        %v836 = vld [vmem:[%s788 + $0xbc] sm:$0xf]
        %v837 = vld [vmem:[%s788 + $0xc0] sm:$0xf]
        %v838 = vld [vmem:[%s788 + $0xc4] sm:$0xf]
        %v839 = vld [vmem:[%s788 + $0xc8] sm:$0xf]
        %v840 = vld [vmem:[%s788 + $0xcc] sm:$0xf]
        %v841 = vld [vmem:[%s788 + $0xd0] sm:$0xf]
        %v842 = vld [vmem:[%s788 + $0xd4] sm:$0xf]
        %v843 = vld [vmem:[%s788 + $0xd8] sm:$0xf]
        %v844 = vld [vmem:[%s788 + $0xdc] sm:$0xf]
        %v845 = vld [vmem:[%s788 + $0xe0] sm:$0xf]
        %v846 = vld [vmem:[%s788 + $0xe4] sm:$0xf]
        %v847 = vld [vmem:[%s788 + $0xe8] sm:$0xf]
        %v848 = vld [vmem:[%s788 + $0xec] sm:$0xf]
        %v849 = vld [vmem:[%s788 + $0xf0] sm:$0xf]
        %v850 = vld [vmem:[%s788 + $0xf4] sm:$0xf]
        %v851 = vld [vmem:[%s788 + $0xf8] sm:$0xf]
        %v852 = vld [vmem:[%s788 + $0xfc] sm:$0xf]
        %v917 = vunpack.c.l.b16 %v789
        %v918 = vunpack.c.l.b16 %v790
        %v919 = vunpack.c.l.b16 %v791
        %v920 = vunpack.c.l.b16 %v792
        %v921 = vunpack.c.l.b16 %v793
        %v922 = vunpack.c.l.b16 %v794
        %v923 = vunpack.c.l.b16 %v795
        %v924 = vunpack.c.l.b16 %v796
        %v925 = vunpack.c.l.b16 %v797
        %v926 = vunpack.c.l.b16 %v798
        %v927 = vunpack.c.l.b16 %v799
        %v928 = vunpack.c.l.b16 %v800
        %v929 = vunpack.c.l.b16 %v801
        %v930 = vunpack.c.l.b16 %v802
        %v931 = vunpack.c.l.b16 %v803
        %v932 = vunpack.c.l.b16 %v804
        %v933 = vunpack.c.l.b16 %v805
        %v934 = vunpack.c.l.b16 %v806
        %v935 = vunpack.c.l.b16 %v807
        %v936 = vunpack.c.l.b16 %v808
        %v937 = vunpack.c.l.b16 %v809
        %v938 = vunpack.c.l.b16 %v810
        %v939 = vunpack.c.l.b16 %v811
        %v940 = vunpack.c.l.b16 %v812
        %v941 = vunpack.c.l.b16 %v813
        %v942 = vunpack.c.l.b16 %v814
        %v943 = vunpack.c.l.b16 %v815
        %v944 = vunpack.c.l.b16 %v816
        %v945 = vunpack.c.l.b16 %v817
        %v946 = vunpack.c.l.b16 %v818
        %v947 = vunpack.c.l.b16 %v819
        %v948 = vunpack.c.l.b16 %v820
        %v949 = vunpack.c.l.b16 %v821
        %v950 = vunpack.c.l.b16 %v822
        %v951 = vunpack.c.l.b16 %v823
        %v952 = vunpack.c.l.b16 %v824
        %v953 = vunpack.c.l.b16 %v825
        %v954 = vunpack.c.l.b16 %v826
        %v955 = vunpack.c.l.b16 %v827
        %v956 = vunpack.c.l.b16 %v828
        %v957 = vunpack.c.l.b16 %v829
        %v958 = vunpack.c.l.b16 %v830
        %v959 = vunpack.c.l.b16 %v831
        %v960 = vunpack.c.l.b16 %v832
        %v961 = vunpack.c.l.b16 %v833
        %v962 = vunpack.c.l.b16 %v834
        %v963 = vunpack.c.l.b16 %v835
        %v964 = vunpack.c.l.b16 %v836
        %v965 = vunpack.c.l.b16 %v837
        %v966 = vunpack.c.l.b16 %v838
        %v967 = vunpack.c.l.b16 %v839
        %v968 = vunpack.c.l.b16 %v840
        %v969 = vunpack.c.l.b16 %v841
        %v970 = vunpack.c.l.b16 %v842
        %v971 = vunpack.c.l.b16 %v843
        %v972 = vunpack.c.l.b16 %v844
        %v973 = vunpack.c.l.b16 %v845
        %v974 = vunpack.c.l.b16 %v846
        %v975 = vunpack.c.l.b16 %v847
        %v976 = vunpack.c.l.b16 %v848
        %v977 = vunpack.c.l.b16 %v849
        %v978 = vunpack.c.l.b16 %v850
        %v979 = vunpack.c.l.b16 %v851
        %v980 = vunpack.c.l.b16 %v852
        %v981 = vpack.c.b16 %v918, %v917
        %v982 = vpack.c.b16 %v920, %v919
        %v983 = vpack.c.b16 %v922, %v921
        %v984 = vpack.c.b16 %v924, %v923
        %v985 = vpack.c.b16 %v926, %v925
        %v986 = vpack.c.b16 %v928, %v927
        %v987 = vpack.c.b16 %v930, %v929
        %v988 = vpack.c.b16 %v932, %v931
        %v989 = vpack.c.b16 %v934, %v933
        %v990 = vpack.c.b16 %v936, %v935
        %v991 = vpack.c.b16 %v938, %v937
        %v992 = vpack.c.b16 %v940, %v939
        %v993 = vpack.c.b16 %v942, %v941
        %v994 = vpack.c.b16 %v944, %v943
        %v995 = vpack.c.b16 %v946, %v945
        %v996 = vpack.c.b16 %v948, %v947
        %v997 = vpack.c.b16 %v950, %v949
        %v998 = vpack.c.b16 %v952, %v951
        %v999 = vpack.c.b16 %v954, %v953
        %v1000 = vpack.c.b16 %v956, %v955
        %v1001 = vpack.c.b16 %v958, %v957
        %v1002 = vpack.c.b16 %v960, %v959
        %v1003 = vpack.c.b16 %v962, %v961
        %v1004 = vpack.c.b16 %v964, %v963
        %v1005 = vpack.c.b16 %v966, %v965
        %v1006 = vpack.c.b16 %v968, %v967
        %v1007 = vpack.c.b16 %v970, %v969
        %v1008 = vpack.c.b16 %v972, %v971
        %v1009 = vpack.c.b16 %v974, %v973
        %v1010 = vpack.c.b16 %v976, %v975
        %v1011 = vpack.c.b16 %v978, %v977
        %v1012 = vpack.c.b16 %v980, %v979
        %1045 = vmatprep.subr.bf16.mxu0 0
        %1046 = vmatpush1.bf16.msra.mxu0 %v988
        %1047 = vmatprep.subr.bf16.mxu0 0
        %1048 = vmatpush1.bf16.msra.mxu0 %v987
        %1049 = vmatprep.subr.bf16.mxu0 0
        %1050 = vmatpush1.bf16.msra.mxu0 %v986
        %1051 = vmatprep.subr.bf16.mxu0 0
        %1052 = vmatpush1.bf16.msra.mxu0 %v985
        %1053 = vmatprep.subr.bf16.mxu0 0
        %1054 = vmatpush1.bf16.msra.mxu0 %v984
        %1055 = vmatprep.subr.bf16.mxu0 0
        %1056 = vmatpush1.bf16.msra.mxu0 %v983
        %1057 = vmatprep.subr.bf16.mxu0 0
        %1058 = vmatpush1.bf16.msra.mxu0 %v982
        %1059 = vmatprep.subr.bf16.mxu0 0
        %1060 = vmatpush1.bf16.msra.mxu0 %v981
        %1061 = vmatprep.subr.bf16.mxu0 0
        %1062 = vmatpush2.bf16.msra.mxu0 %v996
        %1063 = vmatprep.subr.bf16.mxu0 0
        %1064 = vmatpush2.bf16.msra.mxu0 %v995
        %1065 = vmatprep.subr.bf16.mxu0 0
        %1066 = vmatpush2.bf16.msra.mxu0 %v994
        %1067 = vmatprep.subr.bf16.mxu0 0
        %1068 = vmatpush2.bf16.msra.mxu0 %v993
        %1069 = vmatprep.subr.bf16.mxu0 0
        %1070 = vmatpush2.bf16.msra.mxu0 %v992
        %1071 = vmatprep.subr.bf16.mxu0 0
        %1072 = vmatpush2.bf16.msra.mxu0 %v991
        %1073 = vmatprep.subr.bf16.mxu0 0
        %1074 = vmatpush2.bf16.msra.mxu0 %v990
        %1075 = vmatprep.subr.bf16.mxu0 0
        %1076 = vmatpush2.bf16.msra.mxu0 %v989
        %1077 = vmatprep.mubr.bf16.mxu0 %v449
        %1078 = vmatmul.mubr.bf16.gmra.mxu0 %v448
        %v1079 = vpop.f32.mrf.mxu0
        %v1080 = vadd.f32 0.0, %v1079
        %v1081 = vpop.f32.mrf.mxu0
        %v1082 = vpop.f32.mrf.mxu0
        %v1083 = vpop.f32.mrf.mxu0
        %1084 = vdwg.mxu0
        %1085 = vmatprep.subr.bf16.mxu0 0
        %1086 = vmatpush1.bf16.msra.mxu0 %v1004
        %1087 = vmatprep.subr.bf16.mxu0 0
        %1088 = vmatpush1.bf16.msra.mxu0 %v1003
        %1089 = vmatprep.subr.bf16.mxu0 0
        %1090 = vmatpush1.bf16.msra.mxu0 %v1002
        %1091 = vmatprep.subr.bf16.mxu0 0
        %1092 = vmatpush1.bf16.msra.mxu0 %v1001
        %1093 = vmatprep.subr.bf16.mxu0 0
        %1094 = vmatpush1.bf16.msra.mxu0 %v1000
        %1095 = vmatprep.subr.bf16.mxu0 0
        %1096 = vmatpush1.bf16.msra.mxu0 %v999
        %1097 = vmatprep.subr.bf16.mxu0 0
        %1098 = vmatpush1.bf16.msra.mxu0 %v998
        %1099 = vmatprep.subr.bf16.mxu0 0
        %1100 = vmatpush1.bf16.msra.mxu0 %v997
        %1101 = vmatprep.subr.bf16.mxu0 0
        %1102 = vmatpush2.bf16.msra.mxu0 %v1012
        %1103 = vmatprep.subr.bf16.mxu0 0
        %1104 = vmatpush2.bf16.msra.mxu0 %v1011
        %1105 = vmatprep.subr.bf16.mxu0 0
        %1106 = vmatpush2.bf16.msra.mxu0 %v1010
        %1107 = vmatprep.subr.bf16.mxu0 0
        %1108 = vmatpush2.bf16.msra.mxu0 %v1009
        %1109 = vmatprep.subr.bf16.mxu0 0
        %1110 = vmatpush2.bf16.msra.mxu0 %v1008
        %1111 = vmatprep.subr.bf16.mxu0 0
        %1112 = vmatpush2.bf16.msra.mxu0 %v1007
        %1113 = vmatprep.subr.bf16.mxu0 0
        %1114 = vmatpush2.bf16.msra.mxu0 %v1006
        %1115 = vmatprep.subr.bf16.mxu0 0
        %1116 = vmatpush2.bf16.msra.mxu0 %v1005
        %1117 = vmatprep.mubr.bf16.mxu0 %v451
        %1118 = vmatmul.mubr.bf16.gmra.mxu0 %v450
        %v1119 = vpop.f32.mrf.mxu0
        %v1120 = vadd.f32 %v1080, %v1119
        %v1121 = vpop.f32.mrf.mxu0
        %v1122 = vpop.f32.mrf.mxu0
        %v1123 = vpop.f32.mrf.mxu0
        %1124 = vdwg.mxu0
        %s1125 = scalar_lea.vmem %s3, 512
        %v1126 = vld [vmem:[%s1125] sm:$0xf]
        %v1127 = vld [vmem:[%s1125 + $0x4] sm:$0xf]
        %v1128 = vld [vmem:[%s1125 + $0x8] sm:$0xf]
        %v1129 = vld [vmem:[%s1125 + $0xc] sm:$0xf]
        %v1130 = vld [vmem:[%s1125 + $0x10] sm:$0xf]
        %v1131 = vld [vmem:[%s1125 + $0x14] sm:$0xf]
        %v1132 = vld [vmem:[%s1125 + $0x18] sm:$0xf]
        %v1133 = vld [vmem:[%s1125 + $0x1c] sm:$0xf]
        %v1134 = vld [vmem:[%s1125 + $0x20] sm:$0xf]
        %v1135 = vld [vmem:[%s1125 + $0x24] sm:$0xf]
        %v1136 = vld [vmem:[%s1125 + $0x28] sm:$0xf]
        %v1137 = vld [vmem:[%s1125 + $0x2c] sm:$0xf]
        %v1138 = vld [vmem:[%s1125 + $0x30] sm:$0xf]
        %v1139 = vld [vmem:[%s1125 + $0x34] sm:$0xf]
        %v1140 = vld [vmem:[%s1125 + $0x38] sm:$0xf]
        %v1141 = vld [vmem:[%s1125 + $0x3c] sm:$0xf]
        %v1142 = vld [vmem:[%s1125 + $0x40] sm:$0xf]
        %v1143 = vld [vmem:[%s1125 + $0x44] sm:$0xf]
        %v1144 = vld [vmem:[%s1125 + $0x48] sm:$0xf]
        %v1145 = vld [vmem:[%s1125 + $0x4c] sm:$0xf]
        %v1146 = vld [vmem:[%s1125 + $0x50] sm:$0xf]
        %v1147 = vld [vmem:[%s1125 + $0x54] sm:$0xf]
        %v1148 = vld [vmem:[%s1125 + $0x58] sm:$0xf]
        %v1149 = vld [vmem:[%s1125 + $0x5c] sm:$0xf]
        %v1150 = vld [vmem:[%s1125 + $0x60] sm:$0xf]
        %v1151 = vld [vmem:[%s1125 + $0x64] sm:$0xf]
        %v1152 = vld [vmem:[%s1125 + $0x68] sm:$0xf]
        %v1153 = vld [vmem:[%s1125 + $0x6c] sm:$0xf]
        %v1154 = vld [vmem:[%s1125 + $0x70] sm:$0xf]
        %v1155 = vld [vmem:[%s1125 + $0x74] sm:$0xf]
        %v1156 = vld [vmem:[%s1125 + $0x78] sm:$0xf]
        %v1157 = vld [vmem:[%s1125 + $0x7c] sm:$0xf]
        %v1158 = vld [vmem:[%s1125 + $0x80] sm:$0xf]
        %v1159 = vld [vmem:[%s1125 + $0x84] sm:$0xf]
        %v1160 = vld [vmem:[%s1125 + $0x88] sm:$0xf]
        %v1161 = vld [vmem:[%s1125 + $0x8c] sm:$0xf]
        %v1162 = vld [vmem:[%s1125 + $0x90] sm:$0xf]
        %v1163 = vld [vmem:[%s1125 + $0x94] sm:$0xf]
        %v1164 = vld [vmem:[%s1125 + $0x98] sm:$0xf]
        %v1165 = vld [vmem:[%s1125 + $0x9c] sm:$0xf]
        %v1166 = vld [vmem:[%s1125 + $0xa0] sm:$0xf]
        %v1167 = vld [vmem:[%s1125 + $0xa4] sm:$0xf]
        %v1168 = vld [vmem:[%s1125 + $0xa8] sm:$0xf]
        %v1169 = vld [vmem:[%s1125 + $0xac] sm:$0xf]
        %v1170 = vld [vmem:[%s1125 + $0xb0] sm:$0xf]
        %v1171 = vld [vmem:[%s1125 + $0xb4] sm:$0xf]
        %v1172 = vld [vmem:[%s1125 + $0xb8] sm:$0xf]
        %v1173 = vld [vmem:[%s1125 + $0xbc] sm:$0xf]
        %v1174 = vld [vmem:[%s1125 + $0xc0] sm:$0xf]
        %v1175 = vld [vmem:[%s1125 + $0xc4] sm:$0xf]
        %v1176 = vld [vmem:[%s1125 + $0xc8] sm:$0xf]
        %v1177 = vld [vmem:[%s1125 + $0xcc] sm:$0xf]
        %v1178 = vld [vmem:[%s1125 + $0xd0] sm:$0xf]
        %v1179 = vld [vmem:[%s1125 + $0xd4] sm:$0xf]
        %v1180 = vld [vmem:[%s1125 + $0xd8] sm:$0xf]
        %v1181 = vld [vmem:[%s1125 + $0xdc] sm:$0xf]
        %v1182 = vld [vmem:[%s1125 + $0xe0] sm:$0xf]
        %v1183 = vld [vmem:[%s1125 + $0xe4] sm:$0xf]
        %v1184 = vld [vmem:[%s1125 + $0xe8] sm:$0xf]
        %v1185 = vld [vmem:[%s1125 + $0xec] sm:$0xf]
        %v1186 = vld [vmem:[%s1125 + $0xf0] sm:$0xf]
        %v1187 = vld [vmem:[%s1125 + $0xf4] sm:$0xf]
        %v1188 = vld [vmem:[%s1125 + $0xf8] sm:$0xf]
        %v1189 = vld [vmem:[%s1125 + $0xfc] sm:$0xf]
        %v1254 = vunpack.c.l.b16 %v1126
        %v1255 = vunpack.c.l.b16 %v1127
        %v1256 = vunpack.c.l.b16 %v1128
        %v1257 = vunpack.c.l.b16 %v1129
        %v1258 = vunpack.c.l.b16 %v1130
        %v1259 = vunpack.c.l.b16 %v1131
        %v1260 = vunpack.c.l.b16 %v1132
        %v1261 = vunpack.c.l.b16 %v1133
        %v1262 = vunpack.c.l.b16 %v1134
        %v1263 = vunpack.c.l.b16 %v1135
        %v1264 = vunpack.c.l.b16 %v1136
        %v1265 = vunpack.c.l.b16 %v1137
        %v1266 = vunpack.c.l.b16 %v1138
        %v1267 = vunpack.c.l.b16 %v1139
        %v1268 = vunpack.c.l.b16 %v1140
        %v1269 = vunpack.c.l.b16 %v1141
        %v1270 = vunpack.c.l.b16 %v1142
        %v1271 = vunpack.c.l.b16 %v1143
        %v1272 = vunpack.c.l.b16 %v1144
        %v1273 = vunpack.c.l.b16 %v1145
        %v1274 = vunpack.c.l.b16 %v1146
        %v1275 = vunpack.c.l.b16 %v1147
        %v1276 = vunpack.c.l.b16 %v1148
        %v1277 = vunpack.c.l.b16 %v1149
        %v1278 = vunpack.c.l.b16 %v1150
        %v1279 = vunpack.c.l.b16 %v1151
        %v1280 = vunpack.c.l.b16 %v1152
        %v1281 = vunpack.c.l.b16 %v1153
        %v1282 = vunpack.c.l.b16 %v1154
        %v1283 = vunpack.c.l.b16 %v1155
        %v1284 = vunpack.c.l.b16 %v1156
        %v1285 = vunpack.c.l.b16 %v1157
        %v1286 = vunpack.c.l.b16 %v1158
        %v1287 = vunpack.c.l.b16 %v1159
        %v1288 = vunpack.c.l.b16 %v1160
        %v1289 = vunpack.c.l.b16 %v1161
        %v1290 = vunpack.c.l.b16 %v1162
        %v1291 = vunpack.c.l.b16 %v1163
        %v1292 = vunpack.c.l.b16 %v1164
        %v1293 = vunpack.c.l.b16 %v1165
        %v1294 = vunpack.c.l.b16 %v1166
        %v1295 = vunpack.c.l.b16 %v1167
        %v1296 = vunpack.c.l.b16 %v1168
        %v1297 = vunpack.c.l.b16 %v1169
        %v1298 = vunpack.c.l.b16 %v1170
        %v1299 = vunpack.c.l.b16 %v1171
        %v1300 = vunpack.c.l.b16 %v1172
        %v1301 = vunpack.c.l.b16 %v1173
        %v1302 = vunpack.c.l.b16 %v1174
        %v1303 = vunpack.c.l.b16 %v1175
        %v1304 = vunpack.c.l.b16 %v1176
        %v1305 = vunpack.c.l.b16 %v1177
        %v1306 = vunpack.c.l.b16 %v1178
        %v1307 = vunpack.c.l.b16 %v1179
        %v1308 = vunpack.c.l.b16 %v1180
        %v1309 = vunpack.c.l.b16 %v1181
        %v1310 = vunpack.c.l.b16 %v1182
        %v1311 = vunpack.c.l.b16 %v1183
        %v1312 = vunpack.c.l.b16 %v1184
        %v1313 = vunpack.c.l.b16 %v1185
        %v1314 = vunpack.c.l.b16 %v1186
        %v1315 = vunpack.c.l.b16 %v1187
        %v1316 = vunpack.c.l.b16 %v1188
        %v1317 = vunpack.c.l.b16 %v1189
        %v1318 = vpack.c.b16 %v1255, %v1254
        %v1319 = vpack.c.b16 %v1257, %v1256
        %v1320 = vpack.c.b16 %v1259, %v1258
        %v1321 = vpack.c.b16 %v1261, %v1260
        %v1322 = vpack.c.b16 %v1263, %v1262
        %v1323 = vpack.c.b16 %v1265, %v1264
        %v1324 = vpack.c.b16 %v1267, %v1266
        %v1325 = vpack.c.b16 %v1269, %v1268
        %v1326 = vpack.c.b16 %v1271, %v1270
        %v1327 = vpack.c.b16 %v1273, %v1272
        %v1328 = vpack.c.b16 %v1275, %v1274
        %v1329 = vpack.c.b16 %v1277, %v1276
        %v1330 = vpack.c.b16 %v1279, %v1278
        %v1331 = vpack.c.b16 %v1281, %v1280
        %v1332 = vpack.c.b16 %v1283, %v1282
        %v1333 = vpack.c.b16 %v1285, %v1284
        %v1334 = vpack.c.b16 %v1287, %v1286
        %v1335 = vpack.c.b16 %v1289, %v1288
        %v1336 = vpack.c.b16 %v1291, %v1290
        %v1337 = vpack.c.b16 %v1293, %v1292
        %v1338 = vpack.c.b16 %v1295, %v1294
        %v1339 = vpack.c.b16 %v1297, %v1296
        %v1340 = vpack.c.b16 %v1299, %v1298
        %v1341 = vpack.c.b16 %v1301, %v1300
        %v1342 = vpack.c.b16 %v1303, %v1302
        %v1343 = vpack.c.b16 %v1305, %v1304
        %v1344 = vpack.c.b16 %v1307, %v1306
        %v1345 = vpack.c.b16 %v1309, %v1308
        %v1346 = vpack.c.b16 %v1311, %v1310
        %v1347 = vpack.c.b16 %v1313, %v1312
        %v1348 = vpack.c.b16 %v1315, %v1314
        %v1349 = vpack.c.b16 %v1317, %v1316
        %1382 = vmatprep.subr.bf16.mxu0 0
        %1383 = vmatpush1.bf16.msra.mxu0 %v1325
        %1384 = vmatprep.subr.bf16.mxu0 0
        %1385 = vmatpush1.bf16.msra.mxu0 %v1324
        %1386 = vmatprep.subr.bf16.mxu0 0
        %1387 = vmatpush1.bf16.msra.mxu0 %v1323
        %1388 = vmatprep.subr.bf16.mxu0 0
        %1389 = vmatpush1.bf16.msra.mxu0 %v1322
        %1390 = vmatprep.subr.bf16.mxu0 0
        %1391 = vmatpush1.bf16.msra.mxu0 %v1321
        %1392 = vmatprep.subr.bf16.mxu0 0
        %1393 = vmatpush1.bf16.msra.mxu0 %v1320
        %1394 = vmatprep.subr.bf16.mxu0 0
        %1395 = vmatpush1.bf16.msra.mxu0 %v1319
        %1396 = vmatprep.subr.bf16.mxu0 0
        %1397 = vmatpush1.bf16.msra.mxu0 %v1318
        %1398 = vmatprep.subr.bf16.mxu0 0
        %1399 = vmatpush2.bf16.msra.mxu0 %v1333
        %1400 = vmatprep.subr.bf16.mxu0 0
        %1401 = vmatpush2.bf16.msra.mxu0 %v1332
        %1402 = vmatprep.subr.bf16.mxu0 0
        %1403 = vmatpush2.bf16.msra.mxu0 %v1331
        %1404 = vmatprep.subr.bf16.mxu0 0
        %1405 = vmatpush2.bf16.msra.mxu0 %v1330
        %1406 = vmatprep.subr.bf16.mxu0 0
        %1407 = vmatpush2.bf16.msra.mxu0 %v1329
        %1408 = vmatprep.subr.bf16.mxu0 0
        %1409 = vmatpush2.bf16.msra.mxu0 %v1328
        %1410 = vmatprep.subr.bf16.mxu0 0
        %1411 = vmatpush2.bf16.msra.mxu0 %v1327
        %1412 = vmatprep.subr.bf16.mxu0 0
        %1413 = vmatpush2.bf16.msra.mxu0 %v1326
        %1414 = vmatprep.mubr.bf16.mxu0 %v449
        %1415 = vmatmul.mubr.bf16.gmra.mxu0 %v448
        %v1416 = vpop.f32.mrf.mxu0
        %v1417 = vadd.f32 0.0, %v1416
        %v1418 = vpop.f32.mrf.mxu0
        %v1419 = vpop.f32.mrf.mxu0
        %v1420 = vpop.f32.mrf.mxu0
        %1421 = vdwg.mxu0
        %1422 = vmatprep.subr.bf16.mxu0 0
        %1423 = vmatpush1.bf16.msra.mxu0 %v1341
        %1424 = vmatprep.subr.bf16.mxu0 0
        %1425 = vmatpush1.bf16.msra.mxu0 %v1340
        %1426 = vmatprep.subr.bf16.mxu0 0
        %1427 = vmatpush1.bf16.msra.mxu0 %v1339
        %1428 = vmatprep.subr.bf16.mxu0 0
        %1429 = vmatpush1.bf16.msra.mxu0 %v1338
        %1430 = vmatprep.subr.bf16.mxu0 0
        %1431 = vmatpush1.bf16.msra.mxu0 %v1337
        %1432 = vmatprep.subr.bf16.mxu0 0
        %1433 = vmatpush1.bf16.msra.mxu0 %v1336
        %1434 = vmatprep.subr.bf16.mxu0 0
        %1435 = vmatpush1.bf16.msra.mxu0 %v1335
        %1436 = vmatprep.subr.bf16.mxu0 0
        %1437 = vmatpush1.bf16.msra.mxu0 %v1334
        %1438 = vmatprep.subr.bf16.mxu0 0
        %1439 = vmatpush2.bf16.msra.mxu0 %v1349
        %1440 = vmatprep.subr.bf16.mxu0 0
        %1441 = vmatpush2.bf16.msra.mxu0 %v1348
        %1442 = vmatprep.subr.bf16.mxu0 0
        %1443 = vmatpush2.bf16.msra.mxu0 %v1347
        %1444 = vmatprep.subr.bf16.mxu0 0
        %1445 = vmatpush2.bf16.msra.mxu0 %v1346
        %1446 = vmatprep.subr.bf16.mxu0 0
        %1447 = vmatpush2.bf16.msra.mxu0 %v1345
        %1448 = vmatprep.subr.bf16.mxu0 0
        %1449 = vmatpush2.bf16.msra.mxu0 %v1344
        %1450 = vmatprep.subr.bf16.mxu0 0
        %1451 = vmatpush2.bf16.msra.mxu0 %v1343
        %1452 = vmatprep.subr.bf16.mxu0 0
        %1453 = vmatpush2.bf16.msra.mxu0 %v1342
        %1454 = vmatprep.mubr.bf16.mxu0 %v451
        %1455 = vmatmul.mubr.bf16.gmra.mxu0 %v450
        %v1456 = vpop.f32.mrf.mxu0
        %v1457 = vadd.f32 %v1417, %v1456
        %v1458 = vpop.f32.mrf.mxu0
        %v1459 = vpop.f32.mrf.mxu0
        %v1460 = vpop.f32.mrf.mxu0
        %1461 = vdwg.mxu0
        %s1462 = scalar_lea.vmem %s3, 768
        %v1463 = vld [vmem:[%s1462] sm:$0xf]
        %v1464 = vld [vmem:[%s1462 + $0x4] sm:$0xf]
        %v1465 = vld [vmem:[%s1462 + $0x8] sm:$0xf]
        %v1466 = vld [vmem:[%s1462 + $0xc] sm:$0xf]
        %v1467 = vld [vmem:[%s1462 + $0x10] sm:$0xf]
        %v1468 = vld [vmem:[%s1462 + $0x14] sm:$0xf]
        %v1469 = vld [vmem:[%s1462 + $0x18] sm:$0xf]
        %v1470 = vld [vmem:[%s1462 + $0x1c] sm:$0xf]
        %v1471 = vld [vmem:[%s1462 + $0x20] sm:$0xf]
        %v1472 = vld [vmem:[%s1462 + $0x24] sm:$0xf]
        %v1473 = vld [vmem:[%s1462 + $0x28] sm:$0xf]
        %v1474 = vld [vmem:[%s1462 + $0x2c] sm:$0xf]
        %v1475 = vld [vmem:[%s1462 + $0x30] sm:$0xf]
        %v1476 = vld [vmem:[%s1462 + $0x34] sm:$0xf]
        %v1477 = vld [vmem:[%s1462 + $0x38] sm:$0xf]
        %v1478 = vld [vmem:[%s1462 + $0x3c] sm:$0xf]
        %v1479 = vld [vmem:[%s1462 + $0x40] sm:$0xf]
        %v1480 = vld [vmem:[%s1462 + $0x44] sm:$0xf]
        %v1481 = vld [vmem:[%s1462 + $0x48] sm:$0xf]
        %v1482 = vld [vmem:[%s1462 + $0x4c] sm:$0xf]
        %v1483 = vld [vmem:[%s1462 + $0x50] sm:$0xf]
        %v1484 = vld [vmem:[%s1462 + $0x54] sm:$0xf]
        %v1485 = vld [vmem:[%s1462 + $0x58] sm:$0xf]
        %v1486 = vld [vmem:[%s1462 + $0x5c] sm:$0xf]
        %v1487 = vld [vmem:[%s1462 + $0x60] sm:$0xf]
        %v1488 = vld [vmem:[%s1462 + $0x64] sm:$0xf]
        %v1489 = vld [vmem:[%s1462 + $0x68] sm:$0xf]
        %v1490 = vld [vmem:[%s1462 + $0x6c] sm:$0xf]
        %v1491 = vld [vmem:[%s1462 + $0x70] sm:$0xf]
        %v1492 = vld [vmem:[%s1462 + $0x74] sm:$0xf]
        %v1493 = vld [vmem:[%s1462 + $0x78] sm:$0xf]
        %v1494 = vld [vmem:[%s1462 + $0x7c] sm:$0xf]
        %v1495 = vld [vmem:[%s1462 + $0x80] sm:$0xf]
        %v1496 = vld [vmem:[%s1462 + $0x84] sm:$0xf]
        %v1497 = vld [vmem:[%s1462 + $0x88] sm:$0xf]
        %v1498 = vld [vmem:[%s1462 + $0x8c] sm:$0xf]
        %v1499 = vld [vmem:[%s1462 + $0x90] sm:$0xf]
        %v1500 = vld [vmem:[%s1462 + $0x94] sm:$0xf]
        %v1501 = vld [vmem:[%s1462 + $0x98] sm:$0xf]
        %v1502 = vld [vmem:[%s1462 + $0x9c] sm:$0xf]
        %v1503 = vld [vmem:[%s1462 + $0xa0] sm:$0xf]
        %v1504 = vld [vmem:[%s1462 + $0xa4] sm:$0xf]
        %v1505 = vld [vmem:[%s1462 + $0xa8] sm:$0xf]
        %v1506 = vld [vmem:[%s1462 + $0xac] sm:$0xf]
        %v1507 = vld [vmem:[%s1462 + $0xb0] sm:$0xf]
        %v1508 = vld [vmem:[%s1462 + $0xb4] sm:$0xf]
        %v1509 = vld [vmem:[%s1462 + $0xb8] sm:$0xf]
        %v1510 = vld [vmem:[%s1462 + $0xbc] sm:$0xf]
        %v1511 = vld [vmem:[%s1462 + $0xc0] sm:$0xf]
        %v1512 = vld [vmem:[%s1462 + $0xc4] sm:$0xf]
        %v1513 = vld [vmem:[%s1462 + $0xc8] sm:$0xf]
        %v1514 = vld [vmem:[%s1462 + $0xcc] sm:$0xf]
        %v1515 = vld [vmem:[%s1462 + $0xd0] sm:$0xf]
        %v1516 = vld [vmem:[%s1462 + $0xd4] sm:$0xf]
        %v1517 = vld [vmem:[%s1462 + $0xd8] sm:$0xf]
        %v1518 = vld [vmem:[%s1462 + $0xdc] sm:$0xf]
        %v1519 = vld [vmem:[%s1462 + $0xe0] sm:$0xf]
        %v1520 = vld [vmem:[%s1462 + $0xe4] sm:$0xf]
        %v1521 = vld [vmem:[%s1462 + $0xe8] sm:$0xf]
        %v1522 = vld [vmem:[%s1462 + $0xec] sm:$0xf]
        %v1523 = vld [vmem:[%s1462 + $0xf0] sm:$0xf]
        %v1524 = vld [vmem:[%s1462 + $0xf4] sm:$0xf]
        %v1525 = vld [vmem:[%s1462 + $0xf8] sm:$0xf]
        %v1526 = vld [vmem:[%s1462 + $0xfc] sm:$0xf]
        %v1591 = vunpack.c.l.b16 %v1463
        %v1592 = vunpack.c.l.b16 %v1464
        %v1593 = vunpack.c.l.b16 %v1465
        %v1594 = vunpack.c.l.b16 %v1466
        %v1595 = vunpack.c.l.b16 %v1467
        %v1596 = vunpack.c.l.b16 %v1468
        %v1597 = vunpack.c.l.b16 %v1469
        %v1598 = vunpack.c.l.b16 %v1470
        %v1599 = vunpack.c.l.b16 %v1471
        %v1600 = vunpack.c.l.b16 %v1472
        %v1601 = vunpack.c.l.b16 %v1473
        %v1602 = vunpack.c.l.b16 %v1474
        %v1603 = vunpack.c.l.b16 %v1475
        %v1604 = vunpack.c.l.b16 %v1476
        %v1605 = vunpack.c.l.b16 %v1477
        %v1606 = vunpack.c.l.b16 %v1478
        %v1607 = vunpack.c.l.b16 %v1479
        %v1608 = vunpack.c.l.b16 %v1480
        %v1609 = vunpack.c.l.b16 %v1481
        %v1610 = vunpack.c.l.b16 %v1482
        %v1611 = vunpack.c.l.b16 %v1483
        %v1612 = vunpack.c.l.b16 %v1484
        %v1613 = vunpack.c.l.b16 %v1485
        %v1614 = vunpack.c.l.b16 %v1486
        %v1615 = vunpack.c.l.b16 %v1487
        %v1616 = vunpack.c.l.b16 %v1488
        %v1617 = vunpack.c.l.b16 %v1489
        %v1618 = vunpack.c.l.b16 %v1490
        %v1619 = vunpack.c.l.b16 %v1491
        %v1620 = vunpack.c.l.b16 %v1492
        %v1621 = vunpack.c.l.b16 %v1493
        %v1622 = vunpack.c.l.b16 %v1494
        %v1623 = vunpack.c.l.b16 %v1495
        %v1624 = vunpack.c.l.b16 %v1496
        %v1625 = vunpack.c.l.b16 %v1497
        %v1626 = vunpack.c.l.b16 %v1498
        %v1627 = vunpack.c.l.b16 %v1499
        %v1628 = vunpack.c.l.b16 %v1500
        %v1629 = vunpack.c.l.b16 %v1501
        %v1630 = vunpack.c.l.b16 %v1502
        %v1631 = vunpack.c.l.b16 %v1503
        %v1632 = vunpack.c.l.b16 %v1504
        %v1633 = vunpack.c.l.b16 %v1505
        %v1634 = vunpack.c.l.b16 %v1506
        %v1635 = vunpack.c.l.b16 %v1507
        %v1636 = vunpack.c.l.b16 %v1508
        %v1637 = vunpack.c.l.b16 %v1509
        %v1638 = vunpack.c.l.b16 %v1510
        %v1639 = vunpack.c.l.b16 %v1511
        %v1640 = vunpack.c.l.b16 %v1512
        %v1641 = vunpack.c.l.b16 %v1513
        %v1642 = vunpack.c.l.b16 %v1514
        %v1643 = vunpack.c.l.b16 %v1515
        %v1644 = vunpack.c.l.b16 %v1516
        %v1645 = vunpack.c.l.b16 %v1517
        %v1646 = vunpack.c.l.b16 %v1518
        %v1647 = vunpack.c.l.b16 %v1519
        %v1648 = vunpack.c.l.b16 %v1520
        %v1649 = vunpack.c.l.b16 %v1521
        %v1650 = vunpack.c.l.b16 %v1522
        %v1651 = vunpack.c.l.b16 %v1523
        %v1652 = vunpack.c.l.b16 %v1524
        %v1653 = vunpack.c.l.b16 %v1525
        %v1654 = vunpack.c.l.b16 %v1526
        %v1655 = vpack.c.b16 %v1592, %v1591
        %v1656 = vpack.c.b16 %v1594, %v1593
        %v1657 = vpack.c.b16 %v1596, %v1595
        %v1658 = vpack.c.b16 %v1598, %v1597
        %v1659 = vpack.c.b16 %v1600, %v1599
        %v1660 = vpack.c.b16 %v1602, %v1601
        %v1661 = vpack.c.b16 %v1604, %v1603
        %v1662 = vpack.c.b16 %v1606, %v1605
        %v1663 = vpack.c.b16 %v1608, %v1607
        %v1664 = vpack.c.b16 %v1610, %v1609
        %v1665 = vpack.c.b16 %v1612, %v1611
        %v1666 = vpack.c.b16 %v1614, %v1613
        %v1667 = vpack.c.b16 %v1616, %v1615
        %v1668 = vpack.c.b16 %v1618, %v1617
        %v1669 = vpack.c.b16 %v1620, %v1619
        %v1670 = vpack.c.b16 %v1622, %v1621
        %v1671 = vpack.c.b16 %v1624, %v1623
        %v1672 = vpack.c.b16 %v1626, %v1625
        %v1673 = vpack.c.b16 %v1628, %v1627
        %v1674 = vpack.c.b16 %v1630, %v1629
        %v1675 = vpack.c.b16 %v1632, %v1631
        %v1676 = vpack.c.b16 %v1634, %v1633
        %v1677 = vpack.c.b16 %v1636, %v1635
        %v1678 = vpack.c.b16 %v1638, %v1637
        %v1679 = vpack.c.b16 %v1640, %v1639
        %v1680 = vpack.c.b16 %v1642, %v1641
        %v1681 = vpack.c.b16 %v1644, %v1643
        %v1682 = vpack.c.b16 %v1646, %v1645
        %v1683 = vpack.c.b16 %v1648, %v1647
        %v1684 = vpack.c.b16 %v1650, %v1649
        %v1685 = vpack.c.b16 %v1652, %v1651
        %v1686 = vpack.c.b16 %v1654, %v1653
        %1719 = vmatprep.subr.bf16.mxu0 0
        %1720 = vmatpush1.bf16.msra.mxu0 %v1662
        %1721 = vmatprep.subr.bf16.mxu0 0
        %1722 = vmatpush1.bf16.msra.mxu0 %v1661
        %1723 = vmatprep.subr.bf16.mxu0 0
        %1724 = vmatpush1.bf16.msra.mxu0 %v1660
        %1725 = vmatprep.subr.bf16.mxu0 0
        %1726 = vmatpush1.bf16.msra.mxu0 %v1659
        %1727 = vmatprep.subr.bf16.mxu0 0
        %1728 = vmatpush1.bf16.msra.mxu0 %v1658
        %1729 = vmatprep.subr.bf16.mxu0 0
        %1730 = vmatpush1.bf16.msra.mxu0 %v1657
        %1731 = vmatprep.subr.bf16.mxu0 0
        %1732 = vmatpush1.bf16.msra.mxu0 %v1656
        %1733 = vmatprep.subr.bf16.mxu0 0
        %1734 = vmatpush1.bf16.msra.mxu0 %v1655
        %1735 = vmatprep.subr.bf16.mxu0 0
        %1736 = vmatpush2.bf16.msra.mxu0 %v1670
        %1737 = vmatprep.subr.bf16.mxu0 0
        %1738 = vmatpush2.bf16.msra.mxu0 %v1669
        %1739 = vmatprep.subr.bf16.mxu0 0
        %1740 = vmatpush2.bf16.msra.mxu0 %v1668
        %1741 = vmatprep.subr.bf16.mxu0 0
        %1742 = vmatpush2.bf16.msra.mxu0 %v1667
        %1743 = vmatprep.subr.bf16.mxu0 0
        %1744 = vmatpush2.bf16.msra.mxu0 %v1666
        %1745 = vmatprep.subr.bf16.mxu0 0
        %1746 = vmatpush2.bf16.msra.mxu0 %v1665
        %1747 = vmatprep.subr.bf16.mxu0 0
        %1748 = vmatpush2.bf16.msra.mxu0 %v1664
        %1749 = vmatprep.subr.bf16.mxu0 0
        %1750 = vmatpush2.bf16.msra.mxu0 %v1663
        %1751 = vmatprep.mubr.bf16.mxu0 %v449
        %1752 = vmatmul.mubr.bf16.gmra.mxu0 %v448
        %v1753 = vpop.f32.mrf.mxu0
        %v1754 = vadd.f32 0.0, %v1753
        %v1755 = vpop.f32.mrf.mxu0
        %v1756 = vpop.f32.mrf.mxu0
        %v1757 = vpop.f32.mrf.mxu0
        %1758 = vdwg.mxu0
        %1759 = vmatprep.subr.bf16.mxu0 0
        %1760 = vmatpush1.bf16.msra.mxu0 %v1678
        %1761 = vmatprep.subr.bf16.mxu0 0
        %1762 = vmatpush1.bf16.msra.mxu0 %v1677
        %1763 = vmatprep.subr.bf16.mxu0 0
        %1764 = vmatpush1.bf16.msra.mxu0 %v1676
        %1765 = vmatprep.subr.bf16.mxu0 0
        %1766 = vmatpush1.bf16.msra.mxu0 %v1675
        %1767 = vmatprep.subr.bf16.mxu0 0
        %1768 = vmatpush1.bf16.msra.mxu0 %v1674
        %1769 = vmatprep.subr.bf16.mxu0 0
        %1770 = vmatpush1.bf16.msra.mxu0 %v1673
        %1771 = vmatprep.subr.bf16.mxu0 0
        %1772 = vmatpush1.bf16.msra.mxu0 %v1672
        %1773 = vmatprep.subr.bf16.mxu0 0
        %1774 = vmatpush1.bf16.msra.mxu0 %v1671
        %1775 = vmatprep.subr.bf16.mxu0 0
        %1776 = vmatpush2.bf16.msra.mxu0 %v1686
        %1777 = vmatprep.subr.bf16.mxu0 0
        %1778 = vmatpush2.bf16.msra.mxu0 %v1685
        %1779 = vmatprep.subr.bf16.mxu0 0
        %1780 = vmatpush2.bf16.msra.mxu0 %v1684
        %1781 = vmatprep.subr.bf16.mxu0 0
        %1782 = vmatpush2.bf16.msra.mxu0 %v1683
        %1783 = vmatprep.subr.bf16.mxu0 0
        %1784 = vmatpush2.bf16.msra.mxu0 %v1682
        %1785 = vmatprep.subr.bf16.mxu0 0
        %1786 = vmatpush2.bf16.msra.mxu0 %v1681
        %1787 = vmatprep.subr.bf16.mxu0 0
        %1788 = vmatpush2.bf16.msra.mxu0 %v1680
        %1789 = vmatprep.subr.bf16.mxu0 0
        %1790 = vmatpush2.bf16.msra.mxu0 %v1679
        %1791 = vmatprep.mubr.bf16.mxu0 %v451
        %1792 = vmatmul.mubr.bf16.gmra.mxu0 %v450
        %v1793 = vpop.f32.mrf.mxu0
        %v1794 = vadd.f32 %v1754, %v1793
        %v1795 = vpop.f32.mrf.mxu0
        %v1796 = vpop.f32.mrf.mxu0
        %v1797 = vpop.f32.mrf.mxu0
        %1798 = vdwg.mxu0
        %v1799 = vmax.f32 %v783, %v1120
        %v1800 = vmax.f32 %v1457, %v1794
        %v1801 = vmax.f32 %v1799, %v1800
        %v1802 = vpack.c.bf16 %v1801, %v1801
        %1803 = vst [vmem:[%s242] sm:$0xf] %v1802
        %p1804 = scmp.lt.s32.totalorder %s15, 15
        %s1805 = scalar_select %p1804, %s15, 15
        %s1806 = smul.addr %s1805, 4
        %s1807 = scalar_lea.vmem %s4, %s1806
        // Predicated region
        $region60: #{mini_model_forward.7} parent=54 // pred_check
          %p1808 = pneg %p122
        $region61: #{mini_model_forward.7} parent=54 // pred_check_branch
          %1810 = sbr.rel (%p1808) target = $region63
        $region62: #{mini_model_forward.7} parent=54 // pred_region
          _
        $region63: #{mini_model_forward.7} parent=54 // pred_fallthru
          _
      $region55: #{mini_model_forward.7} parent=5 // pred_fallthru
        _
      %p1811 = scmp.le.s32.totalorder 2, %s10
      // Predicated region
      $region64: #{mini_model_forward.7} parent=5 // pred_check
        %p1812 = pneg %p1811
      $region65: #{mini_model_forward.7} parent=5 // pred_check_branch
        %1814 = sbr.rel (%p1812) target = $region67
      $region66: #{mini_model_forward.7} parent=5 // pred_region
        %s1815 = ssub.s32 %s10, 2
        // Predicated region
        $region68: #{mini_model_forward.7} parent=66 // pred_check
          %p1816 = pneg %p128
        $region69: #{mini_model_forward.7} parent=66 // pred_check_branch
          %1818 = sbr.rel (%p1816) target = $region71
        $region70: #{mini_model_forward.7} parent=66 // pred_region
          %p1819 = scmp.lt.s32.totalorder %s16, 15
          %s1820 = scalar_select %p1819, %s16, 15
          %s1821 = smul.addr %s1820, 4
          %s1822 = scalar_lea.vmem %s4, %s1821
        $region71: #{mini_model_forward.7} parent=66 // pred_fallthru
          _
      $region67: #{mini_model_forward.7} parent=5 // pred_fallthru
        _
    $region6: #{mini_model_forward.7} parent=1 // loop_footer
      %s14 = sadd.s32 1, %s10
    $region7: #{mini_model_forward.7} parent=1 // loop_footer_branch
      %9 = sbr.rel target = $region3
    $region8: #{mini_model_forward.7} parent=1 // loop_exit
      _

// kernel: mini_model_forward.8
$region0: #{mini_model_forward.8}
  #allocation0 [shape = 'u32[]', space=smem, size = 0x4, offset = 0x4, fixed_abs, tag = 'smem constant byte address 0x4 - core index']
  #allocation1 [shape = 'u32[144,128]{1,0:T(1,128)}', space=vmem, size = 0x12000, scoped, tag = 'internal scratch']
  %s0 = inlined_call_operand.vmem [shape: bf16[16,72], index: 0, kind: input, shape index: {}]
  %s1 = inlined_call_operand.vmem [shape: bf16[72,2048], index: 1, kind: input, shape index: {}]
  %s2 = inlined_call_operand.vmem [shape: f32[16,1], index: 2, kind: input, shape index: {}]
  %s3 = inlined_call_operand.vmem [shape: bf16[4,512,128], index: 3, kind: input, shape index: {}]
  %s4 = inlined_call_operand.vmem [shape: bf16[16,512], index: 4, kind: output, shape index: {}]
  %s5 = sld [smem:[#allocation0]]
  $region109: #{mini_model_forward.8} parent=0
    _
  %s7 = ssub.s32 1, %s5
  %s8 = scalar_select 0, %s7, %s5
  $region1: #{mini_model_forward.8} parent=0
    #allocation2 [shape = 'u8[147456]{0}', space=vmem, size = 0x24000, scoped, tag = 'input window, operand 1']
    #allocation3 [shape = 'u8[8192]{0}', space=vmem, size = 0x2000, scoped, tag = 'output window, operand 0']
    loop: start=0, step=1, limit=6
    $region2: #{mini_model_forward.8} parent=1 // loop_pre_header
      _
    $region3: #{mini_model_forward.8} parent=1 // loop_header
      %s10 = sphi 0, %s14
      %p11 = scmp.ge.s32.totalorder %s10, 6
      %s18 = sphi 0, %s18
      %s20 = sphi 0, %s18
      %s21 = sphi 0, %s20
      %s35 = sphi 0, %s21
      %s41 = sphi 0, %s43
      %s44 = sphi 0, %s41
      %s45 = sphi 0, %s44
      %s61 = sphi 0, %s45
      %s65 = sphi 0, %s65
      %s67 = sphi 0, %s65
      %s68 = sphi 0, %s67
      %s82 = sphi 0, %s68
      %s86 = sphi 0, %s86
      %s88 = sphi 0, %s86
      %s89 = sphi 0, %s88
      %s103 = sphi 0, %s89
      %s109 = sphi 0, %s111
      %s112 = sphi 0, %s109
      %s113 = sphi 0, %s112
      %s129 = sphi 0, %s113
    $region4: #{mini_model_forward.8} parent=1 // loop_header_branch
      %13 = sbr.rel (%p11) target = $region8
    $region5: #{mini_model_forward.8} parent=1 // loop_body
      %s15 = ssub.s32 %s10, 1
      %s16 = ssub.s32 %s10, 2
      %s17 = sadd.s32 %s10, 1
      %s19 = sadd.s32 %s18, 1
      %p22 = scmp.eq.s32.totalorder %s10, 3
      %p23 = scmp.ne.s32.totalorder %s18, %s20
      %p24 = scmp.eq.s32.totalorder %s10, 0
      %p25 = por %p23, %p24
      %p26 = scmp.ne.s32.totalorder %s18, %s20
      %p27 = scmp.eq.s32.totalorder %s15, 3
      %p28 = por %p26, %p27
      %p29 = scmp.ne.s32.totalorder %s20, %s21
      %p30 = scmp.eq.s32.totalorder %s15, 0
      %p31 = por %p29, %p30
      %p32 = scmp.ne.s32.totalorder %s20, %s21
      %p33 = scmp.eq.s32.totalorder %s16, 3
      %p34 = por %p32, %p33
      %p36 = scmp.ne.s32.totalorder %s21, %s35
      %p37 = scmp.eq.s32.totalorder %s16, 0
      %p38 = por %p36, %p37
      %s39 = ssub.s32 %s10, %s17
      %p40 = scmp.eq.s32.totalorder %s39, 0
      %s42 = sadd.s32 %s41, 1
      %s43 = scalar_select %p40, %s41, %s42
      %p46 = pneg %p40
      %p47 = scmp.eq.s32.totalorder %s10, 3
      %p48 = por %p46, %p47
      %p49 = scmp.ne.s32.totalorder %s41, %s44
      %p50 = scmp.eq.s32.totalorder %s10, 0
      %p51 = por %p49, %p50
      %p52 = scmp.ne.s32.totalorder %s41, %s44
      %p53 = scmp.eq.s32.totalorder %s15, 3
      %p54 = por %p52, %p53
      %p55 = scmp.ne.s32.totalorder %s44, %s45
      %p56 = scmp.eq.s32.totalorder %s15, 0
      %p57 = por %p55, %p56
      %p58 = scmp.ne.s32.totalorder %s44, %s45
      %p59 = scmp.eq.s32.totalorder %s16, 3
      %p60 = por %p58, %p59
      %p62 = scmp.ne.s32.totalorder %s45, %s61
      %p63 = scmp.eq.s32.totalorder %s16, 0
      %p64 = por %p62, %p63
      %s66 = sadd.s32 %s65, 1
      %p69 = scmp.eq.s32.totalorder %s10, 3
      %p70 = scmp.ne.s32.totalorder %s65, %s67
      %p71 = scmp.eq.s32.totalorder %s10, 0
      %p72 = por %p70, %p71
      %p73 = scmp.ne.s32.totalorder %s65, %s67
      %p74 = scmp.eq.s32.totalorder %s15, 3
      %p75 = por %p73, %p74
      %p76 = scmp.ne.s32.totalorder %s67, %s68
      %p77 = scmp.eq.s32.totalorder %s15, 0
      %p78 = por %p76, %p77
      %p79 = scmp.ne.s32.totalorder %s67, %s68
      %p80 = scmp.eq.s32.totalorder %s16, 3
      %p81 = por %p79, %p80
      %p83 = scmp.ne.s32.totalorder %s68, %s82
      %p84 = scmp.eq.s32.totalorder %s16, 0
      %p85 = por %p83, %p84
      %s87 = sadd.s32 %s86, 1
      %p90 = scmp.eq.s32.totalorder %s10, 3
      %p91 = scmp.ne.s32.totalorder %s86, %s88
      %p92 = scmp.eq.s32.totalorder %s10, 0
      %p93 = por %p91, %p92
      %p94 = scmp.ne.s32.totalorder %s86, %s88
      %p95 = scmp.eq.s32.totalorder %s15, 3
      %p96 = por %p94, %p95
      %p97 = scmp.ne.s32.totalorder %s88, %s89
      %p98 = scmp.eq.s32.totalorder %s15, 0
      %p99 = por %p97, %p98
      %p100 = scmp.ne.s32.totalorder %s88, %s89
      %p101 = scmp.eq.s32.totalorder %s16, 3
      %p102 = por %p100, %p101
      %p104 = scmp.ne.s32.totalorder %s89, %s103
      %p105 = scmp.eq.s32.totalorder %s16, 0
      %p106 = por %p104, %p105
      %s107 = ssub.s32 %s10, %s17
      %p108 = scmp.eq.s32.totalorder %s107, 0
      %s110 = sadd.s32 %s109, 1
      %s111 = scalar_select %p108, %s109, %s110
      %p114 = pneg %p108
      %p115 = scmp.eq.s32.totalorder %s10, 3
      %p116 = por %p114, %p115
      %p117 = scmp.ne.s32.totalorder %s109, %s112
      %p118 = scmp.eq.s32.totalorder %s10, 0
      %p119 = por %p117, %p118
      %p120 = scmp.ne.s32.totalorder %s109, %s112
      %p121 = scmp.eq.s32.totalorder %s15, 3
      %p122 = por %p120, %p121
      %p123 = scmp.ne.s32.totalorder %s112, %s113
      %p124 = scmp.eq.s32.totalorder %s15, 0
      %p125 = por %p123, %p124
      %p126 = scmp.ne.s32.totalorder %s112, %s113
      %p127 = scmp.eq.s32.totalorder %s16, 3
      %p128 = por %p126, %p127
      %p130 = scmp.ne.s32.totalorder %s113, %s129
      %p131 = scmp.eq.s32.totalorder %s16, 0
      %p132 = por %p130, %p131
      %p133 = scmp.le.s32.totalorder 1, %s10
      %p134 = scmp.lt.s32.totalorder %s10, 5
      %p135 = pnand %p133, %p134
      %p136 = pneg %p135
      // Predicated region
      $region9: #{mini_model_forward.8} parent=5 // pred_check
        _
      $region10: #{mini_model_forward.8} parent=5 // pred_check_branch
        %138 = sbr.rel (%p135) target = $region12
      $region11: #{mini_model_forward.8} parent=5 // pred_region
        %s139 = ssub.s32 %s10, 1
        // Predicated region
        $region13: #{mini_model_forward.8} parent=11 // pred_check
          %p140 = pneg %p31
        $region14: #{mini_model_forward.8} parent=11 // pred_check_branch
          %142 = sbr.rel (%p140) target = $region16
        $region15: #{mini_model_forward.8} parent=11 // pred_region
          _
        $region16: #{mini_model_forward.8} parent=11 // pred_fallthru
          _
        // Predicated region
        $region17: #{mini_model_forward.8} parent=11 // pred_check
          %p143 = pneg %p78
        $region18: #{mini_model_forward.8} parent=11 // pred_check_branch
          %145 = sbr.rel (%p143) target = $region20
        $region19: #{mini_model_forward.8} parent=11 // pred_region
          _
        $region20: #{mini_model_forward.8} parent=11 // pred_fallthru
          _
        // Predicated region
        $region21: #{mini_model_forward.8} parent=11 // pred_check
          %p146 = pneg %p99
        $region22: #{mini_model_forward.8} parent=11 // pred_check_branch
          %148 = sbr.rel (%p146) target = $region24
        $region23: #{mini_model_forward.8} parent=11 // pred_region
          _
        $region24: #{mini_model_forward.8} parent=11 // pred_fallthru
          _
      $region12: #{mini_model_forward.8} parent=5 // pred_fallthru
        _
      %p149 = scmp.lt.s32.totalorder %s10, 4
      // Predicated region
      $region25: #{mini_model_forward.8} parent=5 // pred_check
        %p150 = pneg %p149
      $region26: #{mini_model_forward.8} parent=5 // pred_check_branch
        %152 = sbr.rel (%p150) target = $region28
      $region27: #{mini_model_forward.8} parent=5 // pred_region
        // Predicated region
        $region29: #{mini_model_forward.8} parent=27 // pred_check
          %p153 = pneg %p51
        $region30: #{mini_model_forward.8} parent=27 // pred_check_branch
          %155 = sbr.rel (%p153) target = $region32
        $region31: #{mini_model_forward.8} parent=27 // pred_region
          %s156 = sand.u32 %s41, 1
          %s157 = sand.u32 %s41, 1
          %s158 = smul.addr %s157, 144
          %s159 = scalar_lea.vmem [#allocation2], %s158
          %s160 = smul.u32 4, %s10
          %s161 = smul.addr %s160, 4
          %s162 = scalar_lea.vmem %s1, %s161
          // Predicated region
          $region33: #{mini_model_forward.8} parent=31 // pred_check
            _
          $region34: #{mini_model_forward.8} parent=31 // pred_check_branch
            %164 = sbr.rel (0) target = $region36
          $region35: #{mini_model_forward.8} parent=31 // pred_region
            // Predicated region
            $region37: #{mini_model_forward.8} parent=35 // pred_check
              _
            $region38: #{mini_model_forward.8} parent=35 // pred_check_branch
              %166 = sbr.rel (0) target = $region40
            $region39: #{mini_model_forward.8} parent=35 // pred_region
              loop: start=0, step=1, limit=1
              $region41: #{mini_model_forward.8} parent=39 // loop_pre_header
                _
              $region42: #{mini_model_forward.8} parent=39 // loop_header
                %s168 = sphi 0, %s172
                %p169 = scmp.ge.s32.totalorder %s168, 1
                %s173 = sphi %s162, %s162
                %s174 = sphi %s159, %s159
              $region43: #{mini_model_forward.8} parent=39 // loop_header_branch
                %171 = sbr.rel (%p169) target = $region47
              $region44: #{mini_model_forward.8} parent=39 // loop_body
                %v175 = vld [vmem:[%s173] sm:$0xff]
                %176 = vst [vmem:[%s174] sm:$0xff] %v175
                %v177 = vld [vmem:[%s173 + $0x8] sm:$0xff]
                %178 = vst [vmem:[%s174 + $0x8] sm:$0xff] %v177
                %v179 = vld [vmem:[%s173 + $0x40] sm:$0xff]
                %180 = vst [vmem:[%s174 + $0x10] sm:$0xff] %v179
                %v181 = vld [vmem:[%s173 + $0x48] sm:$0xff]
                %182 = vst [vmem:[%s174 + $0x18] sm:$0xff] %v181
                %v183 = vld [vmem:[%s173 + $0x80] sm:$0xff]
                %184 = vst [vmem:[%s174 + $0x20] sm:$0xff] %v183
                %v185 = vld [vmem:[%s173 + $0x88] sm:$0xff]
                %186 = vst [vmem:[%s174 + $0x28] sm:$0xff] %v185
                %v187 = vld [vmem:[%s173 + $0xc0] sm:$0xff]
                %188 = vst [vmem:[%s174 + $0x30] sm:$0xff] %v187
                %v189 = vld [vmem:[%s173 + $0xc8] sm:$0xff]
                %190 = vst [vmem:[%s174 + $0x38] sm:$0xff] %v189
                %v191 = vld [vmem:[%s173 + $0x100] sm:$0xff]
                %192 = vst [vmem:[%s174 + $0x40] sm:$0xff] %v191
                %v193 = vld [vmem:[%s173 + $0x108] sm:$0xff]
                %194 = vst [vmem:[%s174 + $0x48] sm:$0xff] %v193
                %v195 = vld [vmem:[%s173 + $0x140] sm:$0xff]
                %196 = vst [vmem:[%s174 + $0x50] sm:$0xff] %v195
                %v197 = vld [vmem:[%s173 + $0x148] sm:$0xff]
                %198 = vst [vmem:[%s174 + $0x58] sm:$0xff] %v197
                %v199 = vld [vmem:[%s173 + $0x180] sm:$0xff]
                %200 = vst [vmem:[%s174 + $0x60] sm:$0xff] %v199
                %v201 = vld [vmem:[%s173 + $0x188] sm:$0xff]
                %202 = vst [vmem:[%s174 + $0x68] sm:$0xff] %v201
                %v203 = vld [vmem:[%s173 + $0x1c0] sm:$0xff]
                %204 = vst [vmem:[%s174 + $0x70] sm:$0xff] %v203
                %v205 = vld [vmem:[%s173 + $0x1c8] sm:$0xff]
                %206 = vst [vmem:[%s174 + $0x78] sm:$0xff] %v205
                %v207 = vld [vmem:[%s173 + $0x200] sm:$0xff]
                %208 = vst [vmem:[%s174 + $0x80] sm:$0xff] %v207
                %v209 = vld [vmem:[%s173 + $0x208] sm:$0xff]
                %210 = vst [vmem:[%s174 + $0x88] sm:$0xff] %v209
              $region45: #{mini_model_forward.8} parent=39 // loop_footer
                %s172 = sadd.s32 1, %s168
              $region46: #{mini_model_forward.8} parent=39 // loop_footer_branch
                %167 = sbr.rel target = $region42
              $region47: #{mini_model_forward.8} parent=39 // loop_exit
                _
            $region40: #{mini_model_forward.8} parent=35 // pred_fallthru
              _
            // Predicated region
            $region48: #{mini_model_forward.8} parent=35 // pred_check
              _
            $region49: #{mini_model_forward.8} parent=35 // pred_check_branch
              %212 = sbr.rel target = $region51
            $region50: #{mini_model_forward.8} parent=35 // pred_region
              _
            $region51: #{mini_model_forward.8} parent=35 // pred_fallthru
              _
          $region36: #{mini_model_forward.8} parent=31 // pred_fallthru
            _
          %213 = vnop
        $region32: #{mini_model_forward.8} parent=27 // pred_fallthru
          _
      $region28: #{mini_model_forward.8} parent=5 // pred_fallthru
        _
      %p214 = scmp.le.s32.totalorder 1, %s10
      %p215 = scmp.lt.s32.totalorder %s10, 5
      %p216 = pnand %p214, %p215
      %p217 = pneg %p216
      // Predicated region
      $region52: #{mini_model_forward.8} parent=5 // pred_check
        _
      $region53: #{mini_model_forward.8} parent=5 // pred_check_branch
        %219 = sbr.rel (%p216) target = $region55
      $region54: #{mini_model_forward.8} parent=5 // pred_region
        %s220 = ssub.s32 %s10, 1
        %s221 = sand.u32 %s44, 1
        %s222 = sand.u32 %s44, 1
        %s223 = smul.addr %s222, 144
        %s224 = scalar_lea.vmem [#allocation2], %s223
        // Predicated region
        $region56: #{mini_model_forward.8} parent=54 // pred_check
          %p225 = pneg %p57
        $region57: #{mini_model_forward.8} parent=54 // pred_check_branch
          %227 = sbr.rel (%p225) target = $region59
        $region58: #{mini_model_forward.8} parent=54 // pred_region
          _
        $region59: #{mini_model_forward.8} parent=54 // pred_fallthru
          _
        %p228 = pneg %p31
        %p229 = pneg %p28
        %s230 = sand.u32 %s44, 1
        %s231 = sand.u32 %s44, 1
        %s232 = smul.addr %s231, 144
        %s233 = scalar_lea.vmem [#allocation2], %s232
        %p234 = pneg %p57
        %p235 = pneg %p54
        %p236 = pneg %p78
        %p237 = pneg %p75
        %p238 = pneg %p99
        %p239 = pneg %p96
        %p240 = pneg %p125
        %p241 = pneg %p122
        %s242 = sand.u32 %s112, 1
        %s243 = sand.u32 %s112, 1
        %s244 = smul.addr %s243, 8
        %s245 = scalar_lea.vmem [#allocation3], %s244
        %s246 = smul.u32 4, %s15
        %v248 = vld [vmem:[%s0] sm:$0xf]
        %v249 = vld [vmem:[%s0 + $0x4] sm:$0xf]
        %v250 = vld [vmem:[%s224] sm:$0xff]
        %v251 = vld [vmem:[%s224 + $0x8] sm:$0xff]
        %v252 = vld [vmem:[%s224 + $0x10] sm:$0xff]
        %v253 = vld [vmem:[%s224 + $0x18] sm:$0xff]
        %v254 = vld [vmem:[%s224 + $0x20] sm:$0xff]
        %v255 = vld [vmem:[%s224 + $0x28] sm:$0xff]
        %v256 = vld [vmem:[%s224 + $0x30] sm:$0xff]
        %v257 = vld [vmem:[%s224 + $0x38] sm:$0xff]
        %v258 = vld [vmem:[%s224 + $0x40] sm:$0xff]
        %v259 = vld [vmem:[%s224 + $0x48] sm:$0xff]
        %v260 = vld [vmem:[%s224 + $0x50] sm:$0xff]
        %v261 = vld [vmem:[%s224 + $0x58] sm:$0xff]
        %v262 = vld [vmem:[%s224 + $0x60] sm:$0xff]
        %v263 = vld [vmem:[%s224 + $0x68] sm:$0xff]
        %v264 = vld [vmem:[%s224 + $0x70] sm:$0xff]
        %v265 = vld [vmem:[%s224 + $0x78] sm:$0xff]
        %v266 = vld [vmem:[%s224 + $0x80] sm:$0xff]
        %v267 = vld [vmem:[%s224 + $0x88] sm:$0xff]
        %v268 = vld [vmem:[%s2] sm:$0xff]
        %v269 = vld [vmem:[%s2 + $0x8] sm:$0xff]
        %271 = vset.pattern.permute.xlu0 0
        %272 = vperm.xlu0 %271, %v268
        %v273 = vpop.permute.xlu0 %272
        %276 = vset.pattern.permute.xlu0 0
        %277 = vperm.xlu0 %276, %v269
        %v278 = vpop.permute.xlu0 %277
        %v282 = vunpack.c.l.b16 %v248
        %v283 = vunpack.c.l.b16 %v249
        %v284 = vpack.c.b16 %v283, %v282
        %v303 = vunpack.c.l.b16 %v250
        %v304 = vunpack.c.h.b16 %v250
        %v305 = vunpack.c.l.b16 %v251
        %v306 = vunpack.c.h.b16 %v251
        %v307 = vunpack.c.l.b16 %v252
        %v308 = vunpack.c.h.b16 %v252
        %v309 = vunpack.c.l.b16 %v253
        %v310 = vunpack.c.h.b16 %v253
        %v311 = vunpack.c.l.b16 %v254
        %v312 = vunpack.c.h.b16 %v254
        %v313 = vunpack.c.l.b16 %v255
        %v314 = vunpack.c.h.b16 %v255
        %v315 = vunpack.c.l.b16 %v256
        %v316 = vunpack.c.h.b16 %v256
        %v317 = vunpack.c.l.b16 %v257
        %v318 = vunpack.c.h.b16 %v257
        %v319 = vunpack.c.l.b16 %v258
        %v320 = vunpack.c.h.b16 %v258
        %v321 = vunpack.c.l.b16 %v259
        %v322 = vunpack.c.h.b16 %v259
        %v323 = vunpack.c.l.b16 %v260
        %v324 = vunpack.c.h.b16 %v260
        %v325 = vunpack.c.l.b16 %v261
        %v326 = vunpack.c.h.b16 %v261
        %v327 = vunpack.c.l.b16 %v262
        %v328 = vunpack.c.h.b16 %v262
        %v329 = vunpack.c.l.b16 %v263
        %v330 = vunpack.c.h.b16 %v263
        %v331 = vunpack.c.l.b16 %v264
        %v332 = vunpack.c.h.b16 %v264
        %v333 = vunpack.c.l.b16 %v265
        %v334 = vunpack.c.h.b16 %v265
        %v335 = vunpack.c.l.b16 %v266
        %v336 = vunpack.c.h.b16 %v266
        %v337 = vunpack.c.l.b16 %v267
        %v338 = vunpack.c.h.b16 %v267
        %v339 = vpack.c.b16 %v307, %v303
        %v340 = vpack.c.b16 %v308, %v304
        %v341 = vpack.c.b16 %v309, %v305
        %v342 = vpack.c.b16 %v310, %v306
        %v343 = vpack.c.b16 %v315, %v311
        %v344 = vpack.c.b16 %v316, %v312
        %v345 = vpack.c.b16 %v317, %v313
        %v346 = vpack.c.b16 %v318, %v314
        %v347 = vpack.c.b16 %v323, %v319
        %v348 = vpack.c.b16 %v324, %v320
        %v349 = vpack.c.b16 %v325, %v321
        %v350 = vpack.c.b16 %v326, %v322
        %v351 = vpack.c.b16 %v331, %v327
        %v352 = vpack.c.b16 %v332, %v328
        %v353 = vpack.c.b16 %v333, %v329
        %v354 = vpack.c.b16 %v334, %v330
        %v355 = vpack.c.b16 %v335, %v335
        %v356 = vpack.c.b16 %v336, %v336
        %v357 = vpack.c.b16 %v337, %v337
        %v358 = vpack.c.b16 %v338, %v338
        %vm375 = vcmask 588800
        %v377 = vsel %vm375, %v284, 0
        %vm379 = vcmask 1043456
        %v381 = vsel %vm379, %v355, 0
        %v384 = vsel %vm379, %v356, 0
        %v387 = vsel %vm379, %v357, 0
        %v390 = vsel %vm379, %v358, 0
        %392 = vmatprep.subr.bf16.mxu0 0
        %393 = vmatpush1.bf16.msra.mxu0 0
        %394 = vmatprep.subr.bf16.mxu0 0
        %395 = vmatpush1.bf16.msra.mxu0 0
        %396 = vmatprep.subr.bf16.mxu0 0
        %397 = vmatpush1.bf16.msra.mxu0 0
        %398 = vmatprep.subr.bf16.mxu0 %v384
        %399 = vmatpush1.bf16.msra.mxu0 %v381
        %400 = vmatprep.subr.bf16.mxu0 %v352
        %401 = vmatpush1.bf16.msra.mxu0 %v351
        %402 = vmatprep.subr.bf16.mxu0 %v348
        %403 = vmatpush1.bf16.msra.mxu0 %v347
        %404 = vmatprep.subr.bf16.mxu0 %v344
        %405 = vmatpush1.bf16.msra.mxu0 %v343
        %406 = vmatprep.subr.bf16.mxu0 %v340
        %407 = vmatpush1.bf16.msra.mxu0 %v339
        %408 = vmatprep.subr.bf16.mxu0 0
        %409 = vmatpush2.bf16.msra.mxu0 0
        %410 = vmatprep.subr.bf16.mxu0 0
        %411 = vmatpush2.bf16.msra.mxu0 0
        %412 = vmatprep.subr.bf16.mxu0 0
        %413 = vmatpush2.bf16.msra.mxu0 0
        %414 = vmatprep.subr.bf16.mxu0 0
        %415 = vmatpush2.bf16.msra.mxu0 0
        %416 = vmatprep.subr.bf16.mxu0 0
        %417 = vmatpush2.bf16.msra.mxu0 0
        %418 = vmatprep.subr.bf16.mxu0 0
        %419 = vmatpush2.bf16.msra.mxu0 0
        %420 = vmatprep.subr.bf16.mxu0 0
        %421 = vmatpush2.bf16.msra.mxu0 0
        %422 = vmatprep.subr.bf16.mxu0 0
        %423 = vmatpush2.bf16.msra.mxu0 0
        %424 = vmatprep.mubr.bf16.mxu0 0
        %425 = vmatmul.mubr.bf16.gmra.mxu0 %v377
        %v426 = vpop.f32.mrf.mxu0
        %v427 = vadd.f32 %v273, %v426
        %v428 = vpop.f32.mrf.mxu0
        %v429 = vadd.f32 %v273, %v428
        %v430 = vpop.f32.mrf.mxu0
        %v431 = vadd.f32 %v278, %v430
        %v432 = vpop.f32.mrf.mxu0
        %v433 = vadd.f32 %v278, %v432
        %434 = vdwg.mxu0
        %435 = vmatprep.subr.bf16.mxu0 0
        %436 = vmatpush1.bf16.msra.mxu0 0
        %437 = vmatprep.subr.bf16.mxu0 0
        %438 = vmatpush1.bf16.msra.mxu0 0
        %439 = vmatprep.subr.bf16.mxu0 0
        %440 = vmatpush1.bf16.msra.mxu0 0
        %441 = vmatprep.subr.bf16.mxu0 %v390
        %442 = vmatpush1.bf16.msra.mxu0 %v387
        %443 = vmatprep.subr.bf16.mxu0 %v354
        %444 = vmatpush1.bf16.msra.mxu0 %v353
        %445 = vmatprep.subr.bf16.mxu0 %v350
        %446 = vmatpush1.bf16.msra.mxu0 %v349
        %447 = vmatprep.subr.bf16.mxu0 %v346
        %448 = vmatpush1.bf16.msra.mxu0 %v345
        %449 = vmatprep.subr.bf16.mxu0 %v342
        %450 = vmatpush1.bf16.msra.mxu0 %v341
        %451 = vmatprep.subr.bf16.mxu0 0
        %452 = vmatpush2.bf16.msra.mxu0 0
        %453 = vmatprep.subr.bf16.mxu0 0
        %454 = vmatpush2.bf16.msra.mxu0 0
        %455 = vmatprep.subr.bf16.mxu0 0
        %456 = vmatpush2.bf16.msra.mxu0 0
        %457 = vmatprep.subr.bf16.mxu0 0
        %458 = vmatpush2.bf16.msra.mxu0 0
        %459 = vmatprep.subr.bf16.mxu0 0
        %460 = vmatpush2.bf16.msra.mxu0 0
        %461 = vmatprep.subr.bf16.mxu0 0
        %462 = vmatpush2.bf16.msra.mxu0 0
        %463 = vmatprep.subr.bf16.mxu0 0
        %464 = vmatpush2.bf16.msra.mxu0 0
        %465 = vmatprep.subr.bf16.mxu0 0
        %466 = vmatpush2.bf16.msra.mxu0 0
        %467 = vmatprep.mubr.bf16.mxu0 0
        %468 = vmatmul.mubr.bf16.gmra.mxu0 %v377
        %v469 = vpop.f32.mrf.mxu0
        %v470 = vadd.f32 %v273, %v469
        %v471 = vpop.f32.mrf.mxu0
        %v472 = vadd.f32 %v273, %v471
        %v473 = vpop.f32.mrf.mxu0
        %v474 = vadd.f32 %v278, %v473
        %v475 = vpop.f32.mrf.mxu0
        %v476 = vadd.f32 %v278, %v475
        %477 = vdwg.mxu0
        %vm478 = vcmp.ge.f32.partialorder %v427, 0.0
        %vm479 = vcmp.ge.f32.partialorder %v429, 0.0
        %vm480 = vcmp.ge.f32.partialorder %v470, 0.0
        %vm481 = vcmp.ge.f32.partialorder %v472, 0.0
        %vm482 = vcmp.ge.f32.partialorder %v431, 0.0
        %vm483 = vcmp.ge.f32.partialorder %v433, 0.0
        %vm484 = vcmp.ge.f32.partialorder %v474, 0.0
        %vm485 = vcmp.ge.f32.partialorder %v476, 0.0
        %v486 = vmul.f32 %v427, 0.1
        %v487 = vmul.f32 %v429, 0.1
        %v488 = vmul.f32 %v470, 0.1
        %v489 = vmul.f32 %v472, 0.1
        %v490 = vmul.f32 %v431, 0.1
        %v491 = vmul.f32 %v433, 0.1
        %v492 = vmul.f32 %v474, 0.1
        %v493 = vmul.f32 %v476, 0.1
        %v494 = vsel %vm478, %v427, %v486
        %v495 = vsel %vm479, %v429, %v487
        %v496 = vsel %vm480, %v470, %v488
        %v497 = vsel %vm481, %v472, %v489
        %v498 = vsel %vm482, %v431, %v490
        %v499 = vsel %vm483, %v433, %v491
        %v500 = vsel %vm484, %v474, %v492
        %v501 = vsel %vm485, %v476, %v493
        %v502 = vpack.c.bf16 %v498, %v494
        %v503 = vpack.c.bf16 %v499, %v495
        %v504 = vpack.c.bf16 %v500, %v496
        %v505 = vpack.c.bf16 %v501, %v497
        %v506 = vld [vmem:[%s3] sm:$0xf]
        %v507 = vld [vmem:[%s3 + $0x4] sm:$0xf]
        %v508 = vld [vmem:[%s3 + $0x8] sm:$0xf]
        %v509 = vld [vmem:[%s3 + $0xc] sm:$0xf]
        %v510 = vld [vmem:[%s3 + $0x10] sm:$0xf]
        %v511 = vld [vmem:[%s3 + $0x14] sm:$0xf]
        %v512 = vld [vmem:[%s3 + $0x18] sm:$0xf]
        %v513 = vld [vmem:[%s3 + $0x1c] sm:$0xf]
        %v514 = vld [vmem:[%s3 + $0x20] sm:$0xf]
        %v515 = vld [vmem:[%s3 + $0x24] sm:$0xf]
        %v516 = vld [vmem:[%s3 + $0x28] sm:$0xf]
        %v517 = vld [vmem:[%s3 + $0x2c] sm:$0xf]
        %v518 = vld [vmem:[%s3 + $0x30] sm:$0xf]
        %v519 = vld [vmem:[%s3 + $0x34] sm:$0xf]
        %v520 = vld [vmem:[%s3 + $0x38] sm:$0xf]
        %v521 = vld [vmem:[%s3 + $0x3c] sm:$0xf]
        %v522 = vld [vmem:[%s3 + $0x40] sm:$0xf]
        %v523 = vld [vmem:[%s3 + $0x44] sm:$0xf]
        %v524 = vld [vmem:[%s3 + $0x48] sm:$0xf]
        %v525 = vld [vmem:[%s3 + $0x4c] sm:$0xf]
        %v526 = vld [vmem:[%s3 + $0x50] sm:$0xf]
        %v527 = vld [vmem:[%s3 + $0x54] sm:$0xf]
        %v528 = vld [vmem:[%s3 + $0x58] sm:$0xf]
        %v529 = vld [vmem:[%s3 + $0x5c] sm:$0xf]
        %v530 = vld [vmem:[%s3 + $0x60] sm:$0xf]
        %v531 = vld [vmem:[%s3 + $0x64] sm:$0xf]
        %v532 = vld [vmem:[%s3 + $0x68] sm:$0xf]
        %v533 = vld [vmem:[%s3 + $0x6c] sm:$0xf]
        %v534 = vld [vmem:[%s3 + $0x70] sm:$0xf]
        %v535 = vld [vmem:[%s3 + $0x74] sm:$0xf]
        %v536 = vld [vmem:[%s3 + $0x78] sm:$0xf]
        %v537 = vld [vmem:[%s3 + $0x7c] sm:$0xf]
        %v538 = vld [vmem:[%s3 + $0x80] sm:$0xf]
        %v539 = vld [vmem:[%s3 + $0x84] sm:$0xf]
        %v540 = vld [vmem:[%s3 + $0x88] sm:$0xf]
        %v541 = vld [vmem:[%s3 + $0x8c] sm:$0xf]
        %v542 = vld [vmem:[%s3 + $0x90] sm:$0xf]
        %v543 = vld [vmem:[%s3 + $0x94] sm:$0xf]
        %v544 = vld [vmem:[%s3 + $0x98] sm:$0xf]
        %v545 = vld [vmem:[%s3 + $0x9c] sm:$0xf]
        %v546 = vld [vmem:[%s3 + $0xa0] sm:$0xf]
        %v547 = vld [vmem:[%s3 + $0xa4] sm:$0xf]
        %v548 = vld [vmem:[%s3 + $0xa8] sm:$0xf]
        %v549 = vld [vmem:[%s3 + $0xac] sm:$0xf]
        %v550 = vld [vmem:[%s3 + $0xb0] sm:$0xf]
        %v551 = vld [vmem:[%s3 + $0xb4] sm:$0xf]
        %v552 = vld [vmem:[%s3 + $0xb8] sm:$0xf]
        %v553 = vld [vmem:[%s3 + $0xbc] sm:$0xf]
        %v554 = vld [vmem:[%s3 + $0xc0] sm:$0xf]
        %v555 = vld [vmem:[%s3 + $0xc4] sm:$0xf]
        %v556 = vld [vmem:[%s3 + $0xc8] sm:$0xf]
        %v557 = vld [vmem:[%s3 + $0xcc] sm:$0xf]
        %v558 = vld [vmem:[%s3 + $0xd0] sm:$0xf]
        %v559 = vld [vmem:[%s3 + $0xd4] sm:$0xf]
        %v560 = vld [vmem:[%s3 + $0xd8] sm:$0xf]
        %v561 = vld [vmem:[%s3 + $0xdc] sm:$0xf]
        %v562 = vld [vmem:[%s3 + $0xe0] sm:$0xf]
        %v563 = vld [vmem:[%s3 + $0xe4] sm:$0xf]
        %v564 = vld [vmem:[%s3 + $0xe8] sm:$0xf]
        %v565 = vld [vmem:[%s3 + $0xec] sm:$0xf]
        %v566 = vld [vmem:[%s3 + $0xf0] sm:$0xf]
        %v567 = vld [vmem:[%s3 + $0xf4] sm:$0xf]
        %v568 = vld [vmem:[%s3 + $0xf8] sm:$0xf]
        %v569 = vld [vmem:[%s3 + $0xfc] sm:$0xf]
        %v634 = vunpack.c.l.b16 %v506
        %v635 = vunpack.c.l.b16 %v507
        %v636 = vunpack.c.l.b16 %v508
        %v637 = vunpack.c.l.b16 %v509
        %v638 = vunpack.c.l.b16 %v510
        %v639 = vunpack.c.l.b16 %v511
        %v640 = vunpack.c.l.b16 %v512
        %v641 = vunpack.c.l.b16 %v513
        %v642 = vunpack.c.l.b16 %v514
        %v643 = vunpack.c.l.b16 %v515
        %v644 = vunpack.c.l.b16 %v516
        %v645 = vunpack.c.l.b16 %v517
        %v646 = vunpack.c.l.b16 %v518
        %v647 = vunpack.c.l.b16 %v519
        %v648 = vunpack.c.l.b16 %v520
        %v649 = vunpack.c.l.b16 %v521
        %v650 = vunpack.c.l.b16 %v522
        %v651 = vunpack.c.l.b16 %v523
        %v652 = vunpack.c.l.b16 %v524
        %v653 = vunpack.c.l.b16 %v525
        %v654 = vunpack.c.l.b16 %v526
        %v655 = vunpack.c.l.b16 %v527
        %v656 = vunpack.c.l.b16 %v528
        %v657 = vunpack.c.l.b16 %v529
        %v658 = vunpack.c.l.b16 %v530
        %v659 = vunpack.c.l.b16 %v531
        %v660 = vunpack.c.l.b16 %v532
        %v661 = vunpack.c.l.b16 %v533
        %v662 = vunpack.c.l.b16 %v534
        %v663 = vunpack.c.l.b16 %v535
        %v664 = vunpack.c.l.b16 %v536
        %v665 = vunpack.c.l.b16 %v537
        %v666 = vunpack.c.l.b16 %v538
        %v667 = vunpack.c.l.b16 %v539
        %v668 = vunpack.c.l.b16 %v540
        %v669 = vunpack.c.l.b16 %v541
        %v670 = vunpack.c.l.b16 %v542
        %v671 = vunpack.c.l.b16 %v543
        %v672 = vunpack.c.l.b16 %v544
        %v673 = vunpack.c.l.b16 %v545
        %v674 = vunpack.c.l.b16 %v546
        %v675 = vunpack.c.l.b16 %v547
        %v676 = vunpack.c.l.b16 %v548
        %v677 = vunpack.c.l.b16 %v549
        %v678 = vunpack.c.l.b16 %v550
        %v679 = vunpack.c.l.b16 %v551
        %v680 = vunpack.c.l.b16 %v552
        %v681 = vunpack.c.l.b16 %v553
        %v682 = vunpack.c.l.b16 %v554
        %v683 = vunpack.c.l.b16 %v555
        %v684 = vunpack.c.l.b16 %v556
        %v685 = vunpack.c.l.b16 %v557
        %v686 = vunpack.c.l.b16 %v558
        %v687 = vunpack.c.l.b16 %v559
        %v688 = vunpack.c.l.b16 %v560
        %v689 = vunpack.c.l.b16 %v561
        %v690 = vunpack.c.l.b16 %v562
        %v691 = vunpack.c.l.b16 %v563
        %v692 = vunpack.c.l.b16 %v564
        %v693 = vunpack.c.l.b16 %v565
        %v694 = vunpack.c.l.b16 %v566
        %v695 = vunpack.c.l.b16 %v567
        %v696 = vunpack.c.l.b16 %v568
        %v697 = vunpack.c.l.b16 %v569
        %v698 = vpack.c.b16 %v635, %v634
        %v699 = vpack.c.b16 %v637, %v636
        %v700 = vpack.c.b16 %v639, %v638
        %v701 = vpack.c.b16 %v641, %v640
        %v702 = vpack.c.b16 %v643, %v642
        %v703 = vpack.c.b16 %v645, %v644
        %v704 = vpack.c.b16 %v647, %v646
        %v705 = vpack.c.b16 %v649, %v648
        %v706 = vpack.c.b16 %v651, %v650
        %v707 = vpack.c.b16 %v653, %v652
        %v708 = vpack.c.b16 %v655, %v654
        %v709 = vpack.c.b16 %v657, %v656
        %v710 = vpack.c.b16 %v659, %v658
        %v711 = vpack.c.b16 %v661, %v660
        %v712 = vpack.c.b16 %v663, %v662
        %v713 = vpack.c.b16 %v665, %v664
        %v714 = vpack.c.b16 %v667, %v666
        %v715 = vpack.c.b16 %v669, %v668
        %v716 = vpack.c.b16 %v671, %v670
        %v717 = vpack.c.b16 %v673, %v672
        %v718 = vpack.c.b16 %v675, %v674
        %v719 = vpack.c.b16 %v677, %v676
        %v720 = vpack.c.b16 %v679, %v678
        %v721 = vpack.c.b16 %v681, %v680
        %v722 = vpack.c.b16 %v683, %v682
        %v723 = vpack.c.b16 %v685, %v684
        %v724 = vpack.c.b16 %v687, %v686
        %v725 = vpack.c.b16 %v689, %v688
        %v726 = vpack.c.b16 %v691, %v690
        %v727 = vpack.c.b16 %v693, %v692
        %v728 = vpack.c.b16 %v695, %v694
        %v729 = vpack.c.b16 %v697, %v696
        %762 = vmatprep.subr.bf16.mxu0 0
        %763 = vmatpush1.bf16.msra.mxu0 %v705
        %764 = vmatprep.subr.bf16.mxu0 0
        %765 = vmatpush1.bf16.msra.mxu0 %v704
        %766 = vmatprep.subr.bf16.mxu0 0
        %767 = vmatpush1.bf16.msra.mxu0 %v703
        %768 = vmatprep.subr.bf16.mxu0 0
        %769 = vmatpush1.bf16.msra.mxu0 %v702
        %770 = vmatprep.subr.bf16.mxu0 0
        %771 = vmatpush1.bf16.msra.mxu0 %v701
        %772 = vmatprep.subr.bf16.mxu0 0
        %773 = vmatpush1.bf16.msra.mxu0 %v700
        %774 = vmatprep.subr.bf16.mxu0 0
        %775 = vmatpush1.bf16.msra.mxu0 %v699
        %776 = vmatprep.subr.bf16.mxu0 0
        %777 = vmatpush1.bf16.msra.mxu0 %v698
        %778 = vmatprep.subr.bf16.mxu0 0
        %779 = vmatpush2.bf16.msra.mxu0 %v713
        %780 = vmatprep.subr.bf16.mxu0 0
        %781 = vmatpush2.bf16.msra.mxu0 %v712
        %782 = vmatprep.subr.bf16.mxu0 0
        %783 = vmatpush2.bf16.msra.mxu0 %v711
        %784 = vmatprep.subr.bf16.mxu0 0
        %785 = vmatpush2.bf16.msra.mxu0 %v710
        %786 = vmatprep.subr.bf16.mxu0 0
        %787 = vmatpush2.bf16.msra.mxu0 %v709
        %788 = vmatprep.subr.bf16.mxu0 0
        %789 = vmatpush2.bf16.msra.mxu0 %v708
        %790 = vmatprep.subr.bf16.mxu0 0
        %791 = vmatpush2.bf16.msra.mxu0 %v707
        %792 = vmatprep.subr.bf16.mxu0 0
        %793 = vmatpush2.bf16.msra.mxu0 %v706
        %794 = vmatprep.mubr.bf16.mxu0 %v503
        %795 = vmatmul.mubr.bf16.gmra.mxu0 %v502
        %v796 = vpop.f32.mrf.mxu0
        %v797 = vadd.f32 0.0, %v796
        %v798 = vpop.f32.mrf.mxu0
        %v799 = vpop.f32.mrf.mxu0
        %v800 = vadd.f32 0.0, %v799
        %v801 = vpop.f32.mrf.mxu0
        %802 = vdwg.mxu0
        %803 = vmatprep.subr.bf16.mxu0 0
        %804 = vmatpush1.bf16.msra.mxu0 %v721
        %805 = vmatprep.subr.bf16.mxu0 0
        %806 = vmatpush1.bf16.msra.mxu0 %v720
        %807 = vmatprep.subr.bf16.mxu0 0
        %808 = vmatpush1.bf16.msra.mxu0 %v719
        %809 = vmatprep.subr.bf16.mxu0 0
        %810 = vmatpush1.bf16.msra.mxu0 %v718
        %811 = vmatprep.subr.bf16.mxu0 0
        %812 = vmatpush1.bf16.msra.mxu0 %v717
        %813 = vmatprep.subr.bf16.mxu0 0
        %814 = vmatpush1.bf16.msra.mxu0 %v716
        %815 = vmatprep.subr.bf16.mxu0 0
        %816 = vmatpush1.bf16.msra.mxu0 %v715
        %817 = vmatprep.subr.bf16.mxu0 0
        %818 = vmatpush1.bf16.msra.mxu0 %v714
        %819 = vmatprep.subr.bf16.mxu0 0
        %820 = vmatpush2.bf16.msra.mxu0 %v729
        %821 = vmatprep.subr.bf16.mxu0 0
        %822 = vmatpush2.bf16.msra.mxu0 %v728
        %823 = vmatprep.subr.bf16.mxu0 0
        %824 = vmatpush2.bf16.msra.mxu0 %v727
        %825 = vmatprep.subr.bf16.mxu0 0
        %826 = vmatpush2.bf16.msra.mxu0 %v726
        %827 = vmatprep.subr.bf16.mxu0 0
        %828 = vmatpush2.bf16.msra.mxu0 %v725
        %829 = vmatprep.subr.bf16.mxu0 0
        %830 = vmatpush2.bf16.msra.mxu0 %v724
        %831 = vmatprep.subr.bf16.mxu0 0
        %832 = vmatpush2.bf16.msra.mxu0 %v723
        %833 = vmatprep.subr.bf16.mxu0 0
        %834 = vmatpush2.bf16.msra.mxu0 %v722
        %835 = vmatprep.mubr.bf16.mxu0 %v505
        %836 = vmatmul.mubr.bf16.gmra.mxu0 %v504
        %v837 = vpop.f32.mrf.mxu0
        %v838 = vadd.f32 %v797, %v837
        %v839 = vpop.f32.mrf.mxu0
        %v840 = vpop.f32.mrf.mxu0
        %v841 = vadd.f32 %v800, %v840
        %v842 = vpop.f32.mrf.mxu0
        %843 = vdwg.mxu0
        %s844 = scalar_lea.vmem %s3, 256
        %v845 = vld [vmem:[%s844] sm:$0xf]
        %v846 = vld [vmem:[%s844 + $0x4] sm:$0xf]
        %v847 = vld [vmem:[%s844 + $0x8] sm:$0xf]
        %v848 = vld [vmem:[%s844 + $0xc] sm:$0xf]
        %v849 = vld [vmem:[%s844 + $0x10] sm:$0xf]
        %v850 = vld [vmem:[%s844 + $0x14] sm:$0xf]
        %v851 = vld [vmem:[%s844 + $0x18] sm:$0xf]
        %v852 = vld [vmem:[%s844 + $0x1c] sm:$0xf]
        %v853 = vld [vmem:[%s844 + $0x20] sm:$0xf]
        %v854 = vld [vmem:[%s844 + $0x24] sm:$0xf]
        %v855 = vld [vmem:[%s844 + $0x28] sm:$0xf]
        %v856 = vld [vmem:[%s844 + $0x2c] sm:$0xf]
        %v857 = vld [vmem:[%s844 + $0x30] sm:$0xf]
        %v858 = vld [vmem:[%s844 + $0x34] sm:$0xf]
        %v859 = vld [vmem:[%s844 + $0x38] sm:$0xf]
        %v860 = vld [vmem:[%s844 + $0x3c] sm:$0xf]
        %v861 = vld [vmem:[%s844 + $0x40] sm:$0xf]
        %v862 = vld [vmem:[%s844 + $0x44] sm:$0xf]
        %v863 = vld [vmem:[%s844 + $0x48] sm:$0xf]
        %v864 = vld [vmem:[%s844 + $0x4c] sm:$0xf]
        %v865 = vld [vmem:[%s844 + $0x50] sm:$0xf]
        %v866 = vld [vmem:[%s844 + $0x54] sm:$0xf]
        %v867 = vld [vmem:[%s844 + $0x58] sm:$0xf]
        %v868 = vld [vmem:[%s844 + $0x5c] sm:$0xf]
        %v869 = vld [vmem:[%s844 + $0x60] sm:$0xf]
        %v870 = vld [vmem:[%s844 + $0x64] sm:$0xf]
        %v871 = vld [vmem:[%s844 + $0x68] sm:$0xf]
        %v872 = vld [vmem:[%s844 + $0x6c] sm:$0xf]
        %v873 = vld [vmem:[%s844 + $0x70] sm:$0xf]
        %v874 = vld [vmem:[%s844 + $0x74] sm:$0xf]
        %v875 = vld [vmem:[%s844 + $0x78] sm:$0xf]
        %v876 = vld [vmem:[%s844 + $0x7c] sm:$0xf]
        %v877 = vld [vmem:[%s844 + $0x80] sm:$0xf]
        %v878 = vld [vmem:[%s844 + $0x84] sm:$0xf]
        %v879 = vld [vmem:[%s844 + $0x88] sm:$0xf]
        %v880 = vld [vmem:[%s844 + $0x8c] sm:$0xf]
        %v881 = vld [vmem:[%s844 + $0x90] sm:$0xf]
        %v882 = vld [vmem:[%s844 + $0x94] sm:$0xf]
        %v883 = vld [vmem:[%s844 + $0x98] sm:$0xf]
        %v884 = vld [vmem:[%s844 + $0x9c] sm:$0xf]
        %v885 = vld [vmem:[%s844 + $0xa0] sm:$0xf]
        %v886 = vld [vmem:[%s844 + $0xa4] sm:$0xf]
        %v887 = vld [vmem:[%s844 + $0xa8] sm:$0xf]
        %v888 = vld [vmem:[%s844 + $0xac] sm:$0xf]
        %v889 = vld [vmem:[%s844 + $0xb0] sm:$0xf]
        %v890 = vld [vmem:[%s844 + $0xb4] sm:$0xf]
        %v891 = vld [vmem:[%s844 + $0xb8] sm:$0xf]
        %v892 = vld [vmem:[%s844 + $0xbc] sm:$0xf]
        %v893 = vld [vmem:[%s844 + $0xc0] sm:$0xf]
        %v894 = vld [vmem:[%s844 + $0xc4] sm:$0xf]
        %v895 = vld [vmem:[%s844 + $0xc8] sm:$0xf]
        %v896 = vld [vmem:[%s844 + $0xcc] sm:$0xf]
        %v897 = vld [vmem:[%s844 + $0xd0] sm:$0xf]
        %v898 = vld [vmem:[%s844 + $0xd4] sm:$0xf]
        %v899 = vld [vmem:[%s844 + $0xd8] sm:$0xf]
        %v900 = vld [vmem:[%s844 + $0xdc] sm:$0xf]
        %v901 = vld [vmem:[%s844 + $0xe0] sm:$0xf]
        %v902 = vld [vmem:[%s844 + $0xe4] sm:$0xf]
        %v903 = vld [vmem:[%s844 + $0xe8] sm:$0xf]
        %v904 = vld [vmem:[%s844 + $0xec] sm:$0xf]
        %v905 = vld [vmem:[%s844 + $0xf0] sm:$0xf]
        %v906 = vld [vmem:[%s844 + $0xf4] sm:$0xf]
        %v907 = vld [vmem:[%s844 + $0xf8] sm:$0xf]
        %v908 = vld [vmem:[%s844 + $0xfc] sm:$0xf]
        %v973 = vunpack.c.l.b16 %v845
        %v974 = vunpack.c.l.b16 %v846
        %v975 = vunpack.c.l.b16 %v847
        %v976 = vunpack.c.l.b16 %v848
        %v977 = vunpack.c.l.b16 %v849
        %v978 = vunpack.c.l.b16 %v850
        %v979 = vunpack.c.l.b16 %v851
        %v980 = vunpack.c.l.b16 %v852
        %v981 = vunpack.c.l.b16 %v853
        %v982 = vunpack.c.l.b16 %v854
        %v983 = vunpack.c.l.b16 %v855
        %v984 = vunpack.c.l.b16 %v856
        %v985 = vunpack.c.l.b16 %v857
        %v986 = vunpack.c.l.b16 %v858
        %v987 = vunpack.c.l.b16 %v859
        %v988 = vunpack.c.l.b16 %v860
        %v989 = vunpack.c.l.b16 %v861
        %v990 = vunpack.c.l.b16 %v862
        %v991 = vunpack.c.l.b16 %v863
        %v992 = vunpack.c.l.b16 %v864
        %v993 = vunpack.c.l.b16 %v865
        %v994 = vunpack.c.l.b16 %v866
        %v995 = vunpack.c.l.b16 %v867
        %v996 = vunpack.c.l.b16 %v868
        %v997 = vunpack.c.l.b16 %v869
        %v998 = vunpack.c.l.b16 %v870
        %v999 = vunpack.c.l.b16 %v871
        %v1000 = vunpack.c.l.b16 %v872
        %v1001 = vunpack.c.l.b16 %v873
        %v1002 = vunpack.c.l.b16 %v874
        %v1003 = vunpack.c.l.b16 %v875
        %v1004 = vunpack.c.l.b16 %v876
        %v1005 = vunpack.c.l.b16 %v877
        %v1006 = vunpack.c.l.b16 %v878
        %v1007 = vunpack.c.l.b16 %v879
        %v1008 = vunpack.c.l.b16 %v880
        %v1009 = vunpack.c.l.b16 %v881
        %v1010 = vunpack.c.l.b16 %v882
        %v1011 = vunpack.c.l.b16 %v883
        %v1012 = vunpack.c.l.b16 %v884
        %v1013 = vunpack.c.l.b16 %v885
        %v1014 = vunpack.c.l.b16 %v886
        %v1015 = vunpack.c.l.b16 %v887
        %v1016 = vunpack.c.l.b16 %v888
        %v1017 = vunpack.c.l.b16 %v889
        %v1018 = vunpack.c.l.b16 %v890
        %v1019 = vunpack.c.l.b16 %v891
        %v1020 = vunpack.c.l.b16 %v892
        %v1021 = vunpack.c.l.b16 %v893
        %v1022 = vunpack.c.l.b16 %v894
        %v1023 = vunpack.c.l.b16 %v895
        %v1024 = vunpack.c.l.b16 %v896
        %v1025 = vunpack.c.l.b16 %v897
        %v1026 = vunpack.c.l.b16 %v898
        %v1027 = vunpack.c.l.b16 %v899
        %v1028 = vunpack.c.l.b16 %v900
        %v1029 = vunpack.c.l.b16 %v901
        %v1030 = vunpack.c.l.b16 %v902
        %v1031 = vunpack.c.l.b16 %v903
        %v1032 = vunpack.c.l.b16 %v904
        %v1033 = vunpack.c.l.b16 %v905
        %v1034 = vunpack.c.l.b16 %v906
        %v1035 = vunpack.c.l.b16 %v907
        %v1036 = vunpack.c.l.b16 %v908
        %v1037 = vpack.c.b16 %v974, %v973
        %v1038 = vpack.c.b16 %v976, %v975
        %v1039 = vpack.c.b16 %v978, %v977
        %v1040 = vpack.c.b16 %v980, %v979
        %v1041 = vpack.c.b16 %v982, %v981
        %v1042 = vpack.c.b16 %v984, %v983
        %v1043 = vpack.c.b16 %v986, %v985
        %v1044 = vpack.c.b16 %v988, %v987
        %v1045 = vpack.c.b16 %v990, %v989
        %v1046 = vpack.c.b16 %v992, %v991
        %v1047 = vpack.c.b16 %v994, %v993
        %v1048 = vpack.c.b16 %v996, %v995
        %v1049 = vpack.c.b16 %v998, %v997
        %v1050 = vpack.c.b16 %v1000, %v999
        %v1051 = vpack.c.b16 %v1002, %v1001
        %v1052 = vpack.c.b16 %v1004, %v1003
        %v1053 = vpack.c.b16 %v1006, %v1005
        %v1054 = vpack.c.b16 %v1008, %v1007
        %v1055 = vpack.c.b16 %v1010, %v1009
        %v1056 = vpack.c.b16 %v1012, %v1011
        %v1057 = vpack.c.b16 %v1014, %v1013
        %v1058 = vpack.c.b16 %v1016, %v1015
        %v1059 = vpack.c.b16 %v1018, %v1017
        %v1060 = vpack.c.b16 %v1020, %v1019
        %v1061 = vpack.c.b16 %v1022, %v1021
        %v1062 = vpack.c.b16 %v1024, %v1023
        %v1063 = vpack.c.b16 %v1026, %v1025
        %v1064 = vpack.c.b16 %v1028, %v1027
        %v1065 = vpack.c.b16 %v1030, %v1029
        %v1066 = vpack.c.b16 %v1032, %v1031
        %v1067 = vpack.c.b16 %v1034, %v1033
        %v1068 = vpack.c.b16 %v1036, %v1035
        %1101 = vmatprep.subr.bf16.mxu0 0
        %1102 = vmatpush1.bf16.msra.mxu0 %v1044
        %1103 = vmatprep.subr.bf16.mxu0 0
        %1104 = vmatpush1.bf16.msra.mxu0 %v1043
        %1105 = vmatprep.subr.bf16.mxu0 0
        %1106 = vmatpush1.bf16.msra.mxu0 %v1042
        %1107 = vmatprep.subr.bf16.mxu0 0
        %1108 = vmatpush1.bf16.msra.mxu0 %v1041
        %1109 = vmatprep.subr.bf16.mxu0 0
        %1110 = vmatpush1.bf16.msra.mxu0 %v1040
        %1111 = vmatprep.subr.bf16.mxu0 0
        %1112 = vmatpush1.bf16.msra.mxu0 %v1039
        %1113 = vmatprep.subr.bf16.mxu0 0
        %1114 = vmatpush1.bf16.msra.mxu0 %v1038
        %1115 = vmatprep.subr.bf16.mxu0 0
        %1116 = vmatpush1.bf16.msra.mxu0 %v1037
        %1117 = vmatprep.subr.bf16.mxu0 0
        %1118 = vmatpush2.bf16.msra.mxu0 %v1052
        %1119 = vmatprep.subr.bf16.mxu0 0
        %1120 = vmatpush2.bf16.msra.mxu0 %v1051
        %1121 = vmatprep.subr.bf16.mxu0 0
        %1122 = vmatpush2.bf16.msra.mxu0 %v1050
        %1123 = vmatprep.subr.bf16.mxu0 0
        %1124 = vmatpush2.bf16.msra.mxu0 %v1049
        %1125 = vmatprep.subr.bf16.mxu0 0
        %1126 = vmatpush2.bf16.msra.mxu0 %v1048
        %1127 = vmatprep.subr.bf16.mxu0 0
        %1128 = vmatpush2.bf16.msra.mxu0 %v1047
        %1129 = vmatprep.subr.bf16.mxu0 0
        %1130 = vmatpush2.bf16.msra.mxu0 %v1046
        %1131 = vmatprep.subr.bf16.mxu0 0
        %1132 = vmatpush2.bf16.msra.mxu0 %v1045
        %1133 = vmatprep.mubr.bf16.mxu0 %v503
        %1134 = vmatmul.mubr.bf16.gmra.mxu0 %v502
        %v1135 = vpop.f32.mrf.mxu0
        %v1136 = vadd.f32 0.0, %v1135
        %v1137 = vpop.f32.mrf.mxu0
        %v1138 = vpop.f32.mrf.mxu0
        %v1139 = vadd.f32 0.0, %v1138
        %v1140 = vpop.f32.mrf.mxu0
        %1141 = vdwg.mxu0
        %1142 = vmatprep.subr.bf16.mxu0 0
        %1143 = vmatpush1.bf16.msra.mxu0 %v1060
        %1144 = vmatprep.subr.bf16.mxu0 0
        %1145 = vmatpush1.bf16.msra.mxu0 %v1059
        %1146 = vmatprep.subr.bf16.mxu0 0
        %1147 = vmatpush1.bf16.msra.mxu0 %v1058
        %1148 = vmatprep.subr.bf16.mxu0 0
        %1149 = vmatpush1.bf16.msra.mxu0 %v1057
        %1150 = vmatprep.subr.bf16.mxu0 0
        %1151 = vmatpush1.bf16.msra.mxu0 %v1056
        %1152 = vmatprep.subr.bf16.mxu0 0
        %1153 = vmatpush1.bf16.msra.mxu0 %v1055
        %1154 = vmatprep.subr.bf16.mxu0 0
        %1155 = vmatpush1.bf16.msra.mxu0 %v1054
        %1156 = vmatprep.subr.bf16.mxu0 0
        %1157 = vmatpush1.bf16.msra.mxu0 %v1053
        %1158 = vmatprep.subr.bf16.mxu0 0
        %1159 = vmatpush2.bf16.msra.mxu0 %v1068
        %1160 = vmatprep.subr.bf16.mxu0 0
        %1161 = vmatpush2.bf16.msra.mxu0 %v1067
        %1162 = vmatprep.subr.bf16.mxu0 0
        %1163 = vmatpush2.bf16.msra.mxu0 %v1066
        %1164 = vmatprep.subr.bf16.mxu0 0
        %1165 = vmatpush2.bf16.msra.mxu0 %v1065
        %1166 = vmatprep.subr.bf16.mxu0 0
        %1167 = vmatpush2.bf16.msra.mxu0 %v1064
        %1168 = vmatprep.subr.bf16.mxu0 0
        %1169 = vmatpush2.bf16.msra.mxu0 %v1063
        %1170 = vmatprep.subr.bf16.mxu0 0
        %1171 = vmatpush2.bf16.msra.mxu0 %v1062
        %1172 = vmatprep.subr.bf16.mxu0 0
        %1173 = vmatpush2.bf16.msra.mxu0 %v1061
        %1174 = vmatprep.mubr.bf16.mxu0 %v505
        %1175 = vmatmul.mubr.bf16.gmra.mxu0 %v504
        %v1176 = vpop.f32.mrf.mxu0
        %v1177 = vadd.f32 %v1136, %v1176
        %v1178 = vpop.f32.mrf.mxu0
        %v1179 = vpop.f32.mrf.mxu0
        %v1180 = vadd.f32 %v1139, %v1179
        %v1181 = vpop.f32.mrf.mxu0
        %1182 = vdwg.mxu0
        %s1183 = scalar_lea.vmem %s3, 512
        %v1184 = vld [vmem:[%s1183] sm:$0xf]
        %v1185 = vld [vmem:[%s1183 + $0x4] sm:$0xf]
        %v1186 = vld [vmem:[%s1183 + $0x8] sm:$0xf]
        %v1187 = vld [vmem:[%s1183 + $0xc] sm:$0xf]
        %v1188 = vld [vmem:[%s1183 + $0x10] sm:$0xf]
        %v1189 = vld [vmem:[%s1183 + $0x14] sm:$0xf]
        %v1190 = vld [vmem:[%s1183 + $0x18] sm:$0xf]
        %v1191 = vld [vmem:[%s1183 + $0x1c] sm:$0xf]
        %v1192 = vld [vmem:[%s1183 + $0x20] sm:$0xf]
        %v1193 = vld [vmem:[%s1183 + $0x24] sm:$0xf]
        %v1194 = vld [vmem:[%s1183 + $0x28] sm:$0xf]
        %v1195 = vld [vmem:[%s1183 + $0x2c] sm:$0xf]
        %v1196 = vld [vmem:[%s1183 + $0x30] sm:$0xf]
        %v1197 = vld [vmem:[%s1183 + $0x34] sm:$0xf]
        %v1198 = vld [vmem:[%s1183 + $0x38] sm:$0xf]
        %v1199 = vld [vmem:[%s1183 + $0x3c] sm:$0xf]
        %v1200 = vld [vmem:[%s1183 + $0x40] sm:$0xf]
        %v1201 = vld [vmem:[%s1183 + $0x44] sm:$0xf]
        %v1202 = vld [vmem:[%s1183 + $0x48] sm:$0xf]
        %v1203 = vld [vmem:[%s1183 + $0x4c] sm:$0xf]
        %v1204 = vld [vmem:[%s1183 + $0x50] sm:$0xf]
        %v1205 = vld [vmem:[%s1183 + $0x54] sm:$0xf]
        %v1206 = vld [vmem:[%s1183 + $0x58] sm:$0xf]
        %v1207 = vld [vmem:[%s1183 + $0x5c] sm:$0xf]
        %v1208 = vld [vmem:[%s1183 + $0x60] sm:$0xf]
        %v1209 = vld [vmem:[%s1183 + $0x64] sm:$0xf]
        %v1210 = vld [vmem:[%s1183 + $0x68] sm:$0xf]
        %v1211 = vld [vmem:[%s1183 + $0x6c] sm:$0xf]
        %v1212 = vld [vmem:[%s1183 + $0x70] sm:$0xf]
        %v1213 = vld [vmem:[%s1183 + $0x74] sm:$0xf]
        %v1214 = vld [vmem:[%s1183 + $0x78] sm:$0xf]
        %v1215 = vld [vmem:[%s1183 + $0x7c] sm:$0xf]
        %v1216 = vld [vmem:[%s1183 + $0x80] sm:$0xf]
        %v1217 = vld [vmem:[%s1183 + $0x84] sm:$0xf]
        %v1218 = vld [vmem:[%s1183 + $0x88] sm:$0xf]
        %v1219 = vld [vmem:[%s1183 + $0x8c] sm:$0xf]
        %v1220 = vld [vmem:[%s1183 + $0x90] sm:$0xf]
        %v1221 = vld [vmem:[%s1183 + $0x94] sm:$0xf]
        %v1222 = vld [vmem:[%s1183 + $0x98] sm:$0xf]
        %v1223 = vld [vmem:[%s1183 + $0x9c] sm:$0xf]
        %v1224 = vld [vmem:[%s1183 + $0xa0] sm:$0xf]
        %v1225 = vld [vmem:[%s1183 + $0xa4] sm:$0xf]
        %v1226 = vld [vmem:[%s1183 + $0xa8] sm:$0xf]
        %v1227 = vld [vmem:[%s1183 + $0xac] sm:$0xf]
        %v1228 = vld [vmem:[%s1183 + $0xb0] sm:$0xf]
        %v1229 = vld [vmem:[%s1183 + $0xb4] sm:$0xf]
        %v1230 = vld [vmem:[%s1183 + $0xb8] sm:$0xf]
        %v1231 = vld [vmem:[%s1183 + $0xbc] sm:$0xf]
        %v1232 = vld [vmem:[%s1183 + $0xc0] sm:$0xf]
        %v1233 = vld [vmem:[%s1183 + $0xc4] sm:$0xf]
        %v1234 = vld [vmem:[%s1183 + $0xc8] sm:$0xf]
        %v1235 = vld [vmem:[%s1183 + $0xcc] sm:$0xf]
        %v1236 = vld [vmem:[%s1183 + $0xd0] sm:$0xf]
        %v1237 = vld [vmem:[%s1183 + $0xd4] sm:$0xf]
        %v1238 = vld [vmem:[%s1183 + $0xd8] sm:$0xf]
        %v1239 = vld [vmem:[%s1183 + $0xdc] sm:$0xf]
        %v1240 = vld [vmem:[%s1183 + $0xe0] sm:$0xf]
        %v1241 = vld [vmem:[%s1183 + $0xe4] sm:$0xf]
        %v1242 = vld [vmem:[%s1183 + $0xe8] sm:$0xf]
        %v1243 = vld [vmem:[%s1183 + $0xec] sm:$0xf]
        %v1244 = vld [vmem:[%s1183 + $0xf0] sm:$0xf]
        %v1245 = vld [vmem:[%s1183 + $0xf4] sm:$0xf]
        %v1246 = vld [vmem:[%s1183 + $0xf8] sm:$0xf]
        %v1247 = vld [vmem:[%s1183 + $0xfc] sm:$0xf]
        %v1312 = vunpack.c.l.b16 %v1184
        %v1313 = vunpack.c.l.b16 %v1185
        %v1314 = vunpack.c.l.b16 %v1186
        %v1315 = vunpack.c.l.b16 %v1187
        %v1316 = vunpack.c.l.b16 %v1188
        %v1317 = vunpack.c.l.b16 %v1189
        %v1318 = vunpack.c.l.b16 %v1190
        %v1319 = vunpack.c.l.b16 %v1191
        %v1320 = vunpack.c.l.b16 %v1192
        %v1321 = vunpack.c.l.b16 %v1193
        %v1322 = vunpack.c.l.b16 %v1194
        %v1323 = vunpack.c.l.b16 %v1195
        %v1324 = vunpack.c.l.b16 %v1196
        %v1325 = vunpack.c.l.b16 %v1197
        %v1326 = vunpack.c.l.b16 %v1198
        %v1327 = vunpack.c.l.b16 %v1199
        %v1328 = vunpack.c.l.b16 %v1200
        %v1329 = vunpack.c.l.b16 %v1201
        %v1330 = vunpack.c.l.b16 %v1202
        %v1331 = vunpack.c.l.b16 %v1203
        %v1332 = vunpack.c.l.b16 %v1204
        %v1333 = vunpack.c.l.b16 %v1205
        %v1334 = vunpack.c.l.b16 %v1206
        %v1335 = vunpack.c.l.b16 %v1207
        %v1336 = vunpack.c.l.b16 %v1208
        %v1337 = vunpack.c.l.b16 %v1209
        %v1338 = vunpack.c.l.b16 %v1210
        %v1339 = vunpack.c.l.b16 %v1211
        %v1340 = vunpack.c.l.b16 %v1212
        %v1341 = vunpack.c.l.b16 %v1213
        %v1342 = vunpack.c.l.b16 %v1214
        %v1343 = vunpack.c.l.b16 %v1215
        %v1344 = vunpack.c.l.b16 %v1216
        %v1345 = vunpack.c.l.b16 %v1217
        %v1346 = vunpack.c.l.b16 %v1218
        %v1347 = vunpack.c.l.b16 %v1219
        %v1348 = vunpack.c.l.b16 %v1220
        %v1349 = vunpack.c.l.b16 %v1221
        %v1350 = vunpack.c.l.b16 %v1222
        %v1351 = vunpack.c.l.b16 %v1223
        %v1352 = vunpack.c.l.b16 %v1224
        %v1353 = vunpack.c.l.b16 %v1225
        %v1354 = vunpack.c.l.b16 %v1226
        %v1355 = vunpack.c.l.b16 %v1227
        %v1356 = vunpack.c.l.b16 %v1228
        %v1357 = vunpack.c.l.b16 %v1229
        %v1358 = vunpack.c.l.b16 %v1230
        %v1359 = vunpack.c.l.b16 %v1231
        %v1360 = vunpack.c.l.b16 %v1232
        %v1361 = vunpack.c.l.b16 %v1233
        %v1362 = vunpack.c.l.b16 %v1234
        %v1363 = vunpack.c.l.b16 %v1235
        %v1364 = vunpack.c.l.b16 %v1236
        %v1365 = vunpack.c.l.b16 %v1237
        %v1366 = vunpack.c.l.b16 %v1238
        %v1367 = vunpack.c.l.b16 %v1239
        %v1368 = vunpack.c.l.b16 %v1240
        %v1369 = vunpack.c.l.b16 %v1241
        %v1370 = vunpack.c.l.b16 %v1242
        %v1371 = vunpack.c.l.b16 %v1243
        %v1372 = vunpack.c.l.b16 %v1244
        %v1373 = vunpack.c.l.b16 %v1245
        %v1374 = vunpack.c.l.b16 %v1246
        %v1375 = vunpack.c.l.b16 %v1247
        %v1376 = vpack.c.b16 %v1313, %v1312
        %v1377 = vpack.c.b16 %v1315, %v1314
        %v1378 = vpack.c.b16 %v1317, %v1316
        %v1379 = vpack.c.b16 %v1319, %v1318
        %v1380 = vpack.c.b16 %v1321, %v1320
        %v1381 = vpack.c.b16 %v1323, %v1322
        %v1382 = vpack.c.b16 %v1325, %v1324
        %v1383 = vpack.c.b16 %v1327, %v1326
        %v1384 = vpack.c.b16 %v1329, %v1328
        %v1385 = vpack.c.b16 %v1331, %v1330
        %v1386 = vpack.c.b16 %v1333, %v1332
        %v1387 = vpack.c.b16 %v1335, %v1334
        %v1388 = vpack.c.b16 %v1337, %v1336
        %v1389 = vpack.c.b16 %v1339, %v1338
        %v1390 = vpack.c.b16 %v1341, %v1340
        %v1391 = vpack.c.b16 %v1343, %v1342
        %v1392 = vpack.c.b16 %v1345, %v1344
        %v1393 = vpack.c.b16 %v1347, %v1346
        %v1394 = vpack.c.b16 %v1349, %v1348
        %v1395 = vpack.c.b16 %v1351, %v1350
        %v1396 = vpack.c.b16 %v1353, %v1352
        %v1397 = vpack.c.b16 %v1355, %v1354
        %v1398 = vpack.c.b16 %v1357, %v1356
        %v1399 = vpack.c.b16 %v1359, %v1358
        %v1400 = vpack.c.b16 %v1361, %v1360
        %v1401 = vpack.c.b16 %v1363, %v1362
        %v1402 = vpack.c.b16 %v1365, %v1364
        %v1403 = vpack.c.b16 %v1367, %v1366
        %v1404 = vpack.c.b16 %v1369, %v1368
        %v1405 = vpack.c.b16 %v1371, %v1370
        %v1406 = vpack.c.b16 %v1373, %v1372
        %v1407 = vpack.c.b16 %v1375, %v1374
        %1440 = vmatprep.subr.bf16.mxu0 0
        %1441 = vmatpush1.bf16.msra.mxu0 %v1383
        %1442 = vmatprep.subr.bf16.mxu0 0
        %1443 = vmatpush1.bf16.msra.mxu0 %v1382
        %1444 = vmatprep.subr.bf16.mxu0 0
        %1445 = vmatpush1.bf16.msra.mxu0 %v1381
        %1446 = vmatprep.subr.bf16.mxu0 0
        %1447 = vmatpush1.bf16.msra.mxu0 %v1380
        %1448 = vmatprep.subr.bf16.mxu0 0
        %1449 = vmatpush1.bf16.msra.mxu0 %v1379
        %1450 = vmatprep.subr.bf16.mxu0 0
        %1451 = vmatpush1.bf16.msra.mxu0 %v1378
        %1452 = vmatprep.subr.bf16.mxu0 0
        %1453 = vmatpush1.bf16.msra.mxu0 %v1377
        %1454 = vmatprep.subr.bf16.mxu0 0
        %1455 = vmatpush1.bf16.msra.mxu0 %v1376
        %1456 = vmatprep.subr.bf16.mxu0 0
        %1457 = vmatpush2.bf16.msra.mxu0 %v1391
        %1458 = vmatprep.subr.bf16.mxu0 0
        %1459 = vmatpush2.bf16.msra.mxu0 %v1390
        %1460 = vmatprep.subr.bf16.mxu0 0
        %1461 = vmatpush2.bf16.msra.mxu0 %v1389
        %1462 = vmatprep.subr.bf16.mxu0 0
        %1463 = vmatpush2.bf16.msra.mxu0 %v1388
        %1464 = vmatprep.subr.bf16.mxu0 0
        %1465 = vmatpush2.bf16.msra.mxu0 %v1387
        %1466 = vmatprep.subr.bf16.mxu0 0
        %1467 = vmatpush2.bf16.msra.mxu0 %v1386
        %1468 = vmatprep.subr.bf16.mxu0 0
        %1469 = vmatpush2.bf16.msra.mxu0 %v1385
        %1470 = vmatprep.subr.bf16.mxu0 0
        %1471 = vmatpush2.bf16.msra.mxu0 %v1384
        %1472 = vmatprep.mubr.bf16.mxu0 %v503
        %1473 = vmatmul.mubr.bf16.gmra.mxu0 %v502
        %v1474 = vpop.f32.mrf.mxu0
        %v1475 = vadd.f32 0.0, %v1474
        %v1476 = vpop.f32.mrf.mxu0
        %v1477 = vpop.f32.mrf.mxu0
        %v1478 = vadd.f32 0.0, %v1477
        %v1479 = vpop.f32.mrf.mxu0
        %1480 = vdwg.mxu0
        %1481 = vmatprep.subr.bf16.mxu0 0
        %1482 = vmatpush1.bf16.msra.mxu0 %v1399
        %1483 = vmatprep.subr.bf16.mxu0 0
        %1484 = vmatpush1.bf16.msra.mxu0 %v1398
        %1485 = vmatprep.subr.bf16.mxu0 0
        %1486 = vmatpush1.bf16.msra.mxu0 %v1397
        %1487 = vmatprep.subr.bf16.mxu0 0
        %1488 = vmatpush1.bf16.msra.mxu0 %v1396
        %1489 = vmatprep.subr.bf16.mxu0 0
        %1490 = vmatpush1.bf16.msra.mxu0 %v1395
        %1491 = vmatprep.subr.bf16.mxu0 0
        %1492 = vmatpush1.bf16.msra.mxu0 %v1394
        %1493 = vmatprep.subr.bf16.mxu0 0
        %1494 = vmatpush1.bf16.msra.mxu0 %v1393
        %1495 = vmatprep.subr.bf16.mxu0 0
        %1496 = vmatpush1.bf16.msra.mxu0 %v1392
        %1497 = vmatprep.subr.bf16.mxu0 0
        %1498 = vmatpush2.bf16.msra.mxu0 %v1407
        %1499 = vmatprep.subr.bf16.mxu0 0
        %1500 = vmatpush2.bf16.msra.mxu0 %v1406
        %1501 = vmatprep.subr.bf16.mxu0 0
        %1502 = vmatpush2.bf16.msra.mxu0 %v1405
        %1503 = vmatprep.subr.bf16.mxu0 0
        %1504 = vmatpush2.bf16.msra.mxu0 %v1404
        %1505 = vmatprep.subr.bf16.mxu0 0
        %1506 = vmatpush2.bf16.msra.mxu0 %v1403
        %1507 = vmatprep.subr.bf16.mxu0 0
        %1508 = vmatpush2.bf16.msra.mxu0 %v1402
        %1509 = vmatprep.subr.bf16.mxu0 0
        %1510 = vmatpush2.bf16.msra.mxu0 %v1401
        %1511 = vmatprep.subr.bf16.mxu0 0
        %1512 = vmatpush2.bf16.msra.mxu0 %v1400
        %1513 = vmatprep.mubr.bf16.mxu0 %v505
        %1514 = vmatmul.mubr.bf16.gmra.mxu0 %v504
        %v1515 = vpop.f32.mrf.mxu0
        %v1516 = vadd.f32 %v1475, %v1515
        %v1517 = vpop.f32.mrf.mxu0
        %v1518 = vpop.f32.mrf.mxu0
        %v1519 = vadd.f32 %v1478, %v1518
        %v1520 = vpop.f32.mrf.mxu0
        %1521 = vdwg.mxu0
        %s1522 = scalar_lea.vmem %s3, 768
        %v1523 = vld [vmem:[%s1522] sm:$0xf]
        %v1524 = vld [vmem:[%s1522 + $0x4] sm:$0xf]
        %v1525 = vld [vmem:[%s1522 + $0x8] sm:$0xf]
        %v1526 = vld [vmem:[%s1522 + $0xc] sm:$0xf]
        %v1527 = vld [vmem:[%s1522 + $0x10] sm:$0xf]
        %v1528 = vld [vmem:[%s1522 + $0x14] sm:$0xf]
        %v1529 = vld [vmem:[%s1522 + $0x18] sm:$0xf]
        %v1530 = vld [vmem:[%s1522 + $0x1c] sm:$0xf]
        %v1531 = vld [vmem:[%s1522 + $0x20] sm:$0xf]
        %v1532 = vld [vmem:[%s1522 + $0x24] sm:$0xf]
        %v1533 = vld [vmem:[%s1522 + $0x28] sm:$0xf]
        %v1534 = vld [vmem:[%s1522 + $0x2c] sm:$0xf]
        %v1535 = vld [vmem:[%s1522 + $0x30] sm:$0xf]
        %v1536 = vld [vmem:[%s1522 + $0x34] sm:$0xf]
        %v1537 = vld [vmem:[%s1522 + $0x38] sm:$0xf]
        %v1538 = vld [vmem:[%s1522 + $0x3c] sm:$0xf]
        %v1539 = vld [vmem:[%s1522 + $0x40] sm:$0xf]
        %v1540 = vld [vmem:[%s1522 + $0x44] sm:$0xf]
        %v1541 = vld [vmem:[%s1522 + $0x48] sm:$0xf]
        %v1542 = vld [vmem:[%s1522 + $0x4c] sm:$0xf]
        %v1543 = vld [vmem:[%s1522 + $0x50] sm:$0xf]
        %v1544 = vld [vmem:[%s1522 + $0x54] sm:$0xf]
        %v1545 = vld [vmem:[%s1522 + $0x58] sm:$0xf]
        %v1546 = vld [vmem:[%s1522 + $0x5c] sm:$0xf]
        %v1547 = vld [vmem:[%s1522 + $0x60] sm:$0xf]
        %v1548 = vld [vmem:[%s1522 + $0x64] sm:$0xf]
        %v1549 = vld [vmem:[%s1522 + $0x68] sm:$0xf]
        %v1550 = vld [vmem:[%s1522 + $0x6c] sm:$0xf]
        %v1551 = vld [vmem:[%s1522 + $0x70] sm:$0xf]
        %v1552 = vld [vmem:[%s1522 + $0x74] sm:$0xf]
        %v1553 = vld [vmem:[%s1522 + $0x78] sm:$0xf]
        %v1554 = vld [vmem:[%s1522 + $0x7c] sm:$0xf]
        %v1555 = vld [vmem:[%s1522 + $0x80] sm:$0xf]
        %v1556 = vld [vmem:[%s1522 + $0x84] sm:$0xf]
        %v1557 = vld [vmem:[%s1522 + $0x88] sm:$0xf]
        %v1558 = vld [vmem:[%s1522 + $0x8c] sm:$0xf]
        %v1559 = vld [vmem:[%s1522 + $0x90] sm:$0xf]
        %v1560 = vld [vmem:[%s1522 + $0x94] sm:$0xf]
        %v1561 = vld [vmem:[%s1522 + $0x98] sm:$0xf]
        %v1562 = vld [vmem:[%s1522 + $0x9c] sm:$0xf]
        %v1563 = vld [vmem:[%s1522 + $0xa0] sm:$0xf]
        %v1564 = vld [vmem:[%s1522 + $0xa4] sm:$0xf]
        %v1565 = vld [vmem:[%s1522 + $0xa8] sm:$0xf]
        %v1566 = vld [vmem:[%s1522 + $0xac] sm:$0xf]
        %v1567 = vld [vmem:[%s1522 + $0xb0] sm:$0xf]
        %v1568 = vld [vmem:[%s1522 + $0xb4] sm:$0xf]
        %v1569 = vld [vmem:[%s1522 + $0xb8] sm:$0xf]
        %v1570 = vld [vmem:[%s1522 + $0xbc] sm:$0xf]
        %v1571 = vld [vmem:[%s1522 + $0xc0] sm:$0xf]
        %v1572 = vld [vmem:[%s1522 + $0xc4] sm:$0xf]
        %v1573 = vld [vmem:[%s1522 + $0xc8] sm:$0xf]
        %v1574 = vld [vmem:[%s1522 + $0xcc] sm:$0xf]
        %v1575 = vld [vmem:[%s1522 + $0xd0] sm:$0xf]
        %v1576 = vld [vmem:[%s1522 + $0xd4] sm:$0xf]
        %v1577 = vld [vmem:[%s1522 + $0xd8] sm:$0xf]
        %v1578 = vld [vmem:[%s1522 + $0xdc] sm:$0xf]
        %v1579 = vld [vmem:[%s1522 + $0xe0] sm:$0xf]
        %v1580 = vld [vmem:[%s1522 + $0xe4] sm:$0xf]
        %v1581 = vld [vmem:[%s1522 + $0xe8] sm:$0xf]
        %v1582 = vld [vmem:[%s1522 + $0xec] sm:$0xf]
        %v1583 = vld [vmem:[%s1522 + $0xf0] sm:$0xf]
        %v1584 = vld [vmem:[%s1522 + $0xf4] sm:$0xf]
        %v1585 = vld [vmem:[%s1522 + $0xf8] sm:$0xf]
        %v1586 = vld [vmem:[%s1522 + $0xfc] sm:$0xf]
        %v1651 = vunpack.c.l.b16 %v1523
        %v1652 = vunpack.c.l.b16 %v1524
        %v1653 = vunpack.c.l.b16 %v1525
        %v1654 = vunpack.c.l.b16 %v1526
        %v1655 = vunpack.c.l.b16 %v1527
        %v1656 = vunpack.c.l.b16 %v1528
        %v1657 = vunpack.c.l.b16 %v1529
        %v1658 = vunpack.c.l.b16 %v1530
        %v1659 = vunpack.c.l.b16 %v1531
        %v1660 = vunpack.c.l.b16 %v1532
        %v1661 = vunpack.c.l.b16 %v1533
        %v1662 = vunpack.c.l.b16 %v1534
        %v1663 = vunpack.c.l.b16 %v1535
        %v1664 = vunpack.c.l.b16 %v1536
        %v1665 = vunpack.c.l.b16 %v1537
        %v1666 = vunpack.c.l.b16 %v1538
        %v1667 = vunpack.c.l.b16 %v1539
        %v1668 = vunpack.c.l.b16 %v1540
        %v1669 = vunpack.c.l.b16 %v1541
        %v1670 = vunpack.c.l.b16 %v1542
        %v1671 = vunpack.c.l.b16 %v1543
        %v1672 = vunpack.c.l.b16 %v1544
        %v1673 = vunpack.c.l.b16 %v1545
        %v1674 = vunpack.c.l.b16 %v1546
        %v1675 = vunpack.c.l.b16 %v1547
        %v1676 = vunpack.c.l.b16 %v1548
        %v1677 = vunpack.c.l.b16 %v1549
        %v1678 = vunpack.c.l.b16 %v1550
        %v1679 = vunpack.c.l.b16 %v1551
        %v1680 = vunpack.c.l.b16 %v1552
        %v1681 = vunpack.c.l.b16 %v1553
        %v1682 = vunpack.c.l.b16 %v1554
        %v1683 = vunpack.c.l.b16 %v1555
        %v1684 = vunpack.c.l.b16 %v1556
        %v1685 = vunpack.c.l.b16 %v1557
        %v1686 = vunpack.c.l.b16 %v1558
        %v1687 = vunpack.c.l.b16 %v1559
        %v1688 = vunpack.c.l.b16 %v1560
        %v1689 = vunpack.c.l.b16 %v1561
        %v1690 = vunpack.c.l.b16 %v1562
        %v1691 = vunpack.c.l.b16 %v1563
        %v1692 = vunpack.c.l.b16 %v1564
        %v1693 = vunpack.c.l.b16 %v1565
        %v1694 = vunpack.c.l.b16 %v1566
        %v1695 = vunpack.c.l.b16 %v1567
        %v1696 = vunpack.c.l.b16 %v1568
        %v1697 = vunpack.c.l.b16 %v1569
        %v1698 = vunpack.c.l.b16 %v1570
        %v1699 = vunpack.c.l.b16 %v1571
        %v1700 = vunpack.c.l.b16 %v1572
        %v1701 = vunpack.c.l.b16 %v1573
        %v1702 = vunpack.c.l.b16 %v1574
        %v1703 = vunpack.c.l.b16 %v1575
        %v1704 = vunpack.c.l.b16 %v1576
        %v1705 = vunpack.c.l.b16 %v1577
        %v1706 = vunpack.c.l.b16 %v1578
        %v1707 = vunpack.c.l.b16 %v1579
        %v1708 = vunpack.c.l.b16 %v1580
        %v1709 = vunpack.c.l.b16 %v1581
        %v1710 = vunpack.c.l.b16 %v1582
        %v1711 = vunpack.c.l.b16 %v1583
        %v1712 = vunpack.c.l.b16 %v1584
        %v1713 = vunpack.c.l.b16 %v1585
        %v1714 = vunpack.c.l.b16 %v1586
        %v1715 = vpack.c.b16 %v1652, %v1651
        %v1716 = vpack.c.b16 %v1654, %v1653
        %v1717 = vpack.c.b16 %v1656, %v1655
        %v1718 = vpack.c.b16 %v1658, %v1657
        %v1719 = vpack.c.b16 %v1660, %v1659
        %v1720 = vpack.c.b16 %v1662, %v1661
        %v1721 = vpack.c.b16 %v1664, %v1663
        %v1722 = vpack.c.b16 %v1666, %v1665
        %v1723 = vpack.c.b16 %v1668, %v1667
        %v1724 = vpack.c.b16 %v1670, %v1669
        %v1725 = vpack.c.b16 %v1672, %v1671
        %v1726 = vpack.c.b16 %v1674, %v1673
        %v1727 = vpack.c.b16 %v1676, %v1675
        %v1728 = vpack.c.b16 %v1678, %v1677
        %v1729 = vpack.c.b16 %v1680, %v1679
        %v1730 = vpack.c.b16 %v1682, %v1681
        %v1731 = vpack.c.b16 %v1684, %v1683
        %v1732 = vpack.c.b16 %v1686, %v1685
        %v1733 = vpack.c.b16 %v1688, %v1687
        %v1734 = vpack.c.b16 %v1690, %v1689
        %v1735 = vpack.c.b16 %v1692, %v1691
        %v1736 = vpack.c.b16 %v1694, %v1693
        %v1737 = vpack.c.b16 %v1696, %v1695
        %v1738 = vpack.c.b16 %v1698, %v1697
        %v1739 = vpack.c.b16 %v1700, %v1699
        %v1740 = vpack.c.b16 %v1702, %v1701
        %v1741 = vpack.c.b16 %v1704, %v1703
        %v1742 = vpack.c.b16 %v1706, %v1705
        %v1743 = vpack.c.b16 %v1708, %v1707
        %v1744 = vpack.c.b16 %v1710, %v1709
        %v1745 = vpack.c.b16 %v1712, %v1711
        %v1746 = vpack.c.b16 %v1714, %v1713
        %1779 = vmatprep.subr.bf16.mxu0 0
        %1780 = vmatpush1.bf16.msra.mxu0 %v1722
        %1781 = vmatprep.subr.bf16.mxu0 0
        %1782 = vmatpush1.bf16.msra.mxu0 %v1721
        %1783 = vmatprep.subr.bf16.mxu0 0
        %1784 = vmatpush1.bf16.msra.mxu0 %v1720
        %1785 = vmatprep.subr.bf16.mxu0 0
        %1786 = vmatpush1.bf16.msra.mxu0 %v1719
        %1787 = vmatprep.subr.bf16.mxu0 0
        %1788 = vmatpush1.bf16.msra.mxu0 %v1718
        %1789 = vmatprep.subr.bf16.mxu0 0
        %1790 = vmatpush1.bf16.msra.mxu0 %v1717
        %1791 = vmatprep.subr.bf16.mxu0 0
        %1792 = vmatpush1.bf16.msra.mxu0 %v1716
        %1793 = vmatprep.subr.bf16.mxu0 0
        %1794 = vmatpush1.bf16.msra.mxu0 %v1715
        %1795 = vmatprep.subr.bf16.mxu0 0
        %1796 = vmatpush2.bf16.msra.mxu0 %v1730
        %1797 = vmatprep.subr.bf16.mxu0 0
        %1798 = vmatpush2.bf16.msra.mxu0 %v1729
        %1799 = vmatprep.subr.bf16.mxu0 0
        %1800 = vmatpush2.bf16.msra.mxu0 %v1728
        %1801 = vmatprep.subr.bf16.mxu0 0
        %1802 = vmatpush2.bf16.msra.mxu0 %v1727
        %1803 = vmatprep.subr.bf16.mxu0 0
        %1804 = vmatpush2.bf16.msra.mxu0 %v1726
        %1805 = vmatprep.subr.bf16.mxu0 0
        %1806 = vmatpush2.bf16.msra.mxu0 %v1725
        %1807 = vmatprep.subr.bf16.mxu0 0
        %1808 = vmatpush2.bf16.msra.mxu0 %v1724
        %1809 = vmatprep.subr.bf16.mxu0 0
        %1810 = vmatpush2.bf16.msra.mxu0 %v1723
        %1811 = vmatprep.mubr.bf16.mxu0 %v503
        %1812 = vmatmul.mubr.bf16.gmra.mxu0 %v502
        %v1813 = vpop.f32.mrf.mxu0
        %v1814 = vadd.f32 0.0, %v1813
        %v1815 = vpop.f32.mrf.mxu0
        %v1816 = vpop.f32.mrf.mxu0
        %v1817 = vadd.f32 0.0, %v1816
        %v1818 = vpop.f32.mrf.mxu0
        %1819 = vdwg.mxu0
        %1820 = vmatprep.subr.bf16.mxu0 0
        %1821 = vmatpush1.bf16.msra.mxu0 %v1738
        %1822 = vmatprep.subr.bf16.mxu0 0
        %1823 = vmatpush1.bf16.msra.mxu0 %v1737
        %1824 = vmatprep.subr.bf16.mxu0 0
        %1825 = vmatpush1.bf16.msra.mxu0 %v1736
        %1826 = vmatprep.subr.bf16.mxu0 0
        %1827 = vmatpush1.bf16.msra.mxu0 %v1735
        %1828 = vmatprep.subr.bf16.mxu0 0
        %1829 = vmatpush1.bf16.msra.mxu0 %v1734
        %1830 = vmatprep.subr.bf16.mxu0 0
        %1831 = vmatpush1.bf16.msra.mxu0 %v1733
        %1832 = vmatprep.subr.bf16.mxu0 0
        %1833 = vmatpush1.bf16.msra.mxu0 %v1732
        %1834 = vmatprep.subr.bf16.mxu0 0
        %1835 = vmatpush1.bf16.msra.mxu0 %v1731
        %1836 = vmatprep.subr.bf16.mxu0 0
        %1837 = vmatpush2.bf16.msra.mxu0 %v1746
        %1838 = vmatprep.subr.bf16.mxu0 0
        %1839 = vmatpush2.bf16.msra.mxu0 %v1745
        %1840 = vmatprep.subr.bf16.mxu0 0
        %1841 = vmatpush2.bf16.msra.mxu0 %v1744
        %1842 = vmatprep.subr.bf16.mxu0 0
        %1843 = vmatpush2.bf16.msra.mxu0 %v1743
        %1844 = vmatprep.subr.bf16.mxu0 0
        %1845 = vmatpush2.bf16.msra.mxu0 %v1742
        %1846 = vmatprep.subr.bf16.mxu0 0
        %1847 = vmatpush2.bf16.msra.mxu0 %v1741
        %1848 = vmatprep.subr.bf16.mxu0 0
        %1849 = vmatpush2.bf16.msra.mxu0 %v1740
        %1850 = vmatprep.subr.bf16.mxu0 0
        %1851 = vmatpush2.bf16.msra.mxu0 %v1739
        %1852 = vmatprep.mubr.bf16.mxu0 %v505
        %1853 = vmatmul.mubr.bf16.gmra.mxu0 %v504
        %v1854 = vpop.f32.mrf.mxu0
        %v1855 = vadd.f32 %v1814, %v1854
        %v1856 = vpop.f32.mrf.mxu0
        %v1857 = vpop.f32.mrf.mxu0
        %v1858 = vadd.f32 %v1817, %v1857
        %v1859 = vpop.f32.mrf.mxu0
        %1860 = vdwg.mxu0
        %v1861 = vmax.f32 %v838, %v1177
        %v1862 = vmax.f32 %v841, %v1180
        %v1863 = vmax.f32 %v1516, %v1855
        %v1864 = vmax.f32 %v1519, %v1858
        %v1865 = vmax.f32 %v1861, %v1863
        %v1866 = vmax.f32 %v1862, %v1864
        %v1867 = vpack.c.bf16 %v1866, %v1865
        %v1869 = vunpack.c.l.b16 %v1867
        %v1870 = vunpack.c.h.b16 %v1867
        %v1871 = vpack.c.b16 %v1869, %v1869
        %v1872 = vpack.c.b16 %v1870, %v1870
        %1875 = vst [vmem:[%s245] sm:$0xf] %v1871
        %1876 = vst [vmem:[%s245 + $0x4] sm:$0xf] %v1872
        %s1877 = sand.u32 %s112, 1
        %s1878 = sand.u32 %s112, 1
        %s1879 = smul.addr %s1878, 8
        %s1880 = scalar_lea.vmem [#allocation3], %s1879
        // Predicated region
        $region60: #{mini_model_forward.8} parent=54 // pred_check
          %p1881 = pneg %p122
        $region61: #{mini_model_forward.8} parent=54 // pred_check_branch
          %1883 = sbr.rel (%p1881) target = $region63
        $region62: #{mini_model_forward.8} parent=54 // pred_region
          %s1884 = smul.addr %s15, 4
          %s1885 = scalar_lea.vmem %s4, %s1884
          // Predicated region
          $region64: #{mini_model_forward.8} parent=62 // pred_check
            _
          $region65: #{mini_model_forward.8} parent=62 // pred_check_branch
            %1887 = sbr.rel (0) target = $region67
          $region66: #{mini_model_forward.8} parent=62 // pred_region
            // Predicated region
            $region68: #{mini_model_forward.8} parent=66 // pred_check
              _
            $region69: #{mini_model_forward.8} parent=66 // pred_check_branch
              %1889 = sbr.rel target = $region71
            $region70: #{mini_model_forward.8} parent=66 // pred_region
              // Predicated region
              $region83: #{mini_model_forward.8} parent=70 // pred_check
                _
              $region84: #{mini_model_forward.8} parent=70 // pred_check_branch
                %1907 = sbr.rel (0) target = $region86
              $region85: #{mini_model_forward.8} parent=70 // pred_region
                loop: start=0, step=1, limit=1
                $region87: #{mini_model_forward.8} parent=85 // loop_pre_header
                  _
                $region88: #{mini_model_forward.8} parent=85 // loop_header
                  %s1909 = sphi 0, %s1913
                  %p1910 = scmp.ge.s32.totalorder %s1909, 1
                  %s1914 = sphi %s1880, %s1880
                  %s1915 = sphi %s1885, %s1885
                $region89: #{mini_model_forward.8} parent=85 // loop_header_branch
                  %1912 = sbr.rel (%p1910) target = $region93
                $region90: #{mini_model_forward.8} parent=85 // loop_body
                  _
                $region91: #{mini_model_forward.8} parent=85 // loop_footer
                  %s1913 = sadd.s32 1, %s1909
                $region92: #{mini_model_forward.8} parent=85 // loop_footer_branch
                  %1908 = sbr.rel target = $region88
                $region93: #{mini_model_forward.8} parent=85 // loop_exit
                  _
                %s1917 = ssub.s32 16, 1
                loop: start=0, step=1, limit=1
                $region94: #{mini_model_forward.8} parent=85 // loop_pre_header
                  _
                $region95: #{mini_model_forward.8} parent=85 // loop_header
                  %s1919 = sphi 0, %s1923
                  %p1920 = scmp.ge.s32.totalorder %s1919, 1
                  %s1924 = sphi %s1880, %s1880
                  %s1925 = sphi %s1885, %s1885
                $region96: #{mini_model_forward.8} parent=85 // loop_header_branch
                  %1922 = sbr.rel (%p1920) target = $region100
                $region97: #{mini_model_forward.8} parent=85 // loop_body
                  %v1926 = vld [vmem:[%s1924] sm:%s1917]
                  %1927 = vst [vmem:[%s1925] sm:%s1917] %v1926
                  %v1928 = vld [vmem:[%s1924 + $0x4] sm:%s1917]
                  %1929 = vst [vmem:[%s1925 + $0x10] sm:%s1917] %v1928
                $region98: #{mini_model_forward.8} parent=85 // loop_footer
                  %s1923 = sadd.s32 1, %s1919
                $region99: #{mini_model_forward.8} parent=85 // loop_footer_branch
                  %1918 = sbr.rel target = $region95
                $region100: #{mini_model_forward.8} parent=85 // loop_exit
                  _
              $region86: #{mini_model_forward.8} parent=70 // pred_fallthru
                _
            $region71: #{mini_model_forward.8} parent=66 // pred_fallthru
              _
            // Predicated region
            $region72: #{mini_model_forward.8} parent=66 // pred_check
              _
            $region73: #{mini_model_forward.8} parent=66 // pred_check_branch
              %1891 = sbr.rel (0) target = $region75
            $region74: #{mini_model_forward.8} parent=66 // pred_region
              %s1893 = ssub.s32 16, 1
              loop: start=0, step=1, limit=1
              $region76: #{mini_model_forward.8} parent=74 // loop_pre_header
                _
              $region77: #{mini_model_forward.8} parent=74 // loop_header
                %s1895 = sphi 0, %s1899
                %p1896 = scmp.ge.s32.totalorder %s1895, 1
                %s1900 = sphi %s1880, %s1880
                %s1901 = sphi %s1885, %s1885
              $region78: #{mini_model_forward.8} parent=74 // loop_header_branch
                %1898 = sbr.rel (%p1896) target = $region82
              $region79: #{mini_model_forward.8} parent=74 // loop_body
                %v1902 = vld [vmem:[%s1900] sm:%s1893]
                %1903 = vst [vmem:[%s1901] sm:%s1893] %v1902
                %v1904 = vld [vmem:[%s1900 + $0x4] sm:%s1893]
                %1905 = vst [vmem:[%s1901 + $0x10] sm:%s1893] %v1904
              $region80: #{mini_model_forward.8} parent=74 // loop_footer
                %s1899 = sadd.s32 1, %s1895
              $region81: #{mini_model_forward.8} parent=74 // loop_footer_branch
                %1894 = sbr.rel target = $region77
              $region82: #{mini_model_forward.8} parent=74 // loop_exit
                _
            $region75: #{mini_model_forward.8} parent=66 // pred_fallthru
              _
          $region67: #{mini_model_forward.8} parent=62 // pred_fallthru
            _
          %1930 = vnop
        $region63: #{mini_model_forward.8} parent=54 // pred_fallthru
          _
      $region55: #{mini_model_forward.8} parent=5 // pred_fallthru
        _
      %p1931 = scmp.le.s32.totalorder 2, %s10
      // Predicated region
      $region101: #{mini_model_forward.8} parent=5 // pred_check
        %p1932 = pneg %p1931
      $region102: #{mini_model_forward.8} parent=5 // pred_check_branch
        %1934 = sbr.rel (%p1932) target = $region104
      $region103: #{mini_model_forward.8} parent=5 // pred_region
        %s1935 = ssub.s32 %s10, 2
        // Predicated region
        $region105: #{mini_model_forward.8} parent=103 // pred_check
          %p1936 = pneg %p128
        $region106: #{mini_model_forward.8} parent=103 // pred_check_branch
          %1938 = sbr.rel (%p1936) target = $region108
        $region107: #{mini_model_forward.8} parent=103 // pred_region
          %s1939 = sand.u32 %s113, 1
          %s1940 = sand.u32 %s113, 1
          %s1941 = smul.addr %s1940, 8
          %s1942 = scalar_lea.vmem [#allocation3], %s1941
        $region108: #{mini_model_forward.8} parent=103 // pred_fallthru
          _
      $region104: #{mini_model_forward.8} parent=5 // pred_fallthru
        _
    $region6: #{mini_model_forward.8} parent=1 // loop_footer
      %s14 = sadd.s32 1, %s10
    $region7: #{mini_model_forward.8} parent=1 // loop_footer_branch
      %9 = sbr.rel target = $region3
    $region8: #{mini_model_forward.8} parent=1 // loop_exit
      _

// kernel: mini_model_forward.9
$region0: #{mini_model_forward.9}
  #allocation0 [shape = 'u32[]', space=smem, size = 0x4, offset = 0x4, fixed_abs, tag = 'smem constant byte address 0x4 - core index']
  #allocation1 [shape = 'u32[144,128]{1,0:T(1,128)}', space=vmem, size = 0x12000, scoped, tag = 'internal scratch']
  %s0 = inlined_call_operand.vmem [shape: bf16[32,16], index: 0, kind: input, shape index: {}]
  %s1 = inlined_call_operand.vmem [shape: bf16[16,512], index: 1, kind: input, shape index: {}]
  %s2 = inlined_call_operand.vmem [shape: f32[32,1], index: 2, kind: input, shape index: {}]
  %s3 = inlined_call_operand.vmem [shape: bf16[4,512,128], index: 3, kind: input, shape index: {}]
  %s4 = inlined_call_operand.vmem [shape: bf16[32,128], index: 4, kind: output, shape index: {}]
  %s5 = sld [smem:[#allocation0]]
  $region26: #{mini_model_forward.9} parent=0
    _
  %s7 = ssub.s32 1, %s5
  %s8 = scalar_select 0, %s7, %s5
  // Predicated region
  $region2: #{mini_model_forward.9} parent=0 // pred_check
    _
  $region3: #{mini_model_forward.9} parent=0 // pred_check_branch
    %10 = sbr.rel (0) target = $region5
  $region4: #{mini_model_forward.9} parent=0 // pred_region
    _
  $region5: #{mini_model_forward.9} parent=0 // pred_fallthru
    _
  // Predicated region
  $region6: #{mini_model_forward.9} parent=0 // pred_check
    _
  $region7: #{mini_model_forward.9} parent=0 // pred_check_branch
    %12 = sbr.rel (0) target = $region9
  $region8: #{mini_model_forward.9} parent=0 // pred_region
    _
  $region9: #{mini_model_forward.9} parent=0 // pred_fallthru
    _
  // Predicated region
  $region10: #{mini_model_forward.9} parent=0 // pred_check
    _
  $region11: #{mini_model_forward.9} parent=0 // pred_check_branch
    %14 = sbr.rel (0) target = $region13
  $region12: #{mini_model_forward.9} parent=0 // pred_region
    _
  $region13: #{mini_model_forward.9} parent=0 // pred_fallthru
    _
  // Predicated region
  $region14: #{mini_model_forward.9} parent=0 // pred_check
    _
  $region15: #{mini_model_forward.9} parent=0 // pred_check_branch
    %16 = sbr.rel (0) target = $region17
  $region16: #{mini_model_forward.9} parent=0 // pred_region
    _
  $region17: #{mini_model_forward.9} parent=0 // pred_fallthru
    _
  %v18 = vld [vmem:[%s0] sm:$0xf]
  %v19 = vld [vmem:[%s0 + $0x4] sm:$0xf]
  %v20 = vld [vmem:[%s0 + $0x8] sm:$0xf]
  %v21 = vld [vmem:[%s0 + $0xc] sm:$0xf]
  %v22 = vld [vmem:[%s1] sm:$0xff]
  %v23 = vld [vmem:[%s1 + $0x8] sm:$0xff]
  %v24 = vld [vmem:[%s1 + $0x10] sm:$0xff]
  %v25 = vld [vmem:[%s1 + $0x18] sm:$0xff]
  %v26 = vld [vmem:[%s2] sm:$0xff]
  %v27 = vld [vmem:[%s2 + $0x8] sm:$0xff]
  %v28 = vld [vmem:[%s2 + $0x10] sm:$0xff]
  %v29 = vld [vmem:[%s2 + $0x18] sm:$0xff]
  %31 = vset.pattern.permute.xlu0 0
  %32 = vperm.xlu0 %31, %v26
  %v33 = vpop.permute.xlu0 %32
  %36 = vset.pattern.permute.xlu0 0
  %37 = vperm.xlu0 %36, %v27
  %v38 = vpop.permute.xlu0 %37
  %41 = vset.pattern.permute.xlu0 0
  %42 = vperm.xlu0 %41, %v28
  %v43 = vpop.permute.xlu0 %42
  %46 = vset.pattern.permute.xlu0 0
  %47 = vperm.xlu0 %46, %v29
  %v48 = vpop.permute.xlu0 %47
  %v54 = vunpack.c.l.b16 %v18
  %v55 = vunpack.c.l.b16 %v19
  %v56 = vunpack.c.l.b16 %v20
  %v57 = vunpack.c.l.b16 %v21
  %v58 = vpack.c.b16 %v55, %v54
  %v59 = vpack.c.b16 %v57, %v56
  %v64 = vunpack.c.l.b16 %v22
  %v65 = vunpack.c.h.b16 %v22
  %v66 = vunpack.c.l.b16 %v23
  %v67 = vunpack.c.h.b16 %v23
  %v68 = vunpack.c.l.b16 %v24
  %v69 = vunpack.c.h.b16 %v24
  %v70 = vunpack.c.l.b16 %v25
  %v71 = vunpack.c.h.b16 %v25
  %v72 = vpack.c.b16 %v68, %v64
  %v73 = vpack.c.b16 %v69, %v65
  %v74 = vpack.c.b16 %v70, %v66
  %v75 = vpack.c.b16 %v71, %v67
  %vm80 = vcmask 130048
  %v82 = vsel %vm80, %v58, 0
  %v85 = vsel %vm80, %v59, 0
  %87 = vmatprep.subr.bf16.mxu0 0
  %88 = vmatpush1.bf16.msra.mxu0 0
  %89 = vmatprep.subr.bf16.mxu0 0
  %90 = vmatpush1.bf16.msra.mxu0 0
  %91 = vmatprep.subr.bf16.mxu0 0
  %92 = vmatpush1.bf16.msra.mxu0 0
  %93 = vmatprep.subr.bf16.mxu0 0
  %94 = vmatpush1.bf16.msra.mxu0 0
  %95 = vmatprep.subr.bf16.mxu0 0
  %96 = vmatpush1.bf16.msra.mxu0 0
  %97 = vmatprep.subr.bf16.mxu0 0
  %98 = vmatpush1.bf16.msra.mxu0 0
  %99 = vmatprep.subr.bf16.mxu0 0
  %100 = vmatpush1.bf16.msra.mxu0 0
  %101 = vmatprep.subr.bf16.mxu0 %v73
  %102 = vmatpush1.bf16.msra.mxu0 %v72
  %103 = vmatprep.subr.bf16.mxu0 0
  %104 = vmatpush2.bf16.msra.mxu0 0
  %105 = vmatprep.subr.bf16.mxu0 0
  %106 = vmatpush2.bf16.msra.mxu0 0
  %107 = vmatprep.subr.bf16.mxu0 0
  %108 = vmatpush2.bf16.msra.mxu0 0
  %109 = vmatprep.subr.bf16.mxu0 0
  %110 = vmatpush2.bf16.msra.mxu0 0
  %111 = vmatprep.subr.bf16.mxu0 0
  %112 = vmatpush2.bf16.msra.mxu0 0
  %113 = vmatprep.subr.bf16.mxu0 0
  %114 = vmatpush2.bf16.msra.mxu0 0
  %115 = vmatprep.subr.bf16.mxu0 0
  %116 = vmatpush2.bf16.msra.mxu0 0
  %117 = vmatprep.subr.bf16.mxu0 0
  %118 = vmatpush2.bf16.msra.mxu0 0
  %119 = vmatprep.mubr.bf16.mxu0 0
  %120 = vmatmul.mubr.bf16.gmra.mxu0 %v82
  %v121 = vpop.f32.mrf.mxu0
  %v122 = vadd.f32 %v33, %v121
  %v123 = vpop.f32.mrf.mxu0
  %v124 = vadd.f32 %v33, %v123
  %v125 = vpop.f32.mrf.mxu0
  %v126 = vadd.f32 %v38, %v125
  %v127 = vpop.f32.mrf.mxu0
  %v128 = vadd.f32 %v38, %v127
  %129 = vmatprep.mubr.bf16.mxu0 0
  %130 = vmatmul.mubr.bf16.gmra.mxu0 %v85
  %v131 = vpop.f32.mrf.mxu0
  %v132 = vadd.f32 %v43, %v131
  %v133 = vpop.f32.mrf.mxu0
  %v134 = vadd.f32 %v43, %v133
  %v135 = vpop.f32.mrf.mxu0
  %v136 = vadd.f32 %v48, %v135
  %v137 = vpop.f32.mrf.mxu0
  %v138 = vadd.f32 %v48, %v137
  %139 = vdwg.mxu0
  %140 = vmatprep.subr.bf16.mxu0 0
  %141 = vmatpush1.bf16.msra.mxu0 0
  %142 = vmatprep.subr.bf16.mxu0 0
  %143 = vmatpush1.bf16.msra.mxu0 0
  %144 = vmatprep.subr.bf16.mxu0 0
  %145 = vmatpush1.bf16.msra.mxu0 0
  %146 = vmatprep.subr.bf16.mxu0 0
  %147 = vmatpush1.bf16.msra.mxu0 0
  %148 = vmatprep.subr.bf16.mxu0 0
  %149 = vmatpush1.bf16.msra.mxu0 0
  %150 = vmatprep.subr.bf16.mxu0 0
  %151 = vmatpush1.bf16.msra.mxu0 0
  %152 = vmatprep.subr.bf16.mxu0 0
  %153 = vmatpush1.bf16.msra.mxu0 0
  %154 = vmatprep.subr.bf16.mxu0 %v75
  %155 = vmatpush1.bf16.msra.mxu0 %v74
  %156 = vmatprep.subr.bf16.mxu0 0
  %157 = vmatpush2.bf16.msra.mxu0 0
  %158 = vmatprep.subr.bf16.mxu0 0
  %159 = vmatpush2.bf16.msra.mxu0 0
  %160 = vmatprep.subr.bf16.mxu0 0
  %161 = vmatpush2.bf16.msra.mxu0 0
  %162 = vmatprep.subr.bf16.mxu0 0
  %163 = vmatpush2.bf16.msra.mxu0 0
  %164 = vmatprep.subr.bf16.mxu0 0
  %165 = vmatpush2.bf16.msra.mxu0 0
  %166 = vmatprep.subr.bf16.mxu0 0
  %167 = vmatpush2.bf16.msra.mxu0 0
  %168 = vmatprep.subr.bf16.mxu0 0
  %169 = vmatpush2.bf16.msra.mxu0 0
  %170 = vmatprep.subr.bf16.mxu0 0
  %171 = vmatpush2.bf16.msra.mxu0 0
  %172 = vmatprep.mubr.bf16.mxu0 0
  %173 = vmatmul.mubr.bf16.gmra.mxu0 %v82
  %v174 = vpop.f32.mrf.mxu0
  %v175 = vadd.f32 %v33, %v174
  %v176 = vpop.f32.mrf.mxu0
  %v177 = vadd.f32 %v33, %v176
  %v178 = vpop.f32.mrf.mxu0
  %v179 = vadd.f32 %v38, %v178
  %v180 = vpop.f32.mrf.mxu0
  %v181 = vadd.f32 %v38, %v180
  %182 = vmatprep.mubr.bf16.mxu0 0
  %183 = vmatmul.mubr.bf16.gmra.mxu0 %v85
  %v184 = vpop.f32.mrf.mxu0
  %v185 = vadd.f32 %v43, %v184
  %v186 = vpop.f32.mrf.mxu0
  %v187 = vadd.f32 %v43, %v186
  %v188 = vpop.f32.mrf.mxu0
  %v189 = vadd.f32 %v48, %v188
  %v190 = vpop.f32.mrf.mxu0
  %v191 = vadd.f32 %v48, %v190
  %192 = vdwg.mxu0
  %vm193 = vcmp.ge.f32.partialorder %v122, 0.0
  %vm194 = vcmp.ge.f32.partialorder %v124, 0.0
  %vm195 = vcmp.ge.f32.partialorder %v175, 0.0
  %vm196 = vcmp.ge.f32.partialorder %v177, 0.0
  %vm197 = vcmp.ge.f32.partialorder %v126, 0.0
  %vm198 = vcmp.ge.f32.partialorder %v128, 0.0
  %vm199 = vcmp.ge.f32.partialorder %v179, 0.0
  %vm200 = vcmp.ge.f32.partialorder %v181, 0.0
  %vm201 = vcmp.ge.f32.partialorder %v132, 0.0
  %vm202 = vcmp.ge.f32.partialorder %v134, 0.0
  %vm203 = vcmp.ge.f32.partialorder %v185, 0.0
  %vm204 = vcmp.ge.f32.partialorder %v187, 0.0
  %vm205 = vcmp.ge.f32.partialorder %v136, 0.0
  %vm206 = vcmp.ge.f32.partialorder %v138, 0.0
  %vm207 = vcmp.ge.f32.partialorder %v189, 0.0
  %vm208 = vcmp.ge.f32.partialorder %v191, 0.0
  %v209 = vmul.f32 %v122, 0.1
  %v210 = vmul.f32 %v124, 0.1
  %v211 = vmul.f32 %v175, 0.1
  %v212 = vmul.f32 %v177, 0.1
  %v213 = vmul.f32 %v126, 0.1
  %v214 = vmul.f32 %v128, 0.1
  %v215 = vmul.f32 %v179, 0.1
  %v216 = vmul.f32 %v181, 0.1
  %v217 = vmul.f32 %v132, 0.1
  %v218 = vmul.f32 %v134, 0.1
  %v219 = vmul.f32 %v185, 0.1
  %v220 = vmul.f32 %v187, 0.1
  %v221 = vmul.f32 %v136, 0.1
  %v222 = vmul.f32 %v138, 0.1
  %v223 = vmul.f32 %v189, 0.1
  %v224 = vmul.f32 %v191, 0.1
  %v225 = vsel %vm193, %v122, %v209
  %v226 = vsel %vm194, %v124, %v210
  %v227 = vsel %vm195, %v175, %v211
  %v228 = vsel %vm196, %v177, %v212
  %v229 = vsel %vm197, %v126, %v213
  %v230 = vsel %vm198, %v128, %v214
  %v231 = vsel %vm199, %v179, %v215
  %v232 = vsel %vm200, %v181, %v216
  %v233 = vsel %vm201, %v132, %v217
  %v234 = vsel %vm202, %v134, %v218
  %v235 = vsel %vm203, %v185, %v219
  %v236 = vsel %vm204, %v187, %v220
  %v237 = vsel %vm205, %v136, %v221
  %v238 = vsel %vm206, %v138, %v222
  %v239 = vsel %vm207, %v189, %v223
  %v240 = vsel %vm208, %v191, %v224
  %v241 = vpack.c.bf16 %v229, %v225
  %v242 = vpack.c.bf16 %v230, %v226
  %v243 = vpack.c.bf16 %v231, %v227
  %v244 = vpack.c.bf16 %v232, %v228
  %v245 = vpack.c.bf16 %v237, %v233
  %v246 = vpack.c.bf16 %v238, %v234
  %v247 = vpack.c.bf16 %v239, %v235
  %v248 = vpack.c.bf16 %v240, %v236
  %v249 = vld [vmem:[%s3] sm:$0xf]
  %v250 = vld [vmem:[%s3 + $0x4] sm:$0xf]
  %v251 = vld [vmem:[%s3 + $0x8] sm:$0xf]
  %v252 = vld [vmem:[%s3 + $0xc] sm:$0xf]
  %v253 = vld [vmem:[%s3 + $0x10] sm:$0xf]
  %v254 = vld [vmem:[%s3 + $0x14] sm:$0xf]
  %v255 = vld [vmem:[%s3 + $0x18] sm:$0xf]
  %v256 = vld [vmem:[%s3 + $0x1c] sm:$0xf]
  %v257 = vld [vmem:[%s3 + $0x20] sm:$0xf]
  %v258 = vld [vmem:[%s3 + $0x24] sm:$0xf]
  %v259 = vld [vmem:[%s3 + $0x28] sm:$0xf]
  %v260 = vld [vmem:[%s3 + $0x2c] sm:$0xf]
  %v261 = vld [vmem:[%s3 + $0x30] sm:$0xf]
  %v262 = vld [vmem:[%s3 + $0x34] sm:$0xf]
  %v263 = vld [vmem:[%s3 + $0x38] sm:$0xf]
  %v264 = vld [vmem:[%s3 + $0x3c] sm:$0xf]
  %v265 = vld [vmem:[%s3 + $0x40] sm:$0xf]
  %v266 = vld [vmem:[%s3 + $0x44] sm:$0xf]
  %v267 = vld [vmem:[%s3 + $0x48] sm:$0xf]
  %v268 = vld [vmem:[%s3 + $0x4c] sm:$0xf]
  %v269 = vld [vmem:[%s3 + $0x50] sm:$0xf]
  %v270 = vld [vmem:[%s3 + $0x54] sm:$0xf]
  %v271 = vld [vmem:[%s3 + $0x58] sm:$0xf]
  %v272 = vld [vmem:[%s3 + $0x5c] sm:$0xf]
  %v273 = vld [vmem:[%s3 + $0x60] sm:$0xf]
  %v274 = vld [vmem:[%s3 + $0x64] sm:$0xf]
  %v275 = vld [vmem:[%s3 + $0x68] sm:$0xf]
  %v276 = vld [vmem:[%s3 + $0x6c] sm:$0xf]
  %v277 = vld [vmem:[%s3 + $0x70] sm:$0xf]
  %v278 = vld [vmem:[%s3 + $0x74] sm:$0xf]
  %v279 = vld [vmem:[%s3 + $0x78] sm:$0xf]
  %v280 = vld [vmem:[%s3 + $0x7c] sm:$0xf]
  %v281 = vld [vmem:[%s3 + $0x80] sm:$0xf]
  %v282 = vld [vmem:[%s3 + $0x84] sm:$0xf]
  %v283 = vld [vmem:[%s3 + $0x88] sm:$0xf]
  %v284 = vld [vmem:[%s3 + $0x8c] sm:$0xf]
  %v285 = vld [vmem:[%s3 + $0x90] sm:$0xf]
  %v286 = vld [vmem:[%s3 + $0x94] sm:$0xf]
  %v287 = vld [vmem:[%s3 + $0x98] sm:$0xf]
  %v288 = vld [vmem:[%s3 + $0x9c] sm:$0xf]
  %v289 = vld [vmem:[%s3 + $0xa0] sm:$0xf]
  %v290 = vld [vmem:[%s3 + $0xa4] sm:$0xf]
  %v291 = vld [vmem:[%s3 + $0xa8] sm:$0xf]
  %v292 = vld [vmem:[%s3 + $0xac] sm:$0xf]
  %v293 = vld [vmem:[%s3 + $0xb0] sm:$0xf]
  %v294 = vld [vmem:[%s3 + $0xb4] sm:$0xf]
  %v295 = vld [vmem:[%s3 + $0xb8] sm:$0xf]
  %v296 = vld [vmem:[%s3 + $0xbc] sm:$0xf]
  %v297 = vld [vmem:[%s3 + $0xc0] sm:$0xf]
  %v298 = vld [vmem:[%s3 + $0xc4] sm:$0xf]
  %v299 = vld [vmem:[%s3 + $0xc8] sm:$0xf]
  %v300 = vld [vmem:[%s3 + $0xcc] sm:$0xf]
  %v301 = vld [vmem:[%s3 + $0xd0] sm:$0xf]
  %v302 = vld [vmem:[%s3 + $0xd4] sm:$0xf]
  %v303 = vld [vmem:[%s3 + $0xd8] sm:$0xf]
  %v304 = vld [vmem:[%s3 + $0xdc] sm:$0xf]
  %v305 = vld [vmem:[%s3 + $0xe0] sm:$0xf]
  %v306 = vld [vmem:[%s3 + $0xe4] sm:$0xf]
  %v307 = vld [vmem:[%s3 + $0xe8] sm:$0xf]
  %v308 = vld [vmem:[%s3 + $0xec] sm:$0xf]
  %v309 = vld [vmem:[%s3 + $0xf0] sm:$0xf]
  %v310 = vld [vmem:[%s3 + $0xf4] sm:$0xf]
  %v311 = vld [vmem:[%s3 + $0xf8] sm:$0xf]
  %v312 = vld [vmem:[%s3 + $0xfc] sm:$0xf]
  %v377 = vunpack.c.l.b16 %v249
  %v378 = vunpack.c.l.b16 %v250
  %v379 = vunpack.c.l.b16 %v251
  %v380 = vunpack.c.l.b16 %v252
  %v381 = vunpack.c.l.b16 %v253
  %v382 = vunpack.c.l.b16 %v254
  %v383 = vunpack.c.l.b16 %v255
  %v384 = vunpack.c.l.b16 %v256
  %v385 = vunpack.c.l.b16 %v257
  %v386 = vunpack.c.l.b16 %v258
  %v387 = vunpack.c.l.b16 %v259
  %v388 = vunpack.c.l.b16 %v260
  %v389 = vunpack.c.l.b16 %v261
  %v390 = vunpack.c.l.b16 %v262
  %v391 = vunpack.c.l.b16 %v263
  %v392 = vunpack.c.l.b16 %v264
  %v393 = vunpack.c.l.b16 %v265
  %v394 = vunpack.c.l.b16 %v266
  %v395 = vunpack.c.l.b16 %v267
  %v396 = vunpack.c.l.b16 %v268
  %v397 = vunpack.c.l.b16 %v269
  %v398 = vunpack.c.l.b16 %v270
  %v399 = vunpack.c.l.b16 %v271
  %v400 = vunpack.c.l.b16 %v272
  %v401 = vunpack.c.l.b16 %v273
  %v402 = vunpack.c.l.b16 %v274
  %v403 = vunpack.c.l.b16 %v275
  %v404 = vunpack.c.l.b16 %v276
  %v405 = vunpack.c.l.b16 %v277
  %v406 = vunpack.c.l.b16 %v278
  %v407 = vunpack.c.l.b16 %v279
  %v408 = vunpack.c.l.b16 %v280
  %v409 = vunpack.c.l.b16 %v281
  %v410 = vunpack.c.l.b16 %v282
  %v411 = vunpack.c.l.b16 %v283
  %v412 = vunpack.c.l.b16 %v284
  %v413 = vunpack.c.l.b16 %v285
  %v414 = vunpack.c.l.b16 %v286
  %v415 = vunpack.c.l.b16 %v287
  %v416 = vunpack.c.l.b16 %v288
  %v417 = vunpack.c.l.b16 %v289
  %v418 = vunpack.c.l.b16 %v290
  %v419 = vunpack.c.l.b16 %v291
  %v420 = vunpack.c.l.b16 %v292
  %v421 = vunpack.c.l.b16 %v293
  %v422 = vunpack.c.l.b16 %v294
  %v423 = vunpack.c.l.b16 %v295
  %v424 = vunpack.c.l.b16 %v296
  %v425 = vunpack.c.l.b16 %v297
  %v426 = vunpack.c.l.b16 %v298
  %v427 = vunpack.c.l.b16 %v299
  %v428 = vunpack.c.l.b16 %v300
  %v429 = vunpack.c.l.b16 %v301
  %v430 = vunpack.c.l.b16 %v302
  %v431 = vunpack.c.l.b16 %v303
  %v432 = vunpack.c.l.b16 %v304
  %v433 = vunpack.c.l.b16 %v305
  %v434 = vunpack.c.l.b16 %v306
  %v435 = vunpack.c.l.b16 %v307
  %v436 = vunpack.c.l.b16 %v308
  %v437 = vunpack.c.l.b16 %v309
  %v438 = vunpack.c.l.b16 %v310
  %v439 = vunpack.c.l.b16 %v311
  %v440 = vunpack.c.l.b16 %v312
  %v441 = vpack.c.b16 %v378, %v377
  %v442 = vpack.c.b16 %v380, %v379
  %v443 = vpack.c.b16 %v382, %v381
  %v444 = vpack.c.b16 %v384, %v383
  %v445 = vpack.c.b16 %v386, %v385
  %v446 = vpack.c.b16 %v388, %v387
  %v447 = vpack.c.b16 %v390, %v389
  %v448 = vpack.c.b16 %v392, %v391
  %v449 = vpack.c.b16 %v394, %v393
  %v450 = vpack.c.b16 %v396, %v395
  %v451 = vpack.c.b16 %v398, %v397
  %v452 = vpack.c.b16 %v400, %v399
  %v453 = vpack.c.b16 %v402, %v401
  %v454 = vpack.c.b16 %v404, %v403
  %v455 = vpack.c.b16 %v406, %v405
  %v456 = vpack.c.b16 %v408, %v407
  %v457 = vpack.c.b16 %v410, %v409
  %v458 = vpack.c.b16 %v412, %v411
  %v459 = vpack.c.b16 %v414, %v413
  %v460 = vpack.c.b16 %v416, %v415
  %v461 = vpack.c.b16 %v418, %v417
  %v462 = vpack.c.b16 %v420, %v419
  %v463 = vpack.c.b16 %v422, %v421
  %v464 = vpack.c.b16 %v424, %v423
  %v465 = vpack.c.b16 %v426, %v425
  %v466 = vpack.c.b16 %v428, %v427
  %v467 = vpack.c.b16 %v430, %v429
  %v468 = vpack.c.b16 %v432, %v431
  %v469 = vpack.c.b16 %v434, %v433
  %v470 = vpack.c.b16 %v436, %v435
  %v471 = vpack.c.b16 %v438, %v437
  %v472 = vpack.c.b16 %v440, %v439
  %505 = vmatprep.subr.bf16.mxu0 0
  %506 = vmatpush1.bf16.msra.mxu0 %v448
  %507 = vmatprep.subr.bf16.mxu0 0
  %508 = vmatpush1.bf16.msra.mxu0 %v447
  %509 = vmatprep.subr.bf16.mxu0 0
  %510 = vmatpush1.bf16.msra.mxu0 %v446
  %511 = vmatprep.subr.bf16.mxu0 0
  %512 = vmatpush1.bf16.msra.mxu0 %v445
  %513 = vmatprep.subr.bf16.mxu0 0
  %514 = vmatpush1.bf16.msra.mxu0 %v444
  %515 = vmatprep.subr.bf16.mxu0 0
  %516 = vmatpush1.bf16.msra.mxu0 %v443
  %517 = vmatprep.subr.bf16.mxu0 0
  %518 = vmatpush1.bf16.msra.mxu0 %v442
  %519 = vmatprep.subr.bf16.mxu0 0
  %520 = vmatpush1.bf16.msra.mxu0 %v441
  %521 = vmatprep.subr.bf16.mxu0 0
  %522 = vmatpush2.bf16.msra.mxu0 %v456
  %523 = vmatprep.subr.bf16.mxu0 0
  %524 = vmatpush2.bf16.msra.mxu0 %v455
  %525 = vmatprep.subr.bf16.mxu0 0
  %526 = vmatpush2.bf16.msra.mxu0 %v454
  %527 = vmatprep.subr.bf16.mxu0 0
  %528 = vmatpush2.bf16.msra.mxu0 %v453
  %529 = vmatprep.subr.bf16.mxu0 0
  %530 = vmatpush2.bf16.msra.mxu0 %v452
  %531 = vmatprep.subr.bf16.mxu0 0
  %532 = vmatpush2.bf16.msra.mxu0 %v451
  %533 = vmatprep.subr.bf16.mxu0 0
  %534 = vmatpush2.bf16.msra.mxu0 %v450
  %535 = vmatprep.subr.bf16.mxu0 0
  %536 = vmatpush2.bf16.msra.mxu0 %v449
  %537 = vmatprep.mubr.bf16.mxu0 %v242
  %538 = vmatmul.mubr.bf16.gmra.mxu0 %v241
  %v539 = vpop.f32.mrf.mxu0
  %v540 = vadd.f32 0.0, %v539
  %v541 = vpop.f32.mrf.mxu0
  %v542 = vpop.f32.mrf.mxu0
  %v543 = vadd.f32 0.0, %v542
  %v544 = vpop.f32.mrf.mxu0
  %545 = vmatprep.mubr.bf16.mxu0 %v246
  %546 = vmatmul.mubr.bf16.gmra.mxu0 %v245
  %v547 = vpop.f32.mrf.mxu0
  %v548 = vadd.f32 0.0, %v547
  %v549 = vpop.f32.mrf.mxu0
  %v550 = vpop.f32.mrf.mxu0
  %v551 = vadd.f32 0.0, %v550
  %v552 = vpop.f32.mrf.mxu0
  %553 = vdwg.mxu0
  %554 = vmatprep.subr.bf16.mxu0 0
  %555 = vmatpush1.bf16.msra.mxu0 %v464
  %556 = vmatprep.subr.bf16.mxu0 0
  %557 = vmatpush1.bf16.msra.mxu0 %v463
  %558 = vmatprep.subr.bf16.mxu0 0
  %559 = vmatpush1.bf16.msra.mxu0 %v462
  %560 = vmatprep.subr.bf16.mxu0 0
  %561 = vmatpush1.bf16.msra.mxu0 %v461
  %562 = vmatprep.subr.bf16.mxu0 0
  %563 = vmatpush1.bf16.msra.mxu0 %v460
  %564 = vmatprep.subr.bf16.mxu0 0
  %565 = vmatpush1.bf16.msra.mxu0 %v459
  %566 = vmatprep.subr.bf16.mxu0 0
  %567 = vmatpush1.bf16.msra.mxu0 %v458
  %568 = vmatprep.subr.bf16.mxu0 0
  %569 = vmatpush1.bf16.msra.mxu0 %v457
  %570 = vmatprep.subr.bf16.mxu0 0
  %571 = vmatpush2.bf16.msra.mxu0 %v472
  %572 = vmatprep.subr.bf16.mxu0 0
  %573 = vmatpush2.bf16.msra.mxu0 %v471
  %574 = vmatprep.subr.bf16.mxu0 0
  %575 = vmatpush2.bf16.msra.mxu0 %v470
  %576 = vmatprep.subr.bf16.mxu0 0
  %577 = vmatpush2.bf16.msra.mxu0 %v469
  %578 = vmatprep.subr.bf16.mxu0 0
  %579 = vmatpush2.bf16.msra.mxu0 %v468
  %580 = vmatprep.subr.bf16.mxu0 0
  %581 = vmatpush2.bf16.msra.mxu0 %v467
  %582 = vmatprep.subr.bf16.mxu0 0
  %583 = vmatpush2.bf16.msra.mxu0 %v466
  %584 = vmatprep.subr.bf16.mxu0 0
  %585 = vmatpush2.bf16.msra.mxu0 %v465
  %586 = vmatprep.mubr.bf16.mxu0 %v244
  %587 = vmatmul.mubr.bf16.gmra.mxu0 %v243
  %v588 = vpop.f32.mrf.mxu0
  %v589 = vadd.f32 %v540, %v588
  %v590 = vpop.f32.mrf.mxu0
  %v591 = vpop.f32.mrf.mxu0
  %v592 = vadd.f32 %v543, %v591
  %v593 = vpop.f32.mrf.mxu0
  %594 = vmatprep.mubr.bf16.mxu0 %v248
  %595 = vmatmul.mubr.bf16.gmra.mxu0 %v247
  %v596 = vpop.f32.mrf.mxu0
  %v597 = vadd.f32 %v548, %v596
  %v598 = vpop.f32.mrf.mxu0
  %v599 = vpop.f32.mrf.mxu0
  %v600 = vadd.f32 %v551, %v599
  %v601 = vpop.f32.mrf.mxu0
  %602 = vdwg.mxu0
  %s603 = scalar_lea.vmem %s3, 256
  %v604 = vld [vmem:[%s603] sm:$0xf]
  %v605 = vld [vmem:[%s603 + $0x4] sm:$0xf]
  %v606 = vld [vmem:[%s603 + $0x8] sm:$0xf]
  %v607 = vld [vmem:[%s603 + $0xc] sm:$0xf]
  %v608 = vld [vmem:[%s603 + $0x10] sm:$0xf]
  %v609 = vld [vmem:[%s603 + $0x14] sm:$0xf]
  %v610 = vld [vmem:[%s603 + $0x18] sm:$0xf]
  %v611 = vld [vmem:[%s603 + $0x1c] sm:$0xf]
  %v612 = vld [vmem:[%s603 + $0x20] sm:$0xf]
  %v613 = vld [vmem:[%s603 + $0x24] sm:$0xf]
  %v614 = vld [vmem:[%s603 + $0x28] sm:$0xf]
  %v615 = vld [vmem:[%s603 + $0x2c] sm:$0xf]
  %v616 = vld [vmem:[%s603 + $0x30] sm:$0xf]
  %v617 = vld [vmem:[%s603 + $0x34] sm:$0xf]
  %v618 = vld [vmem:[%s603 + $0x38] sm:$0xf]
  %v619 = vld [vmem:[%s603 + $0x3c] sm:$0xf]
  %v620 = vld [vmem:[%s603 + $0x40] sm:$0xf]
  %v621 = vld [vmem:[%s603 + $0x44] sm:$0xf]
  %v622 = vld [vmem:[%s603 + $0x48] sm:$0xf]
  %v623 = vld [vmem:[%s603 + $0x4c] sm:$0xf]
  %v624 = vld [vmem:[%s603 + $0x50] sm:$0xf]
  %v625 = vld [vmem:[%s603 + $0x54] sm:$0xf]
  %v626 = vld [vmem:[%s603 + $0x58] sm:$0xf]
  %v627 = vld [vmem:[%s603 + $0x5c] sm:$0xf]
  %v628 = vld [vmem:[%s603 + $0x60] sm:$0xf]
  %v629 = vld [vmem:[%s603 + $0x64] sm:$0xf]
  %v630 = vld [vmem:[%s603 + $0x68] sm:$0xf]
  %v631 = vld [vmem:[%s603 + $0x6c] sm:$0xf]
  %v632 = vld [vmem:[%s603 + $0x70] sm:$0xf]
  %v633 = vld [vmem:[%s603 + $0x74] sm:$0xf]
  %v634 = vld [vmem:[%s603 + $0x78] sm:$0xf]
  %v635 = vld [vmem:[%s603 + $0x7c] sm:$0xf]
  %v636 = vld [vmem:[%s603 + $0x80] sm:$0xf]
  %v637 = vld [vmem:[%s603 + $0x84] sm:$0xf]
  %v638 = vld [vmem:[%s603 + $0x88] sm:$0xf]
  %v639 = vld [vmem:[%s603 + $0x8c] sm:$0xf]
  %v640 = vld [vmem:[%s603 + $0x90] sm:$0xf]
  %v641 = vld [vmem:[%s603 + $0x94] sm:$0xf]
  %v642 = vld [vmem:[%s603 + $0x98] sm:$0xf]
  %v643 = vld [vmem:[%s603 + $0x9c] sm:$0xf]
  %v644 = vld [vmem:[%s603 + $0xa0] sm:$0xf]
  %v645 = vld [vmem:[%s603 + $0xa4] sm:$0xf]
  %v646 = vld [vmem:[%s603 + $0xa8] sm:$0xf]
  %v647 = vld [vmem:[%s603 + $0xac] sm:$0xf]
  %v648 = vld [vmem:[%s603 + $0xb0] sm:$0xf]
  %v649 = vld [vmem:[%s603 + $0xb4] sm:$0xf]
  %v650 = vld [vmem:[%s603 + $0xb8] sm:$0xf]
  %v651 = vld [vmem:[%s603 + $0xbc] sm:$0xf]
  %v652 = vld [vmem:[%s603 + $0xc0] sm:$0xf]
  %v653 = vld [vmem:[%s603 + $0xc4] sm:$0xf]
  %v654 = vld [vmem:[%s603 + $0xc8] sm:$0xf]
  %v655 = vld [vmem:[%s603 + $0xcc] sm:$0xf]
  %v656 = vld [vmem:[%s603 + $0xd0] sm:$0xf]
  %v657 = vld [vmem:[%s603 + $0xd4] sm:$0xf]
  %v658 = vld [vmem:[%s603 + $0xd8] sm:$0xf]
  %v659 = vld [vmem:[%s603 + $0xdc] sm:$0xf]
  %v660 = vld [vmem:[%s603 + $0xe0] sm:$0xf]
  %v661 = vld [vmem:[%s603 + $0xe4] sm:$0xf]
  %v662 = vld [vmem:[%s603 + $0xe8] sm:$0xf]
  %v663 = vld [vmem:[%s603 + $0xec] sm:$0xf]
  %v664 = vld [vmem:[%s603 + $0xf0] sm:$0xf]
  %v665 = vld [vmem:[%s603 + $0xf4] sm:$0xf]
  %v666 = vld [vmem:[%s603 + $0xf8] sm:$0xf]
  %v667 = vld [vmem:[%s603 + $0xfc] sm:$0xf]
  %v732 = vunpack.c.l.b16 %v604
  %v733 = vunpack.c.l.b16 %v605
  %v734 = vunpack.c.l.b16 %v606
  %v735 = vunpack.c.l.b16 %v607
  %v736 = vunpack.c.l.b16 %v608
  %v737 = vunpack.c.l.b16 %v609
  %v738 = vunpack.c.l.b16 %v610
  %v739 = vunpack.c.l.b16 %v611
  %v740 = vunpack.c.l.b16 %v612
  %v741 = vunpack.c.l.b16 %v613
  %v742 = vunpack.c.l.b16 %v614
  %v743 = vunpack.c.l.b16 %v615
  %v744 = vunpack.c.l.b16 %v616
  %v745 = vunpack.c.l.b16 %v617
  %v746 = vunpack.c.l.b16 %v618
  %v747 = vunpack.c.l.b16 %v619
  %v748 = vunpack.c.l.b16 %v620
  %v749 = vunpack.c.l.b16 %v621
  %v750 = vunpack.c.l.b16 %v622
  %v751 = vunpack.c.l.b16 %v623
  %v752 = vunpack.c.l.b16 %v624
  %v753 = vunpack.c.l.b16 %v625
  %v754 = vunpack.c.l.b16 %v626
  %v755 = vunpack.c.l.b16 %v627
  %v756 = vunpack.c.l.b16 %v628
  %v757 = vunpack.c.l.b16 %v629
  %v758 = vunpack.c.l.b16 %v630
  %v759 = vunpack.c.l.b16 %v631
  %v760 = vunpack.c.l.b16 %v632
  %v761 = vunpack.c.l.b16 %v633
  %v762 = vunpack.c.l.b16 %v634
  %v763 = vunpack.c.l.b16 %v635
  %v764 = vunpack.c.l.b16 %v636
  %v765 = vunpack.c.l.b16 %v637
  %v766 = vunpack.c.l.b16 %v638
  %v767 = vunpack.c.l.b16 %v639
  %v768 = vunpack.c.l.b16 %v640
  %v769 = vunpack.c.l.b16 %v641
  %v770 = vunpack.c.l.b16 %v642
  %v771 = vunpack.c.l.b16 %v643
  %v772 = vunpack.c.l.b16 %v644
  %v773 = vunpack.c.l.b16 %v645
  %v774 = vunpack.c.l.b16 %v646
  %v775 = vunpack.c.l.b16 %v647
  %v776 = vunpack.c.l.b16 %v648
  %v777 = vunpack.c.l.b16 %v649
  %v778 = vunpack.c.l.b16 %v650
  %v779 = vunpack.c.l.b16 %v651
  %v780 = vunpack.c.l.b16 %v652
  %v781 = vunpack.c.l.b16 %v653
  %v782 = vunpack.c.l.b16 %v654
  %v783 = vunpack.c.l.b16 %v655
  %v784 = vunpack.c.l.b16 %v656
  %v785 = vunpack.c.l.b16 %v657
  %v786 = vunpack.c.l.b16 %v658
  %v787 = vunpack.c.l.b16 %v659
  %v788 = vunpack.c.l.b16 %v660
  %v789 = vunpack.c.l.b16 %v661
  %v790 = vunpack.c.l.b16 %v662
  %v791 = vunpack.c.l.b16 %v663
  %v792 = vunpack.c.l.b16 %v664
  %v793 = vunpack.c.l.b16 %v665
  %v794 = vunpack.c.l.b16 %v666
  %v795 = vunpack.c.l.b16 %v667
  %v796 = vpack.c.b16 %v733, %v732
  %v797 = vpack.c.b16 %v735, %v734
  %v798 = vpack.c.b16 %v737, %v736
  %v799 = vpack.c.b16 %v739, %v738
  %v800 = vpack.c.b16 %v741, %v740
  %v801 = vpack.c.b16 %v743, %v742
  %v802 = vpack.c.b16 %v745, %v744
  %v803 = vpack.c.b16 %v747, %v746
  %v804 = vpack.c.b16 %v749, %v748
  %v805 = vpack.c.b16 %v751, %v750
  %v806 = vpack.c.b16 %v753, %v752
  %v807 = vpack.c.b16 %v755, %v754
  %v808 = vpack.c.b16 %v757, %v756
  %v809 = vpack.c.b16 %v759, %v758
  %v810 = vpack.c.b16 %v761, %v760
  %v811 = vpack.c.b16 %v763, %v762
  %v812 = vpack.c.b16 %v765, %v764
  %v813 = vpack.c.b16 %v767, %v766
  %v814 = vpack.c.b16 %v769, %v768
  %v815 = vpack.c.b16 %v771, %v770
  %v816 = vpack.c.b16 %v773, %v772
  %v817 = vpack.c.b16 %v775, %v774
  %v818 = vpack.c.b16 %v777, %v776
  %v819 = vpack.c.b16 %v779, %v778
  %v820 = vpack.c.b16 %v781, %v780
  %v821 = vpack.c.b16 %v783, %v782
  %v822 = vpack.c.b16 %v785, %v784
  %v823 = vpack.c.b16 %v787, %v786
  %v824 = vpack.c.b16 %v789, %v788
  %v825 = vpack.c.b16 %v791, %v790
  %v826 = vpack.c.b16 %v793, %v792
  %v827 = vpack.c.b16 %v795, %v794
  %860 = vmatprep.subr.bf16.mxu0 0
  %861 = vmatpush1.bf16.msra.mxu0 %v803
  %862 = vmatprep.subr.bf16.mxu0 0
  %863 = vmatpush1.bf16.msra.mxu0 %v802
  %864 = vmatprep.subr.bf16.mxu0 0
  %865 = vmatpush1.bf16.msra.mxu0 %v801
  %866 = vmatprep.subr.bf16.mxu0 0
  %867 = vmatpush1.bf16.msra.mxu0 %v800
  %868 = vmatprep.subr.bf16.mxu0 0
  %869 = vmatpush1.bf16.msra.mxu0 %v799
  %870 = vmatprep.subr.bf16.mxu0 0
  %871 = vmatpush1.bf16.msra.mxu0 %v798
  %872 = vmatprep.subr.bf16.mxu0 0
  %873 = vmatpush1.bf16.msra.mxu0 %v797
  %874 = vmatprep.subr.bf16.mxu0 0
  %875 = vmatpush1.bf16.msra.mxu0 %v796
  %876 = vmatprep.subr.bf16.mxu0 0
  %877 = vmatpush2.bf16.msra.mxu0 %v811
  %878 = vmatprep.subr.bf16.mxu0 0
  %879 = vmatpush2.bf16.msra.mxu0 %v810
  %880 = vmatprep.subr.bf16.mxu0 0
  %881 = vmatpush2.bf16.msra.mxu0 %v809
  %882 = vmatprep.subr.bf16.mxu0 0
  %883 = vmatpush2.bf16.msra.mxu0 %v808
  %884 = vmatprep.subr.bf16.mxu0 0
  %885 = vmatpush2.bf16.msra.mxu0 %v807
  %886 = vmatprep.subr.bf16.mxu0 0
  %887 = vmatpush2.bf16.msra.mxu0 %v806
  %888 = vmatprep.subr.bf16.mxu0 0
  %889 = vmatpush2.bf16.msra.mxu0 %v805
  %890 = vmatprep.subr.bf16.mxu0 0
  %891 = vmatpush2.bf16.msra.mxu0 %v804
  %892 = vmatprep.mubr.bf16.mxu0 %v242
  %893 = vmatmul.mubr.bf16.gmra.mxu0 %v241
  %v894 = vpop.f32.mrf.mxu0
  %v895 = vadd.f32 0.0, %v894
  %v896 = vpop.f32.mrf.mxu0
  %v897 = vpop.f32.mrf.mxu0
  %v898 = vadd.f32 0.0, %v897
  %v899 = vpop.f32.mrf.mxu0
  %900 = vmatprep.mubr.bf16.mxu0 %v246
  %901 = vmatmul.mubr.bf16.gmra.mxu0 %v245
  %v902 = vpop.f32.mrf.mxu0
  %v903 = vadd.f32 0.0, %v902
  %v904 = vpop.f32.mrf.mxu0
  %v905 = vpop.f32.mrf.mxu0
  %v906 = vadd.f32 0.0, %v905
  %v907 = vpop.f32.mrf.mxu0
  %908 = vdwg.mxu0
  %909 = vmatprep.subr.bf16.mxu0 0
  %910 = vmatpush1.bf16.msra.mxu0 %v819
  %911 = vmatprep.subr.bf16.mxu0 0
  %912 = vmatpush1.bf16.msra.mxu0 %v818
  %913 = vmatprep.subr.bf16.mxu0 0
  %914 = vmatpush1.bf16.msra.mxu0 %v817
  %915 = vmatprep.subr.bf16.mxu0 0
  %916 = vmatpush1.bf16.msra.mxu0 %v816
  %917 = vmatprep.subr.bf16.mxu0 0
  %918 = vmatpush1.bf16.msra.mxu0 %v815
  %919 = vmatprep.subr.bf16.mxu0 0
  %920 = vmatpush1.bf16.msra.mxu0 %v814
  %921 = vmatprep.subr.bf16.mxu0 0
  %922 = vmatpush1.bf16.msra.mxu0 %v813
  %923 = vmatprep.subr.bf16.mxu0 0
  %924 = vmatpush1.bf16.msra.mxu0 %v812
  %925 = vmatprep.subr.bf16.mxu0 0
  %926 = vmatpush2.bf16.msra.mxu0 %v827
  %927 = vmatprep.subr.bf16.mxu0 0
  %928 = vmatpush2.bf16.msra.mxu0 %v826
  %929 = vmatprep.subr.bf16.mxu0 0
  %930 = vmatpush2.bf16.msra.mxu0 %v825
  %931 = vmatprep.subr.bf16.mxu0 0
  %932 = vmatpush2.bf16.msra.mxu0 %v824
  %933 = vmatprep.subr.bf16.mxu0 0
  %934 = vmatpush2.bf16.msra.mxu0 %v823
  %935 = vmatprep.subr.bf16.mxu0 0
  %936 = vmatpush2.bf16.msra.mxu0 %v822
  %937 = vmatprep.subr.bf16.mxu0 0
  %938 = vmatpush2.bf16.msra.mxu0 %v821
  %939 = vmatprep.subr.bf16.mxu0 0
  %940 = vmatpush2.bf16.msra.mxu0 %v820
  %941 = vmatprep.mubr.bf16.mxu0 %v244
  %942 = vmatmul.mubr.bf16.gmra.mxu0 %v243
  %v943 = vpop.f32.mrf.mxu0
  %v944 = vadd.f32 %v895, %v943
  %v945 = vpop.f32.mrf.mxu0
  %v946 = vpop.f32.mrf.mxu0
  %v947 = vadd.f32 %v898, %v946
  %v948 = vpop.f32.mrf.mxu0
  %949 = vmatprep.mubr.bf16.mxu0 %v248
  %950 = vmatmul.mubr.bf16.gmra.mxu0 %v247
  %v951 = vpop.f32.mrf.mxu0
  %v952 = vadd.f32 %v903, %v951
  %v953 = vpop.f32.mrf.mxu0
  %v954 = vpop.f32.mrf.mxu0
  %v955 = vadd.f32 %v906, %v954
  %v956 = vpop.f32.mrf.mxu0
  %957 = vdwg.mxu0
  %s958 = scalar_lea.vmem %s3, 512
  %v959 = vld [vmem:[%s958] sm:$0xf]
  %v960 = vld [vmem:[%s958 + $0x4] sm:$0xf]
  %v961 = vld [vmem:[%s958 + $0x8] sm:$0xf]
  %v962 = vld [vmem:[%s958 + $0xc] sm:$0xf]
  %v963 = vld [vmem:[%s958 + $0x10] sm:$0xf]
  %v964 = vld [vmem:[%s958 + $0x14] sm:$0xf]
  %v965 = vld [vmem:[%s958 + $0x18] sm:$0xf]
  %v966 = vld [vmem:[%s958 + $0x1c] sm:$0xf]
  %v967 = vld [vmem:[%s958 + $0x20] sm:$0xf]
  %v968 = vld [vmem:[%s958 + $0x24] sm:$0xf]
  %v969 = vld [vmem:[%s958 + $0x28] sm:$0xf]
  %v970 = vld [vmem:[%s958 + $0x2c] sm:$0xf]
  %v971 = vld [vmem:[%s958 + $0x30] sm:$0xf]
  %v972 = vld [vmem:[%s958 + $0x34] sm:$0xf]
  %v973 = vld [vmem:[%s958 + $0x38] sm:$0xf]
  %v974 = vld [vmem:[%s958 + $0x3c] sm:$0xf]
  %v975 = vld [vmem:[%s958 + $0x40] sm:$0xf]
  %v976 = vld [vmem:[%s958 + $0x44] sm:$0xf]
  %v977 = vld [vmem:[%s958 + $0x48] sm:$0xf]
  %v978 = vld [vmem:[%s958 + $0x4c] sm:$0xf]
  %v979 = vld [vmem:[%s958 + $0x50] sm:$0xf]
  %v980 = vld [vmem:[%s958 + $0x54] sm:$0xf]
  %v981 = vld [vmem:[%s958 + $0x58] sm:$0xf]
  %v982 = vld [vmem:[%s958 + $0x5c] sm:$0xf]
  %v983 = vld [vmem:[%s958 + $0x60] sm:$0xf]
  %v984 = vld [vmem:[%s958 + $0x64] sm:$0xf]
  %v985 = vld [vmem:[%s958 + $0x68] sm:$0xf]
  %v986 = vld [vmem:[%s958 + $0x6c] sm:$0xf]
  %v987 = vld [vmem:[%s958 + $0x70] sm:$0xf]
  %v988 = vld [vmem:[%s958 + $0x74] sm:$0xf]
  %v989 = vld [vmem:[%s958 + $0x78] sm:$0xf]
  %v990 = vld [vmem:[%s958 + $0x7c] sm:$0xf]
  %v991 = vld [vmem:[%s958 + $0x80] sm:$0xf]
  %v992 = vld [vmem:[%s958 + $0x84] sm:$0xf]
  %v993 = vld [vmem:[%s958 + $0x88] sm:$0xf]
  %v994 = vld [vmem:[%s958 + $0x8c] sm:$0xf]
  %v995 = vld [vmem:[%s958 + $0x90] sm:$0xf]
  %v996 = vld [vmem:[%s958 + $0x94] sm:$0xf]
  %v997 = vld [vmem:[%s958 + $0x98] sm:$0xf]
  %v998 = vld [vmem:[%s958 + $0x9c] sm:$0xf]
  %v999 = vld [vmem:[%s958 + $0xa0] sm:$0xf]
  %v1000 = vld [vmem:[%s958 + $0xa4] sm:$0xf]
  %v1001 = vld [vmem:[%s958 + $0xa8] sm:$0xf]
  %v1002 = vld [vmem:[%s958 + $0xac] sm:$0xf]
  %v1003 = vld [vmem:[%s958 + $0xb0] sm:$0xf]
  %v1004 = vld [vmem:[%s958 + $0xb4] sm:$0xf]
  %v1005 = vld [vmem:[%s958 + $0xb8] sm:$0xf]
  %v1006 = vld [vmem:[%s958 + $0xbc] sm:$0xf]
  %v1007 = vld [vmem:[%s958 + $0xc0] sm:$0xf]
  %v1008 = vld [vmem:[%s958 + $0xc4] sm:$0xf]
  %v1009 = vld [vmem:[%s958 + $0xc8] sm:$0xf]
  %v1010 = vld [vmem:[%s958 + $0xcc] sm:$0xf]
  %v1011 = vld [vmem:[%s958 + $0xd0] sm:$0xf]
  %v1012 = vld [vmem:[%s958 + $0xd4] sm:$0xf]
  %v1013 = vld [vmem:[%s958 + $0xd8] sm:$0xf]
  %v1014 = vld [vmem:[%s958 + $0xdc] sm:$0xf]
  %v1015 = vld [vmem:[%s958 + $0xe0] sm:$0xf]
  %v1016 = vld [vmem:[%s958 + $0xe4] sm:$0xf]
  %v1017 = vld [vmem:[%s958 + $0xe8] sm:$0xf]
  %v1018 = vld [vmem:[%s958 + $0xec] sm:$0xf]
  %v1019 = vld [vmem:[%s958 + $0xf0] sm:$0xf]
  %v1020 = vld [vmem:[%s958 + $0xf4] sm:$0xf]
  %v1021 = vld [vmem:[%s958 + $0xf8] sm:$0xf]
  %v1022 = vld [vmem:[%s958 + $0xfc] sm:$0xf]
  %v1087 = vunpack.c.l.b16 %v959
  %v1088 = vunpack.c.l.b16 %v960
  %v1089 = vunpack.c.l.b16 %v961
  %v1090 = vunpack.c.l.b16 %v962
  %v1091 = vunpack.c.l.b16 %v963
  %v1092 = vunpack.c.l.b16 %v964
  %v1093 = vunpack.c.l.b16 %v965
  %v1094 = vunpack.c.l.b16 %v966
  %v1095 = vunpack.c.l.b16 %v967
  %v1096 = vunpack.c.l.b16 %v968
  %v1097 = vunpack.c.l.b16 %v969
  %v1098 = vunpack.c.l.b16 %v970
  %v1099 = vunpack.c.l.b16 %v971
  %v1100 = vunpack.c.l.b16 %v972
  %v1101 = vunpack.c.l.b16 %v973
  %v1102 = vunpack.c.l.b16 %v974
  %v1103 = vunpack.c.l.b16 %v975
  %v1104 = vunpack.c.l.b16 %v976
  %v1105 = vunpack.c.l.b16 %v977
  %v1106 = vunpack.c.l.b16 %v978
  %v1107 = vunpack.c.l.b16 %v979
  %v1108 = vunpack.c.l.b16 %v980
  %v1109 = vunpack.c.l.b16 %v981
  %v1110 = vunpack.c.l.b16 %v982
  %v1111 = vunpack.c.l.b16 %v983
  %v1112 = vunpack.c.l.b16 %v984
  %v1113 = vunpack.c.l.b16 %v985
  %v1114 = vunpack.c.l.b16 %v986
  %v1115 = vunpack.c.l.b16 %v987
  %v1116 = vunpack.c.l.b16 %v988
  %v1117 = vunpack.c.l.b16 %v989
  %v1118 = vunpack.c.l.b16 %v990
  %v1119 = vunpack.c.l.b16 %v991
  %v1120 = vunpack.c.l.b16 %v992
  %v1121 = vunpack.c.l.b16 %v993
  %v1122 = vunpack.c.l.b16 %v994
  %v1123 = vunpack.c.l.b16 %v995
  %v1124 = vunpack.c.l.b16 %v996
  %v1125 = vunpack.c.l.b16 %v997
  %v1126 = vunpack.c.l.b16 %v998
  %v1127 = vunpack.c.l.b16 %v999
  %v1128 = vunpack.c.l.b16 %v1000
  %v1129 = vunpack.c.l.b16 %v1001
  %v1130 = vunpack.c.l.b16 %v1002
  %v1131 = vunpack.c.l.b16 %v1003
  %v1132 = vunpack.c.l.b16 %v1004
  %v1133 = vunpack.c.l.b16 %v1005
  %v1134 = vunpack.c.l.b16 %v1006
  %v1135 = vunpack.c.l.b16 %v1007
  %v1136 = vunpack.c.l.b16 %v1008
  %v1137 = vunpack.c.l.b16 %v1009
  %v1138 = vunpack.c.l.b16 %v1010
  %v1139 = vunpack.c.l.b16 %v1011
  %v1140 = vunpack.c.l.b16 %v1012
  %v1141 = vunpack.c.l.b16 %v1013
  %v1142 = vunpack.c.l.b16 %v1014
  %v1143 = vunpack.c.l.b16 %v1015
  %v1144 = vunpack.c.l.b16 %v1016
  %v1145 = vunpack.c.l.b16 %v1017
  %v1146 = vunpack.c.l.b16 %v1018
  %v1147 = vunpack.c.l.b16 %v1019
  %v1148 = vunpack.c.l.b16 %v1020
  %v1149 = vunpack.c.l.b16 %v1021
  %v1150 = vunpack.c.l.b16 %v1022
  %v1151 = vpack.c.b16 %v1088, %v1087
  %v1152 = vpack.c.b16 %v1090, %v1089
  %v1153 = vpack.c.b16 %v1092, %v1091
  %v1154 = vpack.c.b16 %v1094, %v1093
  %v1155 = vpack.c.b16 %v1096, %v1095
  %v1156 = vpack.c.b16 %v1098, %v1097
  %v1157 = vpack.c.b16 %v1100, %v1099
  %v1158 = vpack.c.b16 %v1102, %v1101
  %v1159 = vpack.c.b16 %v1104, %v1103
  %v1160 = vpack.c.b16 %v1106, %v1105
  %v1161 = vpack.c.b16 %v1108, %v1107
  %v1162 = vpack.c.b16 %v1110, %v1109
  %v1163 = vpack.c.b16 %v1112, %v1111
  %v1164 = vpack.c.b16 %v1114, %v1113
  %v1165 = vpack.c.b16 %v1116, %v1115
  %v1166 = vpack.c.b16 %v1118, %v1117
  %v1167 = vpack.c.b16 %v1120, %v1119
  %v1168 = vpack.c.b16 %v1122, %v1121
  %v1169 = vpack.c.b16 %v1124, %v1123
  %v1170 = vpack.c.b16 %v1126, %v1125
  %v1171 = vpack.c.b16 %v1128, %v1127
  %v1172 = vpack.c.b16 %v1130, %v1129
  %v1173 = vpack.c.b16 %v1132, %v1131
  %v1174 = vpack.c.b16 %v1134, %v1133
  %v1175 = vpack.c.b16 %v1136, %v1135
  %v1176 = vpack.c.b16 %v1138, %v1137
  %v1177 = vpack.c.b16 %v1140, %v1139
  %v1178 = vpack.c.b16 %v1142, %v1141
  %v1179 = vpack.c.b16 %v1144, %v1143
  %v1180 = vpack.c.b16 %v1146, %v1145
  %v1181 = vpack.c.b16 %v1148, %v1147
  %v1182 = vpack.c.b16 %v1150, %v1149
  %1215 = vmatprep.subr.bf16.mxu0 0
  %1216 = vmatpush1.bf16.msra.mxu0 %v1158
  %1217 = vmatprep.subr.bf16.mxu0 0
  %1218 = vmatpush1.bf16.msra.mxu0 %v1157
  %1219 = vmatprep.subr.bf16.mxu0 0
  %1220 = vmatpush1.bf16.msra.mxu0 %v1156
  %1221 = vmatprep.subr.bf16.mxu0 0
  %1222 = vmatpush1.bf16.msra.mxu0 %v1155
  %1223 = vmatprep.subr.bf16.mxu0 0
  %1224 = vmatpush1.bf16.msra.mxu0 %v1154
  %1225 = vmatprep.subr.bf16.mxu0 0
  %1226 = vmatpush1.bf16.msra.mxu0 %v1153
  %1227 = vmatprep.subr.bf16.mxu0 0
  %1228 = vmatpush1.bf16.msra.mxu0 %v1152
  %1229 = vmatprep.subr.bf16.mxu0 0
  %1230 = vmatpush1.bf16.msra.mxu0 %v1151
  %1231 = vmatprep.subr.bf16.mxu0 0
  %1232 = vmatpush2.bf16.msra.mxu0 %v1166
  %1233 = vmatprep.subr.bf16.mxu0 0
  %1234 = vmatpush2.bf16.msra.mxu0 %v1165
  %1235 = vmatprep.subr.bf16.mxu0 0
  %1236 = vmatpush2.bf16.msra.mxu0 %v1164
  %1237 = vmatprep.subr.bf16.mxu0 0
  %1238 = vmatpush2.bf16.msra.mxu0 %v1163
  %1239 = vmatprep.subr.bf16.mxu0 0
  %1240 = vmatpush2.bf16.msra.mxu0 %v1162
  %1241 = vmatprep.subr.bf16.mxu0 0
  %1242 = vmatpush2.bf16.msra.mxu0 %v1161
  %1243 = vmatprep.subr.bf16.mxu0 0
  %1244 = vmatpush2.bf16.msra.mxu0 %v1160
  %1245 = vmatprep.subr.bf16.mxu0 0
  %1246 = vmatpush2.bf16.msra.mxu0 %v1159
  %1247 = vmatprep.mubr.bf16.mxu0 %v242
  %1248 = vmatmul.mubr.bf16.gmra.mxu0 %v241
  %v1249 = vpop.f32.mrf.mxu0
  %v1250 = vadd.f32 0.0, %v1249
  %v1251 = vpop.f32.mrf.mxu0
  %v1252 = vpop.f32.mrf.mxu0
  %v1253 = vadd.f32 0.0, %v1252
  %v1254 = vpop.f32.mrf.mxu0
  %1255 = vmatprep.mubr.bf16.mxu0 %v246
  %1256 = vmatmul.mubr.bf16.gmra.mxu0 %v245
  %v1257 = vpop.f32.mrf.mxu0
  %v1258 = vadd.f32 0.0, %v1257
  %v1259 = vpop.f32.mrf.mxu0
  %v1260 = vpop.f32.mrf.mxu0
  %v1261 = vadd.f32 0.0, %v1260
  %v1262 = vpop.f32.mrf.mxu0
  %1263 = vdwg.mxu0
  %1264 = vmatprep.subr.bf16.mxu0 0
  %1265 = vmatpush1.bf16.msra.mxu0 %v1174
  %1266 = vmatprep.subr.bf16.mxu0 0
  %1267 = vmatpush1.bf16.msra.mxu0 %v1173
  %1268 = vmatprep.subr.bf16.mxu0 0
  %1269 = vmatpush1.bf16.msra.mxu0 %v1172
  %1270 = vmatprep.subr.bf16.mxu0 0
  %1271 = vmatpush1.bf16.msra.mxu0 %v1171
  %1272 = vmatprep.subr.bf16.mxu0 0
  %1273 = vmatpush1.bf16.msra.mxu0 %v1170
  %1274 = vmatprep.subr.bf16.mxu0 0
  %1275 = vmatpush1.bf16.msra.mxu0 %v1169
  %1276 = vmatprep.subr.bf16.mxu0 0
  %1277 = vmatpush1.bf16.msra.mxu0 %v1168
  %1278 = vmatprep.subr.bf16.mxu0 0
  %1279 = vmatpush1.bf16.msra.mxu0 %v1167
  %1280 = vmatprep.subr.bf16.mxu0 0
  %1281 = vmatpush2.bf16.msra.mxu0 %v1182
  %1282 = vmatprep.subr.bf16.mxu0 0
  %1283 = vmatpush2.bf16.msra.mxu0 %v1181
  %1284 = vmatprep.subr.bf16.mxu0 0
  %1285 = vmatpush2.bf16.msra.mxu0 %v1180
  %1286 = vmatprep.subr.bf16.mxu0 0
  %1287 = vmatpush2.bf16.msra.mxu0 %v1179
  %1288 = vmatprep.subr.bf16.mxu0 0
  %1289 = vmatpush2.bf16.msra.mxu0 %v1178
  %1290 = vmatprep.subr.bf16.mxu0 0
  %1291 = vmatpush2.bf16.msra.mxu0 %v1177
  %1292 = vmatprep.subr.bf16.mxu0 0
  %1293 = vmatpush2.bf16.msra.mxu0 %v1176
  %1294 = vmatprep.subr.bf16.mxu0 0
  %1295 = vmatpush2.bf16.msra.mxu0 %v1175
  %1296 = vmatprep.mubr.bf16.mxu0 %v244
  %1297 = vmatmul.mubr.bf16.gmra.mxu0 %v243
  %v1298 = vpop.f32.mrf.mxu0
  %v1299 = vadd.f32 %v1250, %v1298
  %v1300 = vpop.f32.mrf.mxu0
  %v1301 = vpop.f32.mrf.mxu0
  %v1302 = vadd.f32 %v1253, %v1301
  %v1303 = vpop.f32.mrf.mxu0
  %1304 = vmatprep.mubr.bf16.mxu0 %v248
  %1305 = vmatmul.mubr.bf16.gmra.mxu0 %v247
  %v1306 = vpop.f32.mrf.mxu0
  %v1307 = vadd.f32 %v1258, %v1306
  %v1308 = vpop.f32.mrf.mxu0
  %v1309 = vpop.f32.mrf.mxu0
  %v1310 = vadd.f32 %v1261, %v1309
  %v1311 = vpop.f32.mrf.mxu0
  %1312 = vdwg.mxu0
  %s1313 = scalar_lea.vmem %s3, 768
  %v1314 = vld [vmem:[%s1313] sm:$0xf]
  %v1315 = vld [vmem:[%s1313 + $0x4] sm:$0xf]
  %v1316 = vld [vmem:[%s1313 + $0x8] sm:$0xf]
  %v1317 = vld [vmem:[%s1313 + $0xc] sm:$0xf]
  %v1318 = vld [vmem:[%s1313 + $0x10] sm:$0xf]
  %v1319 = vld [vmem:[%s1313 + $0x14] sm:$0xf]
  %v1320 = vld [vmem:[%s1313 + $0x18] sm:$0xf]
  %v1321 = vld [vmem:[%s1313 + $0x1c] sm:$0xf]
  %v1322 = vld [vmem:[%s1313 + $0x20] sm:$0xf]
  %v1323 = vld [vmem:[%s1313 + $0x24] sm:$0xf]
  %v1324 = vld [vmem:[%s1313 + $0x28] sm:$0xf]
  %v1325 = vld [vmem:[%s1313 + $0x2c] sm:$0xf]
  %v1326 = vld [vmem:[%s1313 + $0x30] sm:$0xf]
  %v1327 = vld [vmem:[%s1313 + $0x34] sm:$0xf]
  %v1328 = vld [vmem:[%s1313 + $0x38] sm:$0xf]
  %v1329 = vld [vmem:[%s1313 + $0x3c] sm:$0xf]
  %v1330 = vld [vmem:[%s1313 + $0x40] sm:$0xf]
  %v1331 = vld [vmem:[%s1313 + $0x44] sm:$0xf]
  %v1332 = vld [vmem:[%s1313 + $0x48] sm:$0xf]
  %v1333 = vld [vmem:[%s1313 + $0x4c] sm:$0xf]
  %v1334 = vld [vmem:[%s1313 + $0x50] sm:$0xf]
  %v1335 = vld [vmem:[%s1313 + $0x54] sm:$0xf]
  %v1336 = vld [vmem:[%s1313 + $0x58] sm:$0xf]
  %v1337 = vld [vmem:[%s1313 + $0x5c] sm:$0xf]
  %v1338 = vld [vmem:[%s1313 + $0x60] sm:$0xf]
  %v1339 = vld [vmem:[%s1313 + $0x64] sm:$0xf]
  %v1340 = vld [vmem:[%s1313 + $0x68] sm:$0xf]
  %v1341 = vld [vmem:[%s1313 + $0x6c] sm:$0xf]
  %v1342 = vld [vmem:[%s1313 + $0x70] sm:$0xf]
  %v1343 = vld [vmem:[%s1313 + $0x74] sm:$0xf]
  %v1344 = vld [vmem:[%s1313 + $0x78] sm:$0xf]
  %v1345 = vld [vmem:[%s1313 + $0x7c] sm:$0xf]
  %v1346 = vld [vmem:[%s1313 + $0x80] sm:$0xf]
  %v1347 = vld [vmem:[%s1313 + $0x84] sm:$0xf]
  %v1348 = vld [vmem:[%s1313 + $0x88] sm:$0xf]
  %v1349 = vld [vmem:[%s1313 + $0x8c] sm:$0xf]
  %v1350 = vld [vmem:[%s1313 + $0x90] sm:$0xf]
  %v1351 = vld [vmem:[%s1313 + $0x94] sm:$0xf]
  %v1352 = vld [vmem:[%s1313 + $0x98] sm:$0xf]
  %v1353 = vld [vmem:[%s1313 + $0x9c] sm:$0xf]
  %v1354 = vld [vmem:[%s1313 + $0xa0] sm:$0xf]
  %v1355 = vld [vmem:[%s1313 + $0xa4] sm:$0xf]
  %v1356 = vld [vmem:[%s1313 + $0xa8] sm:$0xf]
  %v1357 = vld [vmem:[%s1313 + $0xac] sm:$0xf]
  %v1358 = vld [vmem:[%s1313 + $0xb0] sm:$0xf]
  %v1359 = vld [vmem:[%s1313 + $0xb4] sm:$0xf]
  %v1360 = vld [vmem:[%s1313 + $0xb8] sm:$0xf]
  %v1361 = vld [vmem:[%s1313 + $0xbc] sm:$0xf]
  %v1362 = vld [vmem:[%s1313 + $0xc0] sm:$0xf]
  %v1363 = vld [vmem:[%s1313 + $0xc4] sm:$0xf]
  %v1364 = vld [vmem:[%s1313 + $0xc8] sm:$0xf]
  %v1365 = vld [vmem:[%s1313 + $0xcc] sm:$0xf]
  %v1366 = vld [vmem:[%s1313 + $0xd0] sm:$0xf]
  %v1367 = vld [vmem:[%s1313 + $0xd4] sm:$0xf]
  %v1368 = vld [vmem:[%s1313 + $0xd8] sm:$0xf]
  %v1369 = vld [vmem:[%s1313 + $0xdc] sm:$0xf]
  %v1370 = vld [vmem:[%s1313 + $0xe0] sm:$0xf]
  %v1371 = vld [vmem:[%s1313 + $0xe4] sm:$0xf]
  %v1372 = vld [vmem:[%s1313 + $0xe8] sm:$0xf]
  %v1373 = vld [vmem:[%s1313 + $0xec] sm:$0xf]
  %v1374 = vld [vmem:[%s1313 + $0xf0] sm:$0xf]
  %v1375 = vld [vmem:[%s1313 + $0xf4] sm:$0xf]
  %v1376 = vld [vmem:[%s1313 + $0xf8] sm:$0xf]
  %v1377 = vld [vmem:[%s1313 + $0xfc] sm:$0xf]
  %v1442 = vunpack.c.l.b16 %v1314
  %v1443 = vunpack.c.l.b16 %v1315
  %v1444 = vunpack.c.l.b16 %v1316
  %v1445 = vunpack.c.l.b16 %v1317
  %v1446 = vunpack.c.l.b16 %v1318
  %v1447 = vunpack.c.l.b16 %v1319
  %v1448 = vunpack.c.l.b16 %v1320
  %v1449 = vunpack.c.l.b16 %v1321
  %v1450 = vunpack.c.l.b16 %v1322
  %v1451 = vunpack.c.l.b16 %v1323
  %v1452 = vunpack.c.l.b16 %v1324
  %v1453 = vunpack.c.l.b16 %v1325
  %v1454 = vunpack.c.l.b16 %v1326
  %v1455 = vunpack.c.l.b16 %v1327
  %v1456 = vunpack.c.l.b16 %v1328
  %v1457 = vunpack.c.l.b16 %v1329
  %v1458 = vunpack.c.l.b16 %v1330
  %v1459 = vunpack.c.l.b16 %v1331
  %v1460 = vunpack.c.l.b16 %v1332
  %v1461 = vunpack.c.l.b16 %v1333
  %v1462 = vunpack.c.l.b16 %v1334
  %v1463 = vunpack.c.l.b16 %v1335
  %v1464 = vunpack.c.l.b16 %v1336
  %v1465 = vunpack.c.l.b16 %v1337
  %v1466 = vunpack.c.l.b16 %v1338
  %v1467 = vunpack.c.l.b16 %v1339
  %v1468 = vunpack.c.l.b16 %v1340
  %v1469 = vunpack.c.l.b16 %v1341
  %v1470 = vunpack.c.l.b16 %v1342
  %v1471 = vunpack.c.l.b16 %v1343
  %v1472 = vunpack.c.l.b16 %v1344
  %v1473 = vunpack.c.l.b16 %v1345
  %v1474 = vunpack.c.l.b16 %v1346
  %v1475 = vunpack.c.l.b16 %v1347
  %v1476 = vunpack.c.l.b16 %v1348
  %v1477 = vunpack.c.l.b16 %v1349
  %v1478 = vunpack.c.l.b16 %v1350
  %v1479 = vunpack.c.l.b16 %v1351
  %v1480 = vunpack.c.l.b16 %v1352
  %v1481 = vunpack.c.l.b16 %v1353
  %v1482 = vunpack.c.l.b16 %v1354
  %v1483 = vunpack.c.l.b16 %v1355
  %v1484 = vunpack.c.l.b16 %v1356
  %v1485 = vunpack.c.l.b16 %v1357
  %v1486 = vunpack.c.l.b16 %v1358
  %v1487 = vunpack.c.l.b16 %v1359
  %v1488 = vunpack.c.l.b16 %v1360
  %v1489 = vunpack.c.l.b16 %v1361
  %v1490 = vunpack.c.l.b16 %v1362
  %v1491 = vunpack.c.l.b16 %v1363
  %v1492 = vunpack.c.l.b16 %v1364
  %v1493 = vunpack.c.l.b16 %v1365
  %v1494 = vunpack.c.l.b16 %v1366
  %v1495 = vunpack.c.l.b16 %v1367
  %v1496 = vunpack.c.l.b16 %v1368
  %v1497 = vunpack.c.l.b16 %v1369
  %v1498 = vunpack.c.l.b16 %v1370
  %v1499 = vunpack.c.l.b16 %v1371
  %v1500 = vunpack.c.l.b16 %v1372
  %v1501 = vunpack.c.l.b16 %v1373
  %v1502 = vunpack.c.l.b16 %v1374
  %v1503 = vunpack.c.l.b16 %v1375
  %v1504 = vunpack.c.l.b16 %v1376
  %v1505 = vunpack.c.l.b16 %v1377
  %v1506 = vpack.c.b16 %v1443, %v1442
  %v1507 = vpack.c.b16 %v1445, %v1444
  %v1508 = vpack.c.b16 %v1447, %v1446
  %v1509 = vpack.c.b16 %v1449, %v1448
  %v1510 = vpack.c.b16 %v1451, %v1450
  %v1511 = vpack.c.b16 %v1453, %v1452
  %v1512 = vpack.c.b16 %v1455, %v1454
  %v1513 = vpack.c.b16 %v1457, %v1456
  %v1514 = vpack.c.b16 %v1459, %v1458
  %v1515 = vpack.c.b16 %v1461, %v1460
  %v1516 = vpack.c.b16 %v1463, %v1462
  %v1517 = vpack.c.b16 %v1465, %v1464
  %v1518 = vpack.c.b16 %v1467, %v1466
  %v1519 = vpack.c.b16 %v1469, %v1468
  %v1520 = vpack.c.b16 %v1471, %v1470
  %v1521 = vpack.c.b16 %v1473, %v1472
  %v1522 = vpack.c.b16 %v1475, %v1474
  %v1523 = vpack.c.b16 %v1477, %v1476
  %v1524 = vpack.c.b16 %v1479, %v1478
  %v1525 = vpack.c.b16 %v1481, %v1480
  %v1526 = vpack.c.b16 %v1483, %v1482
  %v1527 = vpack.c.b16 %v1485, %v1484
  %v1528 = vpack.c.b16 %v1487, %v1486
  %v1529 = vpack.c.b16 %v1489, %v1488
  %v1530 = vpack.c.b16 %v1491, %v1490
  %v1531 = vpack.c.b16 %v1493, %v1492
  %v1532 = vpack.c.b16 %v1495, %v1494
  %v1533 = vpack.c.b16 %v1497, %v1496
  %v1534 = vpack.c.b16 %v1499, %v1498
  %v1535 = vpack.c.b16 %v1501, %v1500
  %v1536 = vpack.c.b16 %v1503, %v1502
  %v1537 = vpack.c.b16 %v1505, %v1504
  %1570 = vmatprep.subr.bf16.mxu0 0
  %1571 = vmatpush1.bf16.msra.mxu0 %v1513
  %1572 = vmatprep.subr.bf16.mxu0 0
  %1573 = vmatpush1.bf16.msra.mxu0 %v1512
  %1574 = vmatprep.subr.bf16.mxu0 0
  %1575 = vmatpush1.bf16.msra.mxu0 %v1511
  %1576 = vmatprep.subr.bf16.mxu0 0
  %1577 = vmatpush1.bf16.msra.mxu0 %v1510
  %1578 = vmatprep.subr.bf16.mxu0 0
  %1579 = vmatpush1.bf16.msra.mxu0 %v1509
  %1580 = vmatprep.subr.bf16.mxu0 0
  %1581 = vmatpush1.bf16.msra.mxu0 %v1508
  %1582 = vmatprep.subr.bf16.mxu0 0
  %1583 = vmatpush1.bf16.msra.mxu0 %v1507
  %1584 = vmatprep.subr.bf16.mxu0 0
  %1585 = vmatpush1.bf16.msra.mxu0 %v1506
  %1586 = vmatprep.subr.bf16.mxu0 0
  %1587 = vmatpush2.bf16.msra.mxu0 %v1521
  %1588 = vmatprep.subr.bf16.mxu0 0
  %1589 = vmatpush2.bf16.msra.mxu0 %v1520
  %1590 = vmatprep.subr.bf16.mxu0 0
  %1591 = vmatpush2.bf16.msra.mxu0 %v1519
  %1592 = vmatprep.subr.bf16.mxu0 0
  %1593 = vmatpush2.bf16.msra.mxu0 %v1518
  %1594 = vmatprep.subr.bf16.mxu0 0
  %1595 = vmatpush2.bf16.msra.mxu0 %v1517
  %1596 = vmatprep.subr.bf16.mxu0 0
  %1597 = vmatpush2.bf16.msra.mxu0 %v1516
  %1598 = vmatprep.subr.bf16.mxu0 0
  %1599 = vmatpush2.bf16.msra.mxu0 %v1515
  %1600 = vmatprep.subr.bf16.mxu0 0
  %1601 = vmatpush2.bf16.msra.mxu0 %v1514
  %1602 = vmatprep.mubr.bf16.mxu0 %v242
  %1603 = vmatmul.mubr.bf16.gmra.mxu0 %v241
  %v1604 = vpop.f32.mrf.mxu0
  %v1605 = vadd.f32 0.0, %v1604
  %v1606 = vpop.f32.mrf.mxu0
  %v1607 = vpop.f32.mrf.mxu0
  %v1608 = vadd.f32 0.0, %v1607
  %v1609 = vpop.f32.mrf.mxu0
  %1610 = vmatprep.mubr.bf16.mxu0 %v246
  %1611 = vmatmul.mubr.bf16.gmra.mxu0 %v245
  %v1612 = vpop.f32.mrf.mxu0
  %v1613 = vadd.f32 0.0, %v1612
  %v1614 = vpop.f32.mrf.mxu0
  %v1615 = vpop.f32.mrf.mxu0
  %v1616 = vadd.f32 0.0, %v1615
  %v1617 = vpop.f32.mrf.mxu0
  %1618 = vdwg.mxu0
  %1619 = vmatprep.subr.bf16.mxu0 0
  %1620 = vmatpush1.bf16.msra.mxu0 %v1529
  %1621 = vmatprep.subr.bf16.mxu0 0
  %1622 = vmatpush1.bf16.msra.mxu0 %v1528
  %1623 = vmatprep.subr.bf16.mxu0 0
  %1624 = vmatpush1.bf16.msra.mxu0 %v1527
  %1625 = vmatprep.subr.bf16.mxu0 0
  %1626 = vmatpush1.bf16.msra.mxu0 %v1526
  %1627 = vmatprep.subr.bf16.mxu0 0
  %1628 = vmatpush1.bf16.msra.mxu0 %v1525
  %1629 = vmatprep.subr.bf16.mxu0 0
  %1630 = vmatpush1.bf16.msra.mxu0 %v1524
  %1631 = vmatprep.subr.bf16.mxu0 0
  %1632 = vmatpush1.bf16.msra.mxu0 %v1523
  %1633 = vmatprep.subr.bf16.mxu0 0
  %1634 = vmatpush1.bf16.msra.mxu0 %v1522
  %1635 = vmatprep.subr.bf16.mxu0 0
  %1636 = vmatpush2.bf16.msra.mxu0 %v1537
  %1637 = vmatprep.subr.bf16.mxu0 0
  %1638 = vmatpush2.bf16.msra.mxu0 %v1536
  %1639 = vmatprep.subr.bf16.mxu0 0
  %1640 = vmatpush2.bf16.msra.mxu0 %v1535
  %1641 = vmatprep.subr.bf16.mxu0 0
  %1642 = vmatpush2.bf16.msra.mxu0 %v1534
  %1643 = vmatprep.subr.bf16.mxu0 0
  %1644 = vmatpush2.bf16.msra.mxu0 %v1533
  %1645 = vmatprep.subr.bf16.mxu0 0
  %1646 = vmatpush2.bf16.msra.mxu0 %v1532
  %1647 = vmatprep.subr.bf16.mxu0 0
  %1648 = vmatpush2.bf16.msra.mxu0 %v1531
  %1649 = vmatprep.subr.bf16.mxu0 0
  %1650 = vmatpush2.bf16.msra.mxu0 %v1530
  %1651 = vmatprep.mubr.bf16.mxu0 %v244
  %1652 = vmatmul.mubr.bf16.gmra.mxu0 %v243
  %v1653 = vpop.f32.mrf.mxu0
  %v1654 = vadd.f32 %v1605, %v1653
  %v1655 = vpop.f32.mrf.mxu0
  %v1656 = vpop.f32.mrf.mxu0
  %v1657 = vadd.f32 %v1608, %v1656
  %v1658 = vpop.f32.mrf.mxu0
  %1659 = vmatprep.mubr.bf16.mxu0 %v248
  %1660 = vmatmul.mubr.bf16.gmra.mxu0 %v247
  %v1661 = vpop.f32.mrf.mxu0
  %v1662 = vadd.f32 %v1613, %v1661
  %v1663 = vpop.f32.mrf.mxu0
  %v1664 = vpop.f32.mrf.mxu0
  %v1665 = vadd.f32 %v1616, %v1664
  %v1666 = vpop.f32.mrf.mxu0
  %1667 = vdwg.mxu0
  %v1668 = vmax.f32 %v589, %v944
  %v1669 = vmax.f32 %v592, %v947
  %v1670 = vmax.f32 %v597, %v952
  %v1671 = vmax.f32 %v600, %v955
  %v1672 = vmax.f32 %v1299, %v1654
  %v1673 = vmax.f32 %v1302, %v1657
  %v1674 = vmax.f32 %v1307, %v1662
  %v1675 = vmax.f32 %v1310, %v1665
  %v1676 = vmax.f32 %v1668, %v1672
  %v1677 = vmax.f32 %v1669, %v1673
  %v1678 = vmax.f32 %v1670, %v1674
  %v1679 = vmax.f32 %v1671, %v1675
  %v1680 = vpack.c.bf16 %v1677, %v1676
  %v1681 = vpack.c.bf16 %v1679, %v1678
  %v1684 = vunpack.c.l.b16 %v1680
  %v1685 = vunpack.c.h.b16 %v1680
  %v1686 = vunpack.c.l.b16 %v1681
  %v1687 = vunpack.c.h.b16 %v1681
  %v1688 = vpack.c.b16 %v1684, %v1684
  %v1689 = vpack.c.b16 %v1685, %v1685
  %v1690 = vpack.c.b16 %v1686, %v1686
  %v1691 = vpack.c.b16 %v1687, %v1687
  %1696 = vst [vmem:[%s4] sm:$0xf] %v1688
  %1697 = vst [vmem:[%s4 + $0x4] sm:$0xf] %v1689
  %1698 = vst [vmem:[%s4 + $0x8] sm:$0xf] %v1690
  %1699 = vst [vmem:[%s4 + $0xc] sm:$0xf] %v1691
  // Predicated region
  $region18: #{mini_model_forward.9} parent=0 // pred_check
    _
  $region19: #{mini_model_forward.9} parent=0 // pred_check_branch
    %1701 = sbr.rel (0) target = $region21
  $region20: #{mini_model_forward.9} parent=0 // pred_region
    _
  $region21: #{mini_model_forward.9} parent=0 // pred_fallthru
    _
  // Predicated region
  $region22: #{mini_model_forward.9} parent=0 // pred_check
    _
  $region23: #{mini_model_forward.9} parent=0 // pred_check_branch
    %1703 = sbr.rel (0) target = $region25
  $region24: #{mini_model_forward.9} parent=0 // pred_region
    _
  $region25: #{mini_model_forward.9} parent=0 // pred_fallthru
    _

// kernel: mini_model_forward.10
$region0: #{mini_model_forward.10}
  #allocation0 [shape = 'u32[]', space=smem, size = 0x4, offset = 0x4, fixed_abs, tag = 'smem constant byte address 0x4 - core index']
  #allocation1 [shape = 'u32[144,128]{1,0:T(1,128)}', space=vmem, size = 0x12000, scoped, tag = 'internal scratch']
  %s0 = inlined_call_operand.vmem [shape: bf16[64,288], index: 0, kind: input, shape index: {}]
  %s1 = inlined_call_operand.vmem [shape: bf16[288,128], index: 1, kind: input, shape index: {}]
  %s2 = inlined_call_operand.vmem [shape: f32[64,1], index: 2, kind: input, shape index: {}]
  %s3 = inlined_call_operand.vmem [shape: bf16[4,128,32], index: 3, kind: input, shape index: {}]
  %s4 = inlined_call_operand.vmem [shape: bf16[64,32], index: 4, kind: output, shape index: {}]
  %s5 = sld [smem:[#allocation0]]
  $region26: #{mini_model_forward.10} parent=0
    _
  %s7 = ssub.s32 1, %s5
  %s8 = scalar_select 0, %s7, %s5
  // Predicated region
  $region2: #{mini_model_forward.10} parent=0 // pred_check
    _
  $region3: #{mini_model_forward.10} parent=0 // pred_check_branch
    %10 = sbr.rel (0) target = $region5
  $region4: #{mini_model_forward.10} parent=0 // pred_region
    _
  $region5: #{mini_model_forward.10} parent=0 // pred_fallthru
    _
  // Predicated region
  $region6: #{mini_model_forward.10} parent=0 // pred_check
    _
  $region7: #{mini_model_forward.10} parent=0 // pred_check_branch
    %12 = sbr.rel (0) target = $region9
  $region8: #{mini_model_forward.10} parent=0 // pred_region
    _
  $region9: #{mini_model_forward.10} parent=0 // pred_fallthru
    _
  // Predicated region
  $region10: #{mini_model_forward.10} parent=0 // pred_check
    _
  $region11: #{mini_model_forward.10} parent=0 // pred_check_branch
    %14 = sbr.rel (0) target = $region13
  $region12: #{mini_model_forward.10} parent=0 // pred_region
    _
  $region13: #{mini_model_forward.10} parent=0 // pred_fallthru
    _
  // Predicated region
  $region14: #{mini_model_forward.10} parent=0 // pred_check
    _
  $region15: #{mini_model_forward.10} parent=0 // pred_check_branch
    %16 = sbr.rel (0) target = $region17
  $region16: #{mini_model_forward.10} parent=0 // pred_region
    _
  $region17: #{mini_model_forward.10} parent=0 // pred_fallthru
    _
  %v18 = vld [vmem:[%s0] sm:$0xff]
  %v19 = vld [vmem:[%s0 + $0x8] sm:$0xf]
  %v20 = vld [vmem:[%s0 + $0xc] sm:$0xff]
  %v21 = vld [vmem:[%s0 + $0x14] sm:$0xf]
  %v22 = vld [vmem:[%s0 + $0x18] sm:$0xff]
  %v23 = vld [vmem:[%s0 + $0x20] sm:$0xf]
  %v24 = vld [vmem:[%s0 + $0x24] sm:$0xff]
  %v25 = vld [vmem:[%s0 + $0x2c] sm:$0xf]
  %v26 = vld [vmem:[%s0 + $0x30] sm:$0xff]
  %v27 = vld [vmem:[%s0 + $0x38] sm:$0xf]
  %v28 = vld [vmem:[%s0 + $0x3c] sm:$0xff]
  %v29 = vld [vmem:[%s0 + $0x44] sm:$0xf]
  %v30 = vld [vmem:[%s0 + $0x48] sm:$0xff]
  %v31 = vld [vmem:[%s0 + $0x50] sm:$0xf]
  %v32 = vld [vmem:[%s0 + $0x54] sm:$0xff]
  %v33 = vld [vmem:[%s0 + $0x5c] sm:$0xf]
  %v34 = vld [vmem:[%s1] sm:$0xf]
  %v35 = vld [vmem:[%s1 + $0x4] sm:$0xf]
  %v36 = vld [vmem:[%s1 + $0x8] sm:$0xf]
  %v37 = vld [vmem:[%s1 + $0xc] sm:$0xf]
  %v38 = vld [vmem:[%s1 + $0x10] sm:$0xf]
  %v39 = vld [vmem:[%s1 + $0x14] sm:$0xf]
  %v40 = vld [vmem:[%s1 + $0x18] sm:$0xf]
  %v41 = vld [vmem:[%s1 + $0x1c] sm:$0xf]
  %v42 = vld [vmem:[%s1 + $0x20] sm:$0xf]
  %v43 = vld [vmem:[%s1 + $0x24] sm:$0xf]
  %v44 = vld [vmem:[%s1 + $0x28] sm:$0xf]
  %v45 = vld [vmem:[%s1 + $0x2c] sm:$0xf]
  %v46 = vld [vmem:[%s1 + $0x30] sm:$0xf]
  %v47 = vld [vmem:[%s1 + $0x34] sm:$0xf]
  %v48 = vld [vmem:[%s1 + $0x38] sm:$0xf]
  %v49 = vld [vmem:[%s1 + $0x3c] sm:$0xf]
  %v50 = vld [vmem:[%s1 + $0x40] sm:$0xf]
  %v51 = vld [vmem:[%s1 + $0x44] sm:$0xf]
  %v52 = vld [vmem:[%s1 + $0x48] sm:$0xf]
  %v53 = vld [vmem:[%s1 + $0x4c] sm:$0xf]
  %v54 = vld [vmem:[%s1 + $0x50] sm:$0xf]
  %v55 = vld [vmem:[%s1 + $0x54] sm:$0xf]
  %v56 = vld [vmem:[%s1 + $0x58] sm:$0xf]
  %v57 = vld [vmem:[%s1 + $0x5c] sm:$0xf]
  %v58 = vld [vmem:[%s1 + $0x60] sm:$0xf]
  %v59 = vld [vmem:[%s1 + $0x64] sm:$0xf]
  %v60 = vld [vmem:[%s1 + $0x68] sm:$0xf]
  %v61 = vld [vmem:[%s1 + $0x6c] sm:$0xf]
  %v62 = vld [vmem:[%s1 + $0x70] sm:$0xf]
  %v63 = vld [vmem:[%s1 + $0x74] sm:$0xf]
  %v64 = vld [vmem:[%s1 + $0x78] sm:$0xf]
  %v65 = vld [vmem:[%s1 + $0x7c] sm:$0xf]
  %v66 = vld [vmem:[%s1 + $0x80] sm:$0xf]
  %v67 = vld [vmem:[%s1 + $0x84] sm:$0xf]
  %v68 = vld [vmem:[%s1 + $0x88] sm:$0xf]
  %v69 = vld [vmem:[%s1 + $0x8c] sm:$0xf]
  %v70 = vld [vmem:[%s2] sm:$0xff]
  %v71 = vld [vmem:[%s2 + $0x8] sm:$0xff]
  %v72 = vld [vmem:[%s2 + $0x10] sm:$0xff]
  %v73 = vld [vmem:[%s2 + $0x18] sm:$0xff]
  %v74 = vld [vmem:[%s2 + $0x20] sm:$0xff]
  %v75 = vld [vmem:[%s2 + $0x28] sm:$0xff]
  %v76 = vld [vmem:[%s2 + $0x30] sm:$0xff]
  %v77 = vld [vmem:[%s2 + $0x38] sm:$0xff]
  %79 = vset.pattern.permute.xlu0 0
  %80 = vperm.xlu0 %79, %v70
  %v81 = vpop.permute.xlu0 %80
  %84 = vset.pattern.permute.xlu0 0
  %85 = vperm.xlu0 %84, %v71
  %v86 = vpop.permute.xlu0 %85
  %89 = vset.pattern.permute.xlu0 0
  %90 = vperm.xlu0 %89, %v72
  %v91 = vpop.permute.xlu0 %90
  %94 = vset.pattern.permute.xlu0 0
  %95 = vperm.xlu0 %94, %v73
  %v96 = vpop.permute.xlu0 %95
  %99 = vset.pattern.permute.xlu0 0
  %100 = vperm.xlu0 %99, %v74
  %v101 = vpop.permute.xlu0 %100
  %104 = vset.pattern.permute.xlu0 0
  %105 = vperm.xlu0 %104, %v75
  %v106 = vpop.permute.xlu0 %105
  %109 = vset.pattern.permute.xlu0 0
  %110 = vperm.xlu0 %109, %v76
  %v111 = vpop.permute.xlu0 %110
  %114 = vset.pattern.permute.xlu0 0
  %115 = vperm.xlu0 %114, %v77
  %v116 = vpop.permute.xlu0 %115
  %v134 = vunpack.c.l.b16 %v18
  %v135 = vunpack.c.h.b16 %v18
  %v136 = vunpack.c.l.b16 %v19
  %v137 = vunpack.c.l.b16 %v20
  %v138 = vunpack.c.h.b16 %v20
  %v139 = vunpack.c.l.b16 %v21
  %v140 = vunpack.c.l.b16 %v22
  %v141 = vunpack.c.h.b16 %v22
  %v142 = vunpack.c.l.b16 %v23
  %v143 = vunpack.c.l.b16 %v24
  %v144 = vunpack.c.h.b16 %v24
  %v145 = vunpack.c.l.b16 %v25
  %v146 = vunpack.c.l.b16 %v26
  %v147 = vunpack.c.h.b16 %v26
  %v148 = vunpack.c.l.b16 %v27
  %v149 = vunpack.c.l.b16 %v28
  %v150 = vunpack.c.h.b16 %v28
  %v151 = vunpack.c.l.b16 %v29
  %v152 = vunpack.c.l.b16 %v30
  %v153 = vunpack.c.h.b16 %v30
  %v154 = vunpack.c.l.b16 %v31
  %v155 = vunpack.c.l.b16 %v32
  %v156 = vunpack.c.h.b16 %v32
  %v157 = vunpack.c.l.b16 %v33
  %v158 = vpack.c.b16 %v137, %v134
  %v159 = vpack.c.b16 %v138, %v135
  %v160 = vpack.c.b16 %v139, %v136
  %v161 = vpack.c.b16 %v143, %v140
  %v162 = vpack.c.b16 %v144, %v141
  %v163 = vpack.c.b16 %v145, %v142
  %v164 = vpack.c.b16 %v149, %v146
  %v165 = vpack.c.b16 %v150, %v147
  %v166 = vpack.c.b16 %v151, %v148
  %v167 = vpack.c.b16 %v155, %v152
  %v168 = vpack.c.b16 %v156, %v153
  %v169 = vpack.c.b16 %v157, %v154
  %v214 = vunpack.c.l.b16 %v34
  %v215 = vunpack.c.l.b16 %v35
  %v216 = vunpack.c.l.b16 %v36
  %v217 = vunpack.c.l.b16 %v37
  %v218 = vunpack.c.l.b16 %v38
  %v219 = vunpack.c.l.b16 %v39
  %v220 = vunpack.c.l.b16 %v40
  %v221 = vunpack.c.l.b16 %v41
  %v222 = vunpack.c.l.b16 %v42
  %v223 = vunpack.c.l.b16 %v43
  %v224 = vunpack.c.l.b16 %v44
  %v225 = vunpack.c.l.b16 %v45
  %v226 = vunpack.c.l.b16 %v46
  %v227 = vunpack.c.l.b16 %v47
  %v228 = vunpack.c.l.b16 %v48
  %v229 = vunpack.c.l.b16 %v49
  %v230 = vunpack.c.l.b16 %v50
  %v231 = vunpack.c.l.b16 %v51
  %v232 = vunpack.c.l.b16 %v52
  %v233 = vunpack.c.l.b16 %v53
  %v234 = vunpack.c.l.b16 %v54
  %v235 = vunpack.c.l.b16 %v55
  %v236 = vunpack.c.l.b16 %v56
  %v237 = vunpack.c.l.b16 %v57
  %v238 = vunpack.c.l.b16 %v58
  %v239 = vunpack.c.l.b16 %v59
  %v240 = vunpack.c.l.b16 %v60
  %v241 = vunpack.c.l.b16 %v61
  %v242 = vunpack.c.l.b16 %v62
  %v243 = vunpack.c.l.b16 %v63
  %v244 = vunpack.c.l.b16 %v64
  %v245 = vunpack.c.l.b16 %v65
  %v246 = vunpack.c.l.b16 %v66
  %v247 = vunpack.c.l.b16 %v67
  %v248 = vunpack.c.l.b16 %v68
  %v249 = vunpack.c.l.b16 %v69
  %v250 = vpack.c.b16 %v215, %v214
  %v251 = vpack.c.b16 %v217, %v216
  %v252 = vpack.c.b16 %v219, %v218
  %v253 = vpack.c.b16 %v221, %v220
  %v254 = vpack.c.b16 %v223, %v222
  %v255 = vpack.c.b16 %v225, %v224
  %v256 = vpack.c.b16 %v227, %v226
  %v257 = vpack.c.b16 %v229, %v228
  %v258 = vpack.c.b16 %v231, %v230
  %v259 = vpack.c.b16 %v233, %v232
  %v260 = vpack.c.b16 %v235, %v234
  %v261 = vpack.c.b16 %v237, %v236
  %v262 = vpack.c.b16 %v239, %v238
  %v263 = vpack.c.b16 %v241, %v240
  %v264 = vpack.c.b16 %v243, %v242
  %v265 = vpack.c.b16 %v245, %v244
  %v266 = vpack.c.b16 %v247, %v246
  %v267 = vpack.c.b16 %v249, %v248
  %vm286 = vcmask 261120
  %v288 = vsel %vm286, %v160, 0
  %v291 = vsel %vm286, %v163, 0
  %v294 = vsel %vm286, %v166, 0
  %v297 = vsel %vm286, %v169, 0
  %299 = vmatprep.subr.bf16.mxu0 0
  %300 = vmatpush1.bf16.msra.mxu0 %v257
  %301 = vmatprep.subr.bf16.mxu0 0
  %302 = vmatpush1.bf16.msra.mxu0 %v256
  %303 = vmatprep.subr.bf16.mxu0 0
  %304 = vmatpush1.bf16.msra.mxu0 %v255
  %305 = vmatprep.subr.bf16.mxu0 0
  %306 = vmatpush1.bf16.msra.mxu0 %v254
  %307 = vmatprep.subr.bf16.mxu0 0
  %308 = vmatpush1.bf16.msra.mxu0 %v253
  %309 = vmatprep.subr.bf16.mxu0 0
  %310 = vmatpush1.bf16.msra.mxu0 %v252
  %311 = vmatprep.subr.bf16.mxu0 0
  %312 = vmatpush1.bf16.msra.mxu0 %v251
  %313 = vmatprep.subr.bf16.mxu0 0
  %314 = vmatpush1.bf16.msra.mxu0 %v250
  %315 = vmatprep.subr.bf16.mxu0 0
  %316 = vmatpush2.bf16.msra.mxu0 %v265
  %317 = vmatprep.subr.bf16.mxu0 0
  %318 = vmatpush2.bf16.msra.mxu0 %v264
  %319 = vmatprep.subr.bf16.mxu0 0
  %320 = vmatpush2.bf16.msra.mxu0 %v263
  %321 = vmatprep.subr.bf16.mxu0 0
  %322 = vmatpush2.bf16.msra.mxu0 %v262
  %323 = vmatprep.subr.bf16.mxu0 0
  %324 = vmatpush2.bf16.msra.mxu0 %v261
  %325 = vmatprep.subr.bf16.mxu0 0
  %326 = vmatpush2.bf16.msra.mxu0 %v260
  %327 = vmatprep.subr.bf16.mxu0 0
  %328 = vmatpush2.bf16.msra.mxu0 %v259
  %329 = vmatprep.subr.bf16.mxu0 0
  %330 = vmatpush2.bf16.msra.mxu0 %v258
  %331 = vmatprep.mubr.bf16.mxu0 %v159
  %332 = vmatmul.mubr.bf16.gmra.mxu0 %v158
  %v333 = vpop.f32.mrf.mxu0
  %v334 = vadd.f32 %v81, %v333
  %v335 = vpop.f32.mrf.mxu0
  %v336 = vpop.f32.mrf.mxu0
  %v337 = vadd.f32 %v86, %v336
  %v338 = vpop.f32.mrf.mxu0
  %339 = vmatprep.mubr.bf16.mxu0 %v162
  %340 = vmatmul.mubr.bf16.gmra.mxu0 %v161
  %v341 = vpop.f32.mrf.mxu0
  %v342 = vadd.f32 %v91, %v341
  %v343 = vpop.f32.mrf.mxu0
  %v344 = vpop.f32.mrf.mxu0
  %v345 = vadd.f32 %v96, %v344
  %v346 = vpop.f32.mrf.mxu0
  %347 = vmatprep.mubr.bf16.mxu0 %v165
  %348 = vmatmul.mubr.bf16.gmra.mxu0 %v164
  %v349 = vpop.f32.mrf.mxu0
  %v350 = vadd.f32 %v101, %v349
  %v351 = vpop.f32.mrf.mxu0
  %v352 = vpop.f32.mrf.mxu0
  %v353 = vadd.f32 %v106, %v352
  %v354 = vpop.f32.mrf.mxu0
  %355 = vmatprep.mubr.bf16.mxu0 %v168
  %356 = vmatmul.mubr.bf16.gmra.mxu0 %v167
  %v357 = vpop.f32.mrf.mxu0
  %v358 = vadd.f32 %v111, %v357
  %v359 = vpop.f32.mrf.mxu0
  %v360 = vpop.f32.mrf.mxu0
  %v361 = vadd.f32 %v116, %v360
  %v362 = vpop.f32.mrf.mxu0
  %363 = vdwg.mxu0
  %364 = vmatprep.subr.bf16.mxu0 0
  %365 = vmatpush1.bf16.msra.mxu0 0
  %366 = vmatprep.subr.bf16.mxu0 0
  %367 = vmatpush1.bf16.msra.mxu0 0
  %368 = vmatprep.subr.bf16.mxu0 0
  %369 = vmatpush1.bf16.msra.mxu0 0
  %370 = vmatprep.subr.bf16.mxu0 0
  %371 = vmatpush1.bf16.msra.mxu0 0
  %372 = vmatprep.subr.bf16.mxu0 0
  %373 = vmatpush1.bf16.msra.mxu0 0
  %374 = vmatprep.subr.bf16.mxu0 0
  %375 = vmatpush1.bf16.msra.mxu0 0
  %376 = vmatprep.subr.bf16.mxu0 0
  %377 = vmatpush1.bf16.msra.mxu0 %v267
  %378 = vmatprep.subr.bf16.mxu0 0
  %379 = vmatpush1.bf16.msra.mxu0 %v266
  %380 = vmatprep.subr.bf16.mxu0 0
  %381 = vmatpush2.bf16.msra.mxu0 0
  %382 = vmatprep.subr.bf16.mxu0 0
  %383 = vmatpush2.bf16.msra.mxu0 0
  %384 = vmatprep.subr.bf16.mxu0 0
  %385 = vmatpush2.bf16.msra.mxu0 0
  %386 = vmatprep.subr.bf16.mxu0 0
  %387 = vmatpush2.bf16.msra.mxu0 0
  %388 = vmatprep.subr.bf16.mxu0 0
  %389 = vmatpush2.bf16.msra.mxu0 0
  %390 = vmatprep.subr.bf16.mxu0 0
  %391 = vmatpush2.bf16.msra.mxu0 0
  %392 = vmatprep.subr.bf16.mxu0 0
  %393 = vmatpush2.bf16.msra.mxu0 0
  %394 = vmatprep.subr.bf16.mxu0 0
  %395 = vmatpush2.bf16.msra.mxu0 0
  %396 = vmatprep.mubr.bf16.mxu0 0
  %397 = vmatmul.mubr.bf16.gmra.mxu0 %v288
  %v398 = vpop.f32.mrf.mxu0
  %v399 = vadd.f32 %v334, %v398
  %v400 = vpop.f32.mrf.mxu0
  %v401 = vpop.f32.mrf.mxu0
  %v402 = vadd.f32 %v337, %v401
  %v403 = vpop.f32.mrf.mxu0
  %404 = vmatprep.mubr.bf16.mxu0 0
  %405 = vmatmul.mubr.bf16.gmra.mxu0 %v291
  %v406 = vpop.f32.mrf.mxu0
  %v407 = vadd.f32 %v342, %v406
  %v408 = vpop.f32.mrf.mxu0
  %v409 = vpop.f32.mrf.mxu0
  %v410 = vadd.f32 %v345, %v409
  %v411 = vpop.f32.mrf.mxu0
  %412 = vmatprep.mubr.bf16.mxu0 0
  %413 = vmatmul.mubr.bf16.gmra.mxu0 %v294
  %v414 = vpop.f32.mrf.mxu0
  %v415 = vadd.f32 %v350, %v414
  %v416 = vpop.f32.mrf.mxu0
  %v417 = vpop.f32.mrf.mxu0
  %v418 = vadd.f32 %v353, %v417
  %v419 = vpop.f32.mrf.mxu0
  %420 = vmatprep.mubr.bf16.mxu0 0
  %421 = vmatmul.mubr.bf16.gmra.mxu0 %v297
  %v422 = vpop.f32.mrf.mxu0
  %v423 = vadd.f32 %v358, %v422
  %v424 = vpop.f32.mrf.mxu0
  %v425 = vpop.f32.mrf.mxu0
  %v426 = vadd.f32 %v361, %v425
  %v427 = vpop.f32.mrf.mxu0
  %428 = vdwg.mxu0
  %vm429 = vcmp.ge.f32.partialorder %v399, 0.0
  %vm430 = vcmp.ge.f32.partialorder %v402, 0.0
  %vm431 = vcmp.ge.f32.partialorder %v407, 0.0
  %vm432 = vcmp.ge.f32.partialorder %v410, 0.0
  %vm433 = vcmp.ge.f32.partialorder %v415, 0.0
  %vm434 = vcmp.ge.f32.partialorder %v418, 0.0
  %vm435 = vcmp.ge.f32.partialorder %v423, 0.0
  %vm436 = vcmp.ge.f32.partialorder %v426, 0.0
  %v437 = vmul.f32 %v399, 0.1
  %v438 = vmul.f32 %v402, 0.1
  %v439 = vmul.f32 %v407, 0.1
  %v440 = vmul.f32 %v410, 0.1
  %v441 = vmul.f32 %v415, 0.1
  %v442 = vmul.f32 %v418, 0.1
  %v443 = vmul.f32 %v423, 0.1
  %v444 = vmul.f32 %v426, 0.1
  %v445 = vsel %vm429, %v399, %v437
  %v446 = vsel %vm430, %v402, %v438
  %v447 = vsel %vm431, %v407, %v439
  %v448 = vsel %vm432, %v410, %v440
  %v449 = vsel %vm433, %v415, %v441
  %v450 = vsel %vm434, %v418, %v442
  %v451 = vsel %vm435, %v423, %v443
  %v452 = vsel %vm436, %v426, %v444
  %v453 = vpack.c.bf16 %v446, %v445
  %v454 = vpack.c.bf16 %v448, %v447
  %v455 = vpack.c.bf16 %v450, %v449
  %v456 = vpack.c.bf16 %v452, %v451
  %v457 = vld [vmem:[%s3] sm:$0xf]
  %v458 = vld [vmem:[%s3 + $0x4] sm:$0xf]
  %v459 = vld [vmem:[%s3 + $0x8] sm:$0xf]
  %v460 = vld [vmem:[%s3 + $0xc] sm:$0xf]
  %v461 = vld [vmem:[%s3 + $0x10] sm:$0xf]
  %v462 = vld [vmem:[%s3 + $0x14] sm:$0xf]
  %v463 = vld [vmem:[%s3 + $0x18] sm:$0xf]
  %v464 = vld [vmem:[%s3 + $0x1c] sm:$0xf]
  %v465 = vld [vmem:[%s3 + $0x20] sm:$0xf]
  %v466 = vld [vmem:[%s3 + $0x24] sm:$0xf]
  %v467 = vld [vmem:[%s3 + $0x28] sm:$0xf]
  %v468 = vld [vmem:[%s3 + $0x2c] sm:$0xf]
  %v469 = vld [vmem:[%s3 + $0x30] sm:$0xf]
  %v470 = vld [vmem:[%s3 + $0x34] sm:$0xf]
  %v471 = vld [vmem:[%s3 + $0x38] sm:$0xf]
  %v472 = vld [vmem:[%s3 + $0x3c] sm:$0xf]
  %v489 = vunpack.c.l.b16 %v457
  %v490 = vunpack.c.l.b16 %v458
  %v491 = vunpack.c.l.b16 %v459
  %v492 = vunpack.c.l.b16 %v460
  %v493 = vunpack.c.l.b16 %v461
  %v494 = vunpack.c.l.b16 %v462
  %v495 = vunpack.c.l.b16 %v463
  %v496 = vunpack.c.l.b16 %v464
  %v497 = vunpack.c.l.b16 %v465
  %v498 = vunpack.c.l.b16 %v466
  %v499 = vunpack.c.l.b16 %v467
  %v500 = vunpack.c.l.b16 %v468
  %v501 = vunpack.c.l.b16 %v469
  %v502 = vunpack.c.l.b16 %v470
  %v503 = vunpack.c.l.b16 %v471
  %v504 = vunpack.c.l.b16 %v472
  %v505 = vpack.c.b16 %v490, %v489
  %v506 = vpack.c.b16 %v492, %v491
  %v507 = vpack.c.b16 %v494, %v493
  %v508 = vpack.c.b16 %v496, %v495
  %v509 = vpack.c.b16 %v498, %v497
  %v510 = vpack.c.b16 %v500, %v499
  %v511 = vpack.c.b16 %v502, %v501
  %v512 = vpack.c.b16 %v504, %v503
  %521 = vmatprep.subr.bf16.mxu0 0
  %522 = vmatpush1.bf16.msra.mxu0 %v512
  %523 = vmatprep.subr.bf16.mxu0 0
  %524 = vmatpush1.bf16.msra.mxu0 %v511
  %525 = vmatprep.subr.bf16.mxu0 0
  %526 = vmatpush1.bf16.msra.mxu0 %v510
  %527 = vmatprep.subr.bf16.mxu0 0
  %528 = vmatpush1.bf16.msra.mxu0 %v509
  %529 = vmatprep.subr.bf16.mxu0 0
  %530 = vmatpush1.bf16.msra.mxu0 %v508
  %531 = vmatprep.subr.bf16.mxu0 0
  %532 = vmatpush1.bf16.msra.mxu0 %v507
  %533 = vmatprep.subr.bf16.mxu0 0
  %534 = vmatpush1.bf16.msra.mxu0 %v506
  %535 = vmatprep.subr.bf16.mxu0 0
  %536 = vmatpush1.bf16.msra.mxu0 %v505
  %537 = vmatprep.subr.bf16.mxu0 0
  %538 = vmatpush2.bf16.msra.mxu0 0
  %539 = vmatprep.subr.bf16.mxu0 0
  %540 = vmatpush2.bf16.msra.mxu0 0
  %541 = vmatprep.subr.bf16.mxu0 0
  %542 = vmatpush2.bf16.msra.mxu0 0
  %543 = vmatprep.subr.bf16.mxu0 0
  %544 = vmatpush2.bf16.msra.mxu0 0
  %545 = vmatprep.subr.bf16.mxu0 0
  %546 = vmatpush2.bf16.msra.mxu0 0
  %547 = vmatprep.subr.bf16.mxu0 0
  %548 = vmatpush2.bf16.msra.mxu0 0
  %549 = vmatprep.subr.bf16.mxu0 0
  %550 = vmatpush2.bf16.msra.mxu0 0
  %551 = vmatprep.subr.bf16.mxu0 0
  %552 = vmatpush2.bf16.msra.mxu0 0
  %553 = vmatprep.mubr.bf16.mxu0 0
  %554 = vmatmul.mubr.bf16.gmra.mxu0 %v453
  %v555 = vpop.f32.mrf.mxu0
  %v556 = vadd.f32 0.0, %v555
  %v557 = vpop.f32.mrf.mxu0
  %v558 = vpop.f32.mrf.mxu0
  %v559 = vadd.f32 0.0, %v558
  %v560 = vpop.f32.mrf.mxu0
  %561 = vmatprep.mubr.bf16.mxu0 0
  %562 = vmatmul.mubr.bf16.gmra.mxu0 %v454
  %v563 = vpop.f32.mrf.mxu0
  %v564 = vadd.f32 0.0, %v563
  %v565 = vpop.f32.mrf.mxu0
  %v566 = vpop.f32.mrf.mxu0
  %v567 = vadd.f32 0.0, %v566
  %v568 = vpop.f32.mrf.mxu0
  %569 = vmatprep.mubr.bf16.mxu0 0
  %570 = vmatmul.mubr.bf16.gmra.mxu0 %v455
  %v571 = vpop.f32.mrf.mxu0
  %v572 = vadd.f32 0.0, %v571
  %v573 = vpop.f32.mrf.mxu0
  %v574 = vpop.f32.mrf.mxu0
  %v575 = vadd.f32 0.0, %v574
  %v576 = vpop.f32.mrf.mxu0
  %577 = vmatprep.mubr.bf16.mxu0 0
  %578 = vmatmul.mubr.bf16.gmra.mxu0 %v456
  %v579 = vpop.f32.mrf.mxu0
  %v580 = vadd.f32 0.0, %v579
  %v581 = vpop.f32.mrf.mxu0
  %v582 = vpop.f32.mrf.mxu0
  %v583 = vadd.f32 0.0, %v582
  %v584 = vpop.f32.mrf.mxu0
  %585 = vdwg.mxu0
  %s586 = scalar_lea.vmem %s3, 64
  %v587 = vld [vmem:[%s586] sm:$0xf]
  %v588 = vld [vmem:[%s586 + $0x4] sm:$0xf]
  %v589 = vld [vmem:[%s586 + $0x8] sm:$0xf]
  %v590 = vld [vmem:[%s586 + $0xc] sm:$0xf]
  %v591 = vld [vmem:[%s586 + $0x10] sm:$0xf]
  %v592 = vld [vmem:[%s586 + $0x14] sm:$0xf]
  %v593 = vld [vmem:[%s586 + $0x18] sm:$0xf]
  %v594 = vld [vmem:[%s586 + $0x1c] sm:$0xf]
  %v595 = vld [vmem:[%s586 + $0x20] sm:$0xf]
  %v596 = vld [vmem:[%s586 + $0x24] sm:$0xf]
  %v597 = vld [vmem:[%s586 + $0x28] sm:$0xf]
  %v598 = vld [vmem:[%s586 + $0x2c] sm:$0xf]
  %v599 = vld [vmem:[%s586 + $0x30] sm:$0xf]
  %v600 = vld [vmem:[%s586 + $0x34] sm:$0xf]
  %v601 = vld [vmem:[%s586 + $0x38] sm:$0xf]
  %v602 = vld [vmem:[%s586 + $0x3c] sm:$0xf]
  %v619 = vunpack.c.l.b16 %v587
  %v620 = vunpack.c.l.b16 %v588
  %v621 = vunpack.c.l.b16 %v589
  %v622 = vunpack.c.l.b16 %v590
  %v623 = vunpack.c.l.b16 %v591
  %v624 = vunpack.c.l.b16 %v592
  %v625 = vunpack.c.l.b16 %v593
  %v626 = vunpack.c.l.b16 %v594
  %v627 = vunpack.c.l.b16 %v595
  %v628 = vunpack.c.l.b16 %v596
  %v629 = vunpack.c.l.b16 %v597
  %v630 = vunpack.c.l.b16 %v598
  %v631 = vunpack.c.l.b16 %v599
  %v632 = vunpack.c.l.b16 %v600
  %v633 = vunpack.c.l.b16 %v601
  %v634 = vunpack.c.l.b16 %v602
  %v635 = vpack.c.b16 %v620, %v619
  %v636 = vpack.c.b16 %v622, %v621
  %v637 = vpack.c.b16 %v624, %v623
  %v638 = vpack.c.b16 %v626, %v625
  %v639 = vpack.c.b16 %v628, %v627
  %v640 = vpack.c.b16 %v630, %v629
  %v641 = vpack.c.b16 %v632, %v631
  %v642 = vpack.c.b16 %v634, %v633
  %651 = vmatprep.subr.bf16.mxu0 0
  %652 = vmatpush1.bf16.msra.mxu0 %v642
  %653 = vmatprep.subr.bf16.mxu0 0
  %654 = vmatpush1.bf16.msra.mxu0 %v641
  %655 = vmatprep.subr.bf16.mxu0 0
  %656 = vmatpush1.bf16.msra.mxu0 %v640
  %657 = vmatprep.subr.bf16.mxu0 0
  %658 = vmatpush1.bf16.msra.mxu0 %v639
  %659 = vmatprep.subr.bf16.mxu0 0
  %660 = vmatpush1.bf16.msra.mxu0 %v638
  %661 = vmatprep.subr.bf16.mxu0 0
  %662 = vmatpush1.bf16.msra.mxu0 %v637
  %663 = vmatprep.subr.bf16.mxu0 0
  %664 = vmatpush1.bf16.msra.mxu0 %v636
  %665 = vmatprep.subr.bf16.mxu0 0
  %666 = vmatpush1.bf16.msra.mxu0 %v635
  %667 = vmatprep.subr.bf16.mxu0 0
  %668 = vmatpush2.bf16.msra.mxu0 0
  %669 = vmatprep.subr.bf16.mxu0 0
  %670 = vmatpush2.bf16.msra.mxu0 0
  %671 = vmatprep.subr.bf16.mxu0 0
  %672 = vmatpush2.bf16.msra.mxu0 0
  %673 = vmatprep.subr.bf16.mxu0 0
  %674 = vmatpush2.bf16.msra.mxu0 0
  %675 = vmatprep.subr.bf16.mxu0 0
  %676 = vmatpush2.bf16.msra.mxu0 0
  %677 = vmatprep.subr.bf16.mxu0 0
  %678 = vmatpush2.bf16.msra.mxu0 0
  %679 = vmatprep.subr.bf16.mxu0 0
  %680 = vmatpush2.bf16.msra.mxu0 0
  %681 = vmatprep.subr.bf16.mxu0 0
  %682 = vmatpush2.bf16.msra.mxu0 0
  %683 = vmatprep.mubr.bf16.mxu0 0
  %684 = vmatmul.mubr.bf16.gmra.mxu0 %v453
  %v685 = vpop.f32.mrf.mxu0
  %v686 = vadd.f32 0.0, %v685
  %v687 = vpop.f32.mrf.mxu0
  %v688 = vpop.f32.mrf.mxu0
  %v689 = vadd.f32 0.0, %v688
  %v690 = vpop.f32.mrf.mxu0
  %691 = vmatprep.mubr.bf16.mxu0 0
  %692 = vmatmul.mubr.bf16.gmra.mxu0 %v454
  %v693 = vpop.f32.mrf.mxu0
  %v694 = vadd.f32 0.0, %v693
  %v695 = vpop.f32.mrf.mxu0
  %v696 = vpop.f32.mrf.mxu0
  %v697 = vadd.f32 0.0, %v696
  %v698 = vpop.f32.mrf.mxu0
  %699 = vmatprep.mubr.bf16.mxu0 0
  %700 = vmatmul.mubr.bf16.gmra.mxu0 %v455
  %v701 = vpop.f32.mrf.mxu0
  %v702 = vadd.f32 0.0, %v701
  %v703 = vpop.f32.mrf.mxu0
  %v704 = vpop.f32.mrf.mxu0
  %v705 = vadd.f32 0.0, %v704
  %v706 = vpop.f32.mrf.mxu0
  %707 = vmatprep.mubr.bf16.mxu0 0
  %708 = vmatmul.mubr.bf16.gmra.mxu0 %v456
  %v709 = vpop.f32.mrf.mxu0
  %v710 = vadd.f32 0.0, %v709
  %v711 = vpop.f32.mrf.mxu0
  %v712 = vpop.f32.mrf.mxu0
  %v713 = vadd.f32 0.0, %v712
  %v714 = vpop.f32.mrf.mxu0
  %715 = vdwg.mxu0
  %s716 = scalar_lea.vmem %s3, 128
  %v717 = vld [vmem:[%s716] sm:$0xf]
  %v718 = vld [vmem:[%s716 + $0x4] sm:$0xf]
  %v719 = vld [vmem:[%s716 + $0x8] sm:$0xf]
  %v720 = vld [vmem:[%s716 + $0xc] sm:$0xf]
  %v721 = vld [vmem:[%s716 + $0x10] sm:$0xf]
  %v722 = vld [vmem:[%s716 + $0x14] sm:$0xf]
  %v723 = vld [vmem:[%s716 + $0x18] sm:$0xf]
  %v724 = vld [vmem:[%s716 + $0x1c] sm:$0xf]
  %v725 = vld [vmem:[%s716 + $0x20] sm:$0xf]
  %v726 = vld [vmem:[%s716 + $0x24] sm:$0xf]
  %v727 = vld [vmem:[%s716 + $0x28] sm:$0xf]
  %v728 = vld [vmem:[%s716 + $0x2c] sm:$0xf]
  %v729 = vld [vmem:[%s716 + $0x30] sm:$0xf]
  %v730 = vld [vmem:[%s716 + $0x34] sm:$0xf]
  %v731 = vld [vmem:[%s716 + $0x38] sm:$0xf]
  %v732 = vld [vmem:[%s716 + $0x3c] sm:$0xf]
  %v749 = vunpack.c.l.b16 %v717
  %v750 = vunpack.c.l.b16 %v718
  %v751 = vunpack.c.l.b16 %v719
  %v752 = vunpack.c.l.b16 %v720
  %v753 = vunpack.c.l.b16 %v721
  %v754 = vunpack.c.l.b16 %v722
  %v755 = vunpack.c.l.b16 %v723
  %v756 = vunpack.c.l.b16 %v724
  %v757 = vunpack.c.l.b16 %v725
  %v758 = vunpack.c.l.b16 %v726
  %v759 = vunpack.c.l.b16 %v727
  %v760 = vunpack.c.l.b16 %v728
  %v761 = vunpack.c.l.b16 %v729
  %v762 = vunpack.c.l.b16 %v730
  %v763 = vunpack.c.l.b16 %v731
  %v764 = vunpack.c.l.b16 %v732
  %v765 = vpack.c.b16 %v750, %v749
  %v766 = vpack.c.b16 %v752, %v751
  %v767 = vpack.c.b16 %v754, %v753
  %v768 = vpack.c.b16 %v756, %v755
  %v769 = vpack.c.b16 %v758, %v757
  %v770 = vpack.c.b16 %v760, %v759
  %v771 = vpack.c.b16 %v762, %v761
  %v772 = vpack.c.b16 %v764, %v763
  %781 = vmatprep.subr.bf16.mxu0 0
  %782 = vmatpush1.bf16.msra.mxu0 %v772
  %783 = vmatprep.subr.bf16.mxu0 0
  %784 = vmatpush1.bf16.msra.mxu0 %v771
  %785 = vmatprep.subr.bf16.mxu0 0
  %786 = vmatpush1.bf16.msra.mxu0 %v770
  %787 = vmatprep.subr.bf16.mxu0 0
  %788 = vmatpush1.bf16.msra.mxu0 %v769
  %789 = vmatprep.subr.bf16.mxu0 0
  %790 = vmatpush1.bf16.msra.mxu0 %v768
  %791 = vmatprep.subr.bf16.mxu0 0
  %792 = vmatpush1.bf16.msra.mxu0 %v767
  %793 = vmatprep.subr.bf16.mxu0 0
  %794 = vmatpush1.bf16.msra.mxu0 %v766
  %795 = vmatprep.subr.bf16.mxu0 0
  %796 = vmatpush1.bf16.msra.mxu0 %v765
  %797 = vmatprep.subr.bf16.mxu0 0
  %798 = vmatpush2.bf16.msra.mxu0 0
  %799 = vmatprep.subr.bf16.mxu0 0
  %800 = vmatpush2.bf16.msra.mxu0 0
  %801 = vmatprep.subr.bf16.mxu0 0
  %802 = vmatpush2.bf16.msra.mxu0 0
  %803 = vmatprep.subr.bf16.mxu0 0
  %804 = vmatpush2.bf16.msra.mxu0 0
  %805 = vmatprep.subr.bf16.mxu0 0
  %806 = vmatpush2.bf16.msra.mxu0 0
  %807 = vmatprep.subr.bf16.mxu0 0
  %808 = vmatpush2.bf16.msra.mxu0 0
  %809 = vmatprep.subr.bf16.mxu0 0
  %810 = vmatpush2.bf16.msra.mxu0 0
  %811 = vmatprep.subr.bf16.mxu0 0
  %812 = vmatpush2.bf16.msra.mxu0 0
  %813 = vmatprep.mubr.bf16.mxu0 0
  %814 = vmatmul.mubr.bf16.gmra.mxu0 %v453
  %v815 = vpop.f32.mrf.mxu0
  %v816 = vadd.f32 0.0, %v815
  %v817 = vpop.f32.mrf.mxu0
  %v818 = vpop.f32.mrf.mxu0
  %v819 = vadd.f32 0.0, %v818
  %v820 = vpop.f32.mrf.mxu0
  %821 = vmatprep.mubr.bf16.mxu0 0
  %822 = vmatmul.mubr.bf16.gmra.mxu0 %v454
  %v823 = vpop.f32.mrf.mxu0
  %v824 = vadd.f32 0.0, %v823
  %v825 = vpop.f32.mrf.mxu0
  %v826 = vpop.f32.mrf.mxu0
  %v827 = vadd.f32 0.0, %v826
  %v828 = vpop.f32.mrf.mxu0
  %829 = vmatprep.mubr.bf16.mxu0 0
  %830 = vmatmul.mubr.bf16.gmra.mxu0 %v455
  %v831 = vpop.f32.mrf.mxu0
  %v832 = vadd.f32 0.0, %v831
  %v833 = vpop.f32.mrf.mxu0
  %v834 = vpop.f32.mrf.mxu0
  %v835 = vadd.f32 0.0, %v834
  %v836 = vpop.f32.mrf.mxu0
  %837 = vmatprep.mubr.bf16.mxu0 0
  %838 = vmatmul.mubr.bf16.gmra.mxu0 %v456
  %v839 = vpop.f32.mrf.mxu0
  %v840 = vadd.f32 0.0, %v839
  %v841 = vpop.f32.mrf.mxu0
  %v842 = vpop.f32.mrf.mxu0
  %v843 = vadd.f32 0.0, %v842
  %v844 = vpop.f32.mrf.mxu0
  %845 = vdwg.mxu0
  %s846 = scalar_lea.vmem %s3, 192
  %v847 = vld [vmem:[%s846] sm:$0xf]
  %v848 = vld [vmem:[%s846 + $0x4] sm:$0xf]
  %v849 = vld [vmem:[%s846 + $0x8] sm:$0xf]
  %v850 = vld [vmem:[%s846 + $0xc] sm:$0xf]
  %v851 = vld [vmem:[%s846 + $0x10] sm:$0xf]
  %v852 = vld [vmem:[%s846 + $0x14] sm:$0xf]
  %v853 = vld [vmem:[%s846 + $0x18] sm:$0xf]
  %v854 = vld [vmem:[%s846 + $0x1c] sm:$0xf]
  %v855 = vld [vmem:[%s846 + $0x20] sm:$0xf]
  %v856 = vld [vmem:[%s846 + $0x24] sm:$0xf]
  %v857 = vld [vmem:[%s846 + $0x28] sm:$0xf]
  %v858 = vld [vmem:[%s846 + $0x2c] sm:$0xf]
  %v859 = vld [vmem:[%s846 + $0x30] sm:$0xf]
  %v860 = vld [vmem:[%s846 + $0x34] sm:$0xf]
  %v861 = vld [vmem:[%s846 + $0x38] sm:$0xf]
  %v862 = vld [vmem:[%s846 + $0x3c] sm:$0xf]
  %v879 = vunpack.c.l.b16 %v847
  %v880 = vunpack.c.l.b16 %v848
  %v881 = vunpack.c.l.b16 %v849
  %v882 = vunpack.c.l.b16 %v850
  %v883 = vunpack.c.l.b16 %v851
  %v884 = vunpack.c.l.b16 %v852
  %v885 = vunpack.c.l.b16 %v853
  %v886 = vunpack.c.l.b16 %v854
  %v887 = vunpack.c.l.b16 %v855
  %v888 = vunpack.c.l.b16 %v856
  %v889 = vunpack.c.l.b16 %v857
  %v890 = vunpack.c.l.b16 %v858
  %v891 = vunpack.c.l.b16 %v859
  %v892 = vunpack.c.l.b16 %v860
  %v893 = vunpack.c.l.b16 %v861
  %v894 = vunpack.c.l.b16 %v862
  %v895 = vpack.c.b16 %v880, %v879
  %v896 = vpack.c.b16 %v882, %v881
  %v897 = vpack.c.b16 %v884, %v883
  %v898 = vpack.c.b16 %v886, %v885
  %v899 = vpack.c.b16 %v888, %v887
  %v900 = vpack.c.b16 %v890, %v889
  %v901 = vpack.c.b16 %v892, %v891
  %v902 = vpack.c.b16 %v894, %v893
  %911 = vmatprep.subr.bf16.mxu0 0
  %912 = vmatpush1.bf16.msra.mxu0 %v902
  %913 = vmatprep.subr.bf16.mxu0 0
  %914 = vmatpush1.bf16.msra.mxu0 %v901
  %915 = vmatprep.subr.bf16.mxu0 0
  %916 = vmatpush1.bf16.msra.mxu0 %v900
  %917 = vmatprep.subr.bf16.mxu0 0
  %918 = vmatpush1.bf16.msra.mxu0 %v899
  %919 = vmatprep.subr.bf16.mxu0 0
  %920 = vmatpush1.bf16.msra.mxu0 %v898
  %921 = vmatprep.subr.bf16.mxu0 0
  %922 = vmatpush1.bf16.msra.mxu0 %v897
  %923 = vmatprep.subr.bf16.mxu0 0
  %924 = vmatpush1.bf16.msra.mxu0 %v896
  %925 = vmatprep.subr.bf16.mxu0 0
  %926 = vmatpush1.bf16.msra.mxu0 %v895
  %927 = vmatprep.subr.bf16.mxu0 0
  %928 = vmatpush2.bf16.msra.mxu0 0
  %929 = vmatprep.subr.bf16.mxu0 0
  %930 = vmatpush2.bf16.msra.mxu0 0
  %931 = vmatprep.subr.bf16.mxu0 0
  %932 = vmatpush2.bf16.msra.mxu0 0
  %933 = vmatprep.subr.bf16.mxu0 0
  %934 = vmatpush2.bf16.msra.mxu0 0
  %935 = vmatprep.subr.bf16.mxu0 0
  %936 = vmatpush2.bf16.msra.mxu0 0
  %937 = vmatprep.subr.bf16.mxu0 0
  %938 = vmatpush2.bf16.msra.mxu0 0
  %939 = vmatprep.subr.bf16.mxu0 0
  %940 = vmatpush2.bf16.msra.mxu0 0
  %941 = vmatprep.subr.bf16.mxu0 0
  %942 = vmatpush2.bf16.msra.mxu0 0
  %943 = vmatprep.mubr.bf16.mxu0 0
  %944 = vmatmul.mubr.bf16.gmra.mxu0 %v453
  %v945 = vpop.f32.mrf.mxu0
  %v946 = vadd.f32 0.0, %v945
  %v947 = vpop.f32.mrf.mxu0
  %v948 = vpop.f32.mrf.mxu0
  %v949 = vadd.f32 0.0, %v948
  %v950 = vpop.f32.mrf.mxu0
  %951 = vmatprep.mubr.bf16.mxu0 0
  %952 = vmatmul.mubr.bf16.gmra.mxu0 %v454
  %v953 = vpop.f32.mrf.mxu0
  %v954 = vadd.f32 0.0, %v953
  %v955 = vpop.f32.mrf.mxu0
  %v956 = vpop.f32.mrf.mxu0
  %v957 = vadd.f32 0.0, %v956
  %v958 = vpop.f32.mrf.mxu0
  %959 = vmatprep.mubr.bf16.mxu0 0
  %960 = vmatmul.mubr.bf16.gmra.mxu0 %v455
  %v961 = vpop.f32.mrf.mxu0
  %v962 = vadd.f32 0.0, %v961
  %v963 = vpop.f32.mrf.mxu0
  %v964 = vpop.f32.mrf.mxu0
  %v965 = vadd.f32 0.0, %v964
  %v966 = vpop.f32.mrf.mxu0
  %967 = vmatprep.mubr.bf16.mxu0 0
  %968 = vmatmul.mubr.bf16.gmra.mxu0 %v456
  %v969 = vpop.f32.mrf.mxu0
  %v970 = vadd.f32 0.0, %v969
  %v971 = vpop.f32.mrf.mxu0
  %v972 = vpop.f32.mrf.mxu0
  %v973 = vadd.f32 0.0, %v972
  %v974 = vpop.f32.mrf.mxu0
  %975 = vdwg.mxu0
  %v976 = vmax.f32 %v556, %v686
  %v977 = vmax.f32 %v559, %v689
  %v978 = vmax.f32 %v564, %v694
  %v979 = vmax.f32 %v567, %v697
  %v980 = vmax.f32 %v572, %v702
  %v981 = vmax.f32 %v575, %v705
  %v982 = vmax.f32 %v580, %v710
  %v983 = vmax.f32 %v583, %v713
  %v984 = vmax.f32 %v816, %v946
  %v985 = vmax.f32 %v819, %v949
  %v986 = vmax.f32 %v824, %v954
  %v987 = vmax.f32 %v827, %v957
  %v988 = vmax.f32 %v832, %v962
  %v989 = vmax.f32 %v835, %v965
  %v990 = vmax.f32 %v840, %v970
  %v991 = vmax.f32 %v843, %v973
  %v992 = vmax.f32 %v976, %v984
  %v993 = vmax.f32 %v977, %v985
  %v994 = vmax.f32 %v978, %v986
  %v995 = vmax.f32 %v979, %v987
  %v996 = vmax.f32 %v980, %v988
  %v997 = vmax.f32 %v981, %v989
  %v998 = vmax.f32 %v982, %v990
  %v999 = vmax.f32 %v983, %v991
  %v1000 = vpack.c.bf16 %v993, %v992
  %v1001 = vpack.c.bf16 %v995, %v994
  %v1002 = vpack.c.bf16 %v997, %v996
  %v1003 = vpack.c.bf16 %v999, %v998
  %v1008 = vunpack.c.l.b16 %v1000
  %v1009 = vunpack.c.h.b16 %v1000
  %v1010 = vunpack.c.l.b16 %v1001
  %v1011 = vunpack.c.h.b16 %v1001
  %v1012 = vunpack.c.l.b16 %v1002
  %v1013 = vunpack.c.h.b16 %v1002
  %v1014 = vunpack.c.l.b16 %v1003
  %v1015 = vunpack.c.h.b16 %v1003
  %v1016 = vpack.c.b16 %v1008, %v1008
  %v1017 = vpack.c.b16 %v1009, %v1009
  %v1018 = vpack.c.b16 %v1010, %v1010
  %v1019 = vpack.c.b16 %v1011, %v1011
  %v1020 = vpack.c.b16 %v1012, %v1012
  %v1021 = vpack.c.b16 %v1013, %v1013
  %v1022 = vpack.c.b16 %v1014, %v1014
  %v1023 = vpack.c.b16 %v1015, %v1015
  %vm1032 = vcmask 257024
  %1033 = vst.msk [vmem:[%s4] sm:$0xf] %vm1032, %v1016
  %1034 = vst.msk [vmem:[%s4 + $0x4] sm:$0xf] %vm1032, %v1017
  %1035 = vst.msk [vmem:[%s4 + $0x8] sm:$0xf] %vm1032, %v1018
  %1036 = vst.msk [vmem:[%s4 + $0xc] sm:$0xf] %vm1032, %v1019
  %1037 = vst.msk [vmem:[%s4 + $0x10] sm:$0xf] %vm1032, %v1020
  %1038 = vst.msk [vmem:[%s4 + $0x14] sm:$0xf] %vm1032, %v1021
  %1039 = vst.msk [vmem:[%s4 + $0x18] sm:$0xf] %vm1032, %v1022
  %1040 = vst.msk [vmem:[%s4 + $0x1c] sm:$0xf] %vm1032, %v1023
  // Predicated region
  $region18: #{mini_model_forward.10} parent=0 // pred_check
    _
  $region19: #{mini_model_forward.10} parent=0 // pred_check_branch
    %1042 = sbr.rel (0) target = $region21
  $region20: #{mini_model_forward.10} parent=0 // pred_region
    _
  $region21: #{mini_model_forward.10} parent=0 // pred_fallthru
    _
  // Predicated region
  $region22: #{mini_model_forward.10} parent=0 // pred_check
    _
  $region23: #{mini_model_forward.10} parent=0 // pred_check_branch
    %1044 = sbr.rel (0) target = $region25
  $region24: #{mini_model_forward.10} parent=0 // pred_region
    _
  $region25: #{mini_model_forward.10} parent=0 // pred_fallthru
    _

// kernel: mini_model_forward.11
$region0: #{mini_model_forward.11}
  #allocation0 [shape = 'u32[]', space=smem, size = 0x4, offset = 0x4, fixed_abs, tag = 'smem constant byte address 0x4 - core index']
  #allocation1 [shape = 'u32[144,128]{1,0:T(1,128)}', space=vmem, size = 0x12000, scoped, tag = 'internal scratch']
  %s0 = inlined_call_operand.vmem [shape: bf16[128,576], index: 0, kind: input, shape index: {}]
  %s1 = inlined_call_operand.vmem [shape: bf16[576,32], index: 1, kind: input, shape index: {}]
  %s2 = inlined_call_operand.vmem [shape: f32[128,1], index: 2, kind: input, shape index: {}]
  %s3 = inlined_call_operand.vmem [shape: bf16[4,32,8], index: 3, kind: input, shape index: {}]
  %s4 = inlined_call_operand.vmem [shape: bf16[128,8], index: 4, kind: output, shape index: {}]
  %s5 = sld [smem:[#allocation0]]
  $region26: #{mini_model_forward.11} parent=0
    _
  %s7 = ssub.s32 1, %s5
  %s8 = scalar_select 0, %s7, %s5
  // Predicated region
  $region2: #{mini_model_forward.11} parent=0 // pred_check
    _
  $region3: #{mini_model_forward.11} parent=0 // pred_check_branch
    %10 = sbr.rel (0) target = $region5
  $region4: #{mini_model_forward.11} parent=0 // pred_region
    _
  $region5: #{mini_model_forward.11} parent=0 // pred_fallthru
    _
  // Predicated region
  $region6: #{mini_model_forward.11} parent=0 // pred_check
    _
  $region7: #{mini_model_forward.11} parent=0 // pred_check_branch
    %12 = sbr.rel (0) target = $region9
  $region8: #{mini_model_forward.11} parent=0 // pred_region
    _
  $region9: #{mini_model_forward.11} parent=0 // pred_fallthru
    _
  // Predicated region
  $region10: #{mini_model_forward.11} parent=0 // pred_check
    _
  $region11: #{mini_model_forward.11} parent=0 // pred_check_branch
    %14 = sbr.rel (0) target = $region13
  $region12: #{mini_model_forward.11} parent=0 // pred_region
    _
  $region13: #{mini_model_forward.11} parent=0 // pred_fallthru
    _
  // Predicated region
  $region14: #{mini_model_forward.11} parent=0 // pred_check
    _
  $region15: #{mini_model_forward.11} parent=0 // pred_check_branch
    %16 = sbr.rel (0) target = $region17
  $region16: #{mini_model_forward.11} parent=0 // pred_region
    _
  $region17: #{mini_model_forward.11} parent=0 // pred_fallthru
    _
  %v18 = vld [vmem:[%s0] sm:$0xff]
  %v19 = vld [vmem:[%s0 + $0x8] sm:$0xff]
  %v20 = vld [vmem:[%s0 + $0x10] sm:$0xf]
  %v21 = vld [vmem:[%s0 + $0x14] sm:$0xff]
  %v22 = vld [vmem:[%s0 + $0x1c] sm:$0xff]
  %v23 = vld [vmem:[%s0 + $0x24] sm:$0xf]
  %v24 = vld [vmem:[%s0 + $0x28] sm:$0xff]
  %v25 = vld [vmem:[%s0 + $0x30] sm:$0xff]
  %v26 = vld [vmem:[%s0 + $0x38] sm:$0xf]
  %v27 = vld [vmem:[%s0 + $0x3c] sm:$0xff]
  %v28 = vld [vmem:[%s0 + $0x44] sm:$0xff]
  %v29 = vld [vmem:[%s0 + $0x4c] sm:$0xf]
  %v30 = vld [vmem:[%s0 + $0x50] sm:$0xff]
  %v31 = vld [vmem:[%s0 + $0x58] sm:$0xff]
  %v32 = vld [vmem:[%s0 + $0x60] sm:$0xf]
  %v33 = vld [vmem:[%s0 + $0x64] sm:$0xff]
  %v34 = vld [vmem:[%s0 + $0x6c] sm:$0xff]
  %v35 = vld [vmem:[%s0 + $0x74] sm:$0xf]
  %v36 = vld [vmem:[%s0 + $0x78] sm:$0xff]
  %v37 = vld [vmem:[%s0 + $0x80] sm:$0xff]
  %v38 = vld [vmem:[%s0 + $0x88] sm:$0xf]
  %v39 = vld [vmem:[%s0 + $0x8c] sm:$0xff]
  %v40 = vld [vmem:[%s0 + $0x94] sm:$0xff]
  %v41 = vld [vmem:[%s0 + $0x9c] sm:$0xf]
  %v42 = vld [vmem:[%s0 + $0xa0] sm:$0xff]
  %v43 = vld [vmem:[%s0 + $0xa8] sm:$0xff]
  %v44 = vld [vmem:[%s0 + $0xb0] sm:$0xf]
  %v45 = vld [vmem:[%s0 + $0xb4] sm:$0xff]
  %v46 = vld [vmem:[%s0 + $0xbc] sm:$0xff]
  %v47 = vld [vmem:[%s0 + $0xc4] sm:$0xf]
  %v48 = vld [vmem:[%s0 + $0xc8] sm:$0xff]
  %v49 = vld [vmem:[%s0 + $0xd0] sm:$0xff]
  %v50 = vld [vmem:[%s0 + $0xd8] sm:$0xf]
  %v51 = vld [vmem:[%s0 + $0xdc] sm:$0xff]
  %v52 = vld [vmem:[%s0 + $0xe4] sm:$0xff]
  %v53 = vld [vmem:[%s0 + $0xec] sm:$0xf]
  %v54 = vld [vmem:[%s0 + $0xf0] sm:$0xff]
  %v55 = vld [vmem:[%s0 + $0xf8] sm:$0xff]
  %v56 = vld [vmem:[%s0 + $0x100] sm:$0xf]
  %v57 = vld [vmem:[%s0 + $0x104] sm:$0xff]
  %v58 = vld [vmem:[%s0 + $0x10c] sm:$0xff]
  %v59 = vld [vmem:[%s0 + $0x114] sm:$0xf]
  %v60 = vld [vmem:[%s0 + $0x118] sm:$0xff]
  %v61 = vld [vmem:[%s0 + $0x120] sm:$0xff]
  %v62 = vld [vmem:[%s0 + $0x128] sm:$0xf]
  %v63 = vld [vmem:[%s0 + $0x12c] sm:$0xff]
  %v64 = vld [vmem:[%s0 + $0x134] sm:$0xff]
  %v65 = vld [vmem:[%s0 + $0x13c] sm:$0xf]
  %v66 = vld [vmem:[%s1] sm:$0xf]
  %v67 = vld [vmem:[%s1 + $0x4] sm:$0xf]
  %v68 = vld [vmem:[%s1 + $0x8] sm:$0xf]
  %v69 = vld [vmem:[%s1 + $0xc] sm:$0xf]
  %v70 = vld [vmem:[%s1 + $0x10] sm:$0xf]
  %v71 = vld [vmem:[%s1 + $0x14] sm:$0xf]
  %v72 = vld [vmem:[%s1 + $0x18] sm:$0xf]
  %v73 = vld [vmem:[%s1 + $0x1c] sm:$0xf]
  %v74 = vld [vmem:[%s1 + $0x20] sm:$0xf]
  %v75 = vld [vmem:[%s1 + $0x24] sm:$0xf]
  %v76 = vld [vmem:[%s1 + $0x28] sm:$0xf]
  %v77 = vld [vmem:[%s1 + $0x2c] sm:$0xf]
  %v78 = vld [vmem:[%s1 + $0x30] sm:$0xf]
  %v79 = vld [vmem:[%s1 + $0x34] sm:$0xf]
  %v80 = vld [vmem:[%s1 + $0x38] sm:$0xf]
  %v81 = vld [vmem:[%s1 + $0x3c] sm:$0xf]
  %v82 = vld [vmem:[%s1 + $0x40] sm:$0xf]
  %v83 = vld [vmem:[%s1 + $0x44] sm:$0xf]
  %v84 = vld [vmem:[%s1 + $0x48] sm:$0xf]
  %v85 = vld [vmem:[%s1 + $0x4c] sm:$0xf]
  %v86 = vld [vmem:[%s1 + $0x50] sm:$0xf]
  %v87 = vld [vmem:[%s1 + $0x54] sm:$0xf]
  %v88 = vld [vmem:[%s1 + $0x58] sm:$0xf]
  %v89 = vld [vmem:[%s1 + $0x5c] sm:$0xf]
  %v90 = vld [vmem:[%s1 + $0x60] sm:$0xf]
  %v91 = vld [vmem:[%s1 + $0x64] sm:$0xf]
  %v92 = vld [vmem:[%s1 + $0x68] sm:$0xf]
  %v93 = vld [vmem:[%s1 + $0x6c] sm:$0xf]
  %v94 = vld [vmem:[%s1 + $0x70] sm:$0xf]
  %v95 = vld [vmem:[%s1 + $0x74] sm:$0xf]
  %v96 = vld [vmem:[%s1 + $0x78] sm:$0xf]
  %v97 = vld [vmem:[%s1 + $0x7c] sm:$0xf]
  %v98 = vld [vmem:[%s1 + $0x80] sm:$0xf]
  %v99 = vld [vmem:[%s1 + $0x84] sm:$0xf]
  %v100 = vld [vmem:[%s1 + $0x88] sm:$0xf]
  %v101 = vld [vmem:[%s1 + $0x8c] sm:$0xf]
  %v102 = vld [vmem:[%s1 + $0x90] sm:$0xf]
  %v103 = vld [vmem:[%s1 + $0x94] sm:$0xf]
  %v104 = vld [vmem:[%s1 + $0x98] sm:$0xf]
  %v105 = vld [vmem:[%s1 + $0x9c] sm:$0xf]
  %v106 = vld [vmem:[%s1 + $0xa0] sm:$0xf]
  %v107 = vld [vmem:[%s1 + $0xa4] sm:$0xf]
  %v108 = vld [vmem:[%s1 + $0xa8] sm:$0xf]
  %v109 = vld [vmem:[%s1 + $0xac] sm:$0xf]
  %v110 = vld [vmem:[%s1 + $0xb0] sm:$0xf]
  %v111 = vld [vmem:[%s1 + $0xb4] sm:$0xf]
  %v112 = vld [vmem:[%s1 + $0xb8] sm:$0xf]
  %v113 = vld [vmem:[%s1 + $0xbc] sm:$0xf]
  %v114 = vld [vmem:[%s1 + $0xc0] sm:$0xf]
  %v115 = vld [vmem:[%s1 + $0xc4] sm:$0xf]
  %v116 = vld [vmem:[%s1 + $0xc8] sm:$0xf]
  %v117 = vld [vmem:[%s1 + $0xcc] sm:$0xf]
  %v118 = vld [vmem:[%s1 + $0xd0] sm:$0xf]
  %v119 = vld [vmem:[%s1 + $0xd4] sm:$0xf]
  %v120 = vld [vmem:[%s1 + $0xd8] sm:$0xf]
  %v121 = vld [vmem:[%s1 + $0xdc] sm:$0xf]
  %v122 = vld [vmem:[%s1 + $0xe0] sm:$0xf]
  %v123 = vld [vmem:[%s1 + $0xe4] sm:$0xf]
  %v124 = vld [vmem:[%s1 + $0xe8] sm:$0xf]
  %v125 = vld [vmem:[%s1 + $0xec] sm:$0xf]
  %v126 = vld [vmem:[%s1 + $0xf0] sm:$0xf]
  %v127 = vld [vmem:[%s1 + $0xf4] sm:$0xf]
  %v128 = vld [vmem:[%s1 + $0xf8] sm:$0xf]
  %v129 = vld [vmem:[%s1 + $0xfc] sm:$0xf]
  %v130 = vld [vmem:[%s1 + $0x100] sm:$0xf]
  %v131 = vld [vmem:[%s1 + $0x104] sm:$0xf]
  %v132 = vld [vmem:[%s1 + $0x108] sm:$0xf]
  %v133 = vld [vmem:[%s1 + $0x10c] sm:$0xf]
  %v134 = vld [vmem:[%s1 + $0x110] sm:$0xf]
  %v135 = vld [vmem:[%s1 + $0x114] sm:$0xf]
  %v136 = vld [vmem:[%s1 + $0x118] sm:$0xf]
  %v137 = vld [vmem:[%s1 + $0x11c] sm:$0xf]
  %v138 = vld [vmem:[%s2] sm:$0xff]
  %v139 = vld [vmem:[%s2 + $0x8] sm:$0xff]
  %v140 = vld [vmem:[%s2 + $0x10] sm:$0xff]
  %v141 = vld [vmem:[%s2 + $0x18] sm:$0xff]
  %v142 = vld [vmem:[%s2 + $0x20] sm:$0xff]
  %v143 = vld [vmem:[%s2 + $0x28] sm:$0xff]
  %v144 = vld [vmem:[%s2 + $0x30] sm:$0xff]
  %v145 = vld [vmem:[%s2 + $0x38] sm:$0xff]
  %v146 = vld [vmem:[%s2 + $0x40] sm:$0xff]
  %v147 = vld [vmem:[%s2 + $0x48] sm:$0xff]
  %v148 = vld [vmem:[%s2 + $0x50] sm:$0xff]
  %v149 = vld [vmem:[%s2 + $0x58] sm:$0xff]
  %v150 = vld [vmem:[%s2 + $0x60] sm:$0xff]
  %v151 = vld [vmem:[%s2 + $0x68] sm:$0xff]
  %v152 = vld [vmem:[%s2 + $0x70] sm:$0xff]
  %v153 = vld [vmem:[%s2 + $0x78] sm:$0xff]
  %155 = vset.pattern.permute.xlu0 0
  %156 = vperm.xlu0 %155, %v138
  %v157 = vpop.permute.xlu0 %156
  %160 = vset.pattern.permute.xlu0 0
  %161 = vperm.xlu0 %160, %v139
  %v162 = vpop.permute.xlu0 %161
  %165 = vset.pattern.permute.xlu0 0
  %166 = vperm.xlu0 %165, %v140
  %v167 = vpop.permute.xlu0 %166
  %170 = vset.pattern.permute.xlu0 0
  %171 = vperm.xlu0 %170, %v141
  %v172 = vpop.permute.xlu0 %171
  %175 = vset.pattern.permute.xlu0 0
  %176 = vperm.xlu0 %175, %v142
  %v177 = vpop.permute.xlu0 %176
  %180 = vset.pattern.permute.xlu0 0
  %181 = vperm.xlu0 %180, %v143
  %v182 = vpop.permute.xlu0 %181
  %185 = vset.pattern.permute.xlu0 0
  %186 = vperm.xlu0 %185, %v144
  %v187 = vpop.permute.xlu0 %186
  %190 = vset.pattern.permute.xlu0 0
  %191 = vperm.xlu0 %190, %v145
  %v192 = vpop.permute.xlu0 %191
  %195 = vset.pattern.permute.xlu0 0
  %196 = vperm.xlu0 %195, %v146
  %v197 = vpop.permute.xlu0 %196
  %200 = vset.pattern.permute.xlu0 0
  %201 = vperm.xlu0 %200, %v147
  %v202 = vpop.permute.xlu0 %201
  %205 = vset.pattern.permute.xlu0 0
  %206 = vperm.xlu0 %205, %v148
  %v207 = vpop.permute.xlu0 %206
  %210 = vset.pattern.permute.xlu0 0
  %211 = vperm.xlu0 %210, %v149
  %v212 = vpop.permute.xlu0 %211
  %215 = vset.pattern.permute.xlu0 0
  %216 = vperm.xlu0 %215, %v150
  %v217 = vpop.permute.xlu0 %216
  %220 = vset.pattern.permute.xlu0 0
  %221 = vperm.xlu0 %220, %v151
  %v222 = vpop.permute.xlu0 %221
  %225 = vset.pattern.permute.xlu0 0
  %226 = vperm.xlu0 %225, %v152
  %v227 = vpop.permute.xlu0 %226
  %230 = vset.pattern.permute.xlu0 0
  %231 = vperm.xlu0 %230, %v153
  %v232 = vpop.permute.xlu0 %231
  %v282 = vunpack.c.l.b16 %v18
  %v283 = vunpack.c.h.b16 %v18
  %v284 = vunpack.c.l.b16 %v19
  %v285 = vunpack.c.h.b16 %v19
  %v286 = vunpack.c.l.b16 %v20
  %v287 = vunpack.c.l.b16 %v21
  %v288 = vunpack.c.h.b16 %v21
  %v289 = vunpack.c.l.b16 %v22
  %v290 = vunpack.c.h.b16 %v22
  %v291 = vunpack.c.l.b16 %v23
  %v292 = vunpack.c.l.b16 %v24
  %v293 = vunpack.c.h.b16 %v24
  %v294 = vunpack.c.l.b16 %v25
  %v295 = vunpack.c.h.b16 %v25
  %v296 = vunpack.c.l.b16 %v26
  %v297 = vunpack.c.l.b16 %v27
  %v298 = vunpack.c.h.b16 %v27
  %v299 = vunpack.c.l.b16 %v28
  %v300 = vunpack.c.h.b16 %v28
  %v301 = vunpack.c.l.b16 %v29
  %v302 = vunpack.c.l.b16 %v30
  %v303 = vunpack.c.h.b16 %v30
  %v304 = vunpack.c.l.b16 %v31
  %v305 = vunpack.c.h.b16 %v31
  %v306 = vunpack.c.l.b16 %v32
  %v307 = vunpack.c.l.b16 %v33
  %v308 = vunpack.c.h.b16 %v33
  %v309 = vunpack.c.l.b16 %v34
  %v310 = vunpack.c.h.b16 %v34
  %v311 = vunpack.c.l.b16 %v35
  %v312 = vunpack.c.l.b16 %v36
  %v313 = vunpack.c.h.b16 %v36
  %v314 = vunpack.c.l.b16 %v37
  %v315 = vunpack.c.h.b16 %v37
  %v316 = vunpack.c.l.b16 %v38
  %v317 = vunpack.c.l.b16 %v39
  %v318 = vunpack.c.h.b16 %v39
  %v319 = vunpack.c.l.b16 %v40
  %v320 = vunpack.c.h.b16 %v40
  %v321 = vunpack.c.l.b16 %v41
  %v322 = vunpack.c.l.b16 %v42
  %v323 = vunpack.c.h.b16 %v42
  %v324 = vunpack.c.l.b16 %v43
  %v325 = vunpack.c.h.b16 %v43
  %v326 = vunpack.c.l.b16 %v44
  %v327 = vunpack.c.l.b16 %v45
  %v328 = vunpack.c.h.b16 %v45
  %v329 = vunpack.c.l.b16 %v46
  %v330 = vunpack.c.h.b16 %v46
  %v331 = vunpack.c.l.b16 %v47
  %v332 = vunpack.c.l.b16 %v48
  %v333 = vunpack.c.h.b16 %v48
  %v334 = vunpack.c.l.b16 %v49
  %v335 = vunpack.c.h.b16 %v49
  %v336 = vunpack.c.l.b16 %v50
  %v337 = vunpack.c.l.b16 %v51
  %v338 = vunpack.c.h.b16 %v51
  %v339 = vunpack.c.l.b16 %v52
  %v340 = vunpack.c.h.b16 %v52
  %v341 = vunpack.c.l.b16 %v53
  %v342 = vunpack.c.l.b16 %v54
  %v343 = vunpack.c.h.b16 %v54
  %v344 = vunpack.c.l.b16 %v55
  %v345 = vunpack.c.h.b16 %v55
  %v346 = vunpack.c.l.b16 %v56
  %v347 = vunpack.c.l.b16 %v57
  %v348 = vunpack.c.h.b16 %v57
  %v349 = vunpack.c.l.b16 %v58
  %v350 = vunpack.c.h.b16 %v58
  %v351 = vunpack.c.l.b16 %v59
  %v352 = vunpack.c.l.b16 %v60
  %v353 = vunpack.c.h.b16 %v60
  %v354 = vunpack.c.l.b16 %v61
  %v355 = vunpack.c.h.b16 %v61
  %v356 = vunpack.c.l.b16 %v62
  %v357 = vunpack.c.l.b16 %v63
  %v358 = vunpack.c.h.b16 %v63
  %v359 = vunpack.c.l.b16 %v64
  %v360 = vunpack.c.h.b16 %v64
  %v361 = vunpack.c.l.b16 %v65
  %v362 = vpack.c.b16 %v287, %v282
  %v363 = vpack.c.b16 %v288, %v283
  %v364 = vpack.c.b16 %v289, %v284
  %v365 = vpack.c.b16 %v290, %v285
  %v366 = vpack.c.b16 %v291, %v286
  %v367 = vpack.c.b16 %v297, %v292
  %v368 = vpack.c.b16 %v298, %v293
  %v369 = vpack.c.b16 %v299, %v294
  %v370 = vpack.c.b16 %v300, %v295
  %v371 = vpack.c.b16 %v301, %v296
  %v372 = vpack.c.b16 %v307, %v302
  %v373 = vpack.c.b16 %v308, %v303
  %v374 = vpack.c.b16 %v309, %v304
  %v375 = vpack.c.b16 %v310, %v305
  %v376 = vpack.c.b16 %v311, %v306
  %v377 = vpack.c.b16 %v317, %v312
  %v378 = vpack.c.b16 %v318, %v313
  %v379 = vpack.c.b16 %v319, %v314
  %v380 = vpack.c.b16 %v320, %v315
  %v381 = vpack.c.b16 %v321, %v316
  %v382 = vpack.c.b16 %v327, %v322
  %v383 = vpack.c.b16 %v328, %v323
  %v384 = vpack.c.b16 %v329, %v324
  %v385 = vpack.c.b16 %v330, %v325
  %v386 = vpack.c.b16 %v331, %v326
  %v387 = vpack.c.b16 %v337, %v332
  %v388 = vpack.c.b16 %v338, %v333
  %v389 = vpack.c.b16 %v339, %v334
  %v390 = vpack.c.b16 %v340, %v335
  %v391 = vpack.c.b16 %v341, %v336
  %v392 = vpack.c.b16 %v347, %v342
  %v393 = vpack.c.b16 %v348, %v343
  %v394 = vpack.c.b16 %v349, %v344
  %v395 = vpack.c.b16 %v350, %v345
  %v396 = vpack.c.b16 %v351, %v346
  %v397 = vpack.c.b16 %v357, %v352
  %v398 = vpack.c.b16 %v358, %v353
  %v399 = vpack.c.b16 %v359, %v354
  %v400 = vpack.c.b16 %v360, %v355
  %v401 = vpack.c.b16 %v361, %v356
  %v506 = vunpack.c.l.b16 %v66
  %v507 = vunpack.c.l.b16 %v67
  %v508 = vunpack.c.l.b16 %v68
  %v509 = vunpack.c.l.b16 %v69
  %v510 = vunpack.c.l.b16 %v70
  %v511 = vunpack.c.l.b16 %v71
  %v512 = vunpack.c.l.b16 %v72
  %v513 = vunpack.c.l.b16 %v73
  %v514 = vunpack.c.l.b16 %v74
  %v515 = vunpack.c.l.b16 %v75
  %v516 = vunpack.c.l.b16 %v76
  %v517 = vunpack.c.l.b16 %v77
  %v518 = vunpack.c.l.b16 %v78
  %v519 = vunpack.c.l.b16 %v79
  %v520 = vunpack.c.l.b16 %v80
  %v521 = vunpack.c.l.b16 %v81
  %v522 = vunpack.c.l.b16 %v82
  %v523 = vunpack.c.l.b16 %v83
  %v524 = vunpack.c.l.b16 %v84
  %v525 = vunpack.c.l.b16 %v85
  %v526 = vunpack.c.l.b16 %v86
  %v527 = vunpack.c.l.b16 %v87
  %v528 = vunpack.c.l.b16 %v88
  %v529 = vunpack.c.l.b16 %v89
  %v530 = vunpack.c.l.b16 %v90
  %v531 = vunpack.c.l.b16 %v91
  %v532 = vunpack.c.l.b16 %v92
  %v533 = vunpack.c.l.b16 %v93
  %v534 = vunpack.c.l.b16 %v94
  %v535 = vunpack.c.l.b16 %v95
  %v536 = vunpack.c.l.b16 %v96
  %v537 = vunpack.c.l.b16 %v97
  %v538 = vunpack.c.l.b16 %v98
  %v539 = vunpack.c.l.b16 %v99
  %v540 = vunpack.c.l.b16 %v100
  %v541 = vunpack.c.l.b16 %v101
  %v542 = vunpack.c.l.b16 %v102
  %v543 = vunpack.c.l.b16 %v103
  %v544 = vunpack.c.l.b16 %v104
  %v545 = vunpack.c.l.b16 %v105
  %v546 = vunpack.c.l.b16 %v106
  %v547 = vunpack.c.l.b16 %v107
  %v548 = vunpack.c.l.b16 %v108
  %v549 = vunpack.c.l.b16 %v109
  %v550 = vunpack.c.l.b16 %v110
  %v551 = vunpack.c.l.b16 %v111
  %v552 = vunpack.c.l.b16 %v112
  %v553 = vunpack.c.l.b16 %v113
  %v554 = vunpack.c.l.b16 %v114
  %v555 = vunpack.c.l.b16 %v115
  %v556 = vunpack.c.l.b16 %v116
  %v557 = vunpack.c.l.b16 %v117
  %v558 = vunpack.c.l.b16 %v118
  %v559 = vunpack.c.l.b16 %v119
  %v560 = vunpack.c.l.b16 %v120
  %v561 = vunpack.c.l.b16 %v121
  %v562 = vunpack.c.l.b16 %v122
  %v563 = vunpack.c.l.b16 %v123
  %v564 = vunpack.c.l.b16 %v124
  %v565 = vunpack.c.l.b16 %v125
  %v566 = vunpack.c.l.b16 %v126
  %v567 = vunpack.c.l.b16 %v127
  %v568 = vunpack.c.l.b16 %v128
  %v569 = vunpack.c.l.b16 %v129
  %v570 = vunpack.c.l.b16 %v130
  %v571 = vunpack.c.l.b16 %v131
  %v572 = vunpack.c.l.b16 %v132
  %v573 = vunpack.c.l.b16 %v133
  %v574 = vunpack.c.l.b16 %v134
  %v575 = vunpack.c.l.b16 %v135
  %v576 = vunpack.c.l.b16 %v136
  %v577 = vunpack.c.l.b16 %v137
  %v578 = vpack.c.b16 %v507, %v506
  %v579 = vpack.c.b16 %v509, %v508
  %v580 = vpack.c.b16 %v511, %v510
  %v581 = vpack.c.b16 %v513, %v512
  %v582 = vpack.c.b16 %v515, %v514
  %v583 = vpack.c.b16 %v517, %v516
  %v584 = vpack.c.b16 %v519, %v518
  %v585 = vpack.c.b16 %v521, %v520
  %v586 = vpack.c.b16 %v523, %v522
  %v587 = vpack.c.b16 %v525, %v524
  %v588 = vpack.c.b16 %v527, %v526
  %v589 = vpack.c.b16 %v529, %v528
  %v590 = vpack.c.b16 %v531, %v530
  %v591 = vpack.c.b16 %v533, %v532
  %v592 = vpack.c.b16 %v535, %v534
  %v593 = vpack.c.b16 %v537, %v536
  %v594 = vpack.c.b16 %v539, %v538
  %v595 = vpack.c.b16 %v541, %v540
  %v596 = vpack.c.b16 %v543, %v542
  %v597 = vpack.c.b16 %v545, %v544
  %v598 = vpack.c.b16 %v547, %v546
  %v599 = vpack.c.b16 %v549, %v548
  %v600 = vpack.c.b16 %v551, %v550
  %v601 = vpack.c.b16 %v553, %v552
  %v602 = vpack.c.b16 %v555, %v554
  %v603 = vpack.c.b16 %v557, %v556
  %v604 = vpack.c.b16 %v559, %v558
  %v605 = vpack.c.b16 %v561, %v560
  %v606 = vpack.c.b16 %v563, %v562
  %v607 = vpack.c.b16 %v565, %v564
  %v608 = vpack.c.b16 %v567, %v566
  %v609 = vpack.c.b16 %v569, %v568
  %v610 = vpack.c.b16 %v571, %v570
  %v611 = vpack.c.b16 %v573, %v572
  %v612 = vpack.c.b16 %v575, %v574
  %v613 = vpack.c.b16 %v577, %v576
  %vm650 = vcmask 523264
  %v652 = vsel %vm650, %v366, 0
  %v655 = vsel %vm650, %v371, 0
  %v658 = vsel %vm650, %v376, 0
  %v661 = vsel %vm650, %v381, 0
  %v664 = vsel %vm650, %v386, 0
  %v667 = vsel %vm650, %v391, 0
  %v670 = vsel %vm650, %v396, 0
  %v673 = vsel %vm650, %v401, 0
  %675 = vmatprep.subr.bf16.mxu0 0
  %676 = vmatpush1.bf16.msra.mxu0 %v585
  %677 = vmatprep.subr.bf16.mxu0 0
  %678 = vmatpush1.bf16.msra.mxu0 %v584
  %679 = vmatprep.subr.bf16.mxu0 0
  %680 = vmatpush1.bf16.msra.mxu0 %v583
  %681 = vmatprep.subr.bf16.mxu0 0
  %682 = vmatpush1.bf16.msra.mxu0 %v582
  %683 = vmatprep.subr.bf16.mxu0 0
  %684 = vmatpush1.bf16.msra.mxu0 %v581
  %685 = vmatprep.subr.bf16.mxu0 0
  %686 = vmatpush1.bf16.msra.mxu0 %v580
  %687 = vmatprep.subr.bf16.mxu0 0
  %688 = vmatpush1.bf16.msra.mxu0 %v579
  %689 = vmatprep.subr.bf16.mxu0 0
  %690 = vmatpush1.bf16.msra.mxu0 %v578
  %691 = vmatprep.subr.bf16.mxu0 0
  %692 = vmatpush2.bf16.msra.mxu0 %v593
  %693 = vmatprep.subr.bf16.mxu0 0
  %694 = vmatpush2.bf16.msra.mxu0 %v592
  %695 = vmatprep.subr.bf16.mxu0 0
  %696 = vmatpush2.bf16.msra.mxu0 %v591
  %697 = vmatprep.subr.bf16.mxu0 0
  %698 = vmatpush2.bf16.msra.mxu0 %v590
  %699 = vmatprep.subr.bf16.mxu0 0
  %700 = vmatpush2.bf16.msra.mxu0 %v589
  %701 = vmatprep.subr.bf16.mxu0 0
  %702 = vmatpush2.bf16.msra.mxu0 %v588
  %703 = vmatprep.subr.bf16.mxu0 0
  %704 = vmatpush2.bf16.msra.mxu0 %v587
  %705 = vmatprep.subr.bf16.mxu0 0
  %706 = vmatpush2.bf16.msra.mxu0 %v586
  %707 = vmatprep.mubr.bf16.mxu0 %v363
  %708 = vmatmul.mubr.bf16.gmra.mxu0 %v362
  %v709 = vpop.f32.mrf.mxu0
  %v710 = vadd.f32 %v157, %v709
  %v711 = vpop.f32.mrf.mxu0
  %v712 = vpop.f32.mrf.mxu0
  %v713 = vadd.f32 %v162, %v712
  %v714 = vpop.f32.mrf.mxu0
  %715 = vmatprep.mubr.bf16.mxu0 %v368
  %716 = vmatmul.mubr.bf16.gmra.mxu0 %v367
  %v717 = vpop.f32.mrf.mxu0
  %v718 = vadd.f32 %v167, %v717
  %v719 = vpop.f32.mrf.mxu0
  %v720 = vpop.f32.mrf.mxu0
  %v721 = vadd.f32 %v172, %v720
  %v722 = vpop.f32.mrf.mxu0
  %723 = vmatprep.mubr.bf16.mxu0 %v373
  %724 = vmatmul.mubr.bf16.gmra.mxu0 %v372
  %v725 = vpop.f32.mrf.mxu0
  %v726 = vadd.f32 %v177, %v725
  %v727 = vpop.f32.mrf.mxu0
  %v728 = vpop.f32.mrf.mxu0
  %v729 = vadd.f32 %v182, %v728
  %v730 = vpop.f32.mrf.mxu0
  %731 = vmatprep.mubr.bf16.mxu0 %v378
  %732 = vmatmul.mubr.bf16.gmra.mxu0 %v377
  %v733 = vpop.f32.mrf.mxu0
  %v734 = vadd.f32 %v187, %v733
  %v735 = vpop.f32.mrf.mxu0
  %v736 = vpop.f32.mrf.mxu0
  %v737 = vadd.f32 %v192, %v736
  %v738 = vpop.f32.mrf.mxu0
  %739 = vmatprep.mubr.bf16.mxu0 %v383
  %740 = vmatmul.mubr.bf16.gmra.mxu0 %v382
  %v741 = vpop.f32.mrf.mxu0
  %v742 = vadd.f32 %v197, %v741
  %v743 = vpop.f32.mrf.mxu0
  %v744 = vpop.f32.mrf.mxu0
  %v745 = vadd.f32 %v202, %v744
  %v746 = vpop.f32.mrf.mxu0
  %747 = vmatprep.mubr.bf16.mxu0 %v388
  %748 = vmatmul.mubr.bf16.gmra.mxu0 %v387
  %v749 = vpop.f32.mrf.mxu0
  %v750 = vadd.f32 %v207, %v749
  %v751 = vpop.f32.mrf.mxu0
  %v752 = vpop.f32.mrf.mxu0
  %v753 = vadd.f32 %v212, %v752
  %v754 = vpop.f32.mrf.mxu0
  %755 = vmatprep.mubr.bf16.mxu0 %v393
  %756 = vmatmul.mubr.bf16.gmra.mxu0 %v392
  %v757 = vpop.f32.mrf.mxu0
  %v758 = vadd.f32 %v217, %v757
  %v759 = vpop.f32.mrf.mxu0
  %v760 = vpop.f32.mrf.mxu0
  %v761 = vadd.f32 %v222, %v760
  %v762 = vpop.f32.mrf.mxu0
  %763 = vmatprep.mubr.bf16.mxu0 %v398
  %764 = vmatmul.mubr.bf16.gmra.mxu0 %v397
  %v765 = vpop.f32.mrf.mxu0
  %v766 = vadd.f32 %v227, %v765
  %v767 = vpop.f32.mrf.mxu0
  %v768 = vpop.f32.mrf.mxu0
  %v769 = vadd.f32 %v232, %v768
  %v770 = vpop.f32.mrf.mxu0
  %771 = vdwg.mxu0
  %772 = vmatprep.subr.bf16.mxu0 0
  %773 = vmatpush1.bf16.msra.mxu0 %v601
  %774 = vmatprep.subr.bf16.mxu0 0
  %775 = vmatpush1.bf16.msra.mxu0 %v600
  %776 = vmatprep.subr.bf16.mxu0 0
  %777 = vmatpush1.bf16.msra.mxu0 %v599
  %778 = vmatprep.subr.bf16.mxu0 0
  %779 = vmatpush1.bf16.msra.mxu0 %v598
  %780 = vmatprep.subr.bf16.mxu0 0
  %781 = vmatpush1.bf16.msra.mxu0 %v597
  %782 = vmatprep.subr.bf16.mxu0 0
  %783 = vmatpush1.bf16.msra.mxu0 %v596
  %784 = vmatprep.subr.bf16.mxu0 0
  %785 = vmatpush1.bf16.msra.mxu0 %v595
  %786 = vmatprep.subr.bf16.mxu0 0
  %787 = vmatpush1.bf16.msra.mxu0 %v594
  %788 = vmatprep.subr.bf16.mxu0 0
  %789 = vmatpush2.bf16.msra.mxu0 %v609
  %790 = vmatprep.subr.bf16.mxu0 0
  %791 = vmatpush2.bf16.msra.mxu0 %v608
  %792 = vmatprep.subr.bf16.mxu0 0
  %793 = vmatpush2.bf16.msra.mxu0 %v607
  %794 = vmatprep.subr.bf16.mxu0 0
  %795 = vmatpush2.bf16.msra.mxu0 %v606
  %796 = vmatprep.subr.bf16.mxu0 0
  %797 = vmatpush2.bf16.msra.mxu0 %v605
  %798 = vmatprep.subr.bf16.mxu0 0
  %799 = vmatpush2.bf16.msra.mxu0 %v604
  %800 = vmatprep.subr.bf16.mxu0 0
  %801 = vmatpush2.bf16.msra.mxu0 %v603
  %802 = vmatprep.subr.bf16.mxu0 0
  %803 = vmatpush2.bf16.msra.mxu0 %v602
  %804 = vmatprep.mubr.bf16.mxu0 %v365
  %805 = vmatmul.mubr.bf16.gmra.mxu0 %v364
  %v806 = vpop.f32.mrf.mxu0
  %v807 = vadd.f32 %v710, %v806
  %v808 = vpop.f32.mrf.mxu0
  %v809 = vpop.f32.mrf.mxu0
  %v810 = vadd.f32 %v713, %v809
  %v811 = vpop.f32.mrf.mxu0
  %812 = vmatprep.mubr.bf16.mxu0 %v370
  %813 = vmatmul.mubr.bf16.gmra.mxu0 %v369
  %v814 = vpop.f32.mrf.mxu0
  %v815 = vadd.f32 %v718, %v814
  %v816 = vpop.f32.mrf.mxu0
  %v817 = vpop.f32.mrf.mxu0
  %v818 = vadd.f32 %v721, %v817
  %v819 = vpop.f32.mrf.mxu0
  %820 = vmatprep.mubr.bf16.mxu0 %v375
  %821 = vmatmul.mubr.bf16.gmra.mxu0 %v374
  %v822 = vpop.f32.mrf.mxu0
  %v823 = vadd.f32 %v726, %v822
  %v824 = vpop.f32.mrf.mxu0
  %v825 = vpop.f32.mrf.mxu0
  %v826 = vadd.f32 %v729, %v825
  %v827 = vpop.f32.mrf.mxu0
  %828 = vmatprep.mubr.bf16.mxu0 %v380
  %829 = vmatmul.mubr.bf16.gmra.mxu0 %v379
  %v830 = vpop.f32.mrf.mxu0
  %v831 = vadd.f32 %v734, %v830
  %v832 = vpop.f32.mrf.mxu0
  %v833 = vpop.f32.mrf.mxu0
  %v834 = vadd.f32 %v737, %v833
  %v835 = vpop.f32.mrf.mxu0
  %836 = vmatprep.mubr.bf16.mxu0 %v385
  %837 = vmatmul.mubr.bf16.gmra.mxu0 %v384
  %v838 = vpop.f32.mrf.mxu0
  %v839 = vadd.f32 %v742, %v838
  %v840 = vpop.f32.mrf.mxu0
  %v841 = vpop.f32.mrf.mxu0
  %v842 = vadd.f32 %v745, %v841
  %v843 = vpop.f32.mrf.mxu0
  %844 = vmatprep.mubr.bf16.mxu0 %v390
  %845 = vmatmul.mubr.bf16.gmra.mxu0 %v389
  %v846 = vpop.f32.mrf.mxu0
  %v847 = vadd.f32 %v750, %v846
  %v848 = vpop.f32.mrf.mxu0
  %v849 = vpop.f32.mrf.mxu0
  %v850 = vadd.f32 %v753, %v849
  %v851 = vpop.f32.mrf.mxu0
  %852 = vmatprep.mubr.bf16.mxu0 %v395
  %853 = vmatmul.mubr.bf16.gmra.mxu0 %v394
  %v854 = vpop.f32.mrf.mxu0
  %v855 = vadd.f32 %v758, %v854
  %v856 = vpop.f32.mrf.mxu0
  %v857 = vpop.f32.mrf.mxu0
  %v858 = vadd.f32 %v761, %v857
  %v859 = vpop.f32.mrf.mxu0
  %860 = vmatprep.mubr.bf16.mxu0 %v400
  %861 = vmatmul.mubr.bf16.gmra.mxu0 %v399
  %v862 = vpop.f32.mrf.mxu0
  %v863 = vadd.f32 %v766, %v862
  %v864 = vpop.f32.mrf.mxu0
  %v865 = vpop.f32.mrf.mxu0
  %v866 = vadd.f32 %v769, %v865
  %v867 = vpop.f32.mrf.mxu0
  %868 = vdwg.mxu0
  %869 = vmatprep.subr.bf16.mxu0 0
  %870 = vmatpush1.bf16.msra.mxu0 0
  %871 = vmatprep.subr.bf16.mxu0 0
  %872 = vmatpush1.bf16.msra.mxu0 0
  %873 = vmatprep.subr.bf16.mxu0 0
  %874 = vmatpush1.bf16.msra.mxu0 0
  %875 = vmatprep.subr.bf16.mxu0 0
  %876 = vmatpush1.bf16.msra.mxu0 0
  %877 = vmatprep.subr.bf16.mxu0 0
  %878 = vmatpush1.bf16.msra.mxu0 %v613
  %879 = vmatprep.subr.bf16.mxu0 0
  %880 = vmatpush1.bf16.msra.mxu0 %v612
  %881 = vmatprep.subr.bf16.mxu0 0
  %882 = vmatpush1.bf16.msra.mxu0 %v611
  %883 = vmatprep.subr.bf16.mxu0 0
  %884 = vmatpush1.bf16.msra.mxu0 %v610
  %885 = vmatprep.subr.bf16.mxu0 0
  %886 = vmatpush2.bf16.msra.mxu0 0
  %887 = vmatprep.subr.bf16.mxu0 0
  %888 = vmatpush2.bf16.msra.mxu0 0
  %889 = vmatprep.subr.bf16.mxu0 0
  %890 = vmatpush2.bf16.msra.mxu0 0
  %891 = vmatprep.subr.bf16.mxu0 0
  %892 = vmatpush2.bf16.msra.mxu0 0
  %893 = vmatprep.subr.bf16.mxu0 0
  %894 = vmatpush2.bf16.msra.mxu0 0
  %895 = vmatprep.subr.bf16.mxu0 0
  %896 = vmatpush2.bf16.msra.mxu0 0
  %897 = vmatprep.subr.bf16.mxu0 0
  %898 = vmatpush2.bf16.msra.mxu0 0
  %899 = vmatprep.subr.bf16.mxu0 0
  %900 = vmatpush2.bf16.msra.mxu0 0
  %901 = vmatprep.mubr.bf16.mxu0 0
  %902 = vmatmul.mubr.bf16.gmra.mxu0 %v652
  %v903 = vpop.f32.mrf.mxu0
  %v904 = vadd.f32 %v807, %v903
  %v905 = vpop.f32.mrf.mxu0
  %v906 = vpop.f32.mrf.mxu0
  %v907 = vadd.f32 %v810, %v906
  %v908 = vpop.f32.mrf.mxu0
  %909 = vmatprep.mubr.bf16.mxu0 0
  %910 = vmatmul.mubr.bf16.gmra.mxu0 %v655
  %v911 = vpop.f32.mrf.mxu0
  %v912 = vadd.f32 %v815, %v911
  %v913 = vpop.f32.mrf.mxu0
  %v914 = vpop.f32.mrf.mxu0
  %v915 = vadd.f32 %v818, %v914
  %v916 = vpop.f32.mrf.mxu0
  %917 = vmatprep.mubr.bf16.mxu0 0
  %918 = vmatmul.mubr.bf16.gmra.mxu0 %v658
  %v919 = vpop.f32.mrf.mxu0
  %v920 = vadd.f32 %v823, %v919
  %v921 = vpop.f32.mrf.mxu0
  %v922 = vpop.f32.mrf.mxu0
  %v923 = vadd.f32 %v826, %v922
  %v924 = vpop.f32.mrf.mxu0
  %925 = vmatprep.mubr.bf16.mxu0 0
  %926 = vmatmul.mubr.bf16.gmra.mxu0 %v661
  %v927 = vpop.f32.mrf.mxu0
  %v928 = vadd.f32 %v831, %v927
  %v929 = vpop.f32.mrf.mxu0
  %v930 = vpop.f32.mrf.mxu0
  %v931 = vadd.f32 %v834, %v930
  %v932 = vpop.f32.mrf.mxu0
  %933 = vmatprep.mubr.bf16.mxu0 0
  %934 = vmatmul.mubr.bf16.gmra.mxu0 %v664
  %v935 = vpop.f32.mrf.mxu0
  %v936 = vadd.f32 %v839, %v935
  %v937 = vpop.f32.mrf.mxu0
  %v938 = vpop.f32.mrf.mxu0
  %v939 = vadd.f32 %v842, %v938
  %v940 = vpop.f32.mrf.mxu0
  %941 = vmatprep.mubr.bf16.mxu0 0
  %942 = vmatmul.mubr.bf16.gmra.mxu0 %v667
  %v943 = vpop.f32.mrf.mxu0
  %v944 = vadd.f32 %v847, %v943
  %v945 = vpop.f32.mrf.mxu0
  %v946 = vpop.f32.mrf.mxu0
  %v947 = vadd.f32 %v850, %v946
  %v948 = vpop.f32.mrf.mxu0
  %949 = vmatprep.mubr.bf16.mxu0 0
  %950 = vmatmul.mubr.bf16.gmra.mxu0 %v670
  %v951 = vpop.f32.mrf.mxu0
  %v952 = vadd.f32 %v855, %v951
  %v953 = vpop.f32.mrf.mxu0
  %v954 = vpop.f32.mrf.mxu0
  %v955 = vadd.f32 %v858, %v954
  %v956 = vpop.f32.mrf.mxu0
  %957 = vmatprep.mubr.bf16.mxu0 0
  %958 = vmatmul.mubr.bf16.gmra.mxu0 %v673
  %v959 = vpop.f32.mrf.mxu0
  %v960 = vadd.f32 %v863, %v959
  %v961 = vpop.f32.mrf.mxu0
  %v962 = vpop.f32.mrf.mxu0
  %v963 = vadd.f32 %v866, %v962
  %v964 = vpop.f32.mrf.mxu0
  %965 = vdwg.mxu0
  %vm966 = vcmp.ge.f32.partialorder %v904, 0.0
  %vm967 = vcmp.ge.f32.partialorder %v907, 0.0
  %vm968 = vcmp.ge.f32.partialorder %v912, 0.0
  %vm969 = vcmp.ge.f32.partialorder %v915, 0.0
  %vm970 = vcmp.ge.f32.partialorder %v920, 0.0
  %vm971 = vcmp.ge.f32.partialorder %v923, 0.0
  %vm972 = vcmp.ge.f32.partialorder %v928, 0.0
  %vm973 = vcmp.ge.f32.partialorder %v931, 0.0
  %vm974 = vcmp.ge.f32.partialorder %v936, 0.0
  %vm975 = vcmp.ge.f32.partialorder %v939, 0.0
  %vm976 = vcmp.ge.f32.partialorder %v944, 0.0
  %vm977 = vcmp.ge.f32.partialorder %v947, 0.0
  %vm978 = vcmp.ge.f32.partialorder %v952, 0.0
  %vm979 = vcmp.ge.f32.partialorder %v955, 0.0
  %vm980 = vcmp.ge.f32.partialorder %v960, 0.0
  %vm981 = vcmp.ge.f32.partialorder %v963, 0.0
  %v982 = vmul.f32 %v904, 0.1
  %v983 = vmul.f32 %v907, 0.1
  %v984 = vmul.f32 %v912, 0.1
  %v985 = vmul.f32 %v915, 0.1
  %v986 = vmul.f32 %v920, 0.1
  %v987 = vmul.f32 %v923, 0.1
  %v988 = vmul.f32 %v928, 0.1
  %v989 = vmul.f32 %v931, 0.1
  %v990 = vmul.f32 %v936, 0.1
  %v991 = vmul.f32 %v939, 0.1
  %v992 = vmul.f32 %v944, 0.1
  %v993 = vmul.f32 %v947, 0.1
  %v994 = vmul.f32 %v952, 0.1
  %v995 = vmul.f32 %v955, 0.1
  %v996 = vmul.f32 %v960, 0.1
  %v997 = vmul.f32 %v963, 0.1
  %v998 = vsel %vm966, %v904, %v982
  %v999 = vsel %vm967, %v907, %v983
  %v1000 = vsel %vm968, %v912, %v984
  %v1001 = vsel %vm969, %v915, %v985
  %v1002 = vsel %vm970, %v920, %v986
  %v1003 = vsel %vm971, %v923, %v987
  %v1004 = vsel %vm972, %v928, %v988
  %v1005 = vsel %vm973, %v931, %v989
  %v1006 = vsel %vm974, %v936, %v990
  %v1007 = vsel %vm975, %v939, %v991
  %v1008 = vsel %vm976, %v944, %v992
  %v1009 = vsel %vm977, %v947, %v993
  %v1010 = vsel %vm978, %v952, %v994
  %v1011 = vsel %vm979, %v955, %v995
  %v1012 = vsel %vm980, %v960, %v996
  %v1013 = vsel %vm981, %v963, %v997
  %v1014 = vpack.c.bf16 %v999, %v998
  %v1015 = vpack.c.bf16 %v1001, %v1000
  %v1016 = vpack.c.bf16 %v1003, %v1002
  %v1017 = vpack.c.bf16 %v1005, %v1004
  %v1018 = vpack.c.bf16 %v1007, %v1006
  %v1019 = vpack.c.bf16 %v1009, %v1008
  %v1020 = vpack.c.bf16 %v1011, %v1010
  %v1021 = vpack.c.bf16 %v1013, %v1012
  %v1022 = vld [vmem:[%s3] sm:$0xf]
  %v1023 = vld [vmem:[%s3 + $0x4] sm:$0xf]
  %v1024 = vld [vmem:[%s3 + $0x8] sm:$0xf]
  %v1025 = vld [vmem:[%s3 + $0xc] sm:$0xf]
  %v1030 = vunpack.c.l.b16 %v1022
  %v1031 = vunpack.c.l.b16 %v1023
  %v1032 = vunpack.c.l.b16 %v1024
  %v1033 = vunpack.c.l.b16 %v1025
  %v1034 = vpack.c.b16 %v1031, %v1030
  %v1035 = vpack.c.b16 %v1033, %v1032
  %vm1038 = vcmask 261120
  %v1040 = vsel %vm1038, %v1014, 0
  %v1043 = vsel %vm1038, %v1015, 0
  %v1046 = vsel %vm1038, %v1016, 0
  %v1049 = vsel %vm1038, %v1017, 0
  %v1052 = vsel %vm1038, %v1018, 0
  %v1055 = vsel %vm1038, %v1019, 0
  %v1058 = vsel %vm1038, %v1020, 0
  %v1061 = vsel %vm1038, %v1021, 0
  %1063 = vmatprep.subr.bf16.mxu0 0
  %1064 = vmatpush1.bf16.msra.mxu0 0
  %1065 = vmatprep.subr.bf16.mxu0 0
  %1066 = vmatpush1.bf16.msra.mxu0 0
  %1067 = vmatprep.subr.bf16.mxu0 0
  %1068 = vmatpush1.bf16.msra.mxu0 0
  %1069 = vmatprep.subr.bf16.mxu0 0
  %1070 = vmatpush1.bf16.msra.mxu0 0
  %1071 = vmatprep.subr.bf16.mxu0 0
  %1072 = vmatpush1.bf16.msra.mxu0 0
  %1073 = vmatprep.subr.bf16.mxu0 0
  %1074 = vmatpush1.bf16.msra.mxu0 0
  %1075 = vmatprep.subr.bf16.mxu0 0
  %1076 = vmatpush1.bf16.msra.mxu0 %v1035
  %1077 = vmatprep.subr.bf16.mxu0 0
  %1078 = vmatpush1.bf16.msra.mxu0 %v1034
  %1079 = vmatprep.subr.bf16.mxu0 0
  %1080 = vmatpush2.bf16.msra.mxu0 0
  %1081 = vmatprep.subr.bf16.mxu0 0
  %1082 = vmatpush2.bf16.msra.mxu0 0
  %1083 = vmatprep.subr.bf16.mxu0 0
  %1084 = vmatpush2.bf16.msra.mxu0 0
  %1085 = vmatprep.subr.bf16.mxu0 0
  %1086 = vmatpush2.bf16.msra.mxu0 0
  %1087 = vmatprep.subr.bf16.mxu0 0
  %1088 = vmatpush2.bf16.msra.mxu0 0
  %1089 = vmatprep.subr.bf16.mxu0 0
  %1090 = vmatpush2.bf16.msra.mxu0 0
  %1091 = vmatprep.subr.bf16.mxu0 0
  %1092 = vmatpush2.bf16.msra.mxu0 0
  %1093 = vmatprep.subr.bf16.mxu0 0
  %1094 = vmatpush2.bf16.msra.mxu0 0
  %1095 = vmatprep.mubr.bf16.mxu0 0
  %1096 = vmatmul.mubr.bf16.gmra.mxu0 %v1040
  %v1097 = vpop.f32.mrf.mxu0
  %v1098 = vadd.f32 0.0, %v1097
  %v1099 = vpop.f32.mrf.mxu0
  %v1100 = vpop.f32.mrf.mxu0
  %v1101 = vadd.f32 0.0, %v1100
  %v1102 = vpop.f32.mrf.mxu0
  %1103 = vmatprep.mubr.bf16.mxu0 0
  %1104 = vmatmul.mubr.bf16.gmra.mxu0 %v1043
  %v1105 = vpop.f32.mrf.mxu0
  %v1106 = vadd.f32 0.0, %v1105
  %v1107 = vpop.f32.mrf.mxu0
  %v1108 = vpop.f32.mrf.mxu0
  %v1109 = vadd.f32 0.0, %v1108
  %v1110 = vpop.f32.mrf.mxu0
  %1111 = vmatprep.mubr.bf16.mxu0 0
  %1112 = vmatmul.mubr.bf16.gmra.mxu0 %v1046
  %v1113 = vpop.f32.mrf.mxu0
  %v1114 = vadd.f32 0.0, %v1113
  %v1115 = vpop.f32.mrf.mxu0
  %v1116 = vpop.f32.mrf.mxu0
  %v1117 = vadd.f32 0.0, %v1116
  %v1118 = vpop.f32.mrf.mxu0
  %1119 = vmatprep.mubr.bf16.mxu0 0
  %1120 = vmatmul.mubr.bf16.gmra.mxu0 %v1049
  %v1121 = vpop.f32.mrf.mxu0
  %v1122 = vadd.f32 0.0, %v1121
  %v1123 = vpop.f32.mrf.mxu0
  %v1124 = vpop.f32.mrf.mxu0
  %v1125 = vadd.f32 0.0, %v1124
  %v1126 = vpop.f32.mrf.mxu0
  %1127 = vmatprep.mubr.bf16.mxu0 0
  %1128 = vmatmul.mubr.bf16.gmra.mxu0 %v1052
  %v1129 = vpop.f32.mrf.mxu0
  %v1130 = vadd.f32 0.0, %v1129
  %v1131 = vpop.f32.mrf.mxu0
  %v1132 = vpop.f32.mrf.mxu0
  %v1133 = vadd.f32 0.0, %v1132
  %v1134 = vpop.f32.mrf.mxu0
  %1135 = vmatprep.mubr.bf16.mxu0 0
  %1136 = vmatmul.mubr.bf16.gmra.mxu0 %v1055
  %v1137 = vpop.f32.mrf.mxu0
  %v1138 = vadd.f32 0.0, %v1137
  %v1139 = vpop.f32.mrf.mxu0
  %v1140 = vpop.f32.mrf.mxu0
  %v1141 = vadd.f32 0.0, %v1140
  %v1142 = vpop.f32.mrf.mxu0
  %1143 = vmatprep.mubr.bf16.mxu0 0
  %1144 = vmatmul.mubr.bf16.gmra.mxu0 %v1058
  %v1145 = vpop.f32.mrf.mxu0
  %v1146 = vadd.f32 0.0, %v1145
  %v1147 = vpop.f32.mrf.mxu0
  %v1148 = vpop.f32.mrf.mxu0
  %v1149 = vadd.f32 0.0, %v1148
  %v1150 = vpop.f32.mrf.mxu0
  %1151 = vmatprep.mubr.bf16.mxu0 0
  %1152 = vmatmul.mubr.bf16.gmra.mxu0 %v1061
  %v1153 = vpop.f32.mrf.mxu0
  %v1154 = vadd.f32 0.0, %v1153
  %v1155 = vpop.f32.mrf.mxu0
  %v1156 = vpop.f32.mrf.mxu0
  %v1157 = vadd.f32 0.0, %v1156
  %v1158 = vpop.f32.mrf.mxu0
  %1159 = vdwg.mxu0
  %s1160 = scalar_lea.vmem %s3, 16
  %v1161 = vld [vmem:[%s1160] sm:$0xf]
  %v1162 = vld [vmem:[%s1160 + $0x4] sm:$0xf]
  %v1163 = vld [vmem:[%s1160 + $0x8] sm:$0xf]
  %v1164 = vld [vmem:[%s1160 + $0xc] sm:$0xf]
  %v1169 = vunpack.c.l.b16 %v1161
  %v1170 = vunpack.c.l.b16 %v1162
  %v1171 = vunpack.c.l.b16 %v1163
  %v1172 = vunpack.c.l.b16 %v1164
  %v1173 = vpack.c.b16 %v1170, %v1169
  %v1174 = vpack.c.b16 %v1172, %v1171
  %1177 = vmatprep.subr.bf16.mxu0 0
  %1178 = vmatpush1.bf16.msra.mxu0 0
  %1179 = vmatprep.subr.bf16.mxu0 0
  %1180 = vmatpush1.bf16.msra.mxu0 0
  %1181 = vmatprep.subr.bf16.mxu0 0
  %1182 = vmatpush1.bf16.msra.mxu0 0
  %1183 = vmatprep.subr.bf16.mxu0 0
  %1184 = vmatpush1.bf16.msra.mxu0 0
  %1185 = vmatprep.subr.bf16.mxu0 0
  %1186 = vmatpush1.bf16.msra.mxu0 0
  %1187 = vmatprep.subr.bf16.mxu0 0
  %1188 = vmatpush1.bf16.msra.mxu0 0
  %1189 = vmatprep.subr.bf16.mxu0 0
  %1190 = vmatpush1.bf16.msra.mxu0 %v1174
  %1191 = vmatprep.subr.bf16.mxu0 0
  %1192 = vmatpush1.bf16.msra.mxu0 %v1173
  %1193 = vmatprep.subr.bf16.mxu0 0
  %1194 = vmatpush2.bf16.msra.mxu0 0
  %1195 = vmatprep.subr.bf16.mxu0 0
  %1196 = vmatpush2.bf16.msra.mxu0 0
  %1197 = vmatprep.subr.bf16.mxu0 0
  %1198 = vmatpush2.bf16.msra.mxu0 0
  %1199 = vmatprep.subr.bf16.mxu0 0
  %1200 = vmatpush2.bf16.msra.mxu0 0
  %1201 = vmatprep.subr.bf16.mxu0 0
  %1202 = vmatpush2.bf16.msra.mxu0 0
  %1203 = vmatprep.subr.bf16.mxu0 0
  %1204 = vmatpush2.bf16.msra.mxu0 0
  %1205 = vmatprep.subr.bf16.mxu0 0
  %1206 = vmatpush2.bf16.msra.mxu0 0
  %1207 = vmatprep.subr.bf16.mxu0 0
  %1208 = vmatpush2.bf16.msra.mxu0 0
  %1209 = vmatprep.mubr.bf16.mxu0 0
  %1210 = vmatmul.mubr.bf16.gmra.mxu0 %v1040
  %v1211 = vpop.f32.mrf.mxu0
  %v1212 = vadd.f32 0.0, %v1211
  %v1213 = vpop.f32.mrf.mxu0
  %v1214 = vpop.f32.mrf.mxu0
  %v1215 = vadd.f32 0.0, %v1214
  %v1216 = vpop.f32.mrf.mxu0
  %1217 = vmatprep.mubr.bf16.mxu0 0
  %1218 = vmatmul.mubr.bf16.gmra.mxu0 %v1043
  %v1219 = vpop.f32.mrf.mxu0
  %v1220 = vadd.f32 0.0, %v1219
  %v1221 = vpop.f32.mrf.mxu0
  %v1222 = vpop.f32.mrf.mxu0
  %v1223 = vadd.f32 0.0, %v1222
  %v1224 = vpop.f32.mrf.mxu0
  %1225 = vmatprep.mubr.bf16.mxu0 0
  %1226 = vmatmul.mubr.bf16.gmra.mxu0 %v1046
  %v1227 = vpop.f32.mrf.mxu0
  %v1228 = vadd.f32 0.0, %v1227
  %v1229 = vpop.f32.mrf.mxu0
  %v1230 = vpop.f32.mrf.mxu0
  %v1231 = vadd.f32 0.0, %v1230
  %v1232 = vpop.f32.mrf.mxu0
  %1233 = vmatprep.mubr.bf16.mxu0 0
  %1234 = vmatmul.mubr.bf16.gmra.mxu0 %v1049
  %v1235 = vpop.f32.mrf.mxu0
  %v1236 = vadd.f32 0.0, %v1235
  %v1237 = vpop.f32.mrf.mxu0
  %v1238 = vpop.f32.mrf.mxu0
  %v1239 = vadd.f32 0.0, %v1238
  %v1240 = vpop.f32.mrf.mxu0
  %1241 = vmatprep.mubr.bf16.mxu0 0
  %1242 = vmatmul.mubr.bf16.gmra.mxu0 %v1052
  %v1243 = vpop.f32.mrf.mxu0
  %v1244 = vadd.f32 0.0, %v1243
  %v1245 = vpop.f32.mrf.mxu0
  %v1246 = vpop.f32.mrf.mxu0
  %v1247 = vadd.f32 0.0, %v1246
  %v1248 = vpop.f32.mrf.mxu0
  %1249 = vmatprep.mubr.bf16.mxu0 0
  %1250 = vmatmul.mubr.bf16.gmra.mxu0 %v1055
  %v1251 = vpop.f32.mrf.mxu0
  %v1252 = vadd.f32 0.0, %v1251
  %v1253 = vpop.f32.mrf.mxu0
  %v1254 = vpop.f32.mrf.mxu0
  %v1255 = vadd.f32 0.0, %v1254
  %v1256 = vpop.f32.mrf.mxu0
  %1257 = vmatprep.mubr.bf16.mxu0 0
  %1258 = vmatmul.mubr.bf16.gmra.mxu0 %v1058
  %v1259 = vpop.f32.mrf.mxu0
  %v1260 = vadd.f32 0.0, %v1259
  %v1261 = vpop.f32.mrf.mxu0
  %v1262 = vpop.f32.mrf.mxu0
  %v1263 = vadd.f32 0.0, %v1262
  %v1264 = vpop.f32.mrf.mxu0
  %1265 = vmatprep.mubr.bf16.mxu0 0
  %1266 = vmatmul.mubr.bf16.gmra.mxu0 %v1061
  %v1267 = vpop.f32.mrf.mxu0
  %v1268 = vadd.f32 0.0, %v1267
  %v1269 = vpop.f32.mrf.mxu0
  %v1270 = vpop.f32.mrf.mxu0
  %v1271 = vadd.f32 0.0, %v1270
  %v1272 = vpop.f32.mrf.mxu0
  %1273 = vdwg.mxu0
  %s1274 = scalar_lea.vmem %s3, 32
  %v1275 = vld [vmem:[%s1274] sm:$0xf]
  %v1276 = vld [vmem:[%s1274 + $0x4] sm:$0xf]
  %v1277 = vld [vmem:[%s1274 + $0x8] sm:$0xf]
  %v1278 = vld [vmem:[%s1274 + $0xc] sm:$0xf]
  %v1283 = vunpack.c.l.b16 %v1275
  %v1284 = vunpack.c.l.b16 %v1276
  %v1285 = vunpack.c.l.b16 %v1277
  %v1286 = vunpack.c.l.b16 %v1278
  %v1287 = vpack.c.b16 %v1284, %v1283
  %v1288 = vpack.c.b16 %v1286, %v1285
  %1291 = vmatprep.subr.bf16.mxu0 0
  %1292 = vmatpush1.bf16.msra.mxu0 0
  %1293 = vmatprep.subr.bf16.mxu0 0
  %1294 = vmatpush1.bf16.msra.mxu0 0
  %1295 = vmatprep.subr.bf16.mxu0 0
  %1296 = vmatpush1.bf16.msra.mxu0 0
  %1297 = vmatprep.subr.bf16.mxu0 0
  %1298 = vmatpush1.bf16.msra.mxu0 0
  %1299 = vmatprep.subr.bf16.mxu0 0
  %1300 = vmatpush1.bf16.msra.mxu0 0
  %1301 = vmatprep.subr.bf16.mxu0 0
  %1302 = vmatpush1.bf16.msra.mxu0 0
  %1303 = vmatprep.subr.bf16.mxu0 0
  %1304 = vmatpush1.bf16.msra.mxu0 %v1288
  %1305 = vmatprep.subr.bf16.mxu0 0
  %1306 = vmatpush1.bf16.msra.mxu0 %v1287
  %1307 = vmatprep.subr.bf16.mxu0 0
  %1308 = vmatpush2.bf16.msra.mxu0 0
  %1309 = vmatprep.subr.bf16.mxu0 0
  %1310 = vmatpush2.bf16.msra.mxu0 0
  %1311 = vmatprep.subr.bf16.mxu0 0
  %1312 = vmatpush2.bf16.msra.mxu0 0
  %1313 = vmatprep.subr.bf16.mxu0 0
  %1314 = vmatpush2.bf16.msra.mxu0 0
  %1315 = vmatprep.subr.bf16.mxu0 0
  %1316 = vmatpush2.bf16.msra.mxu0 0
  %1317 = vmatprep.subr.bf16.mxu0 0
  %1318 = vmatpush2.bf16.msra.mxu0 0
  %1319 = vmatprep.subr.bf16.mxu0 0
  %1320 = vmatpush2.bf16.msra.mxu0 0
  %1321 = vmatprep.subr.bf16.mxu0 0
  %1322 = vmatpush2.bf16.msra.mxu0 0
  %1323 = vmatprep.mubr.bf16.mxu0 0
  %1324 = vmatmul.mubr.bf16.gmra.mxu0 %v1040
  %v1325 = vpop.f32.mrf.mxu0
  %v1326 = vadd.f32 0.0, %v1325
  %v1327 = vpop.f32.mrf.mxu0
  %v1328 = vpop.f32.mrf.mxu0
  %v1329 = vadd.f32 0.0, %v1328
  %v1330 = vpop.f32.mrf.mxu0
  %1331 = vmatprep.mubr.bf16.mxu0 0
  %1332 = vmatmul.mubr.bf16.gmra.mxu0 %v1043
  %v1333 = vpop.f32.mrf.mxu0
  %v1334 = vadd.f32 0.0, %v1333
  %v1335 = vpop.f32.mrf.mxu0
  %v1336 = vpop.f32.mrf.mxu0
  %v1337 = vadd.f32 0.0, %v1336
  %v1338 = vpop.f32.mrf.mxu0
  %1339 = vmatprep.mubr.bf16.mxu0 0
  %1340 = vmatmul.mubr.bf16.gmra.mxu0 %v1046
  %v1341 = vpop.f32.mrf.mxu0
  %v1342 = vadd.f32 0.0, %v1341
  %v1343 = vpop.f32.mrf.mxu0
  %v1344 = vpop.f32.mrf.mxu0
  %v1345 = vadd.f32 0.0, %v1344
  %v1346 = vpop.f32.mrf.mxu0
  %1347 = vmatprep.mubr.bf16.mxu0 0
  %1348 = vmatmul.mubr.bf16.gmra.mxu0 %v1049
  %v1349 = vpop.f32.mrf.mxu0
  %v1350 = vadd.f32 0.0, %v1349
  %v1351 = vpop.f32.mrf.mxu0
  %v1352 = vpop.f32.mrf.mxu0
  %v1353 = vadd.f32 0.0, %v1352
  %v1354 = vpop.f32.mrf.mxu0
  %1355 = vmatprep.mubr.bf16.mxu0 0
  %1356 = vmatmul.mubr.bf16.gmra.mxu0 %v1052
  %v1357 = vpop.f32.mrf.mxu0
  %v1358 = vadd.f32 0.0, %v1357
  %v1359 = vpop.f32.mrf.mxu0
  %v1360 = vpop.f32.mrf.mxu0
  %v1361 = vadd.f32 0.0, %v1360
  %v1362 = vpop.f32.mrf.mxu0
  %1363 = vmatprep.mubr.bf16.mxu0 0
  %1364 = vmatmul.mubr.bf16.gmra.mxu0 %v1055
  %v1365 = vpop.f32.mrf.mxu0
  %v1366 = vadd.f32 0.0, %v1365
  %v1367 = vpop.f32.mrf.mxu0
  %v1368 = vpop.f32.mrf.mxu0
  %v1369 = vadd.f32 0.0, %v1368
  %v1370 = vpop.f32.mrf.mxu0
  %1371 = vmatprep.mubr.bf16.mxu0 0
  %1372 = vmatmul.mubr.bf16.gmra.mxu0 %v1058
  %v1373 = vpop.f32.mrf.mxu0
  %v1374 = vadd.f32 0.0, %v1373
  %v1375 = vpop.f32.mrf.mxu0
  %v1376 = vpop.f32.mrf.mxu0
  %v1377 = vadd.f32 0.0, %v1376
  %v1378 = vpop.f32.mrf.mxu0
  %1379 = vmatprep.mubr.bf16.mxu0 0
  %1380 = vmatmul.mubr.bf16.gmra.mxu0 %v1061
  %v1381 = vpop.f32.mrf.mxu0
  %v1382 = vadd.f32 0.0, %v1381
  %v1383 = vpop.f32.mrf.mxu0
  %v1384 = vpop.f32.mrf.mxu0
  %v1385 = vadd.f32 0.0, %v1384
  %v1386 = vpop.f32.mrf.mxu0
  %1387 = vdwg.mxu0
  %s1388 = scalar_lea.vmem %s3, 48
  %v1389 = vld [vmem:[%s1388] sm:$0xf]
  %v1390 = vld [vmem:[%s1388 + $0x4] sm:$0xf]
  %v1391 = vld [vmem:[%s1388 + $0x8] sm:$0xf]
  %v1392 = vld [vmem:[%s1388 + $0xc] sm:$0xf]
  %v1397 = vunpack.c.l.b16 %v1389
  %v1398 = vunpack.c.l.b16 %v1390
  %v1399 = vunpack.c.l.b16 %v1391
  %v1400 = vunpack.c.l.b16 %v1392
  %v1401 = vpack.c.b16 %v1398, %v1397
  %v1402 = vpack.c.b16 %v1400, %v1399
  %1405 = vmatprep.subr.bf16.mxu0 0
  %1406 = vmatpush1.bf16.msra.mxu0 0
  %1407 = vmatprep.subr.bf16.mxu0 0
  %1408 = vmatpush1.bf16.msra.mxu0 0
  %1409 = vmatprep.subr.bf16.mxu0 0
  %1410 = vmatpush1.bf16.msra.mxu0 0
  %1411 = vmatprep.subr.bf16.mxu0 0
  %1412 = vmatpush1.bf16.msra.mxu0 0
  %1413 = vmatprep.subr.bf16.mxu0 0
  %1414 = vmatpush1.bf16.msra.mxu0 0
  %1415 = vmatprep.subr.bf16.mxu0 0
  %1416 = vmatpush1.bf16.msra.mxu0 0
  %1417 = vmatprep.subr.bf16.mxu0 0
  %1418 = vmatpush1.bf16.msra.mxu0 %v1402
  %1419 = vmatprep.subr.bf16.mxu0 0
  %1420 = vmatpush1.bf16.msra.mxu0 %v1401
  %1421 = vmatprep.subr.bf16.mxu0 0
  %1422 = vmatpush2.bf16.msra.mxu0 0
  %1423 = vmatprep.subr.bf16.mxu0 0
  %1424 = vmatpush2.bf16.msra.mxu0 0
  %1425 = vmatprep.subr.bf16.mxu0 0
  %1426 = vmatpush2.bf16.msra.mxu0 0
  %1427 = vmatprep.subr.bf16.mxu0 0
  %1428 = vmatpush2.bf16.msra.mxu0 0
  %1429 = vmatprep.subr.bf16.mxu0 0
  %1430 = vmatpush2.bf16.msra.mxu0 0
  %1431 = vmatprep.subr.bf16.mxu0 0
  %1432 = vmatpush2.bf16.msra.mxu0 0
  %1433 = vmatprep.subr.bf16.mxu0 0
  %1434 = vmatpush2.bf16.msra.mxu0 0
  %1435 = vmatprep.subr.bf16.mxu0 0
  %1436 = vmatpush2.bf16.msra.mxu0 0
  %1437 = vmatprep.mubr.bf16.mxu0 0
  %1438 = vmatmul.mubr.bf16.gmra.mxu0 %v1040
  %v1439 = vpop.f32.mrf.mxu0
  %v1440 = vadd.f32 0.0, %v1439
  %v1441 = vpop.f32.mrf.mxu0
  %v1442 = vpop.f32.mrf.mxu0
  %v1443 = vadd.f32 0.0, %v1442
  %v1444 = vpop.f32.mrf.mxu0
  %1445 = vmatprep.mubr.bf16.mxu0 0
  %1446 = vmatmul.mubr.bf16.gmra.mxu0 %v1043
  %v1447 = vpop.f32.mrf.mxu0
  %v1448 = vadd.f32 0.0, %v1447
  %v1449 = vpop.f32.mrf.mxu0
  %v1450 = vpop.f32.mrf.mxu0
  %v1451 = vadd.f32 0.0, %v1450
  %v1452 = vpop.f32.mrf.mxu0
  %1453 = vmatprep.mubr.bf16.mxu0 0
  %1454 = vmatmul.mubr.bf16.gmra.mxu0 %v1046
  %v1455 = vpop.f32.mrf.mxu0
  %v1456 = vadd.f32 0.0, %v1455
  %v1457 = vpop.f32.mrf.mxu0
  %v1458 = vpop.f32.mrf.mxu0
  %v1459 = vadd.f32 0.0, %v1458
  %v1460 = vpop.f32.mrf.mxu0
  %1461 = vmatprep.mubr.bf16.mxu0 0
  %1462 = vmatmul.mubr.bf16.gmra.mxu0 %v1049
  %v1463 = vpop.f32.mrf.mxu0
  %v1464 = vadd.f32 0.0, %v1463
  %v1465 = vpop.f32.mrf.mxu0
  %v1466 = vpop.f32.mrf.mxu0
  %v1467 = vadd.f32 0.0, %v1466
  %v1468 = vpop.f32.mrf.mxu0
  %1469 = vmatprep.mubr.bf16.mxu0 0
  %1470 = vmatmul.mubr.bf16.gmra.mxu0 %v1052
  %v1471 = vpop.f32.mrf.mxu0
  %v1472 = vadd.f32 0.0, %v1471
  %v1473 = vpop.f32.mrf.mxu0
  %v1474 = vpop.f32.mrf.mxu0
  %v1475 = vadd.f32 0.0, %v1474
  %v1476 = vpop.f32.mrf.mxu0
  %1477 = vmatprep.mubr.bf16.mxu0 0
  %1478 = vmatmul.mubr.bf16.gmra.mxu0 %v1055
  %v1479 = vpop.f32.mrf.mxu0
  %v1480 = vadd.f32 0.0, %v1479
  %v1481 = vpop.f32.mrf.mxu0
  %v1482 = vpop.f32.mrf.mxu0
  %v1483 = vadd.f32 0.0, %v1482
  %v1484 = vpop.f32.mrf.mxu0
  %1485 = vmatprep.mubr.bf16.mxu0 0
  %1486 = vmatmul.mubr.bf16.gmra.mxu0 %v1058
  %v1487 = vpop.f32.mrf.mxu0
  %v1488 = vadd.f32 0.0, %v1487
  %v1489 = vpop.f32.mrf.mxu0
  %v1490 = vpop.f32.mrf.mxu0
  %v1491 = vadd.f32 0.0, %v1490
  %v1492 = vpop.f32.mrf.mxu0
  %1493 = vmatprep.mubr.bf16.mxu0 0
  %1494 = vmatmul.mubr.bf16.gmra.mxu0 %v1061
  %v1495 = vpop.f32.mrf.mxu0
  %v1496 = vadd.f32 0.0, %v1495
  %v1497 = vpop.f32.mrf.mxu0
  %v1498 = vpop.f32.mrf.mxu0
  %v1499 = vadd.f32 0.0, %v1498
  %v1500 = vpop.f32.mrf.mxu0
  %1501 = vdwg.mxu0
  %v1502 = vmax.f32 %v1098, %v1212
  %v1503 = vmax.f32 %v1101, %v1215
  %v1504 = vmax.f32 %v1106, %v1220
  %v1505 = vmax.f32 %v1109, %v1223
  %v1506 = vmax.f32 %v1114, %v1228
  %v1507 = vmax.f32 %v1117, %v1231
  %v1508 = vmax.f32 %v1122, %v1236
  %v1509 = vmax.f32 %v1125, %v1239
  %v1510 = vmax.f32 %v1130, %v1244
  %v1511 = vmax.f32 %v1133, %v1247
  %v1512 = vmax.f32 %v1138, %v1252
  %v1513 = vmax.f32 %v1141, %v1255
  %v1514 = vmax.f32 %v1146, %v1260
  %v1515 = vmax.f32 %v1149, %v1263
  %v1516 = vmax.f32 %v1154, %v1268
  %v1517 = vmax.f32 %v1157, %v1271
  %v1518 = vmax.f32 %v1326, %v1440
  %v1519 = vmax.f32 %v1329, %v1443
  %v1520 = vmax.f32 %v1334, %v1448
  %v1521 = vmax.f32 %v1337, %v1451
  %v1522 = vmax.f32 %v1342, %v1456
  %v1523 = vmax.f32 %v1345, %v1459
  %v1524 = vmax.f32 %v1350, %v1464
  %v1525 = vmax.f32 %v1353, %v1467
  %v1526 = vmax.f32 %v1358, %v1472
  %v1527 = vmax.f32 %v1361, %v1475
  %v1528 = vmax.f32 %v1366, %v1480
  %v1529 = vmax.f32 %v1369, %v1483
  %v1530 = vmax.f32 %v1374, %v1488
  %v1531 = vmax.f32 %v1377, %v1491
  %v1532 = vmax.f32 %v1382, %v1496
  %v1533 = vmax.f32 %v1385, %v1499
  %v1534 = vmax.f32 %v1502, %v1518
  %v1535 = vmax.f32 %v1503, %v1519
  %v1536 = vmax.f32 %v1504, %v1520
  %v1537 = vmax.f32 %v1505, %v1521
  %v1538 = vmax.f32 %v1506, %v1522
  %v1539 = vmax.f32 %v1507, %v1523
  %v1540 = vmax.f32 %v1508, %v1524
  %v1541 = vmax.f32 %v1509, %v1525
  %v1542 = vmax.f32 %v1510, %v1526
  %v1543 = vmax.f32 %v1511, %v1527
  %v1544 = vmax.f32 %v1512, %v1528
  %v1545 = vmax.f32 %v1513, %v1529
  %v1546 = vmax.f32 %v1514, %v1530
  %v1547 = vmax.f32 %v1515, %v1531
  %v1548 = vmax.f32 %v1516, %v1532
  %v1549 = vmax.f32 %v1517, %v1533
  %v1550 = vpack.c.bf16 %v1535, %v1534
  %v1551 = vpack.c.bf16 %v1537, %v1536
  %v1552 = vpack.c.bf16 %v1539, %v1538
  %v1553 = vpack.c.bf16 %v1541, %v1540
  %v1554 = vpack.c.bf16 %v1543, %v1542
  %v1555 = vpack.c.bf16 %v1545, %v1544
  %v1556 = vpack.c.bf16 %v1547, %v1546
  %v1557 = vpack.c.bf16 %v1549, %v1548
  %v1566 = vunpack.c.l.b16 %v1550
  %v1567 = vunpack.c.h.b16 %v1550
  %v1568 = vunpack.c.l.b16 %v1551
  %v1569 = vunpack.c.h.b16 %v1551
  %v1570 = vunpack.c.l.b16 %v1552
  %v1571 = vunpack.c.h.b16 %v1552
  %v1572 = vunpack.c.l.b16 %v1553
  %v1573 = vunpack.c.h.b16 %v1553
  %v1574 = vunpack.c.l.b16 %v1554
  %v1575 = vunpack.c.h.b16 %v1554
  %v1576 = vunpack.c.l.b16 %v1555
  %v1577 = vunpack.c.h.b16 %v1555
  %v1578 = vunpack.c.l.b16 %v1556
  %v1579 = vunpack.c.h.b16 %v1556
  %v1580 = vunpack.c.l.b16 %v1557
  %v1581 = vunpack.c.h.b16 %v1557
  %v1582 = vpack.c.b16 %v1566, %v1566
  %v1583 = vpack.c.b16 %v1567, %v1567
  %v1584 = vpack.c.b16 %v1568, %v1568
  %v1585 = vpack.c.b16 %v1569, %v1569
  %v1586 = vpack.c.b16 %v1570, %v1570
  %v1587 = vpack.c.b16 %v1571, %v1571
  %v1588 = vpack.c.b16 %v1572, %v1572
  %v1589 = vpack.c.b16 %v1573, %v1573
  %v1590 = vpack.c.b16 %v1574, %v1574
  %v1591 = vpack.c.b16 %v1575, %v1575
  %v1592 = vpack.c.b16 %v1576, %v1576
  %v1593 = vpack.c.b16 %v1577, %v1577
  %v1594 = vpack.c.b16 %v1578, %v1578
  %v1595 = vpack.c.b16 %v1579, %v1579
  %v1596 = vpack.c.b16 %v1580, %v1580
  %v1597 = vpack.c.b16 %v1581, %v1581
  %vm1614 = vcmask 60416
  %1615 = vst.msk [vmem:[%s4] sm:$0xf] %vm1614, %v1582
  %1616 = vst.msk [vmem:[%s4 + $0x4] sm:$0xf] %vm1614, %v1583
  %1617 = vst.msk [vmem:[%s4 + $0x8] sm:$0xf] %vm1614, %v1584
  %1618 = vst.msk [vmem:[%s4 + $0xc] sm:$0xf] %vm1614, %v1585
  %1619 = vst.msk [vmem:[%s4 + $0x10] sm:$0xf] %vm1614, %v1586
  %1620 = vst.msk [vmem:[%s4 + $0x14] sm:$0xf] %vm1614, %v1587
  %1621 = vst.msk [vmem:[%s4 + $0x18] sm:$0xf] %vm1614, %v1588
  %1622 = vst.msk [vmem:[%s4 + $0x1c] sm:$0xf] %vm1614, %v1589
  %1623 = vst.msk [vmem:[%s4 + $0x20] sm:$0xf] %vm1614, %v1590
  %1624 = vst.msk [vmem:[%s4 + $0x24] sm:$0xf] %vm1614, %v1591
  %1625 = vst.msk [vmem:[%s4 + $0x28] sm:$0xf] %vm1614, %v1592
  %1626 = vst.msk [vmem:[%s4 + $0x2c] sm:$0xf] %vm1614, %v1593
  %1627 = vst.msk [vmem:[%s4 + $0x30] sm:$0xf] %vm1614, %v1594
  %1628 = vst.msk [vmem:[%s4 + $0x34] sm:$0xf] %vm1614, %v1595
  %1629 = vst.msk [vmem:[%s4 + $0x38] sm:$0xf] %vm1614, %v1596
  %1630 = vst.msk [vmem:[%s4 + $0x3c] sm:$0xf] %vm1614, %v1597
  // Predicated region
  $region18: #{mini_model_forward.11} parent=0 // pred_check
    _
  $region19: #{mini_model_forward.11} parent=0 // pred_check_branch
    %1632 = sbr.rel (0) target = $region21
  $region20: #{mini_model_forward.11} parent=0 // pred_region
    _
  $region21: #{mini_model_forward.11} parent=0 // pred_fallthru
    _
  // Predicated region
  $region22: #{mini_model_forward.11} parent=0 // pred_check
    _
  $region23: #{mini_model_forward.11} parent=0 // pred_check_branch
    %1634 = sbr.rel (0) target = $region25
  $region24: #{mini_model_forward.11} parent=0 // pred_region
    _
  $region25: #{mini_model_forward.11} parent=0 // pred_fallthru
    _

// kernel: mini_model_forward.12
$region0: #{mini_model_forward.12}
  #allocation0 [shape = 'u32[]', space=smem, size = 0x4, offset = 0x4, fixed_abs, tag = 'smem constant byte address 0x4 - core index']
  #allocation1 [shape = 'u32[144,128]{1,0:T(1,128)}', space=vmem, size = 0x12000, scoped, tag = 'internal scratch']
  %s0 = inlined_call_operand.vmem [shape: bf16[8,512], index: 0, kind: input, shape index: {}]
  %s1 = inlined_call_operand.vmem [shape: bf16[512,1024], index: 1, kind: input, shape index: {}]
  %s2 = inlined_call_operand.vmem [shape: f32[1,1024], index: 2, kind: input, shape index: {}]
  %s3 = inlined_call_operand.vmem [shape: bf16[8,1024], index: 3, kind: output, shape index: {}]
  %s4 = sld [smem:[#allocation0]]
  $region68: #{mini_model_forward.12} parent=0
    _
  %s6 = ssub.s32 1, %s4
  %s7 = scalar_select 0, %s6, %s4
  $region1: #{mini_model_forward.12} parent=0
    #allocation2 [shape = 'u8[1048576]{0}', space=vmem, size = 0x100000, scoped, tag = 'input window, operand 1']
    loop: start=0, step=1, limit=4
    $region2: #{mini_model_forward.12} parent=1 // loop_pre_header
      _
    $region3: #{mini_model_forward.12} parent=1 // loop_header
      %s9 = sphi 0, %s13
      %p10 = scmp.ge.s32.totalorder %s9, 4
      %s17 = sphi 0, %s17
      %s19 = sphi 0, %s17
      %s20 = sphi 0, %s19
      %s34 = sphi 0, %s20
      %s40 = sphi 0, %s42
      %s43 = sphi 0, %s40
      %s44 = sphi 0, %s43
      %s60 = sphi 0, %s44
      %s66 = sphi 0, %s68
      %s69 = sphi 0, %s66
      %s70 = sphi 0, %s69
      %s86 = sphi 0, %s70
      %s92 = sphi 0, %s94
      %s95 = sphi 0, %s92
      %s96 = sphi 0, %s95
      %s112 = sphi 0, %s96
    $region4: #{mini_model_forward.12} parent=1 // loop_header_branch
      %12 = sbr.rel (%p10) target = $region8
    $region5: #{mini_model_forward.12} parent=1 // loop_body
      %s14 = ssub.s32 %s9, 1
      %s15 = ssub.s32 %s9, 2
      %s16 = sadd.s32 %s9, 1
      %s18 = sadd.s32 %s17, 1
      %p21 = scmp.eq.s32.totalorder %s9, 1
      %p22 = scmp.ne.s32.totalorder %s17, %s19
      %p23 = scmp.eq.s32.totalorder %s9, 0
      %p24 = por %p22, %p23
      %p25 = scmp.ne.s32.totalorder %s17, %s19
      %p26 = scmp.eq.s32.totalorder %s14, 1
      %p27 = por %p25, %p26
      %p28 = scmp.ne.s32.totalorder %s19, %s20
      %p29 = scmp.eq.s32.totalorder %s14, 0
      %p30 = por %p28, %p29
      %p31 = scmp.ne.s32.totalorder %s19, %s20
      %p32 = scmp.eq.s32.totalorder %s15, 1
      %p33 = por %p31, %p32
      %p35 = scmp.ne.s32.totalorder %s20, %s34
      %p36 = scmp.eq.s32.totalorder %s15, 0
      %p37 = por %p35, %p36
      %s38 = ssub.s32 %s9, %s16
      %p39 = scmp.eq.s32.totalorder %s38, 0
      %s41 = sadd.s32 %s40, 1
      %s42 = scalar_select %p39, %s40, %s41
      %p45 = pneg %p39
      %p46 = scmp.eq.s32.totalorder %s9, 1
      %p47 = por %p45, %p46
      %p48 = scmp.ne.s32.totalorder %s40, %s43
      %p49 = scmp.eq.s32.totalorder %s9, 0
      %p50 = por %p48, %p49
      %p51 = scmp.ne.s32.totalorder %s40, %s43
      %p52 = scmp.eq.s32.totalorder %s14, 1
      %p53 = por %p51, %p52
      %p54 = scmp.ne.s32.totalorder %s43, %s44
      %p55 = scmp.eq.s32.totalorder %s14, 0
      %p56 = por %p54, %p55
      %p57 = scmp.ne.s32.totalorder %s43, %s44
      %p58 = scmp.eq.s32.totalorder %s15, 1
      %p59 = por %p57, %p58
      %p61 = scmp.ne.s32.totalorder %s44, %s60
      %p62 = scmp.eq.s32.totalorder %s15, 0
      %p63 = por %p61, %p62
      %s64 = ssub.s32 %s9, %s16
      %p65 = scmp.eq.s32.totalorder %s64, 0
      %s67 = sadd.s32 %s66, 1
      %s68 = scalar_select %p65, %s66, %s67
      %p71 = pneg %p65
      %p72 = scmp.eq.s32.totalorder %s9, 1
      %p73 = por %p71, %p72
      %p74 = scmp.ne.s32.totalorder %s66, %s69
      %p75 = scmp.eq.s32.totalorder %s9, 0
      %p76 = por %p74, %p75
      %p77 = scmp.ne.s32.totalorder %s66, %s69
      %p78 = scmp.eq.s32.totalorder %s14, 1
      %p79 = por %p77, %p78
      %p80 = scmp.ne.s32.totalorder %s69, %s70
      %p81 = scmp.eq.s32.totalorder %s14, 0
      %p82 = por %p80, %p81
      %p83 = scmp.ne.s32.totalorder %s69, %s70
      %p84 = scmp.eq.s32.totalorder %s15, 1
      %p85 = por %p83, %p84
      %p87 = scmp.ne.s32.totalorder %s70, %s86
      %p88 = scmp.eq.s32.totalorder %s15, 0
      %p89 = por %p87, %p88
      %s90 = ssub.s32 %s9, %s16
      %p91 = scmp.eq.s32.totalorder %s90, 0
      %s93 = sadd.s32 %s92, 1
      %s94 = scalar_select %p91, %s92, %s93
      %p97 = pneg %p91
      %p98 = scmp.eq.s32.totalorder %s9, 1
      %p99 = por %p97, %p98
      %p100 = scmp.ne.s32.totalorder %s92, %s95
      %p101 = scmp.eq.s32.totalorder %s9, 0
      %p102 = por %p100, %p101
      %p103 = scmp.ne.s32.totalorder %s92, %s95
      %p104 = scmp.eq.s32.totalorder %s14, 1
      %p105 = por %p103, %p104
      %p106 = scmp.ne.s32.totalorder %s95, %s96
      %p107 = scmp.eq.s32.totalorder %s14, 0
      %p108 = por %p106, %p107
      %p109 = scmp.ne.s32.totalorder %s95, %s96
      %p110 = scmp.eq.s32.totalorder %s15, 1
      %p111 = por %p109, %p110
      %p113 = scmp.ne.s32.totalorder %s96, %s112
      %p114 = scmp.eq.s32.totalorder %s15, 0
      %p115 = por %p113, %p114
      %p116 = scmp.le.s32.totalorder 1, %s9
      %p117 = scmp.lt.s32.totalorder %s9, 3
      %p118 = pnand %p116, %p117
      %p119 = pneg %p118
      // Predicated region
      $region9: #{mini_model_forward.12} parent=5 // pred_check
        _
      $region10: #{mini_model_forward.12} parent=5 // pred_check_branch
        %121 = sbr.rel (%p118) target = $region12
      $region11: #{mini_model_forward.12} parent=5 // pred_region
        %s122 = ssub.s32 %s9, 1
        // Predicated region
        $region13: #{mini_model_forward.12} parent=11 // pred_check
          %p123 = pneg %p30
        $region14: #{mini_model_forward.12} parent=11 // pred_check_branch
          %125 = sbr.rel (%p123) target = $region16
        $region15: #{mini_model_forward.12} parent=11 // pred_region
          _
        $region16: #{mini_model_forward.12} parent=11 // pred_fallthru
          _
      $region12: #{mini_model_forward.12} parent=5 // pred_fallthru
        _
      %p126 = scmp.lt.s32.totalorder %s9, 2
      // Predicated region
      $region17: #{mini_model_forward.12} parent=5 // pred_check
        %p127 = pneg %p126
      $region18: #{mini_model_forward.12} parent=5 // pred_check_branch
        %129 = sbr.rel (%p127) target = $region20
      $region19: #{mini_model_forward.12} parent=5 // pred_region
        // Predicated region
        $region21: #{mini_model_forward.12} parent=19 // pred_check
          %p130 = pneg %p50
        $region22: #{mini_model_forward.12} parent=19 // pred_check_branch
          %132 = sbr.rel (%p130) target = $region24
        $region23: #{mini_model_forward.12} parent=19 // pred_region
          %s133 = sand.u32 %s40, 1
          %s134 = sand.u32 %s40, 1
          %s135 = smul.addr %s134, 1024
          %s136 = scalar_lea.vmem [#allocation2], %s135
          %s137 = smul.u32 4, %s9
          %s138 = smul.addr %s137, 4
          %s139 = scalar_lea.vmem %s1, %s138
          // Predicated region
          $region25: #{mini_model_forward.12} parent=23 // pred_check
            _
          $region26: #{mini_model_forward.12} parent=23 // pred_check_branch
            %141 = sbr.rel (0) target = $region28
          $region27: #{mini_model_forward.12} parent=23 // pred_region
            // Predicated region
            $region29: #{mini_model_forward.12} parent=27 // pred_check
              _
            $region30: #{mini_model_forward.12} parent=27 // pred_check_branch
              %143 = sbr.rel (0) target = $region32
            $region31: #{mini_model_forward.12} parent=27 // pred_region
              loop: start=0, step=1, limit=1
              $region33: #{mini_model_forward.12} parent=31 // loop_pre_header
                _
              $region34: #{mini_model_forward.12} parent=31 // loop_header
                %s145 = sphi 0, %s149
                %p146 = scmp.ge.s32.totalorder %s145, 1
                %s150 = sphi %s139, %s139
                %s151 = sphi %s136, %s136
              $region35: #{mini_model_forward.12} parent=31 // loop_header_branch
                %148 = sbr.rel (%p146) target = $region39
              $region36: #{mini_model_forward.12} parent=31 // loop_body
                %v152 = vld [vmem:[%s150] sm:$0xff]
                %153 = vst [vmem:[%s151] sm:$0xff] %v152
                %v154 = vld [vmem:[%s150 + $0x8] sm:$0xff]
                %155 = vst [vmem:[%s151 + $0x8] sm:$0xff] %v154
                %v156 = vld [vmem:[%s150 + $0x20] sm:$0xff]
                %157 = vst [vmem:[%s151 + $0x10] sm:$0xff] %v156
                %v158 = vld [vmem:[%s150 + $0x28] sm:$0xff]
                %159 = vst [vmem:[%s151 + $0x18] sm:$0xff] %v158
                %v160 = vld [vmem:[%s150 + $0x40] sm:$0xff]
                %161 = vst [vmem:[%s151 + $0x20] sm:$0xff] %v160
                %v162 = vld [vmem:[%s150 + $0x48] sm:$0xff]
                %163 = vst [vmem:[%s151 + $0x28] sm:$0xff] %v162
                %v164 = vld [vmem:[%s150 + $0x60] sm:$0xff]
                %165 = vst [vmem:[%s151 + $0x30] sm:$0xff] %v164
                %v166 = vld [vmem:[%s150 + $0x68] sm:$0xff]
                %167 = vst [vmem:[%s151 + $0x38] sm:$0xff] %v166
                %v168 = vld [vmem:[%s150 + $0x80] sm:$0xff]
                %169 = vst [vmem:[%s151 + $0x40] sm:$0xff] %v168
                %v170 = vld [vmem:[%s150 + $0x88] sm:$0xff]
                %171 = vst [vmem:[%s151 + $0x48] sm:$0xff] %v170
                %v172 = vld [vmem:[%s150 + $0xa0] sm:$0xff]
                %173 = vst [vmem:[%s151 + $0x50] sm:$0xff] %v172
                %v174 = vld [vmem:[%s150 + $0xa8] sm:$0xff]
                %175 = vst [vmem:[%s151 + $0x58] sm:$0xff] %v174
                %v176 = vld [vmem:[%s150 + $0xc0] sm:$0xff]
                %177 = vst [vmem:[%s151 + $0x60] sm:$0xff] %v176
                %v178 = vld [vmem:[%s150 + $0xc8] sm:$0xff]
                %179 = vst [vmem:[%s151 + $0x68] sm:$0xff] %v178
                %v180 = vld [vmem:[%s150 + $0xe0] sm:$0xff]
                %181 = vst [vmem:[%s151 + $0x70] sm:$0xff] %v180
                %v182 = vld [vmem:[%s150 + $0xe8] sm:$0xff]
                %183 = vst [vmem:[%s151 + $0x78] sm:$0xff] %v182
                %v184 = vld [vmem:[%s150 + $0x100] sm:$0xff]
                %185 = vst [vmem:[%s151 + $0x80] sm:$0xff] %v184
                %v186 = vld [vmem:[%s150 + $0x108] sm:$0xff]
                %187 = vst [vmem:[%s151 + $0x88] sm:$0xff] %v186
                %v188 = vld [vmem:[%s150 + $0x120] sm:$0xff]
                %189 = vst [vmem:[%s151 + $0x90] sm:$0xff] %v188
                %v190 = vld [vmem:[%s150 + $0x128] sm:$0xff]
                %191 = vst [vmem:[%s151 + $0x98] sm:$0xff] %v190
                %v192 = vld [vmem:[%s150 + $0x140] sm:$0xff]
                %193 = vst [vmem:[%s151 + $0xa0] sm:$0xff] %v192
                %v194 = vld [vmem:[%s150 + $0x148] sm:$0xff]
                %195 = vst [vmem:[%s151 + $0xa8] sm:$0xff] %v194
                %v196 = vld [vmem:[%s150 + $0x160] sm:$0xff]
                %197 = vst [vmem:[%s151 + $0xb0] sm:$0xff] %v196
                %v198 = vld [vmem:[%s150 + $0x168] sm:$0xff]
                %199 = vst [vmem:[%s151 + $0xb8] sm:$0xff] %v198
                %v200 = vld [vmem:[%s150 + $0x180] sm:$0xff]
                %201 = vst [vmem:[%s151 + $0xc0] sm:$0xff] %v200
                %v202 = vld [vmem:[%s150 + $0x188] sm:$0xff]
                %203 = vst [vmem:[%s151 + $0xc8] sm:$0xff] %v202
                %v204 = vld [vmem:[%s150 + $0x1a0] sm:$0xff]
                %205 = vst [vmem:[%s151 + $0xd0] sm:$0xff] %v204
                %v206 = vld [vmem:[%s150 + $0x1a8] sm:$0xff]
                %207 = vst [vmem:[%s151 + $0xd8] sm:$0xff] %v206
                %v208 = vld [vmem:[%s150 + $0x1c0] sm:$0xff]
                %209 = vst [vmem:[%s151 + $0xe0] sm:$0xff] %v208
                %v210 = vld [vmem:[%s150 + $0x1c8] sm:$0xff]
                %211 = vst [vmem:[%s151 + $0xe8] sm:$0xff] %v210
                %v212 = vld [vmem:[%s150 + $0x1e0] sm:$0xff]
                %213 = vst [vmem:[%s151 + $0xf0] sm:$0xff] %v212
                %v214 = vld [vmem:[%s150 + $0x1e8] sm:$0xff]
                %215 = vst [vmem:[%s151 + $0xf8] sm:$0xff] %v214
                %v216 = vld [vmem:[%s150 + $0x200] sm:$0xff]
                %217 = vst [vmem:[%s151 + $0x100] sm:$0xff] %v216
                %v218 = vld [vmem:[%s150 + $0x208] sm:$0xff]
                %219 = vst [vmem:[%s151 + $0x108] sm:$0xff] %v218
                %v220 = vld [vmem:[%s150 + $0x220] sm:$0xff]
                %221 = vst [vmem:[%s151 + $0x110] sm:$0xff] %v220
                %v222 = vld [vmem:[%s150 + $0x228] sm:$0xff]
                %223 = vst [vmem:[%s151 + $0x118] sm:$0xff] %v222
                %v224 = vld [vmem:[%s150 + $0x240] sm:$0xff]
                %225 = vst [vmem:[%s151 + $0x120] sm:$0xff] %v224
                %v226 = vld [vmem:[%s150 + $0x248] sm:$0xff]
                %227 = vst [vmem:[%s151 + $0x128] sm:$0xff] %v226
                %v228 = vld [vmem:[%s150 + $0x260] sm:$0xff]
                %229 = vst [vmem:[%s151 + $0x130] sm:$0xff] %v228
                %v230 = vld [vmem:[%s150 + $0x268] sm:$0xff]
                %231 = vst [vmem:[%s151 + $0x138] sm:$0xff] %v230
                %v232 = vld [vmem:[%s150 + $0x280] sm:$0xff]
                %233 = vst [vmem:[%s151 + $0x140] sm:$0xff] %v232
                %v234 = vld [vmem:[%s150 + $0x288] sm:$0xff]
                %235 = vst [vmem:[%s151 + $0x148] sm:$0xff] %v234
                %v236 = vld [vmem:[%s150 + $0x2a0] sm:$0xff]
                %237 = vst [vmem:[%s151 + $0x150] sm:$0xff] %v236
                %v238 = vld [vmem:[%s150 + $0x2a8] sm:$0xff]
                %239 = vst [vmem:[%s151 + $0x158] sm:$0xff] %v238
                %v240 = vld [vmem:[%s150 + $0x2c0] sm:$0xff]
                %241 = vst [vmem:[%s151 + $0x160] sm:$0xff] %v240
                %v242 = vld [vmem:[%s150 + $0x2c8] sm:$0xff]
                %243 = vst [vmem:[%s151 + $0x168] sm:$0xff] %v242
                %v244 = vld [vmem:[%s150 + $0x2e0] sm:$0xff]
                %245 = vst [vmem:[%s151 + $0x170] sm:$0xff] %v244
                %v246 = vld [vmem:[%s150 + $0x2e8] sm:$0xff]
                %247 = vst [vmem:[%s151 + $0x178] sm:$0xff] %v246
                %v248 = vld [vmem:[%s150 + $0x300] sm:$0xff]
                %249 = vst [vmem:[%s151 + $0x180] sm:$0xff] %v248
                %v250 = vld [vmem:[%s150 + $0x308] sm:$0xff]
                %251 = vst [vmem:[%s151 + $0x188] sm:$0xff] %v250
                %v252 = vld [vmem:[%s150 + $0x320] sm:$0xff]
                %253 = vst [vmem:[%s151 + $0x190] sm:$0xff] %v252
                %v254 = vld [vmem:[%s150 + $0x328] sm:$0xff]
                %255 = vst [vmem:[%s151 + $0x198] sm:$0xff] %v254
                %v256 = vld [vmem:[%s150 + $0x340] sm:$0xff]
                %257 = vst [vmem:[%s151 + $0x1a0] sm:$0xff] %v256
                %v258 = vld [vmem:[%s150 + $0x348] sm:$0xff]
                %259 = vst [vmem:[%s151 + $0x1a8] sm:$0xff] %v258
                %v260 = vld [vmem:[%s150 + $0x360] sm:$0xff]
                %261 = vst [vmem:[%s151 + $0x1b0] sm:$0xff] %v260
                %v262 = vld [vmem:[%s150 + $0x368] sm:$0xff]
                %263 = vst [vmem:[%s151 + $0x1b8] sm:$0xff] %v262
                %v264 = vld [vmem:[%s150 + $0x380] sm:$0xff]
                %265 = vst [vmem:[%s151 + $0x1c0] sm:$0xff] %v264
                %v266 = vld [vmem:[%s150 + $0x388] sm:$0xff]
                %267 = vst [vmem:[%s151 + $0x1c8] sm:$0xff] %v266
                %v268 = vld [vmem:[%s150 + $0x3a0] sm:$0xff]
                %269 = vst [vmem:[%s151 + $0x1d0] sm:$0xff] %v268
                %v270 = vld [vmem:[%s150 + $0x3a8] sm:$0xff]
                %271 = vst [vmem:[%s151 + $0x1d8] sm:$0xff] %v270
                %v272 = vld [vmem:[%s150 + $0x3c0] sm:$0xff]
                %273 = vst [vmem:[%s151 + $0x1e0] sm:$0xff] %v272
                %v274 = vld [vmem:[%s150 + $0x3c8] sm:$0xff]
                %275 = vst [vmem:[%s151 + $0x1e8] sm:$0xff] %v274
                %v276 = vld [vmem:[%s150 + $0x3e0] sm:$0xff]
                %277 = vst [vmem:[%s151 + $0x1f0] sm:$0xff] %v276
                %v278 = vld [vmem:[%s150 + $0x3e8] sm:$0xff]
                %279 = vst [vmem:[%s151 + $0x1f8] sm:$0xff] %v278
                %v280 = vld [vmem:[%s150 + $0x400] sm:$0xff]
                %281 = vst [vmem:[%s151 + $0x200] sm:$0xff] %v280
                %v282 = vld [vmem:[%s150 + $0x408] sm:$0xff]
                %283 = vst [vmem:[%s151 + $0x208] sm:$0xff] %v282
                %v284 = vld [vmem:[%s150 + $0x420] sm:$0xff]
                %285 = vst [vmem:[%s151 + $0x210] sm:$0xff] %v284
                %v286 = vld [vmem:[%s150 + $0x428] sm:$0xff]
                %287 = vst [vmem:[%s151 + $0x218] sm:$0xff] %v286
                %v288 = vld [vmem:[%s150 + $0x440] sm:$0xff]
                %289 = vst [vmem:[%s151 + $0x220] sm:$0xff] %v288
                %v290 = vld [vmem:[%s150 + $0x448] sm:$0xff]
                %291 = vst [vmem:[%s151 + $0x228] sm:$0xff] %v290
                %v292 = vld [vmem:[%s150 + $0x460] sm:$0xff]
                %293 = vst [vmem:[%s151 + $0x230] sm:$0xff] %v292
                %v294 = vld [vmem:[%s150 + $0x468] sm:$0xff]
                %295 = vst [vmem:[%s151 + $0x238] sm:$0xff] %v294
                %v296 = vld [vmem:[%s150 + $0x480] sm:$0xff]
                %297 = vst [vmem:[%s151 + $0x240] sm:$0xff] %v296
                %v298 = vld [vmem:[%s150 + $0x488] sm:$0xff]
                %299 = vst [vmem:[%s151 + $0x248] sm:$0xff] %v298
                %v300 = vld [vmem:[%s150 + $0x4a0] sm:$0xff]
                %301 = vst [vmem:[%s151 + $0x250] sm:$0xff] %v300
                %v302 = vld [vmem:[%s150 + $0x4a8] sm:$0xff]
                %303 = vst [vmem:[%s151 + $0x258] sm:$0xff] %v302
                %v304 = vld [vmem:[%s150 + $0x4c0] sm:$0xff]
                %305 = vst [vmem:[%s151 + $0x260] sm:$0xff] %v304
                %v306 = vld [vmem:[%s150 + $0x4c8] sm:$0xff]
                %307 = vst [vmem:[%s151 + $0x268] sm:$0xff] %v306
                %v308 = vld [vmem:[%s150 + $0x4e0] sm:$0xff]
                %309 = vst [vmem:[%s151 + $0x270] sm:$0xff] %v308
                %v310 = vld [vmem:[%s150 + $0x4e8] sm:$0xff]
                %311 = vst [vmem:[%s151 + $0x278] sm:$0xff] %v310
                %v312 = vld [vmem:[%s150 + $0x500] sm:$0xff]
                %313 = vst [vmem:[%s151 + $0x280] sm:$0xff] %v312
                %v314 = vld [vmem:[%s150 + $0x508] sm:$0xff]
                %315 = vst [vmem:[%s151 + $0x288] sm:$0xff] %v314
                %v316 = vld [vmem:[%s150 + $0x520] sm:$0xff]
                %317 = vst [vmem:[%s151 + $0x290] sm:$0xff] %v316
                %v318 = vld [vmem:[%s150 + $0x528] sm:$0xff]
                %319 = vst [vmem:[%s151 + $0x298] sm:$0xff] %v318
                %v320 = vld [vmem:[%s150 + $0x540] sm:$0xff]
                %321 = vst [vmem:[%s151 + $0x2a0] sm:$0xff] %v320
                %v322 = vld [vmem:[%s150 + $0x548] sm:$0xff]
                %323 = vst [vmem:[%s151 + $0x2a8] sm:$0xff] %v322
                %v324 = vld [vmem:[%s150 + $0x560] sm:$0xff]
                %325 = vst [vmem:[%s151 + $0x2b0] sm:$0xff] %v324
                %v326 = vld [vmem:[%s150 + $0x568] sm:$0xff]
                %327 = vst [vmem:[%s151 + $0x2b8] sm:$0xff] %v326
                %v328 = vld [vmem:[%s150 + $0x580] sm:$0xff]
                %329 = vst [vmem:[%s151 + $0x2c0] sm:$0xff] %v328
                %v330 = vld [vmem:[%s150 + $0x588] sm:$0xff]
                %331 = vst [vmem:[%s151 + $0x2c8] sm:$0xff] %v330
                %v332 = vld [vmem:[%s150 + $0x5a0] sm:$0xff]
                %333 = vst [vmem:[%s151 + $0x2d0] sm:$0xff] %v332
                %v334 = vld [vmem:[%s150 + $0x5a8] sm:$0xff]
                %335 = vst [vmem:[%s151 + $0x2d8] sm:$0xff] %v334
                %v336 = vld [vmem:[%s150 + $0x5c0] sm:$0xff]
                %337 = vst [vmem:[%s151 + $0x2e0] sm:$0xff] %v336
                %v338 = vld [vmem:[%s150 + $0x5c8] sm:$0xff]
                %339 = vst [vmem:[%s151 + $0x2e8] sm:$0xff] %v338
                %v340 = vld [vmem:[%s150 + $0x5e0] sm:$0xff]
                %341 = vst [vmem:[%s151 + $0x2f0] sm:$0xff] %v340
                %v342 = vld [vmem:[%s150 + $0x5e8] sm:$0xff]
                %343 = vst [vmem:[%s151 + $0x2f8] sm:$0xff] %v342
                %v344 = vld [vmem:[%s150 + $0x600] sm:$0xff]
                %345 = vst [vmem:[%s151 + $0x300] sm:$0xff] %v344
                %v346 = vld [vmem:[%s150 + $0x608] sm:$0xff]
                %347 = vst [vmem:[%s151 + $0x308] sm:$0xff] %v346
                %v348 = vld [vmem:[%s150 + $0x620] sm:$0xff]
                %349 = vst [vmem:[%s151 + $0x310] sm:$0xff] %v348
                %v350 = vld [vmem:[%s150 + $0x628] sm:$0xff]
                %351 = vst [vmem:[%s151 + $0x318] sm:$0xff] %v350
                %v352 = vld [vmem:[%s150 + $0x640] sm:$0xff]
                %353 = vst [vmem:[%s151 + $0x320] sm:$0xff] %v352
                %v354 = vld [vmem:[%s150 + $0x648] sm:$0xff]
                %355 = vst [vmem:[%s151 + $0x328] sm:$0xff] %v354
                %v356 = vld [vmem:[%s150 + $0x660] sm:$0xff]
                %357 = vst [vmem:[%s151 + $0x330] sm:$0xff] %v356
                %v358 = vld [vmem:[%s150 + $0x668] sm:$0xff]
                %359 = vst [vmem:[%s151 + $0x338] sm:$0xff] %v358
                %v360 = vld [vmem:[%s150 + $0x680] sm:$0xff]
                %361 = vst [vmem:[%s151 + $0x340] sm:$0xff] %v360
                %v362 = vld [vmem:[%s150 + $0x688] sm:$0xff]
                %363 = vst [vmem:[%s151 + $0x348] sm:$0xff] %v362
                %v364 = vld [vmem:[%s150 + $0x6a0] sm:$0xff]
                %365 = vst [vmem:[%s151 + $0x350] sm:$0xff] %v364
                %v366 = vld [vmem:[%s150 + $0x6a8] sm:$0xff]
                %367 = vst [vmem:[%s151 + $0x358] sm:$0xff] %v366
                %v368 = vld [vmem:[%s150 + $0x6c0] sm:$0xff]
                %369 = vst [vmem:[%s151 + $0x360] sm:$0xff] %v368
                %v370 = vld [vmem:[%s150 + $0x6c8] sm:$0xff]
                %371 = vst [vmem:[%s151 + $0x368] sm:$0xff] %v370
                %v372 = vld [vmem:[%s150 + $0x6e0] sm:$0xff]
                %373 = vst [vmem:[%s151 + $0x370] sm:$0xff] %v372
                %v374 = vld [vmem:[%s150 + $0x6e8] sm:$0xff]
                %375 = vst [vmem:[%s151 + $0x378] sm:$0xff] %v374
                %v376 = vld [vmem:[%s150 + $0x700] sm:$0xff]
                %377 = vst [vmem:[%s151 + $0x380] sm:$0xff] %v376
                %v378 = vld [vmem:[%s150 + $0x708] sm:$0xff]
                %379 = vst [vmem:[%s151 + $0x388] sm:$0xff] %v378
                %v380 = vld [vmem:[%s150 + $0x720] sm:$0xff]
                %381 = vst [vmem:[%s151 + $0x390] sm:$0xff] %v380
                %v382 = vld [vmem:[%s150 + $0x728] sm:$0xff]
                %383 = vst [vmem:[%s151 + $0x398] sm:$0xff] %v382
                %v384 = vld [vmem:[%s150 + $0x740] sm:$0xff]
                %385 = vst [vmem:[%s151 + $0x3a0] sm:$0xff] %v384
                %v386 = vld [vmem:[%s150 + $0x748] sm:$0xff]
                %387 = vst [vmem:[%s151 + $0x3a8] sm:$0xff] %v386
                %v388 = vld [vmem:[%s150 + $0x760] sm:$0xff]
                %389 = vst [vmem:[%s151 + $0x3b0] sm:$0xff] %v388
                %v390 = vld [vmem:[%s150 + $0x768] sm:$0xff]
                %391 = vst [vmem:[%s151 + $0x3b8] sm:$0xff] %v390
                %v392 = vld [vmem:[%s150 + $0x780] sm:$0xff]
                %393 = vst [vmem:[%s151 + $0x3c0] sm:$0xff] %v392
                %v394 = vld [vmem:[%s150 + $0x788] sm:$0xff]
                %395 = vst [vmem:[%s151 + $0x3c8] sm:$0xff] %v394
                %v396 = vld [vmem:[%s150 + $0x7a0] sm:$0xff]
                %397 = vst [vmem:[%s151 + $0x3d0] sm:$0xff] %v396
                %v398 = vld [vmem:[%s150 + $0x7a8] sm:$0xff]
                %399 = vst [vmem:[%s151 + $0x3d8] sm:$0xff] %v398
                %v400 = vld [vmem:[%s150 + $0x7c0] sm:$0xff]
                %401 = vst [vmem:[%s151 + $0x3e0] sm:$0xff] %v400
                %v402 = vld [vmem:[%s150 + $0x7c8] sm:$0xff]
                %403 = vst [vmem:[%s151 + $0x3e8] sm:$0xff] %v402
                %v404 = vld [vmem:[%s150 + $0x7e0] sm:$0xff]
                %405 = vst [vmem:[%s151 + $0x3f0] sm:$0xff] %v404
                %v406 = vld [vmem:[%s150 + $0x7e8] sm:$0xff]
                %407 = vst [vmem:[%s151 + $0x3f8] sm:$0xff] %v406
              $region37: #{mini_model_forward.12} parent=31 // loop_footer
                %s149 = sadd.s32 1, %s145
              $region38: #{mini_model_forward.12} parent=31 // loop_footer_branch
                %144 = sbr.rel target = $region34
              $region39: #{mini_model_forward.12} parent=31 // loop_exit
                _
            $region32: #{mini_model_forward.12} parent=27 // pred_fallthru
              _
            // Predicated region
            $region40: #{mini_model_forward.12} parent=27 // pred_check
              _
            $region41: #{mini_model_forward.12} parent=27 // pred_check_branch
              %409 = sbr.rel target = $region43
            $region42: #{mini_model_forward.12} parent=27 // pred_region
              _
            $region43: #{mini_model_forward.12} parent=27 // pred_fallthru
              _
          $region28: #{mini_model_forward.12} parent=23 // pred_fallthru
            _
          %410 = vnop
        $region24: #{mini_model_forward.12} parent=19 // pred_fallthru
          _
        // Predicated region
        $region44: #{mini_model_forward.12} parent=19 // pred_check
          %p411 = pneg %p76
        $region45: #{mini_model_forward.12} parent=19 // pred_check_branch
          %413 = sbr.rel (%p411) target = $region47
        $region46: #{mini_model_forward.12} parent=19 // pred_region
          %s414 = smul.u32 4, %s9
          %p415 = scmp.lt.s32.totalorder %s414, 7
          %s416 = scalar_select %p415, %s414, 7
          %s417 = scalar_lea.vmem %s2, %s416
          %s418 = smul.u32 4, %s9
        $region47: #{mini_model_forward.12} parent=19 // pred_fallthru
          _
      $region20: #{mini_model_forward.12} parent=5 // pred_fallthru
        _
      %p419 = scmp.le.s32.totalorder 1, %s9
      %p420 = scmp.lt.s32.totalorder %s9, 3
      %p421 = pnand %p419, %p420
      %p422 = pneg %p421
      // Predicated region
      $region48: #{mini_model_forward.12} parent=5 // pred_check
        _
      $region49: #{mini_model_forward.12} parent=5 // pred_check_branch
        %424 = sbr.rel (%p421) target = $region51
      $region50: #{mini_model_forward.12} parent=5 // pred_region
        %s425 = ssub.s32 %s9, 1
        %s426 = sand.u32 %s43, 1
        %s427 = sand.u32 %s43, 1
        %s428 = smul.addr %s427, 1024
        %s429 = scalar_lea.vmem [#allocation2], %s428
        // Predicated region
        $region52: #{mini_model_forward.12} parent=50 // pred_check
          %p430 = pneg %p56
        $region53: #{mini_model_forward.12} parent=50 // pred_check_branch
          %432 = sbr.rel (%p430) target = $region55
        $region54: #{mini_model_forward.12} parent=50 // pred_region
          _
        $region55: #{mini_model_forward.12} parent=50 // pred_fallthru
          _
        %p433 = pneg %p30
        %p434 = pneg %p27
        %s435 = sand.u32 %s43, 1
        %s436 = sand.u32 %s43, 1
        %s437 = smul.addr %s436, 1024
        %s438 = scalar_lea.vmem [#allocation2], %s437
        %p439 = pneg %p56
        %p440 = pneg %p53
        %s441 = smul.u32 4, %s14
        %p442 = scmp.lt.s32.totalorder %s441, 7
        %s443 = scalar_select %p442, %s441, 7
        %s444 = scalar_lea.vmem %s2, %s443
        %p445 = pneg %p82
        %p446 = pneg %p79
        %p447 = pneg %p108
        %p448 = pneg %p105
        %s449 = smul.u32 4, %s14
        %p450 = scmp.lt.s32.totalorder %s449, 7
        %s451 = scalar_select %p450, %s449, 7
        %s452 = smul.addr %s451, 4
        %s453 = scalar_lea.vmem %s3, %s452
        %s454 = smul.u32 4, %s14
        %s455 = smul.u32 4, %s14
        %p456 = scmp.lt.s32.totalorder %s455, 7
        %s457 = scalar_select %p456, %s455, 7
        %s458 = scalar_lea.vmem %s2, %s457
        %s459 = smul.u32 4, %s14
        %s460 = smul.u32 4, %s14
        %p461 = scmp.lt.s32.totalorder %s460, 7
        %s462 = scalar_select %p461, %s460, 7
        %s463 = smul.addr %s462, 4
        %s464 = scalar_lea.vmem %s3, %s463
        %s465 = smul.u32 4, %s14
        %v466 = vld [vmem:[%s0] sm:$0xff]
        %v467 = vld [vmem:[%s0 + $0x8] sm:$0xff]
        %v468 = vld [vmem:[%s429] sm:$0xff]
        %v469 = vld [vmem:[%s429 + $0x8] sm:$0xff]
        %v470 = vld [vmem:[%s429 + $0x10] sm:$0xff]
        %v471 = vld [vmem:[%s429 + $0x18] sm:$0xff]
        %v472 = vld [vmem:[%s429 + $0x20] sm:$0xff]
        %v473 = vld [vmem:[%s429 + $0x28] sm:$0xff]
        %v474 = vld [vmem:[%s429 + $0x30] sm:$0xff]
        %v475 = vld [vmem:[%s429 + $0x38] sm:$0xff]
        %v476 = vld [vmem:[%s429 + $0x40] sm:$0xff]
        %v477 = vld [vmem:[%s429 + $0x48] sm:$0xff]
        %v478 = vld [vmem:[%s429 + $0x50] sm:$0xff]
        %v479 = vld [vmem:[%s429 + $0x58] sm:$0xff]
        %v480 = vld [vmem:[%s429 + $0x60] sm:$0xff]
        %v481 = vld [vmem:[%s429 + $0x68] sm:$0xff]
        %v482 = vld [vmem:[%s429 + $0x70] sm:$0xff]
        %v483 = vld [vmem:[%s429 + $0x78] sm:$0xff]
        %v484 = vld [vmem:[%s429 + $0x80] sm:$0xff]
        %v485 = vld [vmem:[%s429 + $0x88] sm:$0xff]
        %v486 = vld [vmem:[%s429 + $0x90] sm:$0xff]
        %v487 = vld [vmem:[%s429 + $0x98] sm:$0xff]
        %v488 = vld [vmem:[%s429 + $0xa0] sm:$0xff]
        %v489 = vld [vmem:[%s429 + $0xa8] sm:$0xff]
        %v490 = vld [vmem:[%s429 + $0xb0] sm:$0xff]
        %v491 = vld [vmem:[%s429 + $0xb8] sm:$0xff]
        %v492 = vld [vmem:[%s429 + $0xc0] sm:$0xff]
        %v493 = vld [vmem:[%s429 + $0xc8] sm:$0xff]
        %v494 = vld [vmem:[%s429 + $0xd0] sm:$0xff]
        %v495 = vld [vmem:[%s429 + $0xd8] sm:$0xff]
        %v496 = vld [vmem:[%s429 + $0xe0] sm:$0xff]
        %v497 = vld [vmem:[%s429 + $0xe8] sm:$0xff]
        %v498 = vld [vmem:[%s429 + $0xf0] sm:$0xff]
        %v499 = vld [vmem:[%s429 + $0xf8] sm:$0xff]
        %v500 = vld [vmem:[%s429 + $0x100] sm:$0xff]
        %v501 = vld [vmem:[%s429 + $0x108] sm:$0xff]
        %v502 = vld [vmem:[%s429 + $0x110] sm:$0xff]
        %v503 = vld [vmem:[%s429 + $0x118] sm:$0xff]
        %v504 = vld [vmem:[%s429 + $0x120] sm:$0xff]
        %v505 = vld [vmem:[%s429 + $0x128] sm:$0xff]
        %v506 = vld [vmem:[%s429 + $0x130] sm:$0xff]
        %v507 = vld [vmem:[%s429 + $0x138] sm:$0xff]
        %v508 = vld [vmem:[%s429 + $0x140] sm:$0xff]
        %v509 = vld [vmem:[%s429 + $0x148] sm:$0xff]
        %v510 = vld [vmem:[%s429 + $0x150] sm:$0xff]
        %v511 = vld [vmem:[%s429 + $0x158] sm:$0xff]
        %v512 = vld [vmem:[%s429 + $0x160] sm:$0xff]
        %v513 = vld [vmem:[%s429 + $0x168] sm:$0xff]
        %v514 = vld [vmem:[%s429 + $0x170] sm:$0xff]
        %v515 = vld [vmem:[%s429 + $0x178] sm:$0xff]
        %v516 = vld [vmem:[%s429 + $0x180] sm:$0xff]
        %v517 = vld [vmem:[%s429 + $0x188] sm:$0xff]
        %v518 = vld [vmem:[%s429 + $0x190] sm:$0xff]
        %v519 = vld [vmem:[%s429 + $0x198] sm:$0xff]
        %v520 = vld [vmem:[%s429 + $0x1a0] sm:$0xff]
        %v521 = vld [vmem:[%s429 + $0x1a8] sm:$0xff]
        %v522 = vld [vmem:[%s429 + $0x1b0] sm:$0xff]
        %v523 = vld [vmem:[%s429 + $0x1b8] sm:$0xff]
        %v524 = vld [vmem:[%s429 + $0x1c0] sm:$0xff]
        %v525 = vld [vmem:[%s429 + $0x1c8] sm:$0xff]
        %v526 = vld [vmem:[%s429 + $0x1d0] sm:$0xff]
        %v527 = vld [vmem:[%s429 + $0x1d8] sm:$0xff]
        %v528 = vld [vmem:[%s429 + $0x1e0] sm:$0xff]
        %v529 = vld [vmem:[%s429 + $0x1e8] sm:$0xff]
        %v530 = vld [vmem:[%s429 + $0x1f0] sm:$0xff]
        %v531 = vld [vmem:[%s429 + $0x1f8] sm:$0xff]
        %v532 = vld [vmem:[%s429 + $0x200] sm:$0xff]
        %v533 = vld [vmem:[%s429 + $0x208] sm:$0xff]
        %v534 = vld [vmem:[%s429 + $0x210] sm:$0xff]
        %v535 = vld [vmem:[%s429 + $0x218] sm:$0xff]
        %v536 = vld [vmem:[%s429 + $0x220] sm:$0xff]
        %v537 = vld [vmem:[%s429 + $0x228] sm:$0xff]
        %v538 = vld [vmem:[%s429 + $0x230] sm:$0xff]
        %v539 = vld [vmem:[%s429 + $0x238] sm:$0xff]
        %v540 = vld [vmem:[%s429 + $0x240] sm:$0xff]
        %v541 = vld [vmem:[%s429 + $0x248] sm:$0xff]
        %v542 = vld [vmem:[%s429 + $0x250] sm:$0xff]
        %v543 = vld [vmem:[%s429 + $0x258] sm:$0xff]
        %v544 = vld [vmem:[%s429 + $0x260] sm:$0xff]
        %v545 = vld [vmem:[%s429 + $0x268] sm:$0xff]
        %v546 = vld [vmem:[%s429 + $0x270] sm:$0xff]
        %v547 = vld [vmem:[%s429 + $0x278] sm:$0xff]
        %v548 = vld [vmem:[%s429 + $0x280] sm:$0xff]
        %v549 = vld [vmem:[%s429 + $0x288] sm:$0xff]
        %v550 = vld [vmem:[%s429 + $0x290] sm:$0xff]
        %v551 = vld [vmem:[%s429 + $0x298] sm:$0xff]
        %v552 = vld [vmem:[%s429 + $0x2a0] sm:$0xff]
        %v553 = vld [vmem:[%s429 + $0x2a8] sm:$0xff]
        %v554 = vld [vmem:[%s429 + $0x2b0] sm:$0xff]
        %v555 = vld [vmem:[%s429 + $0x2b8] sm:$0xff]
        %v556 = vld [vmem:[%s429 + $0x2c0] sm:$0xff]
        %v557 = vld [vmem:[%s429 + $0x2c8] sm:$0xff]
        %v558 = vld [vmem:[%s429 + $0x2d0] sm:$0xff]
        %v559 = vld [vmem:[%s429 + $0x2d8] sm:$0xff]
        %v560 = vld [vmem:[%s429 + $0x2e0] sm:$0xff]
        %v561 = vld [vmem:[%s429 + $0x2e8] sm:$0xff]
        %v562 = vld [vmem:[%s429 + $0x2f0] sm:$0xff]
        %v563 = vld [vmem:[%s429 + $0x2f8] sm:$0xff]
        %v564 = vld [vmem:[%s429 + $0x300] sm:$0xff]
        %v565 = vld [vmem:[%s429 + $0x308] sm:$0xff]
        %v566 = vld [vmem:[%s429 + $0x310] sm:$0xff]
        %v567 = vld [vmem:[%s429 + $0x318] sm:$0xff]
        %v568 = vld [vmem:[%s429 + $0x320] sm:$0xff]
        %v569 = vld [vmem:[%s429 + $0x328] sm:$0xff]
        %v570 = vld [vmem:[%s429 + $0x330] sm:$0xff]
        %v571 = vld [vmem:[%s429 + $0x338] sm:$0xff]
        %v572 = vld [vmem:[%s429 + $0x340] sm:$0xff]
        %v573 = vld [vmem:[%s429 + $0x348] sm:$0xff]
        %v574 = vld [vmem:[%s429 + $0x350] sm:$0xff]
        %v575 = vld [vmem:[%s429 + $0x358] sm:$0xff]
        %v576 = vld [vmem:[%s429 + $0x360] sm:$0xff]
        %v577 = vld [vmem:[%s429 + $0x368] sm:$0xff]
        %v578 = vld [vmem:[%s429 + $0x370] sm:$0xff]
        %v579 = vld [vmem:[%s429 + $0x378] sm:$0xff]
        %v580 = vld [vmem:[%s429 + $0x380] sm:$0xff]
        %v581 = vld [vmem:[%s429 + $0x388] sm:$0xff]
        %v582 = vld [vmem:[%s429 + $0x390] sm:$0xff]
        %v583 = vld [vmem:[%s429 + $0x398] sm:$0xff]
        %v584 = vld [vmem:[%s429 + $0x3a0] sm:$0xff]
        %v585 = vld [vmem:[%s429 + $0x3a8] sm:$0xff]
        %v586 = vld [vmem:[%s429 + $0x3b0] sm:$0xff]
        %v587 = vld [vmem:[%s429 + $0x3b8] sm:$0xff]
        %v588 = vld [vmem:[%s429 + $0x3c0] sm:$0xff]
        %v589 = vld [vmem:[%s429 + $0x3c8] sm:$0xff]
        %v590 = vld [vmem:[%s429 + $0x3d0] sm:$0xff]
        %v591 = vld [vmem:[%s429 + $0x3d8] sm:$0xff]
        %v592 = vld [vmem:[%s429 + $0x3e0] sm:$0xff]
        %v593 = vld [vmem:[%s429 + $0x3e8] sm:$0xff]
        %v594 = vld [vmem:[%s429 + $0x3f0] sm:$0xff]
        %v595 = vld [vmem:[%s429 + $0x3f8] sm:$0xff]
        %v596 = vld [vmem:[%s458] sm:$0xf]
        %v598 = vlaneseq
        %v599 = vshrl.u32 %v598, 7
        %v600 = vsub.s32 0, %v599
        %v601 = vrot.slane %v596, %v600
        %v602 = vlaneseq
        %v603 = vshrl.u32 %v602, 7
        %v604 = vsub.s32 1, %v603
        %v605 = vrot.slane %v596, %v604
        %v606 = vlaneseq
        %v607 = vshrl.u32 %v606, 7
        %v608 = vsub.s32 2, %v607
        %v609 = vrot.slane %v596, %v608
        %v610 = vlaneseq
        %v611 = vshrl.u32 %v610, 7
        %v612 = vsub.s32 3, %v611
        %v613 = vrot.slane %v596, %v612
        %v620 = vunpack.c.l.b16 %v466
        %v621 = vunpack.c.h.b16 %v466
        %v622 = vunpack.c.l.b16 %v467
        %v623 = vunpack.c.h.b16 %v467
        %v624 = vpack.c.b16 %v620, %v620
        %v625 = vpack.c.b16 %v621, %v621
        %v626 = vpack.c.b16 %v622, %v622
        %v627 = vpack.c.b16 %v623, %v623
        %v760 = vunpack.c.l.b16 %v468
        %v761 = vunpack.c.h.b16 %v468
        %v762 = vunpack.c.l.b16 %v469
        %v763 = vunpack.c.h.b16 %v469
        %v764 = vunpack.c.l.b16 %v470
        %v765 = vunpack.c.h.b16 %v470
        %v766 = vunpack.c.l.b16 %v471
        %v767 = vunpack.c.h.b16 %v471
        %v768 = vunpack.c.l.b16 %v472
        %v769 = vunpack.c.h.b16 %v472
        %v770 = vunpack.c.l.b16 %v473
        %v771 = vunpack.c.h.b16 %v473
        %v772 = vunpack.c.l.b16 %v474
        %v773 = vunpack.c.h.b16 %v474
        %v774 = vunpack.c.l.b16 %v475
        %v775 = vunpack.c.h.b16 %v475
        %v776 = vunpack.c.l.b16 %v476
        %v777 = vunpack.c.h.b16 %v476
        %v778 = vunpack.c.l.b16 %v477
        %v779 = vunpack.c.h.b16 %v477
        %v780 = vunpack.c.l.b16 %v478
        %v781 = vunpack.c.h.b16 %v478
        %v782 = vunpack.c.l.b16 %v479
        %v783 = vunpack.c.h.b16 %v479
        %v784 = vunpack.c.l.b16 %v480
        %v785 = vunpack.c.h.b16 %v480
        %v786 = vunpack.c.l.b16 %v481
        %v787 = vunpack.c.h.b16 %v481
        %v788 = vunpack.c.l.b16 %v482
        %v789 = vunpack.c.h.b16 %v482
        %v790 = vunpack.c.l.b16 %v483
        %v791 = vunpack.c.h.b16 %v483
        %v792 = vunpack.c.l.b16 %v484
        %v793 = vunpack.c.h.b16 %v484
        %v794 = vunpack.c.l.b16 %v485
        %v795 = vunpack.c.h.b16 %v485
        %v796 = vunpack.c.l.b16 %v486
        %v797 = vunpack.c.h.b16 %v486
        %v798 = vunpack.c.l.b16 %v487
        %v799 = vunpack.c.h.b16 %v487
        %v800 = vunpack.c.l.b16 %v488
        %v801 = vunpack.c.h.b16 %v488
        %v802 = vunpack.c.l.b16 %v489
        %v803 = vunpack.c.h.b16 %v489
        %v804 = vunpack.c.l.b16 %v490
        %v805 = vunpack.c.h.b16 %v490
        %v806 = vunpack.c.l.b16 %v491
        %v807 = vunpack.c.h.b16 %v491
        %v808 = vunpack.c.l.b16 %v492
        %v809 = vunpack.c.h.b16 %v492
        %v810 = vunpack.c.l.b16 %v493
        %v811 = vunpack.c.h.b16 %v493
        %v812 = vunpack.c.l.b16 %v494
        %v813 = vunpack.c.h.b16 %v494
        %v814 = vunpack.c.l.b16 %v495
        %v815 = vunpack.c.h.b16 %v495
        %v816 = vunpack.c.l.b16 %v496
        %v817 = vunpack.c.h.b16 %v496
        %v818 = vunpack.c.l.b16 %v497
        %v819 = vunpack.c.h.b16 %v497
        %v820 = vunpack.c.l.b16 %v498
        %v821 = vunpack.c.h.b16 %v498
        %v822 = vunpack.c.l.b16 %v499
        %v823 = vunpack.c.h.b16 %v499
        %v824 = vunpack.c.l.b16 %v500
        %v825 = vunpack.c.h.b16 %v500
        %v826 = vunpack.c.l.b16 %v501
        %v827 = vunpack.c.h.b16 %v501
        %v828 = vunpack.c.l.b16 %v502
        %v829 = vunpack.c.h.b16 %v502
        %v830 = vunpack.c.l.b16 %v503
        %v831 = vunpack.c.h.b16 %v503
        %v832 = vunpack.c.l.b16 %v504
        %v833 = vunpack.c.h.b16 %v504
        %v834 = vunpack.c.l.b16 %v505
        %v835 = vunpack.c.h.b16 %v505
        %v836 = vunpack.c.l.b16 %v506
        %v837 = vunpack.c.h.b16 %v506
        %v838 = vunpack.c.l.b16 %v507
        %v839 = vunpack.c.h.b16 %v507
        %v840 = vunpack.c.l.b16 %v508
        %v841 = vunpack.c.h.b16 %v508
        %v842 = vunpack.c.l.b16 %v509
        %v843 = vunpack.c.h.b16 %v509
        %v844 = vunpack.c.l.b16 %v510
        %v845 = vunpack.c.h.b16 %v510
        %v846 = vunpack.c.l.b16 %v511
        %v847 = vunpack.c.h.b16 %v511
        %v848 = vunpack.c.l.b16 %v512
        %v849 = vunpack.c.h.b16 %v512
        %v850 = vunpack.c.l.b16 %v513
        %v851 = vunpack.c.h.b16 %v513
        %v852 = vunpack.c.l.b16 %v514
        %v853 = vunpack.c.h.b16 %v514
        %v854 = vunpack.c.l.b16 %v515
        %v855 = vunpack.c.h.b16 %v515
        %v856 = vunpack.c.l.b16 %v516
        %v857 = vunpack.c.h.b16 %v516
        %v858 = vunpack.c.l.b16 %v517
        %v859 = vunpack.c.h.b16 %v517
        %v860 = vunpack.c.l.b16 %v518
        %v861 = vunpack.c.h.b16 %v518
        %v862 = vunpack.c.l.b16 %v519
        %v863 = vunpack.c.h.b16 %v519
        %v864 = vunpack.c.l.b16 %v520
        %v865 = vunpack.c.h.b16 %v520
        %v866 = vunpack.c.l.b16 %v521
        %v867 = vunpack.c.h.b16 %v521
        %v868 = vunpack.c.l.b16 %v522
        %v869 = vunpack.c.h.b16 %v522
        %v870 = vunpack.c.l.b16 %v523
        %v871 = vunpack.c.h.b16 %v523
        %v872 = vunpack.c.l.b16 %v524
        %v873 = vunpack.c.h.b16 %v524
        %v874 = vunpack.c.l.b16 %v525
        %v875 = vunpack.c.h.b16 %v525
        %v876 = vunpack.c.l.b16 %v526
        %v877 = vunpack.c.h.b16 %v526
        %v878 = vunpack.c.l.b16 %v527
        %v879 = vunpack.c.h.b16 %v527
        %v880 = vunpack.c.l.b16 %v528
        %v881 = vunpack.c.h.b16 %v528
        %v882 = vunpack.c.l.b16 %v529
        %v883 = vunpack.c.h.b16 %v529
        %v884 = vunpack.c.l.b16 %v530
        %v885 = vunpack.c.h.b16 %v530
        %v886 = vunpack.c.l.b16 %v531
        %v887 = vunpack.c.h.b16 %v531
        %v888 = vunpack.c.l.b16 %v532
        %v889 = vunpack.c.h.b16 %v532
        %v890 = vunpack.c.l.b16 %v533
        %v891 = vunpack.c.h.b16 %v533
        %v892 = vunpack.c.l.b16 %v534
        %v893 = vunpack.c.h.b16 %v534
        %v894 = vunpack.c.l.b16 %v535
        %v895 = vunpack.c.h.b16 %v535
        %v896 = vunpack.c.l.b16 %v536
        %v897 = vunpack.c.h.b16 %v536
        %v898 = vunpack.c.l.b16 %v537
        %v899 = vunpack.c.h.b16 %v537
        %v900 = vunpack.c.l.b16 %v538
        %v901 = vunpack.c.h.b16 %v538
        %v902 = vunpack.c.l.b16 %v539
        %v903 = vunpack.c.h.b16 %v539
        %v904 = vunpack.c.l.b16 %v540
        %v905 = vunpack.c.h.b16 %v540
        %v906 = vunpack.c.l.b16 %v541
        %v907 = vunpack.c.h.b16 %v541
        %v908 = vunpack.c.l.b16 %v542
        %v909 = vunpack.c.h.b16 %v542
        %v910 = vunpack.c.l.b16 %v543
        %v911 = vunpack.c.h.b16 %v543
        %v912 = vunpack.c.l.b16 %v544
        %v913 = vunpack.c.h.b16 %v544
        %v914 = vunpack.c.l.b16 %v545
        %v915 = vunpack.c.h.b16 %v545
        %v916 = vunpack.c.l.b16 %v546
        %v917 = vunpack.c.h.b16 %v546
        %v918 = vunpack.c.l.b16 %v547
        %v919 = vunpack.c.h.b16 %v547
        %v920 = vunpack.c.l.b16 %v548
        %v921 = vunpack.c.h.b16 %v548
        %v922 = vunpack.c.l.b16 %v549
        %v923 = vunpack.c.h.b16 %v549
        %v924 = vunpack.c.l.b16 %v550
        %v925 = vunpack.c.h.b16 %v550
        %v926 = vunpack.c.l.b16 %v551
        %v927 = vunpack.c.h.b16 %v551
        %v928 = vunpack.c.l.b16 %v552
        %v929 = vunpack.c.h.b16 %v552
        %v930 = vunpack.c.l.b16 %v553
        %v931 = vunpack.c.h.b16 %v553
        %v932 = vunpack.c.l.b16 %v554
        %v933 = vunpack.c.h.b16 %v554
        %v934 = vunpack.c.l.b16 %v555
        %v935 = vunpack.c.h.b16 %v555
        %v936 = vunpack.c.l.b16 %v556
        %v937 = vunpack.c.h.b16 %v556
        %v938 = vunpack.c.l.b16 %v557
        %v939 = vunpack.c.h.b16 %v557
        %v940 = vunpack.c.l.b16 %v558
        %v941 = vunpack.c.h.b16 %v558
        %v942 = vunpack.c.l.b16 %v559
        %v943 = vunpack.c.h.b16 %v559
        %v944 = vunpack.c.l.b16 %v560
        %v945 = vunpack.c.h.b16 %v560
        %v946 = vunpack.c.l.b16 %v561
        %v947 = vunpack.c.h.b16 %v561
        %v948 = vunpack.c.l.b16 %v562
        %v949 = vunpack.c.h.b16 %v562
        %v950 = vunpack.c.l.b16 %v563
        %v951 = vunpack.c.h.b16 %v563
        %v952 = vunpack.c.l.b16 %v564
        %v953 = vunpack.c.h.b16 %v564
        %v954 = vunpack.c.l.b16 %v565
        %v955 = vunpack.c.h.b16 %v565
        %v956 = vunpack.c.l.b16 %v566
        %v957 = vunpack.c.h.b16 %v566
        %v958 = vunpack.c.l.b16 %v567
        %v959 = vunpack.c.h.b16 %v567
        %v960 = vunpack.c.l.b16 %v568
        %v961 = vunpack.c.h.b16 %v568
        %v962 = vunpack.c.l.b16 %v569
        %v963 = vunpack.c.h.b16 %v569
        %v964 = vunpack.c.l.b16 %v570
        %v965 = vunpack.c.h.b16 %v570
        %v966 = vunpack.c.l.b16 %v571
        %v967 = vunpack.c.h.b16 %v571
        %v968 = vunpack.c.l.b16 %v572
        %v969 = vunpack.c.h.b16 %v572
        %v970 = vunpack.c.l.b16 %v573
        %v971 = vunpack.c.h.b16 %v573
        %v972 = vunpack.c.l.b16 %v574
        %v973 = vunpack.c.h.b16 %v574
        %v974 = vunpack.c.l.b16 %v575
        %v975 = vunpack.c.h.b16 %v575
        %v976 = vunpack.c.l.b16 %v576
        %v977 = vunpack.c.h.b16 %v576
        %v978 = vunpack.c.l.b16 %v577
        %v979 = vunpack.c.h.b16 %v577
        %v980 = vunpack.c.l.b16 %v578
        %v981 = vunpack.c.h.b16 %v578
        %v982 = vunpack.c.l.b16 %v579
        %v983 = vunpack.c.h.b16 %v579
        %v984 = vunpack.c.l.b16 %v580
        %v985 = vunpack.c.h.b16 %v580
        %v986 = vunpack.c.l.b16 %v581
        %v987 = vunpack.c.h.b16 %v581
        %v988 = vunpack.c.l.b16 %v582
        %v989 = vunpack.c.h.b16 %v582
        %v990 = vunpack.c.l.b16 %v583
        %v991 = vunpack.c.h.b16 %v583
        %v992 = vunpack.c.l.b16 %v584
        %v993 = vunpack.c.h.b16 %v584
        %v994 = vunpack.c.l.b16 %v585
        %v995 = vunpack.c.h.b16 %v585
        %v996 = vunpack.c.l.b16 %v586
        %v997 = vunpack.c.h.b16 %v586
        %v998 = vunpack.c.l.b16 %v587
        %v999 = vunpack.c.h.b16 %v587
        %v1000 = vunpack.c.l.b16 %v588
        %v1001 = vunpack.c.h.b16 %v588
        %v1002 = vunpack.c.l.b16 %v589
        %v1003 = vunpack.c.h.b16 %v589
        %v1004 = vunpack.c.l.b16 %v590
        %v1005 = vunpack.c.h.b16 %v590
        %v1006 = vunpack.c.l.b16 %v591
        %v1007 = vunpack.c.h.b16 %v591
        %v1008 = vunpack.c.l.b16 %v592
        %v1009 = vunpack.c.h.b16 %v592
        %v1010 = vunpack.c.l.b16 %v593
        %v1011 = vunpack.c.h.b16 %v593
        %v1012 = vunpack.c.l.b16 %v594
        %v1013 = vunpack.c.h.b16 %v594
        %v1014 = vunpack.c.l.b16 %v595
        %v1015 = vunpack.c.h.b16 %v595
        %v1016 = vpack.c.b16 %v764, %v760
        %v1017 = vpack.c.b16 %v765, %v761
        %v1018 = vpack.c.b16 %v766, %v762
        %v1019 = vpack.c.b16 %v767, %v763
        %v1020 = vpack.c.b16 %v772, %v768
        %v1021 = vpack.c.b16 %v773, %v769
        %v1022 = vpack.c.b16 %v774, %v770
        %v1023 = vpack.c.b16 %v775, %v771
        %v1024 = vpack.c.b16 %v780, %v776
        %v1025 = vpack.c.b16 %v781, %v777
        %v1026 = vpack.c.b16 %v782, %v778
        %v1027 = vpack.c.b16 %v783, %v779
        %v1028 = vpack.c.b16 %v788, %v784
        %v1029 = vpack.c.b16 %v789, %v785
        %v1030 = vpack.c.b16 %v790, %v786
        %v1031 = vpack.c.b16 %v791, %v787
        %v1032 = vpack.c.b16 %v796, %v792
        %v1033 = vpack.c.b16 %v797, %v793
        %v1034 = vpack.c.b16 %v798, %v794
        %v1035 = vpack.c.b16 %v799, %v795
        %v1036 = vpack.c.b16 %v804, %v800
        %v1037 = vpack.c.b16 %v805, %v801
        %v1038 = vpack.c.b16 %v806, %v802
        %v1039 = vpack.c.b16 %v807, %v803
        %v1040 = vpack.c.b16 %v812, %v808
        %v1041 = vpack.c.b16 %v813, %v809
        %v1042 = vpack.c.b16 %v814, %v810
        %v1043 = vpack.c.b16 %v815, %v811
        %v1044 = vpack.c.b16 %v820, %v816
        %v1045 = vpack.c.b16 %v821, %v817
        %v1046 = vpack.c.b16 %v822, %v818
        %v1047 = vpack.c.b16 %v823, %v819
        %v1048 = vpack.c.b16 %v828, %v824
        %v1049 = vpack.c.b16 %v829, %v825
        %v1050 = vpack.c.b16 %v830, %v826
        %v1051 = vpack.c.b16 %v831, %v827
        %v1052 = vpack.c.b16 %v836, %v832
        %v1053 = vpack.c.b16 %v837, %v833
        %v1054 = vpack.c.b16 %v838, %v834
        %v1055 = vpack.c.b16 %v839, %v835
        %v1056 = vpack.c.b16 %v844, %v840
        %v1057 = vpack.c.b16 %v845, %v841
        %v1058 = vpack.c.b16 %v846, %v842
        %v1059 = vpack.c.b16 %v847, %v843
        %v1060 = vpack.c.b16 %v852, %v848
        %v1061 = vpack.c.b16 %v853, %v849
        %v1062 = vpack.c.b16 %v854, %v850
        %v1063 = vpack.c.b16 %v855, %v851
        %v1064 = vpack.c.b16 %v860, %v856
        %v1065 = vpack.c.b16 %v861, %v857
        %v1066 = vpack.c.b16 %v862, %v858
        %v1067 = vpack.c.b16 %v863, %v859
        %v1068 = vpack.c.b16 %v868, %v864
        %v1069 = vpack.c.b16 %v869, %v865
        %v1070 = vpack.c.b16 %v870, %v866
        %v1071 = vpack.c.b16 %v871, %v867
        %v1072 = vpack.c.b16 %v876, %v872
        %v1073 = vpack.c.b16 %v877, %v873
        %v1074 = vpack.c.b16 %v878, %v874
        %v1075 = vpack.c.b16 %v879, %v875
        %v1076 = vpack.c.b16 %v884, %v880
        %v1077 = vpack.c.b16 %v885, %v881
        %v1078 = vpack.c.b16 %v886, %v882
        %v1079 = vpack.c.b16 %v887, %v883
        %v1080 = vpack.c.b16 %v892, %v888
        %v1081 = vpack.c.b16 %v893, %v889
        %v1082 = vpack.c.b16 %v894, %v890
        %v1083 = vpack.c.b16 %v895, %v891
        %v1084 = vpack.c.b16 %v900, %v896
        %v1085 = vpack.c.b16 %v901, %v897
        %v1086 = vpack.c.b16 %v902, %v898
        %v1087 = vpack.c.b16 %v903, %v899
        %v1088 = vpack.c.b16 %v908, %v904
        %v1089 = vpack.c.b16 %v909, %v905
        %v1090 = vpack.c.b16 %v910, %v906
        %v1091 = vpack.c.b16 %v911, %v907
        %v1092 = vpack.c.b16 %v916, %v912
        %v1093 = vpack.c.b16 %v917, %v913
        %v1094 = vpack.c.b16 %v918, %v914
        %v1095 = vpack.c.b16 %v919, %v915
        %v1096 = vpack.c.b16 %v924, %v920
        %v1097 = vpack.c.b16 %v925, %v921
        %v1098 = vpack.c.b16 %v926, %v922
        %v1099 = vpack.c.b16 %v927, %v923
        %v1100 = vpack.c.b16 %v932, %v928
        %v1101 = vpack.c.b16 %v933, %v929
        %v1102 = vpack.c.b16 %v934, %v930
        %v1103 = vpack.c.b16 %v935, %v931
        %v1104 = vpack.c.b16 %v940, %v936
        %v1105 = vpack.c.b16 %v941, %v937
        %v1106 = vpack.c.b16 %v942, %v938
        %v1107 = vpack.c.b16 %v943, %v939
        %v1108 = vpack.c.b16 %v948, %v944
        %v1109 = vpack.c.b16 %v949, %v945
        %v1110 = vpack.c.b16 %v950, %v946
        %v1111 = vpack.c.b16 %v951, %v947
        %v1112 = vpack.c.b16 %v956, %v952
        %v1113 = vpack.c.b16 %v957, %v953
        %v1114 = vpack.c.b16 %v958, %v954
        %v1115 = vpack.c.b16 %v959, %v955
        %v1116 = vpack.c.b16 %v964, %v960
        %v1117 = vpack.c.b16 %v965, %v961
        %v1118 = vpack.c.b16 %v966, %v962
        %v1119 = vpack.c.b16 %v967, %v963
        %v1120 = vpack.c.b16 %v972, %v968
        %v1121 = vpack.c.b16 %v973, %v969
        %v1122 = vpack.c.b16 %v974, %v970
        %v1123 = vpack.c.b16 %v975, %v971
        %v1124 = vpack.c.b16 %v980, %v976
        %v1125 = vpack.c.b16 %v981, %v977
        %v1126 = vpack.c.b16 %v982, %v978
        %v1127 = vpack.c.b16 %v983, %v979
        %v1128 = vpack.c.b16 %v988, %v984
        %v1129 = vpack.c.b16 %v989, %v985
        %v1130 = vpack.c.b16 %v990, %v986
        %v1131 = vpack.c.b16 %v991, %v987
        %v1132 = vpack.c.b16 %v996, %v992
        %v1133 = vpack.c.b16 %v997, %v993
        %v1134 = vpack.c.b16 %v998, %v994
        %v1135 = vpack.c.b16 %v999, %v995
        %v1136 = vpack.c.b16 %v1004, %v1000
        %v1137 = vpack.c.b16 %v1005, %v1001
        %v1138 = vpack.c.b16 %v1006, %v1002
        %v1139 = vpack.c.b16 %v1007, %v1003
        %v1140 = vpack.c.b16 %v1012, %v1008
        %v1141 = vpack.c.b16 %v1013, %v1009
        %v1142 = vpack.c.b16 %v1014, %v1010
        %v1143 = vpack.c.b16 %v1015, %v1011
        %1272 = vmatprep.subr.bf16.mxu0 %v1045
        %1273 = vmatpush1.bf16.msra.mxu0 %v1044
        %1274 = vmatprep.subr.bf16.mxu0 %v1041
        %1275 = vmatpush1.bf16.msra.mxu0 %v1040
        %1276 = vmatprep.subr.bf16.mxu0 %v1037
        %1277 = vmatpush1.bf16.msra.mxu0 %v1036
        %1278 = vmatprep.subr.bf16.mxu0 %v1033
        %1279 = vmatpush1.bf16.msra.mxu0 %v1032
        %1280 = vmatprep.subr.bf16.mxu0 %v1029
        %1281 = vmatpush1.bf16.msra.mxu0 %v1028
        %1282 = vmatprep.subr.bf16.mxu0 %v1025
        %1283 = vmatpush1.bf16.msra.mxu0 %v1024
        %1284 = vmatprep.subr.bf16.mxu0 %v1021
        %1285 = vmatpush1.bf16.msra.mxu0 %v1020
        %1286 = vmatprep.subr.bf16.mxu0 %v1017
        %1287 = vmatpush1.bf16.msra.mxu0 %v1016
        %1288 = vmatprep.subr.bf16.mxu0 %v1077
        %1289 = vmatpush2.bf16.msra.mxu0 %v1076
        %1290 = vmatprep.subr.bf16.mxu0 %v1073
        %1291 = vmatpush2.bf16.msra.mxu0 %v1072
        %1292 = vmatprep.subr.bf16.mxu0 %v1069
        %1293 = vmatpush2.bf16.msra.mxu0 %v1068
        %1294 = vmatprep.subr.bf16.mxu0 %v1065
        %1295 = vmatpush2.bf16.msra.mxu0 %v1064
        %1296 = vmatprep.subr.bf16.mxu0 %v1061
        %1297 = vmatpush2.bf16.msra.mxu0 %v1060
        %1298 = vmatprep.subr.bf16.mxu0 %v1057
        %1299 = vmatpush2.bf16.msra.mxu0 %v1056
        %1300 = vmatprep.subr.bf16.mxu0 %v1053
        %1301 = vmatpush2.bf16.msra.mxu0 %v1052
        %1302 = vmatprep.subr.bf16.mxu0 %v1049
        %1303 = vmatpush2.bf16.msra.mxu0 %v1048
        %1304 = vmatprep.mubr.bf16.mxu0 %v625
        %1305 = vmatmul.mubr.bf16.gmra.mxu0 %v624
        %v1306 = vpop.f32.mrf.mxu0
        %v1307 = vadd.f32 %v601, %v1306
        %v1308 = vpop.f32.mrf.mxu0
        %v1309 = vadd.f32 %v605, %v1308
        %v1310 = vpop.f32.mrf.mxu0
        %v1311 = vpop.f32.mrf.mxu0
        %1312 = vdwg.mxu0
        %1313 = vmatprep.subr.bf16.mxu0 %v1109
        %1314 = vmatpush1.bf16.msra.mxu0 %v1108
        %1315 = vmatprep.subr.bf16.mxu0 %v1105
        %1316 = vmatpush1.bf16.msra.mxu0 %v1104
        %1317 = vmatprep.subr.bf16.mxu0 %v1101
        %1318 = vmatpush1.bf16.msra.mxu0 %v1100
        %1319 = vmatprep.subr.bf16.mxu0 %v1097
        %1320 = vmatpush1.bf16.msra.mxu0 %v1096
        %1321 = vmatprep.subr.bf16.mxu0 %v1093
        %1322 = vmatpush1.bf16.msra.mxu0 %v1092
        %1323 = vmatprep.subr.bf16.mxu0 %v1089
        %1324 = vmatpush1.bf16.msra.mxu0 %v1088
        %1325 = vmatprep.subr.bf16.mxu0 %v1085
        %1326 = vmatpush1.bf16.msra.mxu0 %v1084
        %1327 = vmatprep.subr.bf16.mxu0 %v1081
        %1328 = vmatpush1.bf16.msra.mxu0 %v1080
        %1329 = vmatprep.subr.bf16.mxu0 %v1141
        %1330 = vmatpush2.bf16.msra.mxu0 %v1140
        %1331 = vmatprep.subr.bf16.mxu0 %v1137
        %1332 = vmatpush2.bf16.msra.mxu0 %v1136
        %1333 = vmatprep.subr.bf16.mxu0 %v1133
        %1334 = vmatpush2.bf16.msra.mxu0 %v1132
        %1335 = vmatprep.subr.bf16.mxu0 %v1129
        %1336 = vmatpush2.bf16.msra.mxu0 %v1128
        %1337 = vmatprep.subr.bf16.mxu0 %v1125
        %1338 = vmatpush2.bf16.msra.mxu0 %v1124
        %1339 = vmatprep.subr.bf16.mxu0 %v1121
        %1340 = vmatpush2.bf16.msra.mxu0 %v1120
        %1341 = vmatprep.subr.bf16.mxu0 %v1117
        %1342 = vmatpush2.bf16.msra.mxu0 %v1116
        %1343 = vmatprep.subr.bf16.mxu0 %v1113
        %1344 = vmatpush2.bf16.msra.mxu0 %v1112
        %1345 = vmatprep.mubr.bf16.mxu0 %v627
        %1346 = vmatmul.mubr.bf16.gmra.mxu0 %v626
        %v1347 = vpop.f32.mrf.mxu0
        %v1348 = vadd.f32 %v1307, %v1347
        %v1349 = vpop.f32.mrf.mxu0
        %v1350 = vadd.f32 %v1309, %v1349
        %v1351 = vpop.f32.mrf.mxu0
        %v1352 = vpop.f32.mrf.mxu0
        %1353 = vdwg.mxu0
        %1354 = vmatprep.subr.bf16.mxu0 %v1047
        %1355 = vmatpush1.bf16.msra.mxu0 %v1046
        %1356 = vmatprep.subr.bf16.mxu0 %v1043
        %1357 = vmatpush1.bf16.msra.mxu0 %v1042
        %1358 = vmatprep.subr.bf16.mxu0 %v1039
        %1359 = vmatpush1.bf16.msra.mxu0 %v1038
        %1360 = vmatprep.subr.bf16.mxu0 %v1035
        %1361 = vmatpush1.bf16.msra.mxu0 %v1034
        %1362 = vmatprep.subr.bf16.mxu0 %v1031
        %1363 = vmatpush1.bf16.msra.mxu0 %v1030
        %1364 = vmatprep.subr.bf16.mxu0 %v1027
        %1365 = vmatpush1.bf16.msra.mxu0 %v1026
        %1366 = vmatprep.subr.bf16.mxu0 %v1023
        %1367 = vmatpush1.bf16.msra.mxu0 %v1022
        %1368 = vmatprep.subr.bf16.mxu0 %v1019
        %1369 = vmatpush1.bf16.msra.mxu0 %v1018
        %1370 = vmatprep.subr.bf16.mxu0 %v1079
        %1371 = vmatpush2.bf16.msra.mxu0 %v1078
        %1372 = vmatprep.subr.bf16.mxu0 %v1075
        %1373 = vmatpush2.bf16.msra.mxu0 %v1074
        %1374 = vmatprep.subr.bf16.mxu0 %v1071
        %1375 = vmatpush2.bf16.msra.mxu0 %v1070
        %1376 = vmatprep.subr.bf16.mxu0 %v1067
        %1377 = vmatpush2.bf16.msra.mxu0 %v1066
        %1378 = vmatprep.subr.bf16.mxu0 %v1063
        %1379 = vmatpush2.bf16.msra.mxu0 %v1062
        %1380 = vmatprep.subr.bf16.mxu0 %v1059
        %1381 = vmatpush2.bf16.msra.mxu0 %v1058
        %1382 = vmatprep.subr.bf16.mxu0 %v1055
        %1383 = vmatpush2.bf16.msra.mxu0 %v1054
        %1384 = vmatprep.subr.bf16.mxu0 %v1051
        %1385 = vmatpush2.bf16.msra.mxu0 %v1050
        %1386 = vmatprep.mubr.bf16.mxu0 %v625
        %1387 = vmatmul.mubr.bf16.gmra.mxu0 %v624
        %v1388 = vpop.f32.mrf.mxu0
        %v1389 = vadd.f32 %v609, %v1388
        %v1390 = vpop.f32.mrf.mxu0
        %v1391 = vadd.f32 %v613, %v1390
        %v1392 = vpop.f32.mrf.mxu0
        %v1393 = vpop.f32.mrf.mxu0
        %1394 = vdwg.mxu0
        %1395 = vmatprep.subr.bf16.mxu0 %v1111
        %1396 = vmatpush1.bf16.msra.mxu0 %v1110
        %1397 = vmatprep.subr.bf16.mxu0 %v1107
        %1398 = vmatpush1.bf16.msra.mxu0 %v1106
        %1399 = vmatprep.subr.bf16.mxu0 %v1103
        %1400 = vmatpush1.bf16.msra.mxu0 %v1102
        %1401 = vmatprep.subr.bf16.mxu0 %v1099
        %1402 = vmatpush1.bf16.msra.mxu0 %v1098
        %1403 = vmatprep.subr.bf16.mxu0 %v1095
        %1404 = vmatpush1.bf16.msra.mxu0 %v1094
        %1405 = vmatprep.subr.bf16.mxu0 %v1091
        %1406 = vmatpush1.bf16.msra.mxu0 %v1090
        %1407 = vmatprep.subr.bf16.mxu0 %v1087
        %1408 = vmatpush1.bf16.msra.mxu0 %v1086
        %1409 = vmatprep.subr.bf16.mxu0 %v1083
        %1410 = vmatpush1.bf16.msra.mxu0 %v1082
        %1411 = vmatprep.subr.bf16.mxu0 %v1143
        %1412 = vmatpush2.bf16.msra.mxu0 %v1142
        %1413 = vmatprep.subr.bf16.mxu0 %v1139
        %1414 = vmatpush2.bf16.msra.mxu0 %v1138
        %1415 = vmatprep.subr.bf16.mxu0 %v1135
        %1416 = vmatpush2.bf16.msra.mxu0 %v1134
        %1417 = vmatprep.subr.bf16.mxu0 %v1131
        %1418 = vmatpush2.bf16.msra.mxu0 %v1130
        %1419 = vmatprep.subr.bf16.mxu0 %v1127
        %1420 = vmatpush2.bf16.msra.mxu0 %v1126
        %1421 = vmatprep.subr.bf16.mxu0 %v1123
        %1422 = vmatpush2.bf16.msra.mxu0 %v1122
        %1423 = vmatprep.subr.bf16.mxu0 %v1119
        %1424 = vmatpush2.bf16.msra.mxu0 %v1118
        %1425 = vmatprep.subr.bf16.mxu0 %v1115
        %1426 = vmatpush2.bf16.msra.mxu0 %v1114
        %1427 = vmatprep.mubr.bf16.mxu0 %v627
        %1428 = vmatmul.mubr.bf16.gmra.mxu0 %v626
        %v1429 = vpop.f32.mrf.mxu0
        %v1430 = vadd.f32 %v1389, %v1429
        %v1431 = vpop.f32.mrf.mxu0
        %v1432 = vadd.f32 %v1391, %v1431
        %v1433 = vpop.f32.mrf.mxu0
        %v1434 = vpop.f32.mrf.mxu0
        %1435 = vdwg.mxu0
        %vm1436 = vcmp.ge.f32.partialorder %v1348, 0.0
        %vm1437 = vcmp.ge.f32.partialorder %v1350, 0.0
        %vm1438 = vcmp.ge.f32.partialorder %v1430, 0.0
        %vm1439 = vcmp.ge.f32.partialorder %v1432, 0.0
        %v1440 = vmul.f32 %v1348, 0.1
        %v1441 = vmul.f32 %v1350, 0.1
        %v1442 = vmul.f32 %v1430, 0.1
        %v1443 = vmul.f32 %v1432, 0.1
        %v1444 = vsel %vm1436, %v1348, %v1440
        %v1445 = vsel %vm1437, %v1350, %v1441
        %v1446 = vsel %vm1438, %v1430, %v1442
        %v1447 = vsel %vm1439, %v1432, %v1443
        %v1448 = vpack.c.bf16 %v1444, %v1444
        %v1449 = vpack.c.bf16 %v1445, %v1445
        %v1450 = vpack.c.bf16 %v1446, %v1446
        %v1451 = vpack.c.bf16 %v1447, %v1447
        %v1456 = vunpack.c.l.b16 %v1448
        %v1457 = vunpack.c.l.b16 %v1449
        %v1458 = vunpack.c.l.b16 %v1450
        %v1459 = vunpack.c.l.b16 %v1451
        %v1460 = vpack.c.b16 %v1457, %v1456
        %v1461 = vpack.c.b16 %v1459, %v1458
        %1464 = vst [vmem:[%s464] sm:$0xff] %v1460
        %1465 = vst [vmem:[%s464 + $0x8] sm:$0xff] %v1461
        %s1466 = smul.u32 4, %s14
        %p1467 = scmp.lt.s32.totalorder %s1466, 7
        %s1468 = scalar_select %p1467, %s1466, 7
        %s1469 = smul.addr %s1468, 4
        %s1470 = scalar_lea.vmem %s3, %s1469
        // Predicated region
        $region56: #{mini_model_forward.12} parent=50 // pred_check
          %p1471 = pneg %p105
        $region57: #{mini_model_forward.12} parent=50 // pred_check_branch
          %1473 = sbr.rel (%p1471) target = $region59
        $region58: #{mini_model_forward.12} parent=50 // pred_region
          %s1474 = smul.u32 4, %s14
        $region59: #{mini_model_forward.12} parent=50 // pred_fallthru
          _
      $region51: #{mini_model_forward.12} parent=5 // pred_fallthru
        _
      %p1475 = scmp.le.s32.totalorder 2, %s9
      // Predicated region
      $region60: #{mini_model_forward.12} parent=5 // pred_check
        %p1476 = pneg %p1475
      $region61: #{mini_model_forward.12} parent=5 // pred_check_branch
        %1478 = sbr.rel (%p1476) target = $region63
      $region62: #{mini_model_forward.12} parent=5 // pred_region
        %s1479 = ssub.s32 %s9, 2
        // Predicated region
        $region64: #{mini_model_forward.12} parent=62 // pred_check
          %p1480 = pneg %p111
        $region65: #{mini_model_forward.12} parent=62 // pred_check_branch
          %1482 = sbr.rel (%p1480) target = $region67
        $region66: #{mini_model_forward.12} parent=62 // pred_region
          %s1483 = smul.u32 4, %s15
          %p1484 = scmp.lt.s32.totalorder %s1483, 7
          %s1485 = scalar_select %p1484, %s1483, 7
          %s1486 = smul.addr %s1485, 4
          %s1487 = scalar_lea.vmem %s3, %s1486
        $region67: #{mini_model_forward.12} parent=62 // pred_fallthru
          _
      $region63: #{mini_model_forward.12} parent=5 // pred_fallthru
        _
    $region6: #{mini_model_forward.12} parent=1 // loop_footer
      %s13 = sadd.s32 1, %s9
    $region7: #{mini_model_forward.12} parent=1 // loop_footer_branch
      %8 = sbr.rel target = $region3
    $region8: #{mini_model_forward.12} parent=1 // loop_exit
      _

// kernel: mini_model_forward.13
$region0: #{mini_model_forward.13}
  #allocation0 [shape = 'u32[]', space=smem, size = 0x4, offset = 0x4, fixed_abs, tag = 'smem constant byte address 0x4 - core index']
  #allocation1 [shape = 'u32[144,128]{1,0:T(1,128)}', space=vmem, size = 0x12000, scoped, tag = 'internal scratch']
  %s0 = inlined_call_operand.vmem [shape: bf16[8,1024], index: 0, kind: input, shape index: {}]
  %s1 = inlined_call_operand.vmem [shape: bf16[1024,120], index: 1, kind: input, shape index: {}]
  %s2 = inlined_call_operand.vmem [shape: f32[1,120], index: 2, kind: input, shape index: {}]
  %s3 = inlined_call_operand.vmem [shape: f32[8,120], index: 3, kind: output, shape index: {}]
  %s4 = sld [smem:[#allocation0]]
  $region22: #{mini_model_forward.13} parent=0
    _
  %s6 = ssub.s32 1, %s4
  %s7 = scalar_select 0, %s6, %s4
  // Predicated region
  $region2: #{mini_model_forward.13} parent=0 // pred_check
    _
  $region3: #{mini_model_forward.13} parent=0 // pred_check_branch
    %9 = sbr.rel (0) target = $region5
  $region4: #{mini_model_forward.13} parent=0 // pred_region
    _
  $region5: #{mini_model_forward.13} parent=0 // pred_fallthru
    _
  // Predicated region
  $region6: #{mini_model_forward.13} parent=0 // pred_check
    _
  $region7: #{mini_model_forward.13} parent=0 // pred_check_branch
    %11 = sbr.rel (0) target = $region9
  $region8: #{mini_model_forward.13} parent=0 // pred_region
    _
  $region9: #{mini_model_forward.13} parent=0 // pred_fallthru
    _
  // Predicated region
  $region10: #{mini_model_forward.13} parent=0 // pred_check
    _
  $region11: #{mini_model_forward.13} parent=0 // pred_check_branch
    %13 = sbr.rel (0) target = $region13
  $region12: #{mini_model_forward.13} parent=0 // pred_region
    _
  $region13: #{mini_model_forward.13} parent=0 // pred_fallthru
    _
  %v15 = vld [vmem:[%s0] sm:$0xff]
  %v16 = vld [vmem:[%s0 + $0x8] sm:$0xff]
  %v17 = vld [vmem:[%s0 + $0x10] sm:$0xff]
  %v18 = vld [vmem:[%s0 + $0x18] sm:$0xff]
  %v19 = vld [vmem:[%s1] sm:$0xf]
  %v20 = vld [vmem:[%s1 + $0x4] sm:$0xf]
  %v21 = vld [vmem:[%s1 + $0x8] sm:$0xf]
  %v22 = vld [vmem:[%s1 + $0xc] sm:$0xf]
  %v23 = vld [vmem:[%s1 + $0x10] sm:$0xf]
  %v24 = vld [vmem:[%s1 + $0x14] sm:$0xf]
  %v25 = vld [vmem:[%s1 + $0x18] sm:$0xf]
  %v26 = vld [vmem:[%s1 + $0x1c] sm:$0xf]
  %v27 = vld [vmem:[%s1 + $0x20] sm:$0xf]
  %v28 = vld [vmem:[%s1 + $0x24] sm:$0xf]
  %v29 = vld [vmem:[%s1 + $0x28] sm:$0xf]
  %v30 = vld [vmem:[%s1 + $0x2c] sm:$0xf]
  %v31 = vld [vmem:[%s1 + $0x30] sm:$0xf]
  %v32 = vld [vmem:[%s1 + $0x34] sm:$0xf]
  %v33 = vld [vmem:[%s1 + $0x38] sm:$0xf]
  %v34 = vld [vmem:[%s1 + $0x3c] sm:$0xf]
  %v35 = vld [vmem:[%s1 + $0x40] sm:$0xf]
  %v36 = vld [vmem:[%s1 + $0x44] sm:$0xf]
  %v37 = vld [vmem:[%s1 + $0x48] sm:$0xf]
  %v38 = vld [vmem:[%s1 + $0x4c] sm:$0xf]
  %v39 = vld [vmem:[%s1 + $0x50] sm:$0xf]
  %v40 = vld [vmem:[%s1 + $0x54] sm:$0xf]
  %v41 = vld [vmem:[%s1 + $0x58] sm:$0xf]
  %v42 = vld [vmem:[%s1 + $0x5c] sm:$0xf]
  %v43 = vld [vmem:[%s1 + $0x60] sm:$0xf]
  %v44 = vld [vmem:[%s1 + $0x64] sm:$0xf]
  %v45 = vld [vmem:[%s1 + $0x68] sm:$0xf]
  %v46 = vld [vmem:[%s1 + $0x6c] sm:$0xf]
  %v47 = vld [vmem:[%s1 + $0x70] sm:$0xf]
  %v48 = vld [vmem:[%s1 + $0x74] sm:$0xf]
  %v49 = vld [vmem:[%s1 + $0x78] sm:$0xf]
  %v50 = vld [vmem:[%s1 + $0x7c] sm:$0xf]
  %v51 = vld [vmem:[%s1 + $0x80] sm:$0xf]
  %v52 = vld [vmem:[%s1 + $0x84] sm:$0xf]
  %v53 = vld [vmem:[%s1 + $0x88] sm:$0xf]
  %v54 = vld [vmem:[%s1 + $0x8c] sm:$0xf]
  %v55 = vld [vmem:[%s1 + $0x90] sm:$0xf]
  %v56 = vld [vmem:[%s1 + $0x94] sm:$0xf]
  %v57 = vld [vmem:[%s1 + $0x98] sm:$0xf]
  %v58 = vld [vmem:[%s1 + $0x9c] sm:$0xf]
  %v59 = vld [vmem:[%s1 + $0xa0] sm:$0xf]
  %v60 = vld [vmem:[%s1 + $0xa4] sm:$0xf]
  %v61 = vld [vmem:[%s1 + $0xa8] sm:$0xf]
  %v62 = vld [vmem:[%s1 + $0xac] sm:$0xf]
  %v63 = vld [vmem:[%s1 + $0xb0] sm:$0xf]
  %v64 = vld [vmem:[%s1 + $0xb4] sm:$0xf]
  %v65 = vld [vmem:[%s1 + $0xb8] sm:$0xf]
  %v66 = vld [vmem:[%s1 + $0xbc] sm:$0xf]
  %v67 = vld [vmem:[%s1 + $0xc0] sm:$0xf]
  %v68 = vld [vmem:[%s1 + $0xc4] sm:$0xf]
  %v69 = vld [vmem:[%s1 + $0xc8] sm:$0xf]
  %v70 = vld [vmem:[%s1 + $0xcc] sm:$0xf]
  %v71 = vld [vmem:[%s1 + $0xd0] sm:$0xf]
  %v72 = vld [vmem:[%s1 + $0xd4] sm:$0xf]
  %v73 = vld [vmem:[%s1 + $0xd8] sm:$0xf]
  %v74 = vld [vmem:[%s1 + $0xdc] sm:$0xf]
  %v75 = vld [vmem:[%s1 + $0xe0] sm:$0xf]
  %v76 = vld [vmem:[%s1 + $0xe4] sm:$0xf]
  %v77 = vld [vmem:[%s1 + $0xe8] sm:$0xf]
  %v78 = vld [vmem:[%s1 + $0xec] sm:$0xf]
  %v79 = vld [vmem:[%s1 + $0xf0] sm:$0xf]
  %v80 = vld [vmem:[%s1 + $0xf4] sm:$0xf]
  %v81 = vld [vmem:[%s1 + $0xf8] sm:$0xf]
  %v82 = vld [vmem:[%s1 + $0xfc] sm:$0xf]
  %v83 = vld [vmem:[%s1 + $0x100] sm:$0xf]
  %v84 = vld [vmem:[%s1 + $0x104] sm:$0xf]
  %v85 = vld [vmem:[%s1 + $0x108] sm:$0xf]
  %v86 = vld [vmem:[%s1 + $0x10c] sm:$0xf]
  %v87 = vld [vmem:[%s1 + $0x110] sm:$0xf]
  %v88 = vld [vmem:[%s1 + $0x114] sm:$0xf]
  %v89 = vld [vmem:[%s1 + $0x118] sm:$0xf]
  %v90 = vld [vmem:[%s1 + $0x11c] sm:$0xf]
  %v91 = vld [vmem:[%s1 + $0x120] sm:$0xf]
  %v92 = vld [vmem:[%s1 + $0x124] sm:$0xf]
  %v93 = vld [vmem:[%s1 + $0x128] sm:$0xf]
  %v94 = vld [vmem:[%s1 + $0x12c] sm:$0xf]
  %v95 = vld [vmem:[%s1 + $0x130] sm:$0xf]
  %v96 = vld [vmem:[%s1 + $0x134] sm:$0xf]
  %v97 = vld [vmem:[%s1 + $0x138] sm:$0xf]
  %v98 = vld [vmem:[%s1 + $0x13c] sm:$0xf]
  %v99 = vld [vmem:[%s1 + $0x140] sm:$0xf]
  %v100 = vld [vmem:[%s1 + $0x144] sm:$0xf]
  %v101 = vld [vmem:[%s1 + $0x148] sm:$0xf]
  %v102 = vld [vmem:[%s1 + $0x14c] sm:$0xf]
  %v103 = vld [vmem:[%s1 + $0x150] sm:$0xf]
  %v104 = vld [vmem:[%s1 + $0x154] sm:$0xf]
  %v105 = vld [vmem:[%s1 + $0x158] sm:$0xf]
  %v106 = vld [vmem:[%s1 + $0x15c] sm:$0xf]
  %v107 = vld [vmem:[%s1 + $0x160] sm:$0xf]
  %v108 = vld [vmem:[%s1 + $0x164] sm:$0xf]
  %v109 = vld [vmem:[%s1 + $0x168] sm:$0xf]
  %v110 = vld [vmem:[%s1 + $0x16c] sm:$0xf]
  %v111 = vld [vmem:[%s1 + $0x170] sm:$0xf]
  %v112 = vld [vmem:[%s1 + $0x174] sm:$0xf]
  %v113 = vld [vmem:[%s1 + $0x178] sm:$0xf]
  %v114 = vld [vmem:[%s1 + $0x17c] sm:$0xf]
  %v115 = vld [vmem:[%s1 + $0x180] sm:$0xf]
  %v116 = vld [vmem:[%s1 + $0x184] sm:$0xf]
  %v117 = vld [vmem:[%s1 + $0x188] sm:$0xf]
  %v118 = vld [vmem:[%s1 + $0x18c] sm:$0xf]
  %v119 = vld [vmem:[%s1 + $0x190] sm:$0xf]
  %v120 = vld [vmem:[%s1 + $0x194] sm:$0xf]
  %v121 = vld [vmem:[%s1 + $0x198] sm:$0xf]
  %v122 = vld [vmem:[%s1 + $0x19c] sm:$0xf]
  %v123 = vld [vmem:[%s1 + $0x1a0] sm:$0xf]
  %v124 = vld [vmem:[%s1 + $0x1a4] sm:$0xf]
  %v125 = vld [vmem:[%s1 + $0x1a8] sm:$0xf]
  %v126 = vld [vmem:[%s1 + $0x1ac] sm:$0xf]
  %v127 = vld [vmem:[%s1 + $0x1b0] sm:$0xf]
  %v128 = vld [vmem:[%s1 + $0x1b4] sm:$0xf]
  %v129 = vld [vmem:[%s1 + $0x1b8] sm:$0xf]
  %v130 = vld [vmem:[%s1 + $0x1bc] sm:$0xf]
  %v131 = vld [vmem:[%s1 + $0x1c0] sm:$0xf]
  %v132 = vld [vmem:[%s1 + $0x1c4] sm:$0xf]
  %v133 = vld [vmem:[%s1 + $0x1c8] sm:$0xf]
  %v134 = vld [vmem:[%s1 + $0x1cc] sm:$0xf]
  %v135 = vld [vmem:[%s1 + $0x1d0] sm:$0xf]
  %v136 = vld [vmem:[%s1 + $0x1d4] sm:$0xf]
  %v137 = vld [vmem:[%s1 + $0x1d8] sm:$0xf]
  %v138 = vld [vmem:[%s1 + $0x1dc] sm:$0xf]
  %v139 = vld [vmem:[%s1 + $0x1e0] sm:$0xf]
  %v140 = vld [vmem:[%s1 + $0x1e4] sm:$0xf]
  %v141 = vld [vmem:[%s1 + $0x1e8] sm:$0xf]
  %v142 = vld [vmem:[%s1 + $0x1ec] sm:$0xf]
  %v143 = vld [vmem:[%s1 + $0x1f0] sm:$0xf]
  %v144 = vld [vmem:[%s1 + $0x1f4] sm:$0xf]
  %v145 = vld [vmem:[%s1 + $0x1f8] sm:$0xf]
  %v146 = vld [vmem:[%s1 + $0x1fc] sm:$0xf]
  %v147 = vld [vmem:[%s2] sm:$0x1]
  %v149 = vlaneseq
  %v150 = vshrl.u32 %v149, 7
  %v151 = vsub.s32 0, %v150
  %v152 = vrot.slane %v147, %v151
  %v158 = vunpack.c.l.b16 %v15
  %v159 = vunpack.c.h.b16 %v15
  %v160 = vunpack.c.l.b16 %v16
  %v161 = vunpack.c.h.b16 %v16
  %v162 = vunpack.c.l.b16 %v17
  %v163 = vunpack.c.h.b16 %v17
  %v164 = vunpack.c.l.b16 %v18
  %v165 = vunpack.c.h.b16 %v18
  %v166 = vpack.c.b16 %v158, %v158
  %v167 = vpack.c.b16 %v159, %v159
  %v168 = vpack.c.b16 %v160, %v160
  %v169 = vpack.c.b16 %v161, %v161
  %v170 = vpack.c.b16 %v162, %v162
  %v171 = vpack.c.b16 %v163, %v163
  %v172 = vpack.c.b16 %v164, %v164
  %v173 = vpack.c.b16 %v165, %v165
  %v310 = vunpack.c.l.b16 %v19
  %v311 = vunpack.c.l.b16 %v20
  %v312 = vunpack.c.l.b16 %v21
  %v313 = vunpack.c.l.b16 %v22
  %v314 = vunpack.c.l.b16 %v23
  %v315 = vunpack.c.l.b16 %v24
  %v316 = vunpack.c.l.b16 %v25
  %v317 = vunpack.c.l.b16 %v26
  %v318 = vunpack.c.l.b16 %v27
  %v319 = vunpack.c.l.b16 %v28
  %v320 = vunpack.c.l.b16 %v29
  %v321 = vunpack.c.l.b16 %v30
  %v322 = vunpack.c.l.b16 %v31
  %v323 = vunpack.c.l.b16 %v32
  %v324 = vunpack.c.l.b16 %v33
  %v325 = vunpack.c.l.b16 %v34
  %v326 = vunpack.c.l.b16 %v35
  %v327 = vunpack.c.l.b16 %v36
  %v328 = vunpack.c.l.b16 %v37
  %v329 = vunpack.c.l.b16 %v38
  %v330 = vunpack.c.l.b16 %v39
  %v331 = vunpack.c.l.b16 %v40
  %v332 = vunpack.c.l.b16 %v41
  %v333 = vunpack.c.l.b16 %v42
  %v334 = vunpack.c.l.b16 %v43
  %v335 = vunpack.c.l.b16 %v44
  %v336 = vunpack.c.l.b16 %v45
  %v337 = vunpack.c.l.b16 %v46
  %v338 = vunpack.c.l.b16 %v47
  %v339 = vunpack.c.l.b16 %v48
  %v340 = vunpack.c.l.b16 %v49
  %v341 = vunpack.c.l.b16 %v50
  %v342 = vunpack.c.l.b16 %v51
  %v343 = vunpack.c.l.b16 %v52
  %v344 = vunpack.c.l.b16 %v53
  %v345 = vunpack.c.l.b16 %v54
  %v346 = vunpack.c.l.b16 %v55
  %v347 = vunpack.c.l.b16 %v56
  %v348 = vunpack.c.l.b16 %v57
  %v349 = vunpack.c.l.b16 %v58
  %v350 = vunpack.c.l.b16 %v59
  %v351 = vunpack.c.l.b16 %v60
  %v352 = vunpack.c.l.b16 %v61
  %v353 = vunpack.c.l.b16 %v62
  %v354 = vunpack.c.l.b16 %v63
  %v355 = vunpack.c.l.b16 %v64
  %v356 = vunpack.c.l.b16 %v65
  %v357 = vunpack.c.l.b16 %v66
  %v358 = vunpack.c.l.b16 %v67
  %v359 = vunpack.c.l.b16 %v68
  %v360 = vunpack.c.l.b16 %v69
  %v361 = vunpack.c.l.b16 %v70
  %v362 = vunpack.c.l.b16 %v71
  %v363 = vunpack.c.l.b16 %v72
  %v364 = vunpack.c.l.b16 %v73
  %v365 = vunpack.c.l.b16 %v74
  %v366 = vunpack.c.l.b16 %v75
  %v367 = vunpack.c.l.b16 %v76
  %v368 = vunpack.c.l.b16 %v77
  %v369 = vunpack.c.l.b16 %v78
  %v370 = vunpack.c.l.b16 %v79
  %v371 = vunpack.c.l.b16 %v80
  %v372 = vunpack.c.l.b16 %v81
  %v373 = vunpack.c.l.b16 %v82
  %v374 = vunpack.c.l.b16 %v83
  %v375 = vunpack.c.l.b16 %v84
  %v376 = vunpack.c.l.b16 %v85
  %v377 = vunpack.c.l.b16 %v86
  %v378 = vunpack.c.l.b16 %v87
  %v379 = vunpack.c.l.b16 %v88
  %v380 = vunpack.c.l.b16 %v89
  %v381 = vunpack.c.l.b16 %v90
  %v382 = vunpack.c.l.b16 %v91
  %v383 = vunpack.c.l.b16 %v92
  %v384 = vunpack.c.l.b16 %v93
  %v385 = vunpack.c.l.b16 %v94
  %v386 = vunpack.c.l.b16 %v95
  %v387 = vunpack.c.l.b16 %v96
  %v388 = vunpack.c.l.b16 %v97
  %v389 = vunpack.c.l.b16 %v98
  %v390 = vunpack.c.l.b16 %v99
  %v391 = vunpack.c.l.b16 %v100
  %v392 = vunpack.c.l.b16 %v101
  %v393 = vunpack.c.l.b16 %v102
  %v394 = vunpack.c.l.b16 %v103
  %v395 = vunpack.c.l.b16 %v104
  %v396 = vunpack.c.l.b16 %v105
  %v397 = vunpack.c.l.b16 %v106
  %v398 = vunpack.c.l.b16 %v107
  %v399 = vunpack.c.l.b16 %v108
  %v400 = vunpack.c.l.b16 %v109
  %v401 = vunpack.c.l.b16 %v110
  %v402 = vunpack.c.l.b16 %v111
  %v403 = vunpack.c.l.b16 %v112
  %v404 = vunpack.c.l.b16 %v113
  %v405 = vunpack.c.l.b16 %v114
  %v406 = vunpack.c.l.b16 %v115
  %v407 = vunpack.c.l.b16 %v116
  %v408 = vunpack.c.l.b16 %v117
  %v409 = vunpack.c.l.b16 %v118
  %v410 = vunpack.c.l.b16 %v119
  %v411 = vunpack.c.l.b16 %v120
  %v412 = vunpack.c.l.b16 %v121
  %v413 = vunpack.c.l.b16 %v122
  %v414 = vunpack.c.l.b16 %v123
  %v415 = vunpack.c.l.b16 %v124
  %v416 = vunpack.c.l.b16 %v125
  %v417 = vunpack.c.l.b16 %v126
  %v418 = vunpack.c.l.b16 %v127
  %v419 = vunpack.c.l.b16 %v128
  %v420 = vunpack.c.l.b16 %v129
  %v421 = vunpack.c.l.b16 %v130
  %v422 = vunpack.c.l.b16 %v131
  %v423 = vunpack.c.l.b16 %v132
  %v424 = vunpack.c.l.b16 %v133
  %v425 = vunpack.c.l.b16 %v134
  %v426 = vunpack.c.l.b16 %v135
  %v427 = vunpack.c.l.b16 %v136
  %v428 = vunpack.c.l.b16 %v137
  %v429 = vunpack.c.l.b16 %v138
  %v430 = vunpack.c.l.b16 %v139
  %v431 = vunpack.c.l.b16 %v140
  %v432 = vunpack.c.l.b16 %v141
  %v433 = vunpack.c.l.b16 %v142
  %v434 = vunpack.c.l.b16 %v143
  %v435 = vunpack.c.l.b16 %v144
  %v436 = vunpack.c.l.b16 %v145
  %v437 = vunpack.c.l.b16 %v146
  %v438 = vpack.c.b16 %v311, %v310
  %v439 = vpack.c.b16 %v313, %v312
  %v440 = vpack.c.b16 %v315, %v314
  %v441 = vpack.c.b16 %v317, %v316
  %v442 = vpack.c.b16 %v319, %v318
  %v443 = vpack.c.b16 %v321, %v320
  %v444 = vpack.c.b16 %v323, %v322
  %v445 = vpack.c.b16 %v325, %v324
  %v446 = vpack.c.b16 %v327, %v326
  %v447 = vpack.c.b16 %v329, %v328
  %v448 = vpack.c.b16 %v331, %v330
  %v449 = vpack.c.b16 %v333, %v332
  %v450 = vpack.c.b16 %v335, %v334
  %v451 = vpack.c.b16 %v337, %v336
  %v452 = vpack.c.b16 %v339, %v338
  %v453 = vpack.c.b16 %v341, %v340
  %v454 = vpack.c.b16 %v343, %v342
  %v455 = vpack.c.b16 %v345, %v344
  %v456 = vpack.c.b16 %v347, %v346
  %v457 = vpack.c.b16 %v349, %v348
  %v458 = vpack.c.b16 %v351, %v350
  %v459 = vpack.c.b16 %v353, %v352
  %v460 = vpack.c.b16 %v355, %v354
  %v461 = vpack.c.b16 %v357, %v356
  %v462 = vpack.c.b16 %v359, %v358
  %v463 = vpack.c.b16 %v361, %v360
  %v464 = vpack.c.b16 %v363, %v362
  %v465 = vpack.c.b16 %v365, %v364
  %v466 = vpack.c.b16 %v367, %v366
  %v467 = vpack.c.b16 %v369, %v368
  %v468 = vpack.c.b16 %v371, %v370
  %v469 = vpack.c.b16 %v373, %v372
  %v470 = vpack.c.b16 %v375, %v374
  %v471 = vpack.c.b16 %v377, %v376
  %v472 = vpack.c.b16 %v379, %v378
  %v473 = vpack.c.b16 %v381, %v380
  %v474 = vpack.c.b16 %v383, %v382
  %v475 = vpack.c.b16 %v385, %v384
  %v476 = vpack.c.b16 %v387, %v386
  %v477 = vpack.c.b16 %v389, %v388
  %v478 = vpack.c.b16 %v391, %v390
  %v479 = vpack.c.b16 %v393, %v392
  %v480 = vpack.c.b16 %v395, %v394
  %v481 = vpack.c.b16 %v397, %v396
  %v482 = vpack.c.b16 %v399, %v398
  %v483 = vpack.c.b16 %v401, %v400
  %v484 = vpack.c.b16 %v403, %v402
  %v485 = vpack.c.b16 %v405, %v404
  %v486 = vpack.c.b16 %v407, %v406
  %v487 = vpack.c.b16 %v409, %v408
  %v488 = vpack.c.b16 %v411, %v410
  %v489 = vpack.c.b16 %v413, %v412
  %v490 = vpack.c.b16 %v415, %v414
  %v491 = vpack.c.b16 %v417, %v416
  %v492 = vpack.c.b16 %v419, %v418
  %v493 = vpack.c.b16 %v421, %v420
  %v494 = vpack.c.b16 %v423, %v422
  %v495 = vpack.c.b16 %v425, %v424
  %v496 = vpack.c.b16 %v427, %v426
  %v497 = vpack.c.b16 %v429, %v428
  %v498 = vpack.c.b16 %v431, %v430
  %v499 = vpack.c.b16 %v433, %v432
  %v500 = vpack.c.b16 %v435, %v434
  %v501 = vpack.c.b16 %v437, %v436
  %566 = vmatprep.subr.bf16.mxu0 0
  %567 = vmatpush1.bf16.msra.mxu0 %v445
  %568 = vmatprep.subr.bf16.mxu0 0
  %569 = vmatpush1.bf16.msra.mxu0 %v444
  %570 = vmatprep.subr.bf16.mxu0 0
  %571 = vmatpush1.bf16.msra.mxu0 %v443
  %572 = vmatprep.subr.bf16.mxu0 0
  %573 = vmatpush1.bf16.msra.mxu0 %v442
  %574 = vmatprep.subr.bf16.mxu0 0
  %575 = vmatpush1.bf16.msra.mxu0 %v441
  %576 = vmatprep.subr.bf16.mxu0 0
  %577 = vmatpush1.bf16.msra.mxu0 %v440
  %578 = vmatprep.subr.bf16.mxu0 0
  %579 = vmatpush1.bf16.msra.mxu0 %v439
  %580 = vmatprep.subr.bf16.mxu0 0
  %581 = vmatpush1.bf16.msra.mxu0 %v438
  %582 = vmatprep.subr.bf16.mxu0 0
  %583 = vmatpush2.bf16.msra.mxu0 %v453
  %584 = vmatprep.subr.bf16.mxu0 0
  %585 = vmatpush2.bf16.msra.mxu0 %v452
  %586 = vmatprep.subr.bf16.mxu0 0
  %587 = vmatpush2.bf16.msra.mxu0 %v451
  %588 = vmatprep.subr.bf16.mxu0 0
  %589 = vmatpush2.bf16.msra.mxu0 %v450
  %590 = vmatprep.subr.bf16.mxu0 0
  %591 = vmatpush2.bf16.msra.mxu0 %v449
  %592 = vmatprep.subr.bf16.mxu0 0
  %593 = vmatpush2.bf16.msra.mxu0 %v448
  %594 = vmatprep.subr.bf16.mxu0 0
  %595 = vmatpush2.bf16.msra.mxu0 %v447
  %596 = vmatprep.subr.bf16.mxu0 0
  %597 = vmatpush2.bf16.msra.mxu0 %v446
  %598 = vmatprep.mubr.bf16.mxu0 %v167
  %599 = vmatmul.mubr.bf16.gmra.mxu0 %v166
  %v600 = vpop.f32.mrf.mxu0
  %v601 = vadd.f32 %v152, %v600
  %v602 = vpop.f32.mrf.mxu0
  %v603 = vpop.f32.mrf.mxu0
  %v604 = vpop.f32.mrf.mxu0
  %605 = vdwg.mxu0
  %606 = vmatprep.subr.bf16.mxu0 0
  %607 = vmatpush1.bf16.msra.mxu0 %v461
  %608 = vmatprep.subr.bf16.mxu0 0
  %609 = vmatpush1.bf16.msra.mxu0 %v460
  %610 = vmatprep.subr.bf16.mxu0 0
  %611 = vmatpush1.bf16.msra.mxu0 %v459
  %612 = vmatprep.subr.bf16.mxu0 0
  %613 = vmatpush1.bf16.msra.mxu0 %v458
  %614 = vmatprep.subr.bf16.mxu0 0
  %615 = vmatpush1.bf16.msra.mxu0 %v457
  %616 = vmatprep.subr.bf16.mxu0 0
  %617 = vmatpush1.bf16.msra.mxu0 %v456
  %618 = vmatprep.subr.bf16.mxu0 0
  %619 = vmatpush1.bf16.msra.mxu0 %v455
  %620 = vmatprep.subr.bf16.mxu0 0
  %621 = vmatpush1.bf16.msra.mxu0 %v454
  %622 = vmatprep.subr.bf16.mxu0 0
  %623 = vmatpush2.bf16.msra.mxu0 %v469
  %624 = vmatprep.subr.bf16.mxu0 0
  %625 = vmatpush2.bf16.msra.mxu0 %v468
  %626 = vmatprep.subr.bf16.mxu0 0
  %627 = vmatpush2.bf16.msra.mxu0 %v467
  %628 = vmatprep.subr.bf16.mxu0 0
  %629 = vmatpush2.bf16.msra.mxu0 %v466
  %630 = vmatprep.subr.bf16.mxu0 0
  %631 = vmatpush2.bf16.msra.mxu0 %v465
  %632 = vmatprep.subr.bf16.mxu0 0
  %633 = vmatpush2.bf16.msra.mxu0 %v464
  %634 = vmatprep.subr.bf16.mxu0 0
  %635 = vmatpush2.bf16.msra.mxu0 %v463
  %636 = vmatprep.subr.bf16.mxu0 0
  %637 = vmatpush2.bf16.msra.mxu0 %v462
  %638 = vmatprep.mubr.bf16.mxu0 %v169
  %639 = vmatmul.mubr.bf16.gmra.mxu0 %v168
  %v640 = vpop.f32.mrf.mxu0
  %v641 = vadd.f32 %v601, %v640
  %v642 = vpop.f32.mrf.mxu0
  %v643 = vpop.f32.mrf.mxu0
  %v644 = vpop.f32.mrf.mxu0
  %645 = vdwg.mxu0
  %646 = vmatprep.subr.bf16.mxu0 0
  %647 = vmatpush1.bf16.msra.mxu0 %v477
  %648 = vmatprep.subr.bf16.mxu0 0
  %649 = vmatpush1.bf16.msra.mxu0 %v476
  %650 = vmatprep.subr.bf16.mxu0 0
  %651 = vmatpush1.bf16.msra.mxu0 %v475
  %652 = vmatprep.subr.bf16.mxu0 0
  %653 = vmatpush1.bf16.msra.mxu0 %v474
  %654 = vmatprep.subr.bf16.mxu0 0
  %655 = vmatpush1.bf16.msra.mxu0 %v473
  %656 = vmatprep.subr.bf16.mxu0 0
  %657 = vmatpush1.bf16.msra.mxu0 %v472
  %658 = vmatprep.subr.bf16.mxu0 0
  %659 = vmatpush1.bf16.msra.mxu0 %v471
  %660 = vmatprep.subr.bf16.mxu0 0
  %661 = vmatpush1.bf16.msra.mxu0 %v470
  %662 = vmatprep.subr.bf16.mxu0 0
  %663 = vmatpush2.bf16.msra.mxu0 %v485
  %664 = vmatprep.subr.bf16.mxu0 0
  %665 = vmatpush2.bf16.msra.mxu0 %v484
  %666 = vmatprep.subr.bf16.mxu0 0
  %667 = vmatpush2.bf16.msra.mxu0 %v483
  %668 = vmatprep.subr.bf16.mxu0 0
  %669 = vmatpush2.bf16.msra.mxu0 %v482
  %670 = vmatprep.subr.bf16.mxu0 0
  %671 = vmatpush2.bf16.msra.mxu0 %v481
  %672 = vmatprep.subr.bf16.mxu0 0
  %673 = vmatpush2.bf16.msra.mxu0 %v480
  %674 = vmatprep.subr.bf16.mxu0 0
  %675 = vmatpush2.bf16.msra.mxu0 %v479
  %676 = vmatprep.subr.bf16.mxu0 0
  %677 = vmatpush2.bf16.msra.mxu0 %v478
  %678 = vmatprep.mubr.bf16.mxu0 %v171
  %679 = vmatmul.mubr.bf16.gmra.mxu0 %v170
  %v680 = vpop.f32.mrf.mxu0
  %v681 = vadd.f32 %v641, %v680
  %v682 = vpop.f32.mrf.mxu0
  %v683 = vpop.f32.mrf.mxu0
  %v684 = vpop.f32.mrf.mxu0
  %685 = vdwg.mxu0
  %686 = vmatprep.subr.bf16.mxu0 0
  %687 = vmatpush1.bf16.msra.mxu0 %v493
  %688 = vmatprep.subr.bf16.mxu0 0
  %689 = vmatpush1.bf16.msra.mxu0 %v492
  %690 = vmatprep.subr.bf16.mxu0 0
  %691 = vmatpush1.bf16.msra.mxu0 %v491
  %692 = vmatprep.subr.bf16.mxu0 0
  %693 = vmatpush1.bf16.msra.mxu0 %v490
  %694 = vmatprep.subr.bf16.mxu0 0
  %695 = vmatpush1.bf16.msra.mxu0 %v489
  %696 = vmatprep.subr.bf16.mxu0 0
  %697 = vmatpush1.bf16.msra.mxu0 %v488
  %698 = vmatprep.subr.bf16.mxu0 0
  %699 = vmatpush1.bf16.msra.mxu0 %v487
  %700 = vmatprep.subr.bf16.mxu0 0
  %701 = vmatpush1.bf16.msra.mxu0 %v486
  %702 = vmatprep.subr.bf16.mxu0 0
  %703 = vmatpush2.bf16.msra.mxu0 %v501
  %704 = vmatprep.subr.bf16.mxu0 0
  %705 = vmatpush2.bf16.msra.mxu0 %v500
  %706 = vmatprep.subr.bf16.mxu0 0
  %707 = vmatpush2.bf16.msra.mxu0 %v499
  %708 = vmatprep.subr.bf16.mxu0 0
  %709 = vmatpush2.bf16.msra.mxu0 %v498
  %710 = vmatprep.subr.bf16.mxu0 0
  %711 = vmatpush2.bf16.msra.mxu0 %v497
  %712 = vmatprep.subr.bf16.mxu0 0
  %713 = vmatpush2.bf16.msra.mxu0 %v496
  %714 = vmatprep.subr.bf16.mxu0 0
  %715 = vmatpush2.bf16.msra.mxu0 %v495
  %716 = vmatprep.subr.bf16.mxu0 0
  %717 = vmatpush2.bf16.msra.mxu0 %v494
  %718 = vmatprep.mubr.bf16.mxu0 %v173
  %719 = vmatmul.mubr.bf16.gmra.mxu0 %v172
  %v720 = vpop.f32.mrf.mxu0
  %v721 = vadd.f32 %v681, %v720
  %v722 = vpop.f32.mrf.mxu0
  %v723 = vpop.f32.mrf.mxu0
  %v724 = vpop.f32.mrf.mxu0
  %725 = vdwg.mxu0
  %vm726 = vcmask 982016
  %727 = vst.msk [vmem:[%s3] sm:$0xff] %vm726, %v721
  // Predicated region
  $region14: #{mini_model_forward.13} parent=0 // pred_check
    _
  $region15: #{mini_model_forward.13} parent=0 // pred_check_branch
    %729 = sbr.rel (0) target = $region17
  $region16: #{mini_model_forward.13} parent=0 // pred_region
    _
  $region17: #{mini_model_forward.13} parent=0 // pred_fallthru
    _
  // Predicated region
  $region18: #{mini_model_forward.13} parent=0 // pred_check
    _
  $region19: #{mini_model_forward.13} parent=0 // pred_check_branch
    %731 = sbr.rel (0) target = $region21
  $region20: #{mini_model_forward.13} parent=0 // pred_region
    _
  $region21: #{mini_model_forward.13} parent=0 // pred_fallthru
    _

</llo_original>
